<compile_context>
chip_gen: v7x
topology: tpu7x:2x2x1
jax: 0.10.0
libtpu: 0.0.40
codegen_flags: <defaults>
</compile_context>

<pallas_src>
import functools

import numpy as np

import jax
import jax.numpy as jnp
from jax.experimental import pallas as pl
from jax.experimental.pallas import tpu as pltpu

_PROB_EPS = 1e-3            # ProbiouRiouLoss prob_eps default
_IOU_EPS = 1e-6             # rotated_iou_loss eps
_LANES = 128                # boxes per lane row
_SUB = 8                    # sublane rows -> one (8,128) f32 vreg per quantity
_BLOCK_BOXES = _SUB * _LANES            # 1024 boxes per sub-tile
_MAX_GROUPS_PER_STEP = 4                # 1024-box groups folded per grid step

# component rows of the packed box slab
_CX, _CY, _CW, _CH, _CCOS, _CSIN = range(6)
_NCOMP = 6

_NUM_CANDIDATES = 24        # 16 edge-edge + 4 + 4 corner-inside candidates
_INVALID_KEY = 10.0         # valid pseudo-angle keys lie in [0, 4)


# --------------------------------------------------------------------------
# Batcher odd-even merge sorting network (generated + verified at import).
# Comparators are always (i, j) with i < j and min -> i, so restricting the
# power-of-two network to indices < 24 still sorts 24 elements (the dropped
# positions behave as +inf sentinels that never move).
# --------------------------------------------------------------------------
def _oddeven_merge(lo, hi, r):
    step = r * 2
    if step <= hi - lo:
        yield from _oddeven_merge(lo, hi, step)
        yield from _oddeven_merge(lo + r, hi, step)
        for i in range(lo + r, hi - r, step):
            yield (i, i + r)
    else:
        yield (lo, lo + r)


def _oddeven_merge_sort(lo, hi):
    if hi - lo >= 1:
        mid = lo + (hi - lo) // 2
        yield from _oddeven_merge_sort(lo, mid)
        yield from _oddeven_merge_sort(mid + 1, hi)
        yield from _oddeven_merge(lo, hi, 1)


def _binary_columns(n):
    """Column j = bit j of t for every t in [0, 2^n), packed 8 cases/byte."""
    n_bytes = 1 << max(n - 3, 0)
    cols = []
    for j in range(n):
        if j < 3:
            byte = 0
            for b in range(8):
                if (b >> j) & 1:
                    byte |= 1 << b
            cols.append(np.full(n_bytes, byte, dtype=np.uint8))
        else:
            half = 1 << (j - 3)
            unit = np.concatenate(
                [np.zeros(half, np.uint8), np.full(half, 255, np.uint8)])
            cols.append(np.tile(unit, n_bytes // (2 * half)))
    return cols


def _verify_sorting_network(pairs, n):
    """Exhaustive 0-1-principle check (all 2^n binary inputs, bit-packed)."""
    cols = _binary_columns(n)
    for i, j in pairs:
        lo = cols[i] & cols[j]
        hi = cols[i] | cols[j]
        cols[i], cols[j] = lo, hi
    for i in range(n - 1):
        if np.any(cols[i] & ~cols[i + 1]):      # a case with 1 before 0
            return False
    return True


def _build_sort_network(n):
    size = 1
    while size < n:
        size *= 2
    pairs = [(i, j) for (i, j) in _oddeven_merge_sort(0, size - 1)
             if i < n and j < n]
    if not _verify_sorting_network(pairs, n):
        raise AssertionError("generated compare-exchange network does not sort")
    return tuple(pairs)


_SORT_NETWORK = _build_sort_network(_NUM_CANDIDATES)


# --------------------------------------------------------------------------
# Per-box math shared by the Pallas kernel and the pure-JAX reference.
# load1/load2 map a component index -> array tile; every op is element-wise so
# the same code runs on (8, 128) vreg tiles (kernel) or (N,) vectors (ref).
# --------------------------------------------------------------------------
def _per_box_losses(load1, load2, *, fast_math):
    f32 = jnp.float32

    def recip(v):               # approximate reciprocal -> EUP slot
        return pl.reciprocal(v, approx=True) if fast_math else 1.0 / v

    def recip_exact(v):         # approx + one Newton step (~f32 exact)
        if not fast_math:
            return 1.0 / v
        r = pl.reciprocal(v, approx=True)
        return r * (2.0 - v * r)

    # ------------- rotated IoU loss ('linear') via convex polygon clipping ---
    # TODO(synk): mmrotate's rotated_iou_loss wraps the external mmcv
    # box_iou_rotated op; eps / degenerate-geometry handling of that op may
    # differ slightly from this polygon-clipping reimplementation.
    x1, y1 = load1(_CX), load1(_CY)
    cos1, sin1 = load1(_CCOS), load1(_CSIN)
    x2, y2 = load2(_CX), load2(_CY)
    cos2, sin2 = load2(_CCOS), load2(_CSIN)
    hw1, hh1 = 0.5 * load1(_CW), 0.5 * load1(_CH)
    hw2, hh2 = 0.5 * load2(_CW), 0.5 * load2(_CH)

    signs = ((-1.0, -1.0), (1.0, -1.0), (1.0, 1.0), (-1.0, 1.0))   # CCW corners
    c1x, c1y, c2x, c2y = [], [], [], []
    for sgx, sgy in signs:
        dxa, dya = sgx * hw1, sgy * hh1
        c1x.append(x1 + dxa * cos1 - dya * sin1)
        c1y.append(y1 + dxa * sin1 + dya * cos1)
        dxb, dyb = sgx * hw2, sgy * hh2
        c2x.append(x2 + dxb * cos2 - dyb * sin2)
        c2y.append(y2 + dxb * sin2 + dyb * cos2)

    e1x = [c1x[(i + 1) % 4] - c1x[i] for i in range(4)]
    e1y = [c1y[(i + 1) % 4] - c1y[i] for i in range(4)]
    e2x = [c2x[(j + 1) % 4] - c2x[j] for j in range(4)]
    e2y = [c2y[(j + 1) % 4] - c2y[j] for j in range(4)]

    px_l, py_l, pm_l = [], [], []       # candidate x, y, valid mask

    # 16 edge-edge intersection candidates
    for i in range(4):
        ax, ay, rpx, rpy = c1x[i], c1y[i], e1x[i], e1y[i]
        for j in range(4):
            bx, by, spx, spy = c2x[j], c2y[j], e2x[j], e2y[j]
            den = rpx * spy - rpy * spx
            den_ok = jnp.abs(den) > 1e-12
            inv_den = recip_exact(jnp.where(den_ok, den, 1.0))
            qpx = bx - ax
            qpy = by - ay
            tpar = (qpx * spy - qpy * spx) * inv_den
            upar = (qpx * rpy - qpy * rpx) * inv_den
            valid = (den_ok & (tpar >= 0.0) & (tpar <= 1.0)
                     & (upar >= 0.0) & (upar <= 1.0))
            px_l.append(ax + tpar * rpx)
            py_l.append(ay + tpar * rpy)
            pm_l.append(valid.astype(f32))

    # corners of box1 inside box2 (positions alias the already-live corners)
    for i in range(4):
        dx_ = c1x[i] - x2
        dy_ = c1y[i] - y2
        uu = dx_ * cos2 + dy_ * sin2
        vv = -dx_ * sin2 + dy_ * cos2
        inside = (jnp.abs(uu) <= hw2) & (jnp.abs(vv) <= hh2)
        px_l.append(c1x[i])
        py_l.append(c1y[i])
        pm_l.append(inside.astype(f32))

    # corners of box2 inside box1
    for j in range(4):
        dx_ = c2x[j] - x1
        dy_ = c2y[j] - y1
        uu = dx_ * cos1 + dy_ * sin1
        vv = -dx_ * sin1 + dy_ * cos1
        inside = (jnp.abs(uu) <= hw1) & (jnp.abs(vv) <= hh1)
        px_l.append(c2x[j])
        py_l.append(c2y[j])
        pm_l.append(inside.astype(f32))

    k = len(px_l)                       # 24 candidates

    # valid count + centroid of the valid candidates (interior reference point)
    m = pm_l[0]
    sx_acc = px_l[0] * pm_l[0]
    sy_acc = py_l[0] * pm_l[0]
    for t in range(1, k):
        m = m + pm_l[t]
        sx_acc = sx_acc + px_l[t] * pm_l[t]
        sy_acc = sy_acc + py_l[t] * pm_l[t]
    inv_m = recip(jnp.maximum(m, 1.0))
    cx = sx_acc * inv_m
    cy = sy_acc * inv_m

    # (pseudo-angle key, centroid-relative coords); invalid candidates get
    # rx = ry = 0 and key = _INVALID_KEY so they sort to the tail and drop out
    # of the shoelace automatically.  px/py/pm die here.
    key_l, rx_l, ry_l = [], [], []
    for t in range(k):
        valid = pm_l[t]
        rx = (px_l[t] - cx) * valid
        ry = (py_l[t] - cy) * valid
        denom = jnp.abs(rx) + jnp.abs(ry)
        pfrac = rx * recip(jnp.where(denom > 1e-12, denom, 1.0))
        key = jnp.where(ry >= 0.0, 1.0 - pfrac, 3.0 + pfrac)     # CCW in [0,4)
        key_l.append(jnp.where(valid > 0.5, key, _INVALID_KEY))
        rx_l.append(rx)
        ry_l.append(ry)

    # Sort the 24 (key, rx, ry) triples ascending by key with the verified
    # Batcher network: O(k log^2 k) compare-exchanges on the VPU instead of
    # the former O(k^2) rank + pair-matching loops (and no rank[] RMW spills).
    for i, j in _SORT_NETWORK:
        ki, kj = key_l[i], key_l[j]
        swap = kj < ki
        key_l[i] = jnp.minimum(ki, kj)
        key_l[j] = jnp.maximum(ki, kj)
        xi, xj = rx_l[i], rx_l[j]
        rx_l[i] = jnp.where(swap, xj, xi)
        rx_l[j] = jnp.where(swap, xi, xj)
        yi, yj = ry_l[i], ry_l[j]
        ry_l[i] = jnp.where(swap, yj, yi)
        ry_l[j] = jnp.where(swap, yi, yj)

    # Linear shoelace over consecutive sorted vertices (invalid tail has
    # rx = ry = 0, so its terms vanish without masking).
    csum = rx_l[0] * ry_l[1] - rx_l[1] * ry_l[0]
    for t in range(1, k - 1):
        csum = csum + (rx_l[t] * ry_l[t + 1] - rx_l[t + 1] * ry_l[t])

    # wrap-around term: last valid vertex back to the first vertex
    lx, ly = rx_l[0], ry_l[0]
    for t in range(1, k):
        take = key_l[t] < (_INVALID_KEY - 0.5)
        lx = jnp.where(take, rx_l[t], lx)
        ly = jnp.where(take, ry_l[t], ly)
    csum = csum + (lx * ry_l[0] - rx_l[0] * ly)

    inter = 0.5 * jnp.abs(csum)
    area1 = jnp.abs(load1(_CW) * load1(_CH))
    area2 = jnp.abs(load2(_CW) * load2(_CH))
    union = area1 + area2 - inter + 1e-8
    iou = jnp.maximum(inter * recip_exact(union), _IOU_EPS)
    r_loss = 1.0 - iou

    # ------------- ProbIoU loss (probiou_loss, mode='l1', deform=True) -------
    # evaluated last (re-reads the inputs) so nothing from it stays live
    # across the register-pressure peak of the sort network.
    x1, y1, w1, h1 = load1(_CX), load1(_CY), load1(_CW), load1(_CH)
    cos1, sin1 = load1(_CCOS), load1(_CSIN)
    x2, y2, w2, h2 = load2(_CX), load2(_CY), load2(_CW), load2(_CH)
    cos2, sin2 = load2(_CCOS), load2(_CSIN)

    a1_, b1_ = w1 * w1 * (1.0 / 12.0), h1 * h1 * (1.0 / 12.0)
    a2_, b2_ = w2 * w2 * (1.0 / 12.0), h2 * h2 * (1.0 / 12.0)
    c1sq, s1sq = cos1 * cos1, sin1 * sin1
    c2sq, s2sq = cos2 * cos2, sin2 * sin2
    a1 = a1_ * c1sq + b1_ * s1sq
    b1 = a1_ * s1sq + b1_ * c1sq
    c1 = (a1_ - b1_) * cos1 * sin1
    a2 = a2_ * c2sq + b2_ * s2sq
    b2 = a2_ * s2sq + b2_ * c2sq
    c2 = (a2_ - b2_) * cos2 * sin2

    dx = x1 - x2
    dy = y1 - y2
    sa, sb, sc = a1 + a2, b1 + b2, c1 + c2
    t1 = 0.25 * (sa * dy * dy + sb * dx * dx) + 0.5 * (sc * (-dx) * dy)
    t2 = sa * sb - sc * sc
    t3_ = (a1 * b1 - c1 * c1) * (a2 * b2 - c2 * c2)
    t3 = 0.5 * jnp.log(t2 / (4.0 * jnp.sqrt(jnp.maximum(t3_, 0.0)) + _PROB_EPS))
    b_d = jnp.clip(t1 / t2 + t3, _PROB_EPS, 100.0)
    p_loss = jnp.sqrt(1.0 - jnp.exp(-b_d) + _PROB_EPS)

    return p_loss, r_loss


def _combine(p_loss, r_loss, mode):
    if mode == "avg":
        return 0.5 * (p_loss + r_loss)
    if mode == "multi":
        return jnp.sqrt(jnp.abs(p_loss * r_loss))
    if mode == "compensate":
        delta = jnp.abs(r_loss - p_loss) / (r_loss + p_loss)
        return delta * p_loss + (1.0 - delta) * r_loss
    raise ValueError(f"unsupported mode: {mode}")


# --------------------------------------------------------------------------
# Pallas kernel
# --------------------------------------------------------------------------
def _make_kernel(u_steps, mode):
    def kernel(pred_ref, target_ref, weight_ref, out_ref):
        def process(rows):
            load_p = lambda c: pred_ref[c, rows, :]
            load_t = lambda c: target_ref[c, rows, :]
            p_loss, r_loss = _per_box_losses(load_p, load_t, fast_math=True)
            loss = _combine(p_loss, r_loss, mode)
            out_ref[rows, :] = loss * weight_ref[rows, :]

        if u_steps == 1:
            process(slice(None))
        else:
            # fold several 1024-box groups into one grid step (amortizes the
            # fixed per-step overhead without widening any working tile)
            @pl.loop(0, u_steps)
            def _(u):
                start = pl.multiple_of(u * _SUB, _SUB)
                process(pl.ds(start, _SUB))

    return kernel


def _choose_groups_per_step(num_groups):
    """1024-box groups folded into one grid step; keep grid >= 2 whenever
    there is more than one group so both v7x TensorCores get work."""
    if num_groups <= 1:
        return 1
    return max(1, min(_MAX_GROUPS_PER_STEP, num_groups // 2))


def _pack_boxes(boxes, n_padded):
    """(N, 5) boxes -> f32 slab (6, n_padded/128, 128) of component rows."""
    # TODO(synk): cos/sin could be computed in-kernel on the EUP (5-row slab)
    # once Mosaic sin/cos lowering is confirmed for the target jaxlib.
    n = boxes.shape[0]
    x, y, w, h, ang = (boxes[:, c].astype(jnp.float32) for c in range(5))
    comp = jnp.stack([x, y, w, h, jnp.cos(ang), jnp.sin(ang)], axis=0)
    pad = n_padded - n
    if pad:
        # benign padding boxes (unit square at origin); excluded by zero weight
        pad_col = jnp.array([0.0, 0.0, 1.0, 1.0, 1.0, 0.0], jnp.float32)[:, None]
        comp = jnp.concatenate(
            [comp, jnp.broadcast_to(pad_col, (_NCOMP, pad))], axis=1)
    return comp.reshape(_NCOMP, n_padded // _LANES, _LANES)


@functools.partial(jax.jit, static_argnames=("mode", "loss_weight"))
def probiou_riou_loss(loc_p, loc_t, weight, avg_factor=1.0,
                      mode="avg", loss_weight=1.0):
    """ProbiouRiouLoss.forward (use_pv2=False).  Returns shape (1,)."""
    n = loc_p.shape[0]
    num_groups = -(-n // _BLOCK_BOXES)                       # ceil, >= 1
    u_steps = _choose_groups_per_step(num_groups)
    num_groups = -(-num_groups // u_steps) * u_steps         # multiple of u
    n_padded = num_groups * _BLOCK_BOXES
    g_rows = n_padded // _LANES
    rows_per_step = u_steps * _SUB

    pred = _pack_boxes(loc_p, n_padded)                      # (6, g_rows, 128)
    targ = _pack_boxes(loc_t, n_padded)
    wgt = jnp.pad(weight.astype(jnp.float32), (0, n_padded - n))
    wgt = wgt.reshape(g_rows, _LANES)

    partials = pl.pallas_call(
        _make_kernel(u_steps, mode),
        out_shape=jax.ShapeDtypeStruct((g_rows, _LANES), jnp.float32),
        grid_spec=pltpu.PrefetchScalarGridSpec(
            num_scalar_prefetch=0,
            grid=(g_rows // rows_per_step,),
            in_specs=[
                pl.BlockSpec((_NCOMP, rows_per_step, _LANES),
                             lambda i: (0, i, 0)),
                pl.BlockSpec((_NCOMP, rows_per_step, _LANES),
                             lambda i: (0, i, 0)),
                pl.BlockSpec((rows_per_step, _LANES), lambda i: (i, 0)),
            ],
            out_specs=pl.BlockSpec((rows_per_step, _LANES), lambda i: (i, 0)),
        ),
        compiler_params=pltpu.CompilerParams(
            dimension_semantics=("parallel",)),
    )(pred, targ, wgt)

    # lane-dense partials; final reduction + avg_factor in the JAX wrapper
    return loss_weight * jnp.sum(partials).reshape(1) / avg_factor


# --------------------------------------------------------------------------
# Pure-JAX reference (same math, no Pallas), used for validation.
# --------------------------------------------------------------------------
def _array_loader(boxes):
    boxes = boxes.astype(jnp.float32)
    comp = {
        _CX: boxes[:, 0], _CY: boxes[:, 1],
        _CW: boxes[:, 2], _CH: boxes[:, 3],
        _CCOS: jnp.cos(boxes[:, 4]), _CSIN: jnp.sin(boxes[:, 4]),
    }
    return lambda c: comp[c]


def _reference(loc_p, loc_t, weight, avg_factor=1.0, mode="avg",
               loss_weight=1.0):
    p_loss, r_loss = _per_box_losses(_array_loader(loc_p),
                                     _array_loader(loc_t), fast_math=False)
    loss = _combine(p_loss, r_loss, mode)
    total = jnp.sum(loss * weight.astype(jnp.float32))
    return loss_weight * total.reshape(1) / avg_factor


if __name__ == "__main__":
    def _make_inputs(key, n_boxes):
        k1, k2, k3, k4, k5 = jax.random.split(key, 5)
        centers = jax.random.uniform(k1, (n_boxes, 2), minval=0.0, maxval=10.0)
        sizes = jax.random.uniform(k2, (n_boxes, 2), minval=1.0, maxval=5.0)
        angles = jax.random.uniform(k3, (n_boxes, 1), minval=-1.5, maxval=1.5)
        loc_p = jnp.concatenate([centers, sizes, angles],
                                axis=1).astype(jnp.float32)
        noise = 0.3 * jax.random.normal(k4, (n_boxes, 5))
        loc_t = (loc_p + noise).astype(jnp.float32)
        loc_t = loc_t.at[:, 2:4].set(jnp.maximum(loc_t[:, 2:4], 0.5))
        weight = jax.random.uniform(k5, (n_boxes,), minval=0.0,
                                    maxval=1.0).astype(jnp.float32)
        return loc_p, loc_t, weight

    key = jax.random.PRNGKey(0)
    k_small, k_large = jax.random.split(key)

    # Small case: one 1024-box group, grid=(1,), no inner loop.
    loc_p, loc_t, weight = _make_inputs(k_small, 200)
    out = probiou_riou_loss(loc_p, loc_t, weight, avg_factor=200.0)
    out = jax.block_until_ready(out)
    ref = _reference(loc_p, loc_t, weight, avg_factor=200.0)
    assert out.shape == (1,)
    assert bool(jnp.all(jnp.isfinite(out)))
    assert bool(jnp.allclose(out, ref, rtol=5e-2, atol=1e-3)), (out, ref)

    # Larger case: exercises the multi-group inner pl.loop (u_steps=2) and a
    # multi-step grid (grid=(3,)) so both v7x TensorCores get work.
    loc_p2, loc_t2, weight2 = _make_inputs(k_large, 5000)
    out2 = probiou_riou_loss(loc_p2, loc_t2, weight2, avg_factor=5000.0)
    out2 = jax.block_until_ready(out2)
    ref2 = _reference(loc_p2, loc_t2, weight2, avg_factor=5000.0)
    assert out2.shape == (1,)
    assert bool(jnp.all(jnp.isfinite(out2)))
    assert bool(jnp.allclose(out2, ref2, rtol=5e-2, atol=1e-3)), (out2, ref2)

    print("KERNEL_OK")
</pallas_src>

<mosaic_0001>
module attributes {stable_mosaic.version = 11 : i64} {
  func.func @kernel(%arg0: i32, %arg1: memref<6x8x128xf32, #tpu.memory_space<vmem>>, %arg2: memref<6x8x128xf32, #tpu.memory_space<vmem>>, %arg3: memref<8x128xf32, #tpu.memory_space<vmem>>, %arg4: memref<8x128xf32, #tpu.memory_space<vmem>>) attributes {dimension_semantics = [#tpu.dimension_semantics<parallel>], iteration_bounds = array<i64: 1>, scalar_prefetch = 0 : i64, scratch_operands = 0 : i64, tpu.core_type = #tpu.core_type<tc>, window_params = [{transform_indices = @transform_0, window_bounds = array<i64: 6, 8, 128>}, {transform_indices = @transform_1, window_bounds = array<i64: 6, 8, 128>}, {transform_indices = @transform_2, window_bounds = array<i64: 8, 128>}, {transform_indices = @transform_3, window_bounds = array<i64: 8, 128>}]} {
    %c0 = arith.constant 0 : index
    %c0_0 = arith.constant 0 : index
    %c0_1 = arith.constant 0 : index
    %0 = vector.load %arg1[%c0, %c0_0, %c0_1] : memref<6x8x128xf32, #tpu.memory_space<vmem>>, vector<1x8x128xf32>
    %1 = vector.shape_cast %0 : vector<1x8x128xf32> to vector<8x128xf32>
    %c1 = arith.constant 1 : index
    %c0_2 = arith.constant 0 : index
    %c0_3 = arith.constant 0 : index
    %2 = vector.load %arg1[%c1, %c0_2, %c0_3] : memref<6x8x128xf32, #tpu.memory_space<vmem>>, vector<1x8x128xf32>
    %3 = vector.shape_cast %2 : vector<1x8x128xf32> to vector<8x128xf32>
    %c4 = arith.constant 4 : index
    %c0_4 = arith.constant 0 : index
    %c0_5 = arith.constant 0 : index
    %4 = vector.load %arg1[%c4, %c0_4, %c0_5] : memref<6x8x128xf32, #tpu.memory_space<vmem>>, vector<1x8x128xf32>
    %5 = vector.shape_cast %4 : vector<1x8x128xf32> to vector<8x128xf32>
    %c5 = arith.constant 5 : index
    %c0_6 = arith.constant 0 : index
    %c0_7 = arith.constant 0 : index
    %6 = vector.load %arg1[%c5, %c0_6, %c0_7] : memref<6x8x128xf32, #tpu.memory_space<vmem>>, vector<1x8x128xf32>
    %7 = vector.shape_cast %6 : vector<1x8x128xf32> to vector<8x128xf32>
    %c0_8 = arith.constant 0 : index
    %c0_9 = arith.constant 0 : index
    %c0_10 = arith.constant 0 : index
    %8 = vector.load %arg2[%c0_8, %c0_9, %c0_10] : memref<6x8x128xf32, #tpu.memory_space<vmem>>, vector<1x8x128xf32>
    %9 = vector.shape_cast %8 : vector<1x8x128xf32> to vector<8x128xf32>
    %c1_11 = arith.constant 1 : index
    %c0_12 = arith.constant 0 : index
    %c0_13 = arith.constant 0 : index
    %10 = vector.load %arg2[%c1_11, %c0_12, %c0_13] : memref<6x8x128xf32, #tpu.memory_space<vmem>>, vector<1x8x128xf32>
    %11 = vector.shape_cast %10 : vector<1x8x128xf32> to vector<8x128xf32>
    %c4_14 = arith.constant 4 : index
    %c0_15 = arith.constant 0 : index
    %c0_16 = arith.constant 0 : index
    %12 = vector.load %arg2[%c4_14, %c0_15, %c0_16] : memref<6x8x128xf32, #tpu.memory_space<vmem>>, vector<1x8x128xf32>
    %13 = vector.shape_cast %12 : vector<1x8x128xf32> to vector<8x128xf32>
    %c5_17 = arith.constant 5 : index
    %c0_18 = arith.constant 0 : index
    %c0_19 = arith.constant 0 : index
    %14 = vector.load %arg2[%c5_17, %c0_18, %c0_19] : memref<6x8x128xf32, #tpu.memory_space<vmem>>, vector<1x8x128xf32>
    %15 = vector.shape_cast %14 : vector<1x8x128xf32> to vector<8x128xf32>
    %c2 = arith.constant 2 : index
    %c0_20 = arith.constant 0 : index
    %c0_21 = arith.constant 0 : index
    %16 = vector.load %arg1[%c2, %c0_20, %c0_21] : memref<6x8x128xf32, #tpu.memory_space<vmem>>, vector<1x8x128xf32>
    %17 = vector.shape_cast %16 : vector<1x8x128xf32> to vector<8x128xf32>
    %cst = arith.constant 5.000000e-01 : f32
    %18 = vector.broadcast %cst : f32 to vector<8x128xf32>
    %19 = arith.mulf %18, %17 : vector<8x128xf32>
    %c3 = arith.constant 3 : index
    %c0_22 = arith.constant 0 : index
    %c0_23 = arith.constant 0 : index
    %20 = vector.load %arg1[%c3, %c0_22, %c0_23] : memref<6x8x128xf32, #tpu.memory_space<vmem>>, vector<1x8x128xf32>
    %21 = vector.shape_cast %20 : vector<1x8x128xf32> to vector<8x128xf32>
    %cst_24 = arith.constant 5.000000e-01 : f32
    %22 = vector.broadcast %cst_24 : f32 to vector<8x128xf32>
    %23 = arith.mulf %22, %21 : vector<8x128xf32>
    %c2_25 = arith.constant 2 : index
    %c0_26 = arith.constant 0 : index
    %c0_27 = arith.constant 0 : index
    %24 = vector.load %arg2[%c2_25, %c0_26, %c0_27] : memref<6x8x128xf32, #tpu.memory_space<vmem>>, vector<1x8x128xf32>
    %25 = vector.shape_cast %24 : vector<1x8x128xf32> to vector<8x128xf32>
    %cst_28 = arith.constant 5.000000e-01 : f32
    %26 = vector.broadcast %cst_28 : f32 to vector<8x128xf32>
    %27 = arith.mulf %26, %25 : vector<8x128xf32>
    %c3_29 = arith.constant 3 : index
    %c0_30 = arith.constant 0 : index
    %c0_31 = arith.constant 0 : index
    %28 = vector.load %arg2[%c3_29, %c0_30, %c0_31] : memref<6x8x128xf32, #tpu.memory_space<vmem>>, vector<1x8x128xf32>
    %29 = vector.shape_cast %28 : vector<1x8x128xf32> to vector<8x128xf32>
    %cst_32 = arith.constant 5.000000e-01 : f32
    %30 = vector.broadcast %cst_32 : f32 to vector<8x128xf32>
    %31 = arith.mulf %30, %29 : vector<8x128xf32>
    %cst_33 = arith.constant -1.000000e+00 : f32
    %32 = vector.broadcast %cst_33 : f32 to vector<8x128xf32>
    %33 = arith.mulf %32, %19 : vector<8x128xf32>
    %cst_34 = arith.constant -1.000000e+00 : f32
    %34 = vector.broadcast %cst_34 : f32 to vector<8x128xf32>
    %35 = arith.mulf %34, %23 : vector<8x128xf32>
    %36 = arith.mulf %33, %5 : vector<8x128xf32>
    %37 = arith.addf %1, %36 : vector<8x128xf32>
    %38 = arith.mulf %35, %7 : vector<8x128xf32>
    %39 = arith.subf %37, %38 : vector<8x128xf32>
    %40 = arith.mulf %33, %7 : vector<8x128xf32>
    %41 = arith.addf %3, %40 : vector<8x128xf32>
    %42 = arith.mulf %35, %5 : vector<8x128xf32>
    %43 = arith.addf %41, %42 : vector<8x128xf32>
    %cst_35 = arith.constant -1.000000e+00 : f32
    %44 = vector.broadcast %cst_35 : f32 to vector<8x128xf32>
    %45 = arith.mulf %44, %27 : vector<8x128xf32>
    %cst_36 = arith.constant -1.000000e+00 : f32
    %46 = vector.broadcast %cst_36 : f32 to vector<8x128xf32>
    %47 = arith.mulf %46, %31 : vector<8x128xf32>
    %48 = arith.mulf %45, %13 : vector<8x128xf32>
    %49 = arith.addf %9, %48 : vector<8x128xf32>
    %50 = arith.mulf %47, %15 : vector<8x128xf32>
    %51 = arith.subf %49, %50 : vector<8x128xf32>
    %52 = arith.mulf %45, %15 : vector<8x128xf32>
    %53 = arith.addf %11, %52 : vector<8x128xf32>
    %54 = arith.mulf %47, %13 : vector<8x128xf32>
    %55 = arith.addf %53, %54 : vector<8x128xf32>
    %cst_37 = arith.constant 1.000000e+00 : f32
    %56 = vector.broadcast %cst_37 : f32 to vector<8x128xf32>
    %57 = arith.mulf %56, %19 : vector<8x128xf32>
    %cst_38 = arith.constant -1.000000e+00 : f32
    %58 = vector.broadcast %cst_38 : f32 to vector<8x128xf32>
    %59 = arith.mulf %58, %23 : vector<8x128xf32>
    %60 = arith.mulf %57, %5 : vector<8x128xf32>
    %61 = arith.addf %1, %60 : vector<8x128xf32>
    %62 = arith.mulf %59, %7 : vector<8x128xf32>
    %63 = arith.subf %61, %62 : vector<8x128xf32>
    %64 = arith.mulf %57, %7 : vector<8x128xf32>
    %65 = arith.addf %3, %64 : vector<8x128xf32>
    %66 = arith.mulf %59, %5 : vector<8x128xf32>
    %67 = arith.addf %65, %66 : vector<8x128xf32>
    %cst_39 = arith.constant 1.000000e+00 : f32
    %68 = vector.broadcast %cst_39 : f32 to vector<8x128xf32>
    %69 = arith.mulf %68, %27 : vector<8x128xf32>
    %cst_40 = arith.constant -1.000000e+00 : f32
    %70 = vector.broadcast %cst_40 : f32 to vector<8x128xf32>
    %71 = arith.mulf %70, %31 : vector<8x128xf32>
    %72 = arith.mulf %69, %13 : vector<8x128xf32>
    %73 = arith.addf %9, %72 : vector<8x128xf32>
    %74 = arith.mulf %71, %15 : vector<8x128xf32>
    %75 = arith.subf %73, %74 : vector<8x128xf32>
    %76 = arith.mulf %69, %15 : vector<8x128xf32>
    %77 = arith.addf %11, %76 : vector<8x128xf32>
    %78 = arith.mulf %71, %13 : vector<8x128xf32>
    %79 = arith.addf %77, %78 : vector<8x128xf32>
    %cst_41 = arith.constant 1.000000e+00 : f32
    %80 = vector.broadcast %cst_41 : f32 to vector<8x128xf32>
    %81 = arith.mulf %80, %19 : vector<8x128xf32>
    %cst_42 = arith.constant 1.000000e+00 : f32
    %82 = vector.broadcast %cst_42 : f32 to vector<8x128xf32>
    %83 = arith.mulf %82, %23 : vector<8x128xf32>
    %84 = arith.mulf %81, %5 : vector<8x128xf32>
    %85 = arith.addf %1, %84 : vector<8x128xf32>
    %86 = arith.mulf %83, %7 : vector<8x128xf32>
    %87 = arith.subf %85, %86 : vector<8x128xf32>
    %88 = arith.mulf %81, %7 : vector<8x128xf32>
    %89 = arith.addf %3, %88 : vector<8x128xf32>
    %90 = arith.mulf %83, %5 : vector<8x128xf32>
    %91 = arith.addf %89, %90 : vector<8x128xf32>
    %cst_43 = arith.constant 1.000000e+00 : f32
    %92 = vector.broadcast %cst_43 : f32 to vector<8x128xf32>
    %93 = arith.mulf %92, %27 : vector<8x128xf32>
    %cst_44 = arith.constant 1.000000e+00 : f32
    %94 = vector.broadcast %cst_44 : f32 to vector<8x128xf32>
    %95 = arith.mulf %94, %31 : vector<8x128xf32>
    %96 = arith.mulf %93, %13 : vector<8x128xf32>
    %97 = arith.addf %9, %96 : vector<8x128xf32>
    %98 = arith.mulf %95, %15 : vector<8x128xf32>
    %99 = arith.subf %97, %98 : vector<8x128xf32>
    %100 = arith.mulf %93, %15 : vector<8x128xf32>
    %101 = arith.addf %11, %100 : vector<8x128xf32>
    %102 = arith.mulf %95, %13 : vector<8x128xf32>
    %103 = arith.addf %101, %102 : vector<8x128xf32>
    %cst_45 = arith.constant -1.000000e+00 : f32
    %104 = vector.broadcast %cst_45 : f32 to vector<8x128xf32>
    %105 = arith.mulf %104, %19 : vector<8x128xf32>
    %cst_46 = arith.constant 1.000000e+00 : f32
    %106 = vector.broadcast %cst_46 : f32 to vector<8x128xf32>
    %107 = arith.mulf %106, %23 : vector<8x128xf32>
    %108 = arith.mulf %105, %5 : vector<8x128xf32>
    %109 = arith.addf %1, %108 : vector<8x128xf32>
    %110 = arith.mulf %107, %7 : vector<8x128xf32>
    %111 = arith.subf %109, %110 : vector<8x128xf32>
    %112 = arith.mulf %105, %7 : vector<8x128xf32>
    %113 = arith.addf %3, %112 : vector<8x128xf32>
    %114 = arith.mulf %107, %5 : vector<8x128xf32>
    %115 = arith.addf %113, %114 : vector<8x128xf32>
    %cst_47 = arith.constant -1.000000e+00 : f32
    %116 = vector.broadcast %cst_47 : f32 to vector<8x128xf32>
    %117 = arith.mulf %116, %27 : vector<8x128xf32>
    %cst_48 = arith.constant 1.000000e+00 : f32
    %118 = vector.broadcast %cst_48 : f32 to vector<8x128xf32>
    %119 = arith.mulf %118, %31 : vector<8x128xf32>
    %120 = arith.mulf %117, %13 : vector<8x128xf32>
    %121 = arith.addf %9, %120 : vector<8x128xf32>
    %122 = arith.mulf %119, %15 : vector<8x128xf32>
    %123 = arith.subf %121, %122 : vector<8x128xf32>
    %124 = arith.mulf %117, %15 : vector<8x128xf32>
    %125 = arith.addf %11, %124 : vector<8x128xf32>
    %126 = arith.mulf %119, %13 : vector<8x128xf32>
    %127 = arith.addf %125, %126 : vector<8x128xf32>
    %128 = arith.subf %63, %39 : vector<8x128xf32>
    %129 = arith.subf %87, %63 : vector<8x128xf32>
    %130 = arith.subf %111, %87 : vector<8x128xf32>
    %131 = arith.subf %39, %111 : vector<8x128xf32>
    %132 = arith.subf %67, %43 : vector<8x128xf32>
    %133 = arith.subf %91, %67 : vector<8x128xf32>
    %134 = arith.subf %115, %91 : vector<8x128xf32>
    %135 = arith.subf %43, %115 : vector<8x128xf32>
    %136 = arith.subf %75, %51 : vector<8x128xf32>
    %137 = arith.subf %99, %75 : vector<8x128xf32>
    %138 = arith.subf %123, %99 : vector<8x128xf32>
    %139 = arith.subf %51, %123 : vector<8x128xf32>
    %140 = arith.subf %79, %55 : vector<8x128xf32>
    %141 = arith.subf %103, %79 : vector<8x128xf32>
    %142 = arith.subf %127, %103 : vector<8x128xf32>
    %143 = arith.subf %55, %127 : vector<8x128xf32>
    %144 = arith.mulf %128, %140 : vector<8x128xf32>
    %145 = arith.mulf %132, %136 : vector<8x128xf32>
    %146 = arith.subf %144, %145 : vector<8x128xf32>
    %147 = math.absf %146 : vector<8x128xf32>
    %cst_49 = arith.constant 9.99999996E-13 : f32
    %148 = vector.broadcast %cst_49 : f32 to vector<8x128xf32>
    %149 = arith.cmpf ogt, %147, %148 : vector<8x128xf32>
    %cst_50 = arith.constant 1.000000e+00 : f32
    %150 = vector.broadcast %cst_50 : f32 to vector<8x128xf32>
    %151 = arith.select %149, %146, %150 : vector<8x128xi1>, vector<8x128xf32>
    %152 = tpu.reciprocal %151 {approx = true} : vector<8x128xf32> -> vector<8x128xf32>
    %153 = arith.mulf %151, %152 : vector<8x128xf32>
    %cst_51 = arith.constant 2.000000e+00 : f32
    %154 = vector.broadcast %cst_51 : f32 to vector<8x128xf32>
    %155 = arith.subf %154, %153 : vector<8x128xf32>
    %156 = arith.mulf %152, %155 : vector<8x128xf32>
    %157 = arith.subf %51, %39 : vector<8x128xf32>
    %158 = arith.subf %55, %43 : vector<8x128xf32>
    %159 = arith.mulf %157, %140 : vector<8x128xf32>
    %160 = arith.mulf %158, %136 : vector<8x128xf32>
    %161 = arith.subf %159, %160 : vector<8x128xf32>
    %162 = arith.mulf %161, %156 : vector<8x128xf32>
    %163 = arith.mulf %157, %132 : vector<8x128xf32>
    %164 = arith.mulf %158, %128 : vector<8x128xf32>
    %165 = arith.subf %163, %164 : vector<8x128xf32>
    %166 = arith.mulf %165, %156 : vector<8x128xf32>
    %cst_52 = arith.constant 0.000000e+00 : f32
    %167 = vector.broadcast %cst_52 : f32 to vector<8x128xf32>
    %168 = arith.cmpf oge, %162, %167 : vector<8x128xf32>
    %169 = arith.andi %149, %168 : vector<8x128xi1>
    %cst_53 = arith.constant 1.000000e+00 : f32
    %170 = vector.broadcast %cst_53 : f32 to vector<8x128xf32>
    %171 = arith.cmpf ole, %162, %170 : vector<8x128xf32>
    %172 = arith.andi %169, %171 : vector<8x128xi1>
    %cst_54 = arith.constant 0.000000e+00 : f32
    %173 = vector.broadcast %cst_54 : f32 to vector<8x128xf32>
    %174 = arith.cmpf oge, %166, %173 : vector<8x128xf32>
    %175 = arith.andi %172, %174 : vector<8x128xi1>
    %cst_55 = arith.constant 1.000000e+00 : f32
    %176 = vector.broadcast %cst_55 : f32 to vector<8x128xf32>
    %177 = arith.cmpf ole, %166, %176 : vector<8x128xf32>
    %178 = arith.andi %175, %177 : vector<8x128xi1>
    %179 = arith.mulf %162, %128 : vector<8x128xf32>
    %180 = arith.addf %39, %179 : vector<8x128xf32>
    %181 = arith.mulf %162, %132 : vector<8x128xf32>
    %182 = arith.addf %43, %181 : vector<8x128xf32>
    %183 = arith.extui %178 : vector<8x128xi1> to vector<8x128xi32>
    %184 = arith.sitofp %183 : vector<8x128xi32> to vector<8x128xf32>
    %185 = arith.mulf %128, %141 : vector<8x128xf32>
    %186 = arith.mulf %132, %137 : vector<8x128xf32>
    %187 = arith.subf %185, %186 : vector<8x128xf32>
    %188 = math.absf %187 : vector<8x128xf32>
    %cst_56 = arith.constant 9.99999996E-13 : f32
    %189 = vector.broadcast %cst_56 : f32 to vector<8x128xf32>
    %190 = arith.cmpf ogt, %188, %189 : vector<8x128xf32>
    %cst_57 = arith.constant 1.000000e+00 : f32
    %191 = vector.broadcast %cst_57 : f32 to vector<8x128xf32>
    %192 = arith.select %190, %187, %191 : vector<8x128xi1>, vector<8x128xf32>
    %193 = tpu.reciprocal %192 {approx = true} : vector<8x128xf32> -> vector<8x128xf32>
    %194 = arith.mulf %192, %193 : vector<8x128xf32>
    %cst_58 = arith.constant 2.000000e+00 : f32
    %195 = vector.broadcast %cst_58 : f32 to vector<8x128xf32>
    %196 = arith.subf %195, %194 : vector<8x128xf32>
    %197 = arith.mulf %193, %196 : vector<8x128xf32>
    %198 = arith.subf %75, %39 : vector<8x128xf32>
    %199 = arith.subf %79, %43 : vector<8x128xf32>
    %200 = arith.mulf %198, %141 : vector<8x128xf32>
    %201 = arith.mulf %199, %137 : vector<8x128xf32>
    %202 = arith.subf %200, %201 : vector<8x128xf32>
    %203 = arith.mulf %202, %197 : vector<8x128xf32>
    %204 = arith.mulf %198, %132 : vector<8x128xf32>
    %205 = arith.mulf %199, %128 : vector<8x128xf32>
    %206 = arith.subf %204, %205 : vector<8x128xf32>
    %207 = arith.mulf %206, %197 : vector<8x128xf32>
    %cst_59 = arith.constant 0.000000e+00 : f32
    %208 = vector.broadcast %cst_59 : f32 to vector<8x128xf32>
    %209 = arith.cmpf oge, %203, %208 : vector<8x128xf32>
    %210 = arith.andi %190, %209 : vector<8x128xi1>
    %cst_60 = arith.constant 1.000000e+00 : f32
    %211 = vector.broadcast %cst_60 : f32 to vector<8x128xf32>
    %212 = arith.cmpf ole, %203, %211 : vector<8x128xf32>
    %213 = arith.andi %210, %212 : vector<8x128xi1>
    %cst_61 = arith.constant 0.000000e+00 : f32
    %214 = vector.broadcast %cst_61 : f32 to vector<8x128xf32>
    %215 = arith.cmpf oge, %207, %214 : vector<8x128xf32>
    %216 = arith.andi %213, %215 : vector<8x128xi1>
    %cst_62 = arith.constant 1.000000e+00 : f32
    %217 = vector.broadcast %cst_62 : f32 to vector<8x128xf32>
    %218 = arith.cmpf ole, %207, %217 : vector<8x128xf32>
    %219 = arith.andi %216, %218 : vector<8x128xi1>
    %220 = arith.mulf %203, %128 : vector<8x128xf32>
    %221 = arith.addf %39, %220 : vector<8x128xf32>
    %222 = arith.mulf %203, %132 : vector<8x128xf32>
    %223 = arith.addf %43, %222 : vector<8x128xf32>
    %224 = arith.extui %219 : vector<8x128xi1> to vector<8x128xi32>
    %225 = arith.sitofp %224 : vector<8x128xi32> to vector<8x128xf32>
    %226 = arith.mulf %128, %142 : vector<8x128xf32>
    %227 = arith.mulf %132, %138 : vector<8x128xf32>
    %228 = arith.subf %226, %227 : vector<8x128xf32>
    %229 = math.absf %228 : vector<8x128xf32>
    %cst_63 = arith.constant 9.99999996E-13 : f32
    %230 = vector.broadcast %cst_63 : f32 to vector<8x128xf32>
    %231 = arith.cmpf ogt, %229, %230 : vector<8x128xf32>
    %cst_64 = arith.constant 1.000000e+00 : f32
    %232 = vector.broadcast %cst_64 : f32 to vector<8x128xf32>
    %233 = arith.select %231, %228, %232 : vector<8x128xi1>, vector<8x128xf32>
    %234 = tpu.reciprocal %233 {approx = true} : vector<8x128xf32> -> vector<8x128xf32>
    %235 = arith.mulf %233, %234 : vector<8x128xf32>
    %cst_65 = arith.constant 2.000000e+00 : f32
    %236 = vector.broadcast %cst_65 : f32 to vector<8x128xf32>
    %237 = arith.subf %236, %235 : vector<8x128xf32>
    %238 = arith.mulf %234, %237 : vector<8x128xf32>
    %239 = arith.subf %99, %39 : vector<8x128xf32>
    %240 = arith.subf %103, %43 : vector<8x128xf32>
    %241 = arith.mulf %239, %142 : vector<8x128xf32>
    %242 = arith.mulf %240, %138 : vector<8x128xf32>
    %243 = arith.subf %241, %242 : vector<8x128xf32>
    %244 = arith.mulf %243, %238 : vector<8x128xf32>
    %245 = arith.mulf %239, %132 : vector<8x128xf32>
    %246 = arith.mulf %240, %128 : vector<8x128xf32>
    %247 = arith.subf %245, %246 : vector<8x128xf32>
    %248 = arith.mulf %247, %238 : vector<8x128xf32>
    %cst_66 = arith.constant 0.000000e+00 : f32
    %249 = vector.broadcast %cst_66 : f32 to vector<8x128xf32>
    %250 = arith.cmpf oge, %244, %249 : vector<8x128xf32>
    %251 = arith.andi %231, %250 : vector<8x128xi1>
    %cst_67 = arith.constant 1.000000e+00 : f32
    %252 = vector.broadcast %cst_67 : f32 to vector<8x128xf32>
    %253 = arith.cmpf ole, %244, %252 : vector<8x128xf32>
    %254 = arith.andi %251, %253 : vector<8x128xi1>
    %cst_68 = arith.constant 0.000000e+00 : f32
    %255 = vector.broadcast %cst_68 : f32 to vector<8x128xf32>
    %256 = arith.cmpf oge, %248, %255 : vector<8x128xf32>
    %257 = arith.andi %254, %256 : vector<8x128xi1>
    %cst_69 = arith.constant 1.000000e+00 : f32
    %258 = vector.broadcast %cst_69 : f32 to vector<8x128xf32>
    %259 = arith.cmpf ole, %248, %258 : vector<8x128xf32>
    %260 = arith.andi %257, %259 : vector<8x128xi1>
    %261 = arith.mulf %244, %128 : vector<8x128xf32>
    %262 = arith.addf %39, %261 : vector<8x128xf32>
    %263 = arith.mulf %244, %132 : vector<8x128xf32>
    %264 = arith.addf %43, %263 : vector<8x128xf32>
    %265 = arith.extui %260 : vector<8x128xi1> to vector<8x128xi32>
    %266 = arith.sitofp %265 : vector<8x128xi32> to vector<8x128xf32>
    %267 = arith.mulf %128, %143 : vector<8x128xf32>
    %268 = arith.mulf %132, %139 : vector<8x128xf32>
    %269 = arith.subf %267, %268 : vector<8x128xf32>
    %270 = math.absf %269 : vector<8x128xf32>
    %cst_70 = arith.constant 9.99999996E-13 : f32
    %271 = vector.broadcast %cst_70 : f32 to vector<8x128xf32>
    %272 = arith.cmpf ogt, %270, %271 : vector<8x128xf32>
    %cst_71 = arith.constant 1.000000e+00 : f32
    %273 = vector.broadcast %cst_71 : f32 to vector<8x128xf32>
    %274 = arith.select %272, %269, %273 : vector<8x128xi1>, vector<8x128xf32>
    %275 = tpu.reciprocal %274 {approx = true} : vector<8x128xf32> -> vector<8x128xf32>
    %276 = arith.mulf %274, %275 : vector<8x128xf32>
    %cst_72 = arith.constant 2.000000e+00 : f32
    %277 = vector.broadcast %cst_72 : f32 to vector<8x128xf32>
    %278 = arith.subf %277, %276 : vector<8x128xf32>
    %279 = arith.mulf %275, %278 : vector<8x128xf32>
    %280 = arith.subf %123, %39 : vector<8x128xf32>
    %281 = arith.subf %127, %43 : vector<8x128xf32>
    %282 = arith.mulf %280, %143 : vector<8x128xf32>
    %283 = arith.mulf %281, %139 : vector<8x128xf32>
    %284 = arith.subf %282, %283 : vector<8x128xf32>
    %285 = arith.mulf %284, %279 : vector<8x128xf32>
    %286 = arith.mulf %280, %132 : vector<8x128xf32>
    %287 = arith.mulf %281, %128 : vector<8x128xf32>
    %288 = arith.subf %286, %287 : vector<8x128xf32>
    %289 = arith.mulf %288, %279 : vector<8x128xf32>
    %cst_73 = arith.constant 0.000000e+00 : f32
    %290 = vector.broadcast %cst_73 : f32 to vector<8x128xf32>
    %291 = arith.cmpf oge, %285, %290 : vector<8x128xf32>
    %292 = arith.andi %272, %291 : vector<8x128xi1>
    %cst_74 = arith.constant 1.000000e+00 : f32
    %293 = vector.broadcast %cst_74 : f32 to vector<8x128xf32>
    %294 = arith.cmpf ole, %285, %293 : vector<8x128xf32>
    %295 = arith.andi %292, %294 : vector<8x128xi1>
    %cst_75 = arith.constant 0.000000e+00 : f32
    %296 = vector.broadcast %cst_75 : f32 to vector<8x128xf32>
    %297 = arith.cmpf oge, %289, %296 : vector<8x128xf32>
    %298 = arith.andi %295, %297 : vector<8x128xi1>
    %cst_76 = arith.constant 1.000000e+00 : f32
    %299 = vector.broadcast %cst_76 : f32 to vector<8x128xf32>
    %300 = arith.cmpf ole, %289, %299 : vector<8x128xf32>
    %301 = arith.andi %298, %300 : vector<8x128xi1>
    %302 = arith.mulf %285, %128 : vector<8x128xf32>
    %303 = arith.addf %39, %302 : vector<8x128xf32>
    %304 = arith.mulf %285, %132 : vector<8x128xf32>
    %305 = arith.addf %43, %304 : vector<8x128xf32>
    %306 = arith.extui %301 : vector<8x128xi1> to vector<8x128xi32>
    %307 = arith.sitofp %306 : vector<8x128xi32> to vector<8x128xf32>
    %308 = arith.mulf %129, %140 : vector<8x128xf32>
    %309 = arith.mulf %133, %136 : vector<8x128xf32>
    %310 = arith.subf %308, %309 : vector<8x128xf32>
    %311 = math.absf %310 : vector<8x128xf32>
    %cst_77 = arith.constant 9.99999996E-13 : f32
    %312 = vector.broadcast %cst_77 : f32 to vector<8x128xf32>
    %313 = arith.cmpf ogt, %311, %312 : vector<8x128xf32>
    %cst_78 = arith.constant 1.000000e+00 : f32
    %314 = vector.broadcast %cst_78 : f32 to vector<8x128xf32>
    %315 = arith.select %313, %310, %314 : vector<8x128xi1>, vector<8x128xf32>
    %316 = tpu.reciprocal %315 {approx = true} : vector<8x128xf32> -> vector<8x128xf32>
    %317 = arith.mulf %315, %316 : vector<8x128xf32>
    %cst_79 = arith.constant 2.000000e+00 : f32
    %318 = vector.broadcast %cst_79 : f32 to vector<8x128xf32>
    %319 = arith.subf %318, %317 : vector<8x128xf32>
    %320 = arith.mulf %316, %319 : vector<8x128xf32>
    %321 = arith.subf %51, %63 : vector<8x128xf32>
    %322 = arith.subf %55, %67 : vector<8x128xf32>
    %323 = arith.mulf %321, %140 : vector<8x128xf32>
    %324 = arith.mulf %322, %136 : vector<8x128xf32>
    %325 = arith.subf %323, %324 : vector<8x128xf32>
    %326 = arith.mulf %325, %320 : vector<8x128xf32>
    %327 = arith.mulf %321, %133 : vector<8x128xf32>
    %328 = arith.mulf %322, %129 : vector<8x128xf32>
    %329 = arith.subf %327, %328 : vector<8x128xf32>
    %330 = arith.mulf %329, %320 : vector<8x128xf32>
    %cst_80 = arith.constant 0.000000e+00 : f32
    %331 = vector.broadcast %cst_80 : f32 to vector<8x128xf32>
    %332 = arith.cmpf oge, %326, %331 : vector<8x128xf32>
    %333 = arith.andi %313, %332 : vector<8x128xi1>
    %cst_81 = arith.constant 1.000000e+00 : f32
    %334 = vector.broadcast %cst_81 : f32 to vector<8x128xf32>
    %335 = arith.cmpf ole, %326, %334 : vector<8x128xf32>
    %336 = arith.andi %333, %335 : vector<8x128xi1>
    %cst_82 = arith.constant 0.000000e+00 : f32
    %337 = vector.broadcast %cst_82 : f32 to vector<8x128xf32>
    %338 = arith.cmpf oge, %330, %337 : vector<8x128xf32>
    %339 = arith.andi %336, %338 : vector<8x128xi1>
    %cst_83 = arith.constant 1.000000e+00 : f32
    %340 = vector.broadcast %cst_83 : f32 to vector<8x128xf32>
    %341 = arith.cmpf ole, %330, %340 : vector<8x128xf32>
    %342 = arith.andi %339, %341 : vector<8x128xi1>
    %343 = arith.mulf %326, %129 : vector<8x128xf32>
    %344 = arith.addf %63, %343 : vector<8x128xf32>
    %345 = arith.mulf %326, %133 : vector<8x128xf32>
    %346 = arith.addf %67, %345 : vector<8x128xf32>
    %347 = arith.extui %342 : vector<8x128xi1> to vector<8x128xi32>
    %348 = arith.sitofp %347 : vector<8x128xi32> to vector<8x128xf32>
    %349 = arith.mulf %129, %141 : vector<8x128xf32>
    %350 = arith.mulf %133, %137 : vector<8x128xf32>
    %351 = arith.subf %349, %350 : vector<8x128xf32>
    %352 = math.absf %351 : vector<8x128xf32>
    %cst_84 = arith.constant 9.99999996E-13 : f32
    %353 = vector.broadcast %cst_84 : f32 to vector<8x128xf32>
    %354 = arith.cmpf ogt, %352, %353 : vector<8x128xf32>
    %cst_85 = arith.constant 1.000000e+00 : f32
    %355 = vector.broadcast %cst_85 : f32 to vector<8x128xf32>
    %356 = arith.select %354, %351, %355 : vector<8x128xi1>, vector<8x128xf32>
    %357 = tpu.reciprocal %356 {approx = true} : vector<8x128xf32> -> vector<8x128xf32>
    %358 = arith.mulf %356, %357 : vector<8x128xf32>
    %cst_86 = arith.constant 2.000000e+00 : f32
    %359 = vector.broadcast %cst_86 : f32 to vector<8x128xf32>
    %360 = arith.subf %359, %358 : vector<8x128xf32>
    %361 = arith.mulf %357, %360 : vector<8x128xf32>
    %362 = arith.subf %75, %63 : vector<8x128xf32>
    %363 = arith.subf %79, %67 : vector<8x128xf32>
    %364 = arith.mulf %362, %141 : vector<8x128xf32>
    %365 = arith.mulf %363, %137 : vector<8x128xf32>
    %366 = arith.subf %364, %365 : vector<8x128xf32>
    %367 = arith.mulf %366, %361 : vector<8x128xf32>
    %368 = arith.mulf %362, %133 : vector<8x128xf32>
    %369 = arith.mulf %363, %129 : vector<8x128xf32>
    %370 = arith.subf %368, %369 : vector<8x128xf32>
    %371 = arith.mulf %370, %361 : vector<8x128xf32>
    %cst_87 = arith.constant 0.000000e+00 : f32
    %372 = vector.broadcast %cst_87 : f32 to vector<8x128xf32>
    %373 = arith.cmpf oge, %367, %372 : vector<8x128xf32>
    %374 = arith.andi %354, %373 : vector<8x128xi1>
    %cst_88 = arith.constant 1.000000e+00 : f32
    %375 = vector.broadcast %cst_88 : f32 to vector<8x128xf32>
    %376 = arith.cmpf ole, %367, %375 : vector<8x128xf32>
    %377 = arith.andi %374, %376 : vector<8x128xi1>
    %cst_89 = arith.constant 0.000000e+00 : f32
    %378 = vector.broadcast %cst_89 : f32 to vector<8x128xf32>
    %379 = arith.cmpf oge, %371, %378 : vector<8x128xf32>
    %380 = arith.andi %377, %379 : vector<8x128xi1>
    %cst_90 = arith.constant 1.000000e+00 : f32
    %381 = vector.broadcast %cst_90 : f32 to vector<8x128xf32>
    %382 = arith.cmpf ole, %371, %381 : vector<8x128xf32>
    %383 = arith.andi %380, %382 : vector<8x128xi1>
    %384 = arith.mulf %367, %129 : vector<8x128xf32>
    %385 = arith.addf %63, %384 : vector<8x128xf32>
    %386 = arith.mulf %367, %133 : vector<8x128xf32>
    %387 = arith.addf %67, %386 : vector<8x128xf32>
    %388 = arith.extui %383 : vector<8x128xi1> to vector<8x128xi32>
    %389 = arith.sitofp %388 : vector<8x128xi32> to vector<8x128xf32>
    %390 = arith.mulf %129, %142 : vector<8x128xf32>
    %391 = arith.mulf %133, %138 : vector<8x128xf32>
    %392 = arith.subf %390, %391 : vector<8x128xf32>
    %393 = math.absf %392 : vector<8x128xf32>
    %cst_91 = arith.constant 9.99999996E-13 : f32
    %394 = vector.broadcast %cst_91 : f32 to vector<8x128xf32>
    %395 = arith.cmpf ogt, %393, %394 : vector<8x128xf32>
    %cst_92 = arith.constant 1.000000e+00 : f32
    %396 = vector.broadcast %cst_92 : f32 to vector<8x128xf32>
    %397 = arith.select %395, %392, %396 : vector<8x128xi1>, vector<8x128xf32>
    %398 = tpu.reciprocal %397 {approx = true} : vector<8x128xf32> -> vector<8x128xf32>
    %399 = arith.mulf %397, %398 : vector<8x128xf32>
    %cst_93 = arith.constant 2.000000e+00 : f32
    %400 = vector.broadcast %cst_93 : f32 to vector<8x128xf32>
    %401 = arith.subf %400, %399 : vector<8x128xf32>
    %402 = arith.mulf %398, %401 : vector<8x128xf32>
    %403 = arith.subf %99, %63 : vector<8x128xf32>
    %404 = arith.subf %103, %67 : vector<8x128xf32>
    %405 = arith.mulf %403, %142 : vector<8x128xf32>
    %406 = arith.mulf %404, %138 : vector<8x128xf32>
    %407 = arith.subf %405, %406 : vector<8x128xf32>
    %408 = arith.mulf %407, %402 : vector<8x128xf32>
    %409 = arith.mulf %403, %133 : vector<8x128xf32>
    %410 = arith.mulf %404, %129 : vector<8x128xf32>
    %411 = arith.subf %409, %410 : vector<8x128xf32>
    %412 = arith.mulf %411, %402 : vector<8x128xf32>
    %cst_94 = arith.constant 0.000000e+00 : f32
    %413 = vector.broadcast %cst_94 : f32 to vector<8x128xf32>
    %414 = arith.cmpf oge, %408, %413 : vector<8x128xf32>
    %415 = arith.andi %395, %414 : vector<8x128xi1>
    %cst_95 = arith.constant 1.000000e+00 : f32
    %416 = vector.broadcast %cst_95 : f32 to vector<8x128xf32>
    %417 = arith.cmpf ole, %408, %416 : vector<8x128xf32>
    %418 = arith.andi %415, %417 : vector<8x128xi1>
    %cst_96 = arith.constant 0.000000e+00 : f32
    %419 = vector.broadcast %cst_96 : f32 to vector<8x128xf32>
    %420 = arith.cmpf oge, %412, %419 : vector<8x128xf32>
    %421 = arith.andi %418, %420 : vector<8x128xi1>
    %cst_97 = arith.constant 1.000000e+00 : f32
    %422 = vector.broadcast %cst_97 : f32 to vector<8x128xf32>
    %423 = arith.cmpf ole, %412, %422 : vector<8x128xf32>
    %424 = arith.andi %421, %423 : vector<8x128xi1>
    %425 = arith.mulf %408, %129 : vector<8x128xf32>
    %426 = arith.addf %63, %425 : vector<8x128xf32>
    %427 = arith.mulf %408, %133 : vector<8x128xf32>
    %428 = arith.addf %67, %427 : vector<8x128xf32>
    %429 = arith.extui %424 : vector<8x128xi1> to vector<8x128xi32>
    %430 = arith.sitofp %429 : vector<8x128xi32> to vector<8x128xf32>
    %431 = arith.mulf %129, %143 : vector<8x128xf32>
    %432 = arith.mulf %133, %139 : vector<8x128xf32>
    %433 = arith.subf %431, %432 : vector<8x128xf32>
    %434 = math.absf %433 : vector<8x128xf32>
    %cst_98 = arith.constant 9.99999996E-13 : f32
    %435 = vector.broadcast %cst_98 : f32 to vector<8x128xf32>
    %436 = arith.cmpf ogt, %434, %435 : vector<8x128xf32>
    %cst_99 = arith.constant 1.000000e+00 : f32
    %437 = vector.broadcast %cst_99 : f32 to vector<8x128xf32>
    %438 = arith.select %436, %433, %437 : vector<8x128xi1>, vector<8x128xf32>
    %439 = tpu.reciprocal %438 {approx = true} : vector<8x128xf32> -> vector<8x128xf32>
    %440 = arith.mulf %438, %439 : vector<8x128xf32>
    %cst_100 = arith.constant 2.000000e+00 : f32
    %441 = vector.broadcast %cst_100 : f32 to vector<8x128xf32>
    %442 = arith.subf %441, %440 : vector<8x128xf32>
    %443 = arith.mulf %439, %442 : vector<8x128xf32>
    %444 = arith.subf %123, %63 : vector<8x128xf32>
    %445 = arith.subf %127, %67 : vector<8x128xf32>
    %446 = arith.mulf %444, %143 : vector<8x128xf32>
    %447 = arith.mulf %445, %139 : vector<8x128xf32>
    %448 = arith.subf %446, %447 : vector<8x128xf32>
    %449 = arith.mulf %448, %443 : vector<8x128xf32>
    %450 = arith.mulf %444, %133 : vector<8x128xf32>
    %451 = arith.mulf %445, %129 : vector<8x128xf32>
    %452 = arith.subf %450, %451 : vector<8x128xf32>
    %453 = arith.mulf %452, %443 : vector<8x128xf32>
    %cst_101 = arith.constant 0.000000e+00 : f32
    %454 = vector.broadcast %cst_101 : f32 to vector<8x128xf32>
    %455 = arith.cmpf oge, %449, %454 : vector<8x128xf32>
    %456 = arith.andi %436, %455 : vector<8x128xi1>
    %cst_102 = arith.constant 1.000000e+00 : f32
    %457 = vector.broadcast %cst_102 : f32 to vector<8x128xf32>
    %458 = arith.cmpf ole, %449, %457 : vector<8x128xf32>
    %459 = arith.andi %456, %458 : vector<8x128xi1>
    %cst_103 = arith.constant 0.000000e+00 : f32
    %460 = vector.broadcast %cst_103 : f32 to vector<8x128xf32>
    %461 = arith.cmpf oge, %453, %460 : vector<8x128xf32>
    %462 = arith.andi %459, %461 : vector<8x128xi1>
    %cst_104 = arith.constant 1.000000e+00 : f32
    %463 = vector.broadcast %cst_104 : f32 to vector<8x128xf32>
    %464 = arith.cmpf ole, %453, %463 : vector<8x128xf32>
    %465 = arith.andi %462, %464 : vector<8x128xi1>
    %466 = arith.mulf %449, %129 : vector<8x128xf32>
    %467 = arith.addf %63, %466 : vector<8x128xf32>
    %468 = arith.mulf %449, %133 : vector<8x128xf32>
    %469 = arith.addf %67, %468 : vector<8x128xf32>
    %470 = arith.extui %465 : vector<8x128xi1> to vector<8x128xi32>
    %471 = arith.sitofp %470 : vector<8x128xi32> to vector<8x128xf32>
    %472 = arith.mulf %130, %140 : vector<8x128xf32>
    %473 = arith.mulf %134, %136 : vector<8x128xf32>
    %474 = arith.subf %472, %473 : vector<8x128xf32>
    %475 = math.absf %474 : vector<8x128xf32>
    %cst_105 = arith.constant 9.99999996E-13 : f32
    %476 = vector.broadcast %cst_105 : f32 to vector<8x128xf32>
    %477 = arith.cmpf ogt, %475, %476 : vector<8x128xf32>
    %cst_106 = arith.constant 1.000000e+00 : f32
    %478 = vector.broadcast %cst_106 : f32 to vector<8x128xf32>
    %479 = arith.select %477, %474, %478 : vector<8x128xi1>, vector<8x128xf32>
    %480 = tpu.reciprocal %479 {approx = true} : vector<8x128xf32> -> vector<8x128xf32>
    %481 = arith.mulf %479, %480 : vector<8x128xf32>
    %cst_107 = arith.constant 2.000000e+00 : f32
    %482 = vector.broadcast %cst_107 : f32 to vector<8x128xf32>
    %483 = arith.subf %482, %481 : vector<8x128xf32>
    %484 = arith.mulf %480, %483 : vector<8x128xf32>
    %485 = arith.subf %51, %87 : vector<8x128xf32>
    %486 = arith.subf %55, %91 : vector<8x128xf32>
    %487 = arith.mulf %485, %140 : vector<8x128xf32>
    %488 = arith.mulf %486, %136 : vector<8x128xf32>
    %489 = arith.subf %487, %488 : vector<8x128xf32>
    %490 = arith.mulf %489, %484 : vector<8x128xf32>
    %491 = arith.mulf %485, %134 : vector<8x128xf32>
    %492 = arith.mulf %486, %130 : vector<8x128xf32>
    %493 = arith.subf %491, %492 : vector<8x128xf32>
    %494 = arith.mulf %493, %484 : vector<8x128xf32>
    %cst_108 = arith.constant 0.000000e+00 : f32
    %495 = vector.broadcast %cst_108 : f32 to vector<8x128xf32>
    %496 = arith.cmpf oge, %490, %495 : vector<8x128xf32>
    %497 = arith.andi %477, %496 : vector<8x128xi1>
    %cst_109 = arith.constant 1.000000e+00 : f32
    %498 = vector.broadcast %cst_109 : f32 to vector<8x128xf32>
    %499 = arith.cmpf ole, %490, %498 : vector<8x128xf32>
    %500 = arith.andi %497, %499 : vector<8x128xi1>
    %cst_110 = arith.constant 0.000000e+00 : f32
    %501 = vector.broadcast %cst_110 : f32 to vector<8x128xf32>
    %502 = arith.cmpf oge, %494, %501 : vector<8x128xf32>
    %503 = arith.andi %500, %502 : vector<8x128xi1>
    %cst_111 = arith.constant 1.000000e+00 : f32
    %504 = vector.broadcast %cst_111 : f32 to vector<8x128xf32>
    %505 = arith.cmpf ole, %494, %504 : vector<8x128xf32>
    %506 = arith.andi %503, %505 : vector<8x128xi1>
    %507 = arith.mulf %490, %130 : vector<8x128xf32>
    %508 = arith.addf %87, %507 : vector<8x128xf32>
    %509 = arith.mulf %490, %134 : vector<8x128xf32>
    %510 = arith.addf %91, %509 : vector<8x128xf32>
    %511 = arith.extui %506 : vector<8x128xi1> to vector<8x128xi32>
    %512 = arith.sitofp %511 : vector<8x128xi32> to vector<8x128xf32>
    %513 = arith.mulf %130, %141 : vector<8x128xf32>
    %514 = arith.mulf %134, %137 : vector<8x128xf32>
    %515 = arith.subf %513, %514 : vector<8x128xf32>
    %516 = math.absf %515 : vector<8x128xf32>
    %cst_112 = arith.constant 9.99999996E-13 : f32
    %517 = vector.broadcast %cst_112 : f32 to vector<8x128xf32>
    %518 = arith.cmpf ogt, %516, %517 : vector<8x128xf32>
    %cst_113 = arith.constant 1.000000e+00 : f32
    %519 = vector.broadcast %cst_113 : f32 to vector<8x128xf32>
    %520 = arith.select %518, %515, %519 : vector<8x128xi1>, vector<8x128xf32>
    %521 = tpu.reciprocal %520 {approx = true} : vector<8x128xf32> -> vector<8x128xf32>
    %522 = arith.mulf %520, %521 : vector<8x128xf32>
    %cst_114 = arith.constant 2.000000e+00 : f32
    %523 = vector.broadcast %cst_114 : f32 to vector<8x128xf32>
    %524 = arith.subf %523, %522 : vector<8x128xf32>
    %525 = arith.mulf %521, %524 : vector<8x128xf32>
    %526 = arith.subf %75, %87 : vector<8x128xf32>
    %527 = arith.subf %79, %91 : vector<8x128xf32>
    %528 = arith.mulf %526, %141 : vector<8x128xf32>
    %529 = arith.mulf %527, %137 : vector<8x128xf32>
    %530 = arith.subf %528, %529 : vector<8x128xf32>
    %531 = arith.mulf %530, %525 : vector<8x128xf32>
    %532 = arith.mulf %526, %134 : vector<8x128xf32>
    %533 = arith.mulf %527, %130 : vector<8x128xf32>
    %534 = arith.subf %532, %533 : vector<8x128xf32>
    %535 = arith.mulf %534, %525 : vector<8x128xf32>
    %cst_115 = arith.constant 0.000000e+00 : f32
    %536 = vector.broadcast %cst_115 : f32 to vector<8x128xf32>
    %537 = arith.cmpf oge, %531, %536 : vector<8x128xf32>
    %538 = arith.andi %518, %537 : vector<8x128xi1>
    %cst_116 = arith.constant 1.000000e+00 : f32
    %539 = vector.broadcast %cst_116 : f32 to vector<8x128xf32>
    %540 = arith.cmpf ole, %531, %539 : vector<8x128xf32>
    %541 = arith.andi %538, %540 : vector<8x128xi1>
    %cst_117 = arith.constant 0.000000e+00 : f32
    %542 = vector.broadcast %cst_117 : f32 to vector<8x128xf32>
    %543 = arith.cmpf oge, %535, %542 : vector<8x128xf32>
    %544 = arith.andi %541, %543 : vector<8x128xi1>
    %cst_118 = arith.constant 1.000000e+00 : f32
    %545 = vector.broadcast %cst_118 : f32 to vector<8x128xf32>
    %546 = arith.cmpf ole, %535, %545 : vector<8x128xf32>
    %547 = arith.andi %544, %546 : vector<8x128xi1>
    %548 = arith.mulf %531, %130 : vector<8x128xf32>
    %549 = arith.addf %87, %548 : vector<8x128xf32>
    %550 = arith.mulf %531, %134 : vector<8x128xf32>
    %551 = arith.addf %91, %550 : vector<8x128xf32>
    %552 = arith.extui %547 : vector<8x128xi1> to vector<8x128xi32>
    %553 = arith.sitofp %552 : vector<8x128xi32> to vector<8x128xf32>
    %554 = arith.mulf %130, %142 : vector<8x128xf32>
    %555 = arith.mulf %134, %138 : vector<8x128xf32>
    %556 = arith.subf %554, %555 : vector<8x128xf32>
    %557 = math.absf %556 : vector<8x128xf32>
    %cst_119 = arith.constant 9.99999996E-13 : f32
    %558 = vector.broadcast %cst_119 : f32 to vector<8x128xf32>
    %559 = arith.cmpf ogt, %557, %558 : vector<8x128xf32>
    %cst_120 = arith.constant 1.000000e+00 : f32
    %560 = vector.broadcast %cst_120 : f32 to vector<8x128xf32>
    %561 = arith.select %559, %556, %560 : vector<8x128xi1>, vector<8x128xf32>
    %562 = tpu.reciprocal %561 {approx = true} : vector<8x128xf32> -> vector<8x128xf32>
    %563 = arith.mulf %561, %562 : vector<8x128xf32>
    %cst_121 = arith.constant 2.000000e+00 : f32
    %564 = vector.broadcast %cst_121 : f32 to vector<8x128xf32>
    %565 = arith.subf %564, %563 : vector<8x128xf32>
    %566 = arith.mulf %562, %565 : vector<8x128xf32>
    %567 = arith.subf %99, %87 : vector<8x128xf32>
    %568 = arith.subf %103, %91 : vector<8x128xf32>
    %569 = arith.mulf %567, %142 : vector<8x128xf32>
    %570 = arith.mulf %568, %138 : vector<8x128xf32>
    %571 = arith.subf %569, %570 : vector<8x128xf32>
    %572 = arith.mulf %571, %566 : vector<8x128xf32>
    %573 = arith.mulf %567, %134 : vector<8x128xf32>
    %574 = arith.mulf %568, %130 : vector<8x128xf32>
    %575 = arith.subf %573, %574 : vector<8x128xf32>
    %576 = arith.mulf %575, %566 : vector<8x128xf32>
    %cst_122 = arith.constant 0.000000e+00 : f32
    %577 = vector.broadcast %cst_122 : f32 to vector<8x128xf32>
    %578 = arith.cmpf oge, %572, %577 : vector<8x128xf32>
    %579 = arith.andi %559, %578 : vector<8x128xi1>
    %cst_123 = arith.constant 1.000000e+00 : f32
    %580 = vector.broadcast %cst_123 : f32 to vector<8x128xf32>
    %581 = arith.cmpf ole, %572, %580 : vector<8x128xf32>
    %582 = arith.andi %579, %581 : vector<8x128xi1>
    %cst_124 = arith.constant 0.000000e+00 : f32
    %583 = vector.broadcast %cst_124 : f32 to vector<8x128xf32>
    %584 = arith.cmpf oge, %576, %583 : vector<8x128xf32>
    %585 = arith.andi %582, %584 : vector<8x128xi1>
    %cst_125 = arith.constant 1.000000e+00 : f32
    %586 = vector.broadcast %cst_125 : f32 to vector<8x128xf32>
    %587 = arith.cmpf ole, %576, %586 : vector<8x128xf32>
    %588 = arith.andi %585, %587 : vector<8x128xi1>
    %589 = arith.mulf %572, %130 : vector<8x128xf32>
    %590 = arith.addf %87, %589 : vector<8x128xf32>
    %591 = arith.mulf %572, %134 : vector<8x128xf32>
    %592 = arith.addf %91, %591 : vector<8x128xf32>
    %593 = arith.extui %588 : vector<8x128xi1> to vector<8x128xi32>
    %594 = arith.sitofp %593 : vector<8x128xi32> to vector<8x128xf32>
    %595 = arith.mulf %130, %143 : vector<8x128xf32>
    %596 = arith.mulf %134, %139 : vector<8x128xf32>
    %597 = arith.subf %595, %596 : vector<8x128xf32>
    %598 = math.absf %597 : vector<8x128xf32>
    %cst_126 = arith.constant 9.99999996E-13 : f32
    %599 = vector.broadcast %cst_126 : f32 to vector<8x128xf32>
    %600 = arith.cmpf ogt, %598, %599 : vector<8x128xf32>
    %cst_127 = arith.constant 1.000000e+00 : f32
    %601 = vector.broadcast %cst_127 : f32 to vector<8x128xf32>
    %602 = arith.select %600, %597, %601 : vector<8x128xi1>, vector<8x128xf32>
    %603 = tpu.reciprocal %602 {approx = true} : vector<8x128xf32> -> vector<8x128xf32>
    %604 = arith.mulf %602, %603 : vector<8x128xf32>
    %cst_128 = arith.constant 2.000000e+00 : f32
    %605 = vector.broadcast %cst_128 : f32 to vector<8x128xf32>
    %606 = arith.subf %605, %604 : vector<8x128xf32>
    %607 = arith.mulf %603, %606 : vector<8x128xf32>
    %608 = arith.subf %123, %87 : vector<8x128xf32>
    %609 = arith.subf %127, %91 : vector<8x128xf32>
    %610 = arith.mulf %608, %143 : vector<8x128xf32>
    %611 = arith.mulf %609, %139 : vector<8x128xf32>
    %612 = arith.subf %610, %611 : vector<8x128xf32>
    %613 = arith.mulf %612, %607 : vector<8x128xf32>
    %614 = arith.mulf %608, %134 : vector<8x128xf32>
    %615 = arith.mulf %609, %130 : vector<8x128xf32>
    %616 = arith.subf %614, %615 : vector<8x128xf32>
    %617 = arith.mulf %616, %607 : vector<8x128xf32>
    %cst_129 = arith.constant 0.000000e+00 : f32
    %618 = vector.broadcast %cst_129 : f32 to vector<8x128xf32>
    %619 = arith.cmpf oge, %613, %618 : vector<8x128xf32>
    %620 = arith.andi %600, %619 : vector<8x128xi1>
    %cst_130 = arith.constant 1.000000e+00 : f32
    %621 = vector.broadcast %cst_130 : f32 to vector<8x128xf32>
    %622 = arith.cmpf ole, %613, %621 : vector<8x128xf32>
    %623 = arith.andi %620, %622 : vector<8x128xi1>
    %cst_131 = arith.constant 0.000000e+00 : f32
    %624 = vector.broadcast %cst_131 : f32 to vector<8x128xf32>
    %625 = arith.cmpf oge, %617, %624 : vector<8x128xf32>
    %626 = arith.andi %623, %625 : vector<8x128xi1>
    %cst_132 = arith.constant 1.000000e+00 : f32
    %627 = vector.broadcast %cst_132 : f32 to vector<8x128xf32>
    %628 = arith.cmpf ole, %617, %627 : vector<8x128xf32>
    %629 = arith.andi %626, %628 : vector<8x128xi1>
    %630 = arith.mulf %613, %130 : vector<8x128xf32>
    %631 = arith.addf %87, %630 : vector<8x128xf32>
    %632 = arith.mulf %613, %134 : vector<8x128xf32>
    %633 = arith.addf %91, %632 : vector<8x128xf32>
    %634 = arith.extui %629 : vector<8x128xi1> to vector<8x128xi32>
    %635 = arith.sitofp %634 : vector<8x128xi32> to vector<8x128xf32>
    %636 = arith.mulf %131, %140 : vector<8x128xf32>
    %637 = arith.mulf %135, %136 : vector<8x128xf32>
    %638 = arith.subf %636, %637 : vector<8x128xf32>
    %639 = math.absf %638 : vector<8x128xf32>
    %cst_133 = arith.constant 9.99999996E-13 : f32
    %640 = vector.broadcast %cst_133 : f32 to vector<8x128xf32>
    %641 = arith.cmpf ogt, %639, %640 : vector<8x128xf32>
    %cst_134 = arith.constant 1.000000e+00 : f32
    %642 = vector.broadcast %cst_134 : f32 to vector<8x128xf32>
    %643 = arith.select %641, %638, %642 : vector<8x128xi1>, vector<8x128xf32>
    %644 = tpu.reciprocal %643 {approx = true} : vector<8x128xf32> -> vector<8x128xf32>
    %645 = arith.mulf %643, %644 : vector<8x128xf32>
    %cst_135 = arith.constant 2.000000e+00 : f32
    %646 = vector.broadcast %cst_135 : f32 to vector<8x128xf32>
    %647 = arith.subf %646, %645 : vector<8x128xf32>
    %648 = arith.mulf %644, %647 : vector<8x128xf32>
    %649 = arith.subf %51, %111 : vector<8x128xf32>
    %650 = arith.subf %55, %115 : vector<8x128xf32>
    %651 = arith.mulf %649, %140 : vector<8x128xf32>
    %652 = arith.mulf %650, %136 : vector<8x128xf32>
    %653 = arith.subf %651, %652 : vector<8x128xf32>
    %654 = arith.mulf %653, %648 : vector<8x128xf32>
    %655 = arith.mulf %649, %135 : vector<8x128xf32>
    %656 = arith.mulf %650, %131 : vector<8x128xf32>
    %657 = arith.subf %655, %656 : vector<8x128xf32>
    %658 = arith.mulf %657, %648 : vector<8x128xf32>
    %cst_136 = arith.constant 0.000000e+00 : f32
    %659 = vector.broadcast %cst_136 : f32 to vector<8x128xf32>
    %660 = arith.cmpf oge, %654, %659 : vector<8x128xf32>
    %661 = arith.andi %641, %660 : vector<8x128xi1>
    %cst_137 = arith.constant 1.000000e+00 : f32
    %662 = vector.broadcast %cst_137 : f32 to vector<8x128xf32>
    %663 = arith.cmpf ole, %654, %662 : vector<8x128xf32>
    %664 = arith.andi %661, %663 : vector<8x128xi1>
    %cst_138 = arith.constant 0.000000e+00 : f32
    %665 = vector.broadcast %cst_138 : f32 to vector<8x128xf32>
    %666 = arith.cmpf oge, %658, %665 : vector<8x128xf32>
    %667 = arith.andi %664, %666 : vector<8x128xi1>
    %cst_139 = arith.constant 1.000000e+00 : f32
    %668 = vector.broadcast %cst_139 : f32 to vector<8x128xf32>
    %669 = arith.cmpf ole, %658, %668 : vector<8x128xf32>
    %670 = arith.andi %667, %669 : vector<8x128xi1>
    %671 = arith.mulf %654, %131 : vector<8x128xf32>
    %672 = arith.addf %111, %671 : vector<8x128xf32>
    %673 = arith.mulf %654, %135 : vector<8x128xf32>
    %674 = arith.addf %115, %673 : vector<8x128xf32>
    %675 = arith.extui %670 : vector<8x128xi1> to vector<8x128xi32>
    %676 = arith.sitofp %675 : vector<8x128xi32> to vector<8x128xf32>
    %677 = arith.mulf %131, %141 : vector<8x128xf32>
    %678 = arith.mulf %135, %137 : vector<8x128xf32>
    %679 = arith.subf %677, %678 : vector<8x128xf32>
    %680 = math.absf %679 : vector<8x128xf32>
    %cst_140 = arith.constant 9.99999996E-13 : f32
    %681 = vector.broadcast %cst_140 : f32 to vector<8x128xf32>
    %682 = arith.cmpf ogt, %680, %681 : vector<8x128xf32>
    %cst_141 = arith.constant 1.000000e+00 : f32
    %683 = vector.broadcast %cst_141 : f32 to vector<8x128xf32>
    %684 = arith.select %682, %679, %683 : vector<8x128xi1>, vector<8x128xf32>
    %685 = tpu.reciprocal %684 {approx = true} : vector<8x128xf32> -> vector<8x128xf32>
    %686 = arith.mulf %684, %685 : vector<8x128xf32>
    %cst_142 = arith.constant 2.000000e+00 : f32
    %687 = vector.broadcast %cst_142 : f32 to vector<8x128xf32>
    %688 = arith.subf %687, %686 : vector<8x128xf32>
    %689 = arith.mulf %685, %688 : vector<8x128xf32>
    %690 = arith.subf %75, %111 : vector<8x128xf32>
    %691 = arith.subf %79, %115 : vector<8x128xf32>
    %692 = arith.mulf %690, %141 : vector<8x128xf32>
    %693 = arith.mulf %691, %137 : vector<8x128xf32>
    %694 = arith.subf %692, %693 : vector<8x128xf32>
    %695 = arith.mulf %694, %689 : vector<8x128xf32>
    %696 = arith.mulf %690, %135 : vector<8x128xf32>
    %697 = arith.mulf %691, %131 : vector<8x128xf32>
    %698 = arith.subf %696, %697 : vector<8x128xf32>
    %699 = arith.mulf %698, %689 : vector<8x128xf32>
    %cst_143 = arith.constant 0.000000e+00 : f32
    %700 = vector.broadcast %cst_143 : f32 to vector<8x128xf32>
    %701 = arith.cmpf oge, %695, %700 : vector<8x128xf32>
    %702 = arith.andi %682, %701 : vector<8x128xi1>
    %cst_144 = arith.constant 1.000000e+00 : f32
    %703 = vector.broadcast %cst_144 : f32 to vector<8x128xf32>
    %704 = arith.cmpf ole, %695, %703 : vector<8x128xf32>
    %705 = arith.andi %702, %704 : vector<8x128xi1>
    %cst_145 = arith.constant 0.000000e+00 : f32
    %706 = vector.broadcast %cst_145 : f32 to vector<8x128xf32>
    %707 = arith.cmpf oge, %699, %706 : vector<8x128xf32>
    %708 = arith.andi %705, %707 : vector<8x128xi1>
    %cst_146 = arith.constant 1.000000e+00 : f32
    %709 = vector.broadcast %cst_146 : f32 to vector<8x128xf32>
    %710 = arith.cmpf ole, %699, %709 : vector<8x128xf32>
    %711 = arith.andi %708, %710 : vector<8x128xi1>
    %712 = arith.mulf %695, %131 : vector<8x128xf32>
    %713 = arith.addf %111, %712 : vector<8x128xf32>
    %714 = arith.mulf %695, %135 : vector<8x128xf32>
    %715 = arith.addf %115, %714 : vector<8x128xf32>
    %716 = arith.extui %711 : vector<8x128xi1> to vector<8x128xi32>
    %717 = arith.sitofp %716 : vector<8x128xi32> to vector<8x128xf32>
    %718 = arith.mulf %131, %142 : vector<8x128xf32>
    %719 = arith.mulf %135, %138 : vector<8x128xf32>
    %720 = arith.subf %718, %719 : vector<8x128xf32>
    %721 = math.absf %720 : vector<8x128xf32>
    %cst_147 = arith.constant 9.99999996E-13 : f32
    %722 = vector.broadcast %cst_147 : f32 to vector<8x128xf32>
    %723 = arith.cmpf ogt, %721, %722 : vector<8x128xf32>
    %cst_148 = arith.constant 1.000000e+00 : f32
    %724 = vector.broadcast %cst_148 : f32 to vector<8x128xf32>
    %725 = arith.select %723, %720, %724 : vector<8x128xi1>, vector<8x128xf32>
    %726 = tpu.reciprocal %725 {approx = true} : vector<8x128xf32> -> vector<8x128xf32>
    %727 = arith.mulf %725, %726 : vector<8x128xf32>
    %cst_149 = arith.constant 2.000000e+00 : f32
    %728 = vector.broadcast %cst_149 : f32 to vector<8x128xf32>
    %729 = arith.subf %728, %727 : vector<8x128xf32>
    %730 = arith.mulf %726, %729 : vector<8x128xf32>
    %731 = arith.subf %99, %111 : vector<8x128xf32>
    %732 = arith.subf %103, %115 : vector<8x128xf32>
    %733 = arith.mulf %731, %142 : vector<8x128xf32>
    %734 = arith.mulf %732, %138 : vector<8x128xf32>
    %735 = arith.subf %733, %734 : vector<8x128xf32>
    %736 = arith.mulf %735, %730 : vector<8x128xf32>
    %737 = arith.mulf %731, %135 : vector<8x128xf32>
    %738 = arith.mulf %732, %131 : vector<8x128xf32>
    %739 = arith.subf %737, %738 : vector<8x128xf32>
    %740 = arith.mulf %739, %730 : vector<8x128xf32>
    %cst_150 = arith.constant 0.000000e+00 : f32
    %741 = vector.broadcast %cst_150 : f32 to vector<8x128xf32>
    %742 = arith.cmpf oge, %736, %741 : vector<8x128xf32>
    %743 = arith.andi %723, %742 : vector<8x128xi1>
    %cst_151 = arith.constant 1.000000e+00 : f32
    %744 = vector.broadcast %cst_151 : f32 to vector<8x128xf32>
    %745 = arith.cmpf ole, %736, %744 : vector<8x128xf32>
    %746 = arith.andi %743, %745 : vector<8x128xi1>
    %cst_152 = arith.constant 0.000000e+00 : f32
    %747 = vector.broadcast %cst_152 : f32 to vector<8x128xf32>
    %748 = arith.cmpf oge, %740, %747 : vector<8x128xf32>
    %749 = arith.andi %746, %748 : vector<8x128xi1>
    %cst_153 = arith.constant 1.000000e+00 : f32
    %750 = vector.broadcast %cst_153 : f32 to vector<8x128xf32>
    %751 = arith.cmpf ole, %740, %750 : vector<8x128xf32>
    %752 = arith.andi %749, %751 : vector<8x128xi1>
    %753 = arith.mulf %736, %131 : vector<8x128xf32>
    %754 = arith.addf %111, %753 : vector<8x128xf32>
    %755 = arith.mulf %736, %135 : vector<8x128xf32>
    %756 = arith.addf %115, %755 : vector<8x128xf32>
    %757 = arith.extui %752 : vector<8x128xi1> to vector<8x128xi32>
    %758 = arith.sitofp %757 : vector<8x128xi32> to vector<8x128xf32>
    %759 = arith.mulf %131, %143 : vector<8x128xf32>
    %760 = arith.mulf %135, %139 : vector<8x128xf32>
    %761 = arith.subf %759, %760 : vector<8x128xf32>
    %762 = math.absf %761 : vector<8x128xf32>
    %cst_154 = arith.constant 9.99999996E-13 : f32
    %763 = vector.broadcast %cst_154 : f32 to vector<8x128xf32>
    %764 = arith.cmpf ogt, %762, %763 : vector<8x128xf32>
    %cst_155 = arith.constant 1.000000e+00 : f32
    %765 = vector.broadcast %cst_155 : f32 to vector<8x128xf32>
    %766 = arith.select %764, %761, %765 : vector<8x128xi1>, vector<8x128xf32>
    %767 = tpu.reciprocal %766 {approx = true} : vector<8x128xf32> -> vector<8x128xf32>
    %768 = arith.mulf %766, %767 : vector<8x128xf32>
    %cst_156 = arith.constant 2.000000e+00 : f32
    %769 = vector.broadcast %cst_156 : f32 to vector<8x128xf32>
    %770 = arith.subf %769, %768 : vector<8x128xf32>
    %771 = arith.mulf %767, %770 : vector<8x128xf32>
    %772 = arith.subf %123, %111 : vector<8x128xf32>
    %773 = arith.subf %127, %115 : vector<8x128xf32>
    %774 = arith.mulf %772, %143 : vector<8x128xf32>
    %775 = arith.mulf %773, %139 : vector<8x128xf32>
    %776 = arith.subf %774, %775 : vector<8x128xf32>
    %777 = arith.mulf %776, %771 : vector<8x128xf32>
    %778 = arith.mulf %772, %135 : vector<8x128xf32>
    %779 = arith.mulf %773, %131 : vector<8x128xf32>
    %780 = arith.subf %778, %779 : vector<8x128xf32>
    %781 = arith.mulf %780, %771 : vector<8x128xf32>
    %cst_157 = arith.constant 0.000000e+00 : f32
    %782 = vector.broadcast %cst_157 : f32 to vector<8x128xf32>
    %783 = arith.cmpf oge, %777, %782 : vector<8x128xf32>
    %784 = arith.andi %764, %783 : vector<8x128xi1>
    %cst_158 = arith.constant 1.000000e+00 : f32
    %785 = vector.broadcast %cst_158 : f32 to vector<8x128xf32>
    %786 = arith.cmpf ole, %777, %785 : vector<8x128xf32>
    %787 = arith.andi %784, %786 : vector<8x128xi1>
    %cst_159 = arith.constant 0.000000e+00 : f32
    %788 = vector.broadcast %cst_159 : f32 to vector<8x128xf32>
    %789 = arith.cmpf oge, %781, %788 : vector<8x128xf32>
    %790 = arith.andi %787, %789 : vector<8x128xi1>
    %cst_160 = arith.constant 1.000000e+00 : f32
    %791 = vector.broadcast %cst_160 : f32 to vector<8x128xf32>
    %792 = arith.cmpf ole, %781, %791 : vector<8x128xf32>
    %793 = arith.andi %790, %792 : vector<8x128xi1>
    %794 = arith.mulf %777, %131 : vector<8x128xf32>
    %795 = arith.addf %111, %794 : vector<8x128xf32>
    %796 = arith.mulf %777, %135 : vector<8x128xf32>
    %797 = arith.addf %115, %796 : vector<8x128xf32>
    %798 = arith.extui %793 : vector<8x128xi1> to vector<8x128xi32>
    %799 = arith.sitofp %798 : vector<8x128xi32> to vector<8x128xf32>
    %800 = arith.subf %39, %9 : vector<8x128xf32>
    %801 = arith.subf %43, %11 : vector<8x128xf32>
    %802 = arith.mulf %800, %13 : vector<8x128xf32>
    %803 = arith.mulf %801, %15 : vector<8x128xf32>
    %804 = arith.addf %802, %803 : vector<8x128xf32>
    %cst_161 = arith.constant 0.000000e+00 : f32
    %805 = vector.broadcast %cst_161 : f32 to vector<8x128xf32>
    %806 = arith.subf %805, %800 : vector<8x128xf32>
    %807 = arith.mulf %806, %15 : vector<8x128xf32>
    %808 = arith.mulf %801, %13 : vector<8x128xf32>
    %809 = arith.addf %807, %808 : vector<8x128xf32>
    %810 = math.absf %804 : vector<8x128xf32>
    %811 = arith.cmpf ole, %810, %27 : vector<8x128xf32>
    %812 = math.absf %809 : vector<8x128xf32>
    %813 = arith.cmpf ole, %812, %31 : vector<8x128xf32>
    %814 = arith.andi %811, %813 : vector<8x128xi1>
    %815 = arith.extui %814 : vector<8x128xi1> to vector<8x128xi32>
    %816 = arith.sitofp %815 : vector<8x128xi32> to vector<8x128xf32>
    %817 = arith.subf %63, %9 : vector<8x128xf32>
    %818 = arith.subf %67, %11 : vector<8x128xf32>
    %819 = arith.mulf %817, %13 : vector<8x128xf32>
    %820 = arith.mulf %818, %15 : vector<8x128xf32>
    %821 = arith.addf %819, %820 : vector<8x128xf32>
    %cst_162 = arith.constant 0.000000e+00 : f32
    %822 = vector.broadcast %cst_162 : f32 to vector<8x128xf32>
    %823 = arith.subf %822, %817 : vector<8x128xf32>
    %824 = arith.mulf %823, %15 : vector<8x128xf32>
    %825 = arith.mulf %818, %13 : vector<8x128xf32>
    %826 = arith.addf %824, %825 : vector<8x128xf32>
    %827 = math.absf %821 : vector<8x128xf32>
    %828 = arith.cmpf ole, %827, %27 : vector<8x128xf32>
    %829 = math.absf %826 : vector<8x128xf32>
    %830 = arith.cmpf ole, %829, %31 : vector<8x128xf32>
    %831 = arith.andi %828, %830 : vector<8x128xi1>
    %832 = arith.extui %831 : vector<8x128xi1> to vector<8x128xi32>
    %833 = arith.sitofp %832 : vector<8x128xi32> to vector<8x128xf32>
    %834 = arith.subf %87, %9 : vector<8x128xf32>
    %835 = arith.subf %91, %11 : vector<8x128xf32>
    %836 = arith.mulf %834, %13 : vector<8x128xf32>
    %837 = arith.mulf %835, %15 : vector<8x128xf32>
    %838 = arith.addf %836, %837 : vector<8x128xf32>
    %cst_163 = arith.constant 0.000000e+00 : f32
    %839 = vector.broadcast %cst_163 : f32 to vector<8x128xf32>
    %840 = arith.subf %839, %834 : vector<8x128xf32>
    %841 = arith.mulf %840, %15 : vector<8x128xf32>
    %842 = arith.mulf %835, %13 : vector<8x128xf32>
    %843 = arith.addf %841, %842 : vector<8x128xf32>
    %844 = math.absf %838 : vector<8x128xf32>
    %845 = arith.cmpf ole, %844, %27 : vector<8x128xf32>
    %846 = math.absf %843 : vector<8x128xf32>
    %847 = arith.cmpf ole, %846, %31 : vector<8x128xf32>
    %848 = arith.andi %845, %847 : vector<8x128xi1>
    %849 = arith.extui %848 : vector<8x128xi1> to vector<8x128xi32>
    %850 = arith.sitofp %849 : vector<8x128xi32> to vector<8x128xf32>
    %851 = arith.subf %111, %9 : vector<8x128xf32>
    %852 = arith.subf %115, %11 : vector<8x128xf32>
    %853 = arith.mulf %851, %13 : vector<8x128xf32>
    %854 = arith.mulf %852, %15 : vector<8x128xf32>
    %855 = arith.addf %853, %854 : vector<8x128xf32>
    %cst_164 = arith.constant 0.000000e+00 : f32
    %856 = vector.broadcast %cst_164 : f32 to vector<8x128xf32>
    %857 = arith.subf %856, %851 : vector<8x128xf32>
    %858 = arith.mulf %857, %15 : vector<8x128xf32>
    %859 = arith.mulf %852, %13 : vector<8x128xf32>
    %860 = arith.addf %858, %859 : vector<8x128xf32>
    %861 = math.absf %855 : vector<8x128xf32>
    %862 = arith.cmpf ole, %861, %27 : vector<8x128xf32>
    %863 = math.absf %860 : vector<8x128xf32>
    %864 = arith.cmpf ole, %863, %31 : vector<8x128xf32>
    %865 = arith.andi %862, %864 : vector<8x128xi1>
    %866 = arith.extui %865 : vector<8x128xi1> to vector<8x128xi32>
    %867 = arith.sitofp %866 : vector<8x128xi32> to vector<8x128xf32>
    %868 = arith.subf %51, %1 : vector<8x128xf32>
    %869 = arith.subf %55, %3 : vector<8x128xf32>
    %870 = arith.mulf %868, %5 : vector<8x128xf32>
    %871 = arith.mulf %869, %7 : vector<8x128xf32>
    %872 = arith.addf %870, %871 : vector<8x128xf32>
    %cst_165 = arith.constant 0.000000e+00 : f32
    %873 = vector.broadcast %cst_165 : f32 to vector<8x128xf32>
    %874 = arith.subf %873, %868 : vector<8x128xf32>
    %875 = arith.mulf %874, %7 : vector<8x128xf32>
    %876 = arith.mulf %869, %5 : vector<8x128xf32>
    %877 = arith.addf %875, %876 : vector<8x128xf32>
    %878 = math.absf %872 : vector<8x128xf32>
    %879 = arith.cmpf ole, %878, %19 : vector<8x128xf32>
    %880 = math.absf %877 : vector<8x128xf32>
    %881 = arith.cmpf ole, %880, %23 : vector<8x128xf32>
    %882 = arith.andi %879, %881 : vector<8x128xi1>
    %883 = arith.extui %882 : vector<8x128xi1> to vector<8x128xi32>
    %884 = arith.sitofp %883 : vector<8x128xi32> to vector<8x128xf32>
    %885 = arith.subf %75, %1 : vector<8x128xf32>
    %886 = arith.subf %79, %3 : vector<8x128xf32>
    %887 = arith.mulf %885, %5 : vector<8x128xf32>
    %888 = arith.mulf %886, %7 : vector<8x128xf32>
    %889 = arith.addf %887, %888 : vector<8x128xf32>
    %cst_166 = arith.constant 0.000000e+00 : f32
    %890 = vector.broadcast %cst_166 : f32 to vector<8x128xf32>
    %891 = arith.subf %890, %885 : vector<8x128xf32>
    %892 = arith.mulf %891, %7 : vector<8x128xf32>
    %893 = arith.mulf %886, %5 : vector<8x128xf32>
    %894 = arith.addf %892, %893 : vector<8x128xf32>
    %895 = math.absf %889 : vector<8x128xf32>
    %896 = arith.cmpf ole, %895, %19 : vector<8x128xf32>
    %897 = math.absf %894 : vector<8x128xf32>
    %898 = arith.cmpf ole, %897, %23 : vector<8x128xf32>
    %899 = arith.andi %896, %898 : vector<8x128xi1>
    %900 = arith.extui %899 : vector<8x128xi1> to vector<8x128xi32>
    %901 = arith.sitofp %900 : vector<8x128xi32> to vector<8x128xf32>
    %902 = arith.subf %99, %1 : vector<8x128xf32>
    %903 = arith.subf %103, %3 : vector<8x128xf32>
    %904 = arith.mulf %902, %5 : vector<8x128xf32>
    %905 = arith.mulf %903, %7 : vector<8x128xf32>
    %906 = arith.addf %904, %905 : vector<8x128xf32>
    %cst_167 = arith.constant 0.000000e+00 : f32
    %907 = vector.broadcast %cst_167 : f32 to vector<8x128xf32>
    %908 = arith.subf %907, %902 : vector<8x128xf32>
    %909 = arith.mulf %908, %7 : vector<8x128xf32>
    %910 = arith.mulf %903, %5 : vector<8x128xf32>
    %911 = arith.addf %909, %910 : vector<8x128xf32>
    %912 = math.absf %906 : vector<8x128xf32>
    %913 = arith.cmpf ole, %912, %19 : vector<8x128xf32>
    %914 = math.absf %911 : vector<8x128xf32>
    %915 = arith.cmpf ole, %914, %23 : vector<8x128xf32>
    %916 = arith.andi %913, %915 : vector<8x128xi1>
    %917 = arith.extui %916 : vector<8x128xi1> to vector<8x128xi32>
    %918 = arith.sitofp %917 : vector<8x128xi32> to vector<8x128xf32>
    %919 = arith.subf %123, %1 : vector<8x128xf32>
    %920 = arith.subf %127, %3 : vector<8x128xf32>
    %921 = arith.mulf %919, %5 : vector<8x128xf32>
    %922 = arith.mulf %920, %7 : vector<8x128xf32>
    %923 = arith.addf %921, %922 : vector<8x128xf32>
    %cst_168 = arith.constant 0.000000e+00 : f32
    %924 = vector.broadcast %cst_168 : f32 to vector<8x128xf32>
    %925 = arith.subf %924, %919 : vector<8x128xf32>
    %926 = arith.mulf %925, %7 : vector<8x128xf32>
    %927 = arith.mulf %920, %5 : vector<8x128xf32>
    %928 = arith.addf %926, %927 : vector<8x128xf32>
    %929 = math.absf %923 : vector<8x128xf32>
    %930 = arith.cmpf ole, %929, %19 : vector<8x128xf32>
    %931 = math.absf %928 : vector<8x128xf32>
    %932 = arith.cmpf ole, %931, %23 : vector<8x128xf32>
    %933 = arith.andi %930, %932 : vector<8x128xi1>
    %934 = arith.extui %933 : vector<8x128xi1> to vector<8x128xi32>
    %935 = arith.sitofp %934 : vector<8x128xi32> to vector<8x128xf32>
    %936 = arith.mulf %180, %184 : vector<8x128xf32>
    %937 = arith.mulf %182, %184 : vector<8x128xf32>
    %938 = arith.addf %184, %225 : vector<8x128xf32>
    %939 = arith.mulf %221, %225 : vector<8x128xf32>
    %940 = arith.addf %936, %939 : vector<8x128xf32>
    %941 = arith.mulf %223, %225 : vector<8x128xf32>
    %942 = arith.addf %937, %941 : vector<8x128xf32>
    %943 = arith.addf %938, %266 : vector<8x128xf32>
    %944 = arith.mulf %262, %266 : vector<8x128xf32>
    %945 = arith.addf %940, %944 : vector<8x128xf32>
    %946 = arith.mulf %264, %266 : vector<8x128xf32>
    %947 = arith.addf %942, %946 : vector<8x128xf32>
    %948 = arith.addf %943, %307 : vector<8x128xf32>
    %949 = arith.mulf %303, %307 : vector<8x128xf32>
    %950 = arith.addf %945, %949 : vector<8x128xf32>
    %951 = arith.mulf %305, %307 : vector<8x128xf32>
    %952 = arith.addf %947, %951 : vector<8x128xf32>
    %953 = arith.addf %948, %348 : vector<8x128xf32>
    %954 = arith.mulf %344, %348 : vector<8x128xf32>
    %955 = arith.addf %950, %954 : vector<8x128xf32>
    %956 = arith.mulf %346, %348 : vector<8x128xf32>
    %957 = arith.addf %952, %956 : vector<8x128xf32>
    %958 = arith.addf %953, %389 : vector<8x128xf32>
    %959 = arith.mulf %385, %389 : vector<8x128xf32>
    %960 = arith.addf %955, %959 : vector<8x128xf32>
    %961 = arith.mulf %387, %389 : vector<8x128xf32>
    %962 = arith.addf %957, %961 : vector<8x128xf32>
    %963 = arith.addf %958, %430 : vector<8x128xf32>
    %964 = arith.mulf %426, %430 : vector<8x128xf32>
    %965 = arith.addf %960, %964 : vector<8x128xf32>
    %966 = arith.mulf %428, %430 : vector<8x128xf32>
    %967 = arith.addf %962, %966 : vector<8x128xf32>
    %968 = arith.addf %963, %471 : vector<8x128xf32>
    %969 = arith.mulf %467, %471 : vector<8x128xf32>
    %970 = arith.addf %965, %969 : vector<8x128xf32>
    %971 = arith.mulf %469, %471 : vector<8x128xf32>
    %972 = arith.addf %967, %971 : vector<8x128xf32>
    %973 = arith.addf %968, %512 : vector<8x128xf32>
    %974 = arith.mulf %508, %512 : vector<8x128xf32>
    %975 = arith.addf %970, %974 : vector<8x128xf32>
    %976 = arith.mulf %510, %512 : vector<8x128xf32>
    %977 = arith.addf %972, %976 : vector<8x128xf32>
    %978 = arith.addf %973, %553 : vector<8x128xf32>
    %979 = arith.mulf %549, %553 : vector<8x128xf32>
    %980 = arith.addf %975, %979 : vector<8x128xf32>
    %981 = arith.mulf %551, %553 : vector<8x128xf32>
    %982 = arith.addf %977, %981 : vector<8x128xf32>
    %983 = arith.addf %978, %594 : vector<8x128xf32>
    %984 = arith.mulf %590, %594 : vector<8x128xf32>
    %985 = arith.addf %980, %984 : vector<8x128xf32>
    %986 = arith.mulf %592, %594 : vector<8x128xf32>
    %987 = arith.addf %982, %986 : vector<8x128xf32>
    %988 = arith.addf %983, %635 : vector<8x128xf32>
    %989 = arith.mulf %631, %635 : vector<8x128xf32>
    %990 = arith.addf %985, %989 : vector<8x128xf32>
    %991 = arith.mulf %633, %635 : vector<8x128xf32>
    %992 = arith.addf %987, %991 : vector<8x128xf32>
    %993 = arith.addf %988, %676 : vector<8x128xf32>
    %994 = arith.mulf %672, %676 : vector<8x128xf32>
    %995 = arith.addf %990, %994 : vector<8x128xf32>
    %996 = arith.mulf %674, %676 : vector<8x128xf32>
    %997 = arith.addf %992, %996 : vector<8x128xf32>
    %998 = arith.addf %993, %717 : vector<8x128xf32>
    %999 = arith.mulf %713, %717 : vector<8x128xf32>
    %1000 = arith.addf %995, %999 : vector<8x128xf32>
    %1001 = arith.mulf %715, %717 : vector<8x128xf32>
    %1002 = arith.addf %997, %1001 : vector<8x128xf32>
    %1003 = arith.addf %998, %758 : vector<8x128xf32>
    %1004 = arith.mulf %754, %758 : vector<8x128xf32>
    %1005 = arith.addf %1000, %1004 : vector<8x128xf32>
    %1006 = arith.mulf %756, %758 : vector<8x128xf32>
    %1007 = arith.addf %1002, %1006 : vector<8x128xf32>
    %1008 = arith.addf %1003, %799 : vector<8x128xf32>
    %1009 = arith.mulf %795, %799 : vector<8x128xf32>
    %1010 = arith.addf %1005, %1009 : vector<8x128xf32>
    %1011 = arith.mulf %797, %799 : vector<8x128xf32>
    %1012 = arith.addf %1007, %1011 : vector<8x128xf32>
    %1013 = arith.addf %1008, %816 : vector<8x128xf32>
    %1014 = arith.mulf %39, %816 : vector<8x128xf32>
    %1015 = arith.addf %1010, %1014 : vector<8x128xf32>
    %1016 = arith.mulf %43, %816 : vector<8x128xf32>
    %1017 = arith.addf %1012, %1016 : vector<8x128xf32>
    %1018 = arith.addf %1013, %833 : vector<8x128xf32>
    %1019 = arith.mulf %63, %833 : vector<8x128xf32>
    %1020 = arith.addf %1015, %1019 : vector<8x128xf32>
    %1021 = arith.mulf %67, %833 : vector<8x128xf32>
    %1022 = arith.addf %1017, %1021 : vector<8x128xf32>
    %1023 = arith.addf %1018, %850 : vector<8x128xf32>
    %1024 = arith.mulf %87, %850 : vector<8x128xf32>
    %1025 = arith.addf %1020, %1024 : vector<8x128xf32>
    %1026 = arith.mulf %91, %850 : vector<8x128xf32>
    %1027 = arith.addf %1022, %1026 : vector<8x128xf32>
    %1028 = arith.addf %1023, %867 : vector<8x128xf32>
    %1029 = arith.mulf %111, %867 : vector<8x128xf32>
    %1030 = arith.addf %1025, %1029 : vector<8x128xf32>
    %1031 = arith.mulf %115, %867 : vector<8x128xf32>
    %1032 = arith.addf %1027, %1031 : vector<8x128xf32>
    %1033 = arith.addf %1028, %884 : vector<8x128xf32>
    %1034 = arith.mulf %51, %884 : vector<8x128xf32>
    %1035 = arith.addf %1030, %1034 : vector<8x128xf32>
    %1036 = arith.mulf %55, %884 : vector<8x128xf32>
    %1037 = arith.addf %1032, %1036 : vector<8x128xf32>
    %1038 = arith.addf %1033, %901 : vector<8x128xf32>
    %1039 = arith.mulf %75, %901 : vector<8x128xf32>
    %1040 = arith.addf %1035, %1039 : vector<8x128xf32>
    %1041 = arith.mulf %79, %901 : vector<8x128xf32>
    %1042 = arith.addf %1037, %1041 : vector<8x128xf32>
    %1043 = arith.addf %1038, %918 : vector<8x128xf32>
    %1044 = arith.mulf %99, %918 : vector<8x128xf32>
    %1045 = arith.addf %1040, %1044 : vector<8x128xf32>
    %1046 = arith.mulf %103, %918 : vector<8x128xf32>
    %1047 = arith.addf %1042, %1046 : vector<8x128xf32>
    %1048 = arith.addf %1043, %935 : vector<8x128xf32>
    %1049 = arith.mulf %123, %935 : vector<8x128xf32>
    %1050 = arith.addf %1045, %1049 : vector<8x128xf32>
    %1051 = arith.mulf %127, %935 : vector<8x128xf32>
    %1052 = arith.addf %1047, %1051 : vector<8x128xf32>
    %cst_169 = arith.constant 1.000000e+00 : f32
    %1053 = vector.broadcast %cst_169 : f32 to vector<8x128xf32>
    %1054 = arith.maximumf %1048, %1053 : vector<8x128xf32>
    %1055 = tpu.reciprocal %1054 {approx = true} : vector<8x128xf32> -> vector<8x128xf32>
    %1056 = arith.mulf %1050, %1055 : vector<8x128xf32>
    %1057 = arith.mulf %1052, %1055 : vector<8x128xf32>
    %1058 = arith.subf %180, %1056 : vector<8x128xf32>
    %1059 = arith.mulf %1058, %184 : vector<8x128xf32>
    %1060 = arith.subf %182, %1057 : vector<8x128xf32>
    %1061 = arith.mulf %1060, %184 : vector<8x128xf32>
    %1062 = math.absf %1059 : vector<8x128xf32>
    %1063 = math.absf %1061 : vector<8x128xf32>
    %1064 = arith.addf %1062, %1063 : vector<8x128xf32>
    %cst_170 = arith.constant 9.99999996E-13 : f32
    %1065 = vector.broadcast %cst_170 : f32 to vector<8x128xf32>
    %1066 = arith.cmpf ogt, %1064, %1065 : vector<8x128xf32>
    %cst_171 = arith.constant 1.000000e+00 : f32
    %1067 = vector.broadcast %cst_171 : f32 to vector<8x128xf32>
    %1068 = arith.select %1066, %1064, %1067 : vector<8x128xi1>, vector<8x128xf32>
    %1069 = tpu.reciprocal %1068 {approx = true} : vector<8x128xf32> -> vector<8x128xf32>
    %1070 = arith.mulf %1059, %1069 : vector<8x128xf32>
    %cst_172 = arith.constant 0.000000e+00 : f32
    %1071 = vector.broadcast %cst_172 : f32 to vector<8x128xf32>
    %1072 = arith.cmpf oge, %1061, %1071 : vector<8x128xf32>
    %cst_173 = arith.constant 1.000000e+00 : f32
    %1073 = vector.broadcast %cst_173 : f32 to vector<8x128xf32>
    %1074 = arith.subf %1073, %1070 : vector<8x128xf32>
    %cst_174 = arith.constant 3.000000e+00 : f32
    %1075 = vector.broadcast %cst_174 : f32 to vector<8x128xf32>
    %1076 = arith.addf %1075, %1070 : vector<8x128xf32>
    %1077 = arith.select %1072, %1074, %1076 : vector<8x128xi1>, vector<8x128xf32>
    %cst_175 = arith.constant 5.000000e-01 : f32
    %1078 = vector.broadcast %cst_175 : f32 to vector<8x128xf32>
    %1079 = arith.cmpf ogt, %184, %1078 : vector<8x128xf32>
    %cst_176 = arith.constant 1.000000e+01 : f32
    %1080 = vector.broadcast %cst_176 : f32 to vector<8x128xf32>
    %1081 = arith.select %1079, %1077, %1080 : vector<8x128xi1>, vector<8x128xf32>
    %1082 = arith.subf %221, %1056 : vector<8x128xf32>
    %1083 = arith.mulf %1082, %225 : vector<8x128xf32>
    %1084 = arith.subf %223, %1057 : vector<8x128xf32>
    %1085 = arith.mulf %1084, %225 : vector<8x128xf32>
    %1086 = math.absf %1083 : vector<8x128xf32>
    %1087 = math.absf %1085 : vector<8x128xf32>
    %1088 = arith.addf %1086, %1087 : vector<8x128xf32>
    %cst_177 = arith.constant 9.99999996E-13 : f32
    %1089 = vector.broadcast %cst_177 : f32 to vector<8x128xf32>
    %1090 = arith.cmpf ogt, %1088, %1089 : vector<8x128xf32>
    %cst_178 = arith.constant 1.000000e+00 : f32
    %1091 = vector.broadcast %cst_178 : f32 to vector<8x128xf32>
    %1092 = arith.select %1090, %1088, %1091 : vector<8x128xi1>, vector<8x128xf32>
    %1093 = tpu.reciprocal %1092 {approx = true} : vector<8x128xf32> -> vector<8x128xf32>
    %1094 = arith.mulf %1083, %1093 : vector<8x128xf32>
    %cst_179 = arith.constant 0.000000e+00 : f32
    %1095 = vector.broadcast %cst_179 : f32 to vector<8x128xf32>
    %1096 = arith.cmpf oge, %1085, %1095 : vector<8x128xf32>
    %cst_180 = arith.constant 1.000000e+00 : f32
    %1097 = vector.broadcast %cst_180 : f32 to vector<8x128xf32>
    %1098 = arith.subf %1097, %1094 : vector<8x128xf32>
    %cst_181 = arith.constant 3.000000e+00 : f32
    %1099 = vector.broadcast %cst_181 : f32 to vector<8x128xf32>
    %1100 = arith.addf %1099, %1094 : vector<8x128xf32>
    %1101 = arith.select %1096, %1098, %1100 : vector<8x128xi1>, vector<8x128xf32>
    %cst_182 = arith.constant 5.000000e-01 : f32
    %1102 = vector.broadcast %cst_182 : f32 to vector<8x128xf32>
    %1103 = arith.cmpf ogt, %225, %1102 : vector<8x128xf32>
    %cst_183 = arith.constant 1.000000e+01 : f32
    %1104 = vector.broadcast %cst_183 : f32 to vector<8x128xf32>
    %1105 = arith.select %1103, %1101, %1104 : vector<8x128xi1>, vector<8x128xf32>
    %1106 = arith.subf %262, %1056 : vector<8x128xf32>
    %1107 = arith.mulf %1106, %266 : vector<8x128xf32>
    %1108 = arith.subf %264, %1057 : vector<8x128xf32>
    %1109 = arith.mulf %1108, %266 : vector<8x128xf32>
    %1110 = math.absf %1107 : vector<8x128xf32>
    %1111 = math.absf %1109 : vector<8x128xf32>
    %1112 = arith.addf %1110, %1111 : vector<8x128xf32>
    %cst_184 = arith.constant 9.99999996E-13 : f32
    %1113 = vector.broadcast %cst_184 : f32 to vector<8x128xf32>
    %1114 = arith.cmpf ogt, %1112, %1113 : vector<8x128xf32>
    %cst_185 = arith.constant 1.000000e+00 : f32
    %1115 = vector.broadcast %cst_185 : f32 to vector<8x128xf32>
    %1116 = arith.select %1114, %1112, %1115 : vector<8x128xi1>, vector<8x128xf32>
    %1117 = tpu.reciprocal %1116 {approx = true} : vector<8x128xf32> -> vector<8x128xf32>
    %1118 = arith.mulf %1107, %1117 : vector<8x128xf32>
    %cst_186 = arith.constant 0.000000e+00 : f32
    %1119 = vector.broadcast %cst_186 : f32 to vector<8x128xf32>
    %1120 = arith.cmpf oge, %1109, %1119 : vector<8x128xf32>
    %cst_187 = arith.constant 1.000000e+00 : f32
    %1121 = vector.broadcast %cst_187 : f32 to vector<8x128xf32>
    %1122 = arith.subf %1121, %1118 : vector<8x128xf32>
    %cst_188 = arith.constant 3.000000e+00 : f32
    %1123 = vector.broadcast %cst_188 : f32 to vector<8x128xf32>
    %1124 = arith.addf %1123, %1118 : vector<8x128xf32>
    %1125 = arith.select %1120, %1122, %1124 : vector<8x128xi1>, vector<8x128xf32>
    %cst_189 = arith.constant 5.000000e-01 : f32
    %1126 = vector.broadcast %cst_189 : f32 to vector<8x128xf32>
    %1127 = arith.cmpf ogt, %266, %1126 : vector<8x128xf32>
    %cst_190 = arith.constant 1.000000e+01 : f32
    %1128 = vector.broadcast %cst_190 : f32 to vector<8x128xf32>
    %1129 = arith.select %1127, %1125, %1128 : vector<8x128xi1>, vector<8x128xf32>
    %1130 = arith.subf %303, %1056 : vector<8x128xf32>
    %1131 = arith.mulf %1130, %307 : vector<8x128xf32>
    %1132 = arith.subf %305, %1057 : vector<8x128xf32>
    %1133 = arith.mulf %1132, %307 : vector<8x128xf32>
    %1134 = math.absf %1131 : vector<8x128xf32>
    %1135 = math.absf %1133 : vector<8x128xf32>
    %1136 = arith.addf %1134, %1135 : vector<8x128xf32>
    %cst_191 = arith.constant 9.99999996E-13 : f32
    %1137 = vector.broadcast %cst_191 : f32 to vector<8x128xf32>
    %1138 = arith.cmpf ogt, %1136, %1137 : vector<8x128xf32>
    %cst_192 = arith.constant 1.000000e+00 : f32
    %1139 = vector.broadcast %cst_192 : f32 to vector<8x128xf32>
    %1140 = arith.select %1138, %1136, %1139 : vector<8x128xi1>, vector<8x128xf32>
    %1141 = tpu.reciprocal %1140 {approx = true} : vector<8x128xf32> -> vector<8x128xf32>
    %1142 = arith.mulf %1131, %1141 : vector<8x128xf32>
    %cst_193 = arith.constant 0.000000e+00 : f32
    %1143 = vector.broadcast %cst_193 : f32 to vector<8x128xf32>
    %1144 = arith.cmpf oge, %1133, %1143 : vector<8x128xf32>
    %cst_194 = arith.constant 1.000000e+00 : f32
    %1145 = vector.broadcast %cst_194 : f32 to vector<8x128xf32>
    %1146 = arith.subf %1145, %1142 : vector<8x128xf32>
    %cst_195 = arith.constant 3.000000e+00 : f32
    %1147 = vector.broadcast %cst_195 : f32 to vector<8x128xf32>
    %1148 = arith.addf %1147, %1142 : vector<8x128xf32>
    %1149 = arith.select %1144, %1146, %1148 : vector<8x128xi1>, vector<8x128xf32>
    %cst_196 = arith.constant 5.000000e-01 : f32
    %1150 = vector.broadcast %cst_196 : f32 to vector<8x128xf32>
    %1151 = arith.cmpf ogt, %307, %1150 : vector<8x128xf32>
    %cst_197 = arith.constant 1.000000e+01 : f32
    %1152 = vector.broadcast %cst_197 : f32 to vector<8x128xf32>
    %1153 = arith.select %1151, %1149, %1152 : vector<8x128xi1>, vector<8x128xf32>
    %1154 = arith.subf %344, %1056 : vector<8x128xf32>
    %1155 = arith.mulf %1154, %348 : vector<8x128xf32>
    %1156 = arith.subf %346, %1057 : vector<8x128xf32>
    %1157 = arith.mulf %1156, %348 : vector<8x128xf32>
    %1158 = math.absf %1155 : vector<8x128xf32>
    %1159 = math.absf %1157 : vector<8x128xf32>
    %1160 = arith.addf %1158, %1159 : vector<8x128xf32>
    %cst_198 = arith.constant 9.99999996E-13 : f32
    %1161 = vector.broadcast %cst_198 : f32 to vector<8x128xf32>
    %1162 = arith.cmpf ogt, %1160, %1161 : vector<8x128xf32>
    %cst_199 = arith.constant 1.000000e+00 : f32
    %1163 = vector.broadcast %cst_199 : f32 to vector<8x128xf32>
    %1164 = arith.select %1162, %1160, %1163 : vector<8x128xi1>, vector<8x128xf32>
    %1165 = tpu.reciprocal %1164 {approx = true} : vector<8x128xf32> -> vector<8x128xf32>
    %1166 = arith.mulf %1155, %1165 : vector<8x128xf32>
    %cst_200 = arith.constant 0.000000e+00 : f32
    %1167 = vector.broadcast %cst_200 : f32 to vector<8x128xf32>
    %1168 = arith.cmpf oge, %1157, %1167 : vector<8x128xf32>
    %cst_201 = arith.constant 1.000000e+00 : f32
    %1169 = vector.broadcast %cst_201 : f32 to vector<8x128xf32>
    %1170 = arith.subf %1169, %1166 : vector<8x128xf32>
    %cst_202 = arith.constant 3.000000e+00 : f32
    %1171 = vector.broadcast %cst_202 : f32 to vector<8x128xf32>
    %1172 = arith.addf %1171, %1166 : vector<8x128xf32>
    %1173 = arith.select %1168, %1170, %1172 : vector<8x128xi1>, vector<8x128xf32>
    %cst_203 = arith.constant 5.000000e-01 : f32
    %1174 = vector.broadcast %cst_203 : f32 to vector<8x128xf32>
    %1175 = arith.cmpf ogt, %348, %1174 : vector<8x128xf32>
    %cst_204 = arith.constant 1.000000e+01 : f32
    %1176 = vector.broadcast %cst_204 : f32 to vector<8x128xf32>
    %1177 = arith.select %1175, %1173, %1176 : vector<8x128xi1>, vector<8x128xf32>
    %1178 = arith.subf %385, %1056 : vector<8x128xf32>
    %1179 = arith.mulf %1178, %389 : vector<8x128xf32>
    %1180 = arith.subf %387, %1057 : vector<8x128xf32>
    %1181 = arith.mulf %1180, %389 : vector<8x128xf32>
    %1182 = math.absf %1179 : vector<8x128xf32>
    %1183 = math.absf %1181 : vector<8x128xf32>
    %1184 = arith.addf %1182, %1183 : vector<8x128xf32>
    %cst_205 = arith.constant 9.99999996E-13 : f32
    %1185 = vector.broadcast %cst_205 : f32 to vector<8x128xf32>
    %1186 = arith.cmpf ogt, %1184, %1185 : vector<8x128xf32>
    %cst_206 = arith.constant 1.000000e+00 : f32
    %1187 = vector.broadcast %cst_206 : f32 to vector<8x128xf32>
    %1188 = arith.select %1186, %1184, %1187 : vector<8x128xi1>, vector<8x128xf32>
    %1189 = tpu.reciprocal %1188 {approx = true} : vector<8x128xf32> -> vector<8x128xf32>
    %1190 = arith.mulf %1179, %1189 : vector<8x128xf32>
    %cst_207 = arith.constant 0.000000e+00 : f32
    %1191 = vector.broadcast %cst_207 : f32 to vector<8x128xf32>
    %1192 = arith.cmpf oge, %1181, %1191 : vector<8x128xf32>
    %cst_208 = arith.constant 1.000000e+00 : f32
    %1193 = vector.broadcast %cst_208 : f32 to vector<8x128xf32>
    %1194 = arith.subf %1193, %1190 : vector<8x128xf32>
    %cst_209 = arith.constant 3.000000e+00 : f32
    %1195 = vector.broadcast %cst_209 : f32 to vector<8x128xf32>
    %1196 = arith.addf %1195, %1190 : vector<8x128xf32>
    %1197 = arith.select %1192, %1194, %1196 : vector<8x128xi1>, vector<8x128xf32>
    %cst_210 = arith.constant 5.000000e-01 : f32
    %1198 = vector.broadcast %cst_210 : f32 to vector<8x128xf32>
    %1199 = arith.cmpf ogt, %389, %1198 : vector<8x128xf32>
    %cst_211 = arith.constant 1.000000e+01 : f32
    %1200 = vector.broadcast %cst_211 : f32 to vector<8x128xf32>
    %1201 = arith.select %1199, %1197, %1200 : vector<8x128xi1>, vector<8x128xf32>
    %1202 = arith.subf %426, %1056 : vector<8x128xf32>
    %1203 = arith.mulf %1202, %430 : vector<8x128xf32>
    %1204 = arith.subf %428, %1057 : vector<8x128xf32>
    %1205 = arith.mulf %1204, %430 : vector<8x128xf32>
    %1206 = math.absf %1203 : vector<8x128xf32>
    %1207 = math.absf %1205 : vector<8x128xf32>
    %1208 = arith.addf %1206, %1207 : vector<8x128xf32>
    %cst_212 = arith.constant 9.99999996E-13 : f32
    %1209 = vector.broadcast %cst_212 : f32 to vector<8x128xf32>
    %1210 = arith.cmpf ogt, %1208, %1209 : vector<8x128xf32>
    %cst_213 = arith.constant 1.000000e+00 : f32
    %1211 = vector.broadcast %cst_213 : f32 to vector<8x128xf32>
    %1212 = arith.select %1210, %1208, %1211 : vector<8x128xi1>, vector<8x128xf32>
    %1213 = tpu.reciprocal %1212 {approx = true} : vector<8x128xf32> -> vector<8x128xf32>
    %1214 = arith.mulf %1203, %1213 : vector<8x128xf32>
    %cst_214 = arith.constant 0.000000e+00 : f32
    %1215 = vector.broadcast %cst_214 : f32 to vector<8x128xf32>
    %1216 = arith.cmpf oge, %1205, %1215 : vector<8x128xf32>
    %cst_215 = arith.constant 1.000000e+00 : f32
    %1217 = vector.broadcast %cst_215 : f32 to vector<8x128xf32>
    %1218 = arith.subf %1217, %1214 : vector<8x128xf32>
    %cst_216 = arith.constant 3.000000e+00 : f32
    %1219 = vector.broadcast %cst_216 : f32 to vector<8x128xf32>
    %1220 = arith.addf %1219, %1214 : vector<8x128xf32>
    %1221 = arith.select %1216, %1218, %1220 : vector<8x128xi1>, vector<8x128xf32>
    %cst_217 = arith.constant 5.000000e-01 : f32
    %1222 = vector.broadcast %cst_217 : f32 to vector<8x128xf32>
    %1223 = arith.cmpf ogt, %430, %1222 : vector<8x128xf32>
    %cst_218 = arith.constant 1.000000e+01 : f32
    %1224 = vector.broadcast %cst_218 : f32 to vector<8x128xf32>
    %1225 = arith.select %1223, %1221, %1224 : vector<8x128xi1>, vector<8x128xf32>
    %1226 = arith.subf %467, %1056 : vector<8x128xf32>
    %1227 = arith.mulf %1226, %471 : vector<8x128xf32>
    %1228 = arith.subf %469, %1057 : vector<8x128xf32>
    %1229 = arith.mulf %1228, %471 : vector<8x128xf32>
    %1230 = math.absf %1227 : vector<8x128xf32>
    %1231 = math.absf %1229 : vector<8x128xf32>
    %1232 = arith.addf %1230, %1231 : vector<8x128xf32>
    %cst_219 = arith.constant 9.99999996E-13 : f32
    %1233 = vector.broadcast %cst_219 : f32 to vector<8x128xf32>
    %1234 = arith.cmpf ogt, %1232, %1233 : vector<8x128xf32>
    %cst_220 = arith.constant 1.000000e+00 : f32
    %1235 = vector.broadcast %cst_220 : f32 to vector<8x128xf32>
    %1236 = arith.select %1234, %1232, %1235 : vector<8x128xi1>, vector<8x128xf32>
    %1237 = tpu.reciprocal %1236 {approx = true} : vector<8x128xf32> -> vector<8x128xf32>
    %1238 = arith.mulf %1227, %1237 : vector<8x128xf32>
    %cst_221 = arith.constant 0.000000e+00 : f32
    %1239 = vector.broadcast %cst_221 : f32 to vector<8x128xf32>
    %1240 = arith.cmpf oge, %1229, %1239 : vector<8x128xf32>
    %cst_222 = arith.constant 1.000000e+00 : f32
    %1241 = vector.broadcast %cst_222 : f32 to vector<8x128xf32>
    %1242 = arith.subf %1241, %1238 : vector<8x128xf32>
    %cst_223 = arith.constant 3.000000e+00 : f32
    %1243 = vector.broadcast %cst_223 : f32 to vector<8x128xf32>
    %1244 = arith.addf %1243, %1238 : vector<8x128xf32>
    %1245 = arith.select %1240, %1242, %1244 : vector<8x128xi1>, vector<8x128xf32>
    %cst_224 = arith.constant 5.000000e-01 : f32
    %1246 = vector.broadcast %cst_224 : f32 to vector<8x128xf32>
    %1247 = arith.cmpf ogt, %471, %1246 : vector<8x128xf32>
    %cst_225 = arith.constant 1.000000e+01 : f32
    %1248 = vector.broadcast %cst_225 : f32 to vector<8x128xf32>
    %1249 = arith.select %1247, %1245, %1248 : vector<8x128xi1>, vector<8x128xf32>
    %1250 = arith.subf %508, %1056 : vector<8x128xf32>
    %1251 = arith.mulf %1250, %512 : vector<8x128xf32>
    %1252 = arith.subf %510, %1057 : vector<8x128xf32>
    %1253 = arith.mulf %1252, %512 : vector<8x128xf32>
    %1254 = math.absf %1251 : vector<8x128xf32>
    %1255 = math.absf %1253 : vector<8x128xf32>
    %1256 = arith.addf %1254, %1255 : vector<8x128xf32>
    %cst_226 = arith.constant 9.99999996E-13 : f32
    %1257 = vector.broadcast %cst_226 : f32 to vector<8x128xf32>
    %1258 = arith.cmpf ogt, %1256, %1257 : vector<8x128xf32>
    %cst_227 = arith.constant 1.000000e+00 : f32
    %1259 = vector.broadcast %cst_227 : f32 to vector<8x128xf32>
    %1260 = arith.select %1258, %1256, %1259 : vector<8x128xi1>, vector<8x128xf32>
    %1261 = tpu.reciprocal %1260 {approx = true} : vector<8x128xf32> -> vector<8x128xf32>
    %1262 = arith.mulf %1251, %1261 : vector<8x128xf32>
    %cst_228 = arith.constant 0.000000e+00 : f32
    %1263 = vector.broadcast %cst_228 : f32 to vector<8x128xf32>
    %1264 = arith.cmpf oge, %1253, %1263 : vector<8x128xf32>
    %cst_229 = arith.constant 1.000000e+00 : f32
    %1265 = vector.broadcast %cst_229 : f32 to vector<8x128xf32>
    %1266 = arith.subf %1265, %1262 : vector<8x128xf32>
    %cst_230 = arith.constant 3.000000e+00 : f32
    %1267 = vector.broadcast %cst_230 : f32 to vector<8x128xf32>
    %1268 = arith.addf %1267, %1262 : vector<8x128xf32>
    %1269 = arith.select %1264, %1266, %1268 : vector<8x128xi1>, vector<8x128xf32>
    %cst_231 = arith.constant 5.000000e-01 : f32
    %1270 = vector.broadcast %cst_231 : f32 to vector<8x128xf32>
    %1271 = arith.cmpf ogt, %512, %1270 : vector<8x128xf32>
    %cst_232 = arith.constant 1.000000e+01 : f32
    %1272 = vector.broadcast %cst_232 : f32 to vector<8x128xf32>
    %1273 = arith.select %1271, %1269, %1272 : vector<8x128xi1>, vector<8x128xf32>
    %1274 = arith.subf %549, %1056 : vector<8x128xf32>
    %1275 = arith.mulf %1274, %553 : vector<8x128xf32>
    %1276 = arith.subf %551, %1057 : vector<8x128xf32>
    %1277 = arith.mulf %1276, %553 : vector<8x128xf32>
    %1278 = math.absf %1275 : vector<8x128xf32>
    %1279 = math.absf %1277 : vector<8x128xf32>
    %1280 = arith.addf %1278, %1279 : vector<8x128xf32>
    %cst_233 = arith.constant 9.99999996E-13 : f32
    %1281 = vector.broadcast %cst_233 : f32 to vector<8x128xf32>
    %1282 = arith.cmpf ogt, %1280, %1281 : vector<8x128xf32>
    %cst_234 = arith.constant 1.000000e+00 : f32
    %1283 = vector.broadcast %cst_234 : f32 to vector<8x128xf32>
    %1284 = arith.select %1282, %1280, %1283 : vector<8x128xi1>, vector<8x128xf32>
    %1285 = tpu.reciprocal %1284 {approx = true} : vector<8x128xf32> -> vector<8x128xf32>
    %1286 = arith.mulf %1275, %1285 : vector<8x128xf32>
    %cst_235 = arith.constant 0.000000e+00 : f32
    %1287 = vector.broadcast %cst_235 : f32 to vector<8x128xf32>
    %1288 = arith.cmpf oge, %1277, %1287 : vector<8x128xf32>
    %cst_236 = arith.constant 1.000000e+00 : f32
    %1289 = vector.broadcast %cst_236 : f32 to vector<8x128xf32>
    %1290 = arith.subf %1289, %1286 : vector<8x128xf32>
    %cst_237 = arith.constant 3.000000e+00 : f32
    %1291 = vector.broadcast %cst_237 : f32 to vector<8x128xf32>
    %1292 = arith.addf %1291, %1286 : vector<8x128xf32>
    %1293 = arith.select %1288, %1290, %1292 : vector<8x128xi1>, vector<8x128xf32>
    %cst_238 = arith.constant 5.000000e-01 : f32
    %1294 = vector.broadcast %cst_238 : f32 to vector<8x128xf32>
    %1295 = arith.cmpf ogt, %553, %1294 : vector<8x128xf32>
    %cst_239 = arith.constant 1.000000e+01 : f32
    %1296 = vector.broadcast %cst_239 : f32 to vector<8x128xf32>
    %1297 = arith.select %1295, %1293, %1296 : vector<8x128xi1>, vector<8x128xf32>
    %1298 = arith.subf %590, %1056 : vector<8x128xf32>
    %1299 = arith.mulf %1298, %594 : vector<8x128xf32>
    %1300 = arith.subf %592, %1057 : vector<8x128xf32>
    %1301 = arith.mulf %1300, %594 : vector<8x128xf32>
    %1302 = math.absf %1299 : vector<8x128xf32>
    %1303 = math.absf %1301 : vector<8x128xf32>
    %1304 = arith.addf %1302, %1303 : vector<8x128xf32>
    %cst_240 = arith.constant 9.99999996E-13 : f32
    %1305 = vector.broadcast %cst_240 : f32 to vector<8x128xf32>
    %1306 = arith.cmpf ogt, %1304, %1305 : vector<8x128xf32>
    %cst_241 = arith.constant 1.000000e+00 : f32
    %1307 = vector.broadcast %cst_241 : f32 to vector<8x128xf32>
    %1308 = arith.select %1306, %1304, %1307 : vector<8x128xi1>, vector<8x128xf32>
    %1309 = tpu.reciprocal %1308 {approx = true} : vector<8x128xf32> -> vector<8x128xf32>
    %1310 = arith.mulf %1299, %1309 : vector<8x128xf32>
    %cst_242 = arith.constant 0.000000e+00 : f32
    %1311 = vector.broadcast %cst_242 : f32 to vector<8x128xf32>
    %1312 = arith.cmpf oge, %1301, %1311 : vector<8x128xf32>
    %cst_243 = arith.constant 1.000000e+00 : f32
    %1313 = vector.broadcast %cst_243 : f32 to vector<8x128xf32>
    %1314 = arith.subf %1313, %1310 : vector<8x128xf32>
    %cst_244 = arith.constant 3.000000e+00 : f32
    %1315 = vector.broadcast %cst_244 : f32 to vector<8x128xf32>
    %1316 = arith.addf %1315, %1310 : vector<8x128xf32>
    %1317 = arith.select %1312, %1314, %1316 : vector<8x128xi1>, vector<8x128xf32>
    %cst_245 = arith.constant 5.000000e-01 : f32
    %1318 = vector.broadcast %cst_245 : f32 to vector<8x128xf32>
    %1319 = arith.cmpf ogt, %594, %1318 : vector<8x128xf32>
    %cst_246 = arith.constant 1.000000e+01 : f32
    %1320 = vector.broadcast %cst_246 : f32 to vector<8x128xf32>
    %1321 = arith.select %1319, %1317, %1320 : vector<8x128xi1>, vector<8x128xf32>
    %1322 = arith.subf %631, %1056 : vector<8x128xf32>
    %1323 = arith.mulf %1322, %635 : vector<8x128xf32>
    %1324 = arith.subf %633, %1057 : vector<8x128xf32>
    %1325 = arith.mulf %1324, %635 : vector<8x128xf32>
    %1326 = math.absf %1323 : vector<8x128xf32>
    %1327 = math.absf %1325 : vector<8x128xf32>
    %1328 = arith.addf %1326, %1327 : vector<8x128xf32>
    %cst_247 = arith.constant 9.99999996E-13 : f32
    %1329 = vector.broadcast %cst_247 : f32 to vector<8x128xf32>
    %1330 = arith.cmpf ogt, %1328, %1329 : vector<8x128xf32>
    %cst_248 = arith.constant 1.000000e+00 : f32
    %1331 = vector.broadcast %cst_248 : f32 to vector<8x128xf32>
    %1332 = arith.select %1330, %1328, %1331 : vector<8x128xi1>, vector<8x128xf32>
    %1333 = tpu.reciprocal %1332 {approx = true} : vector<8x128xf32> -> vector<8x128xf32>
    %1334 = arith.mulf %1323, %1333 : vector<8x128xf32>
    %cst_249 = arith.constant 0.000000e+00 : f32
    %1335 = vector.broadcast %cst_249 : f32 to vector<8x128xf32>
    %1336 = arith.cmpf oge, %1325, %1335 : vector<8x128xf32>
    %cst_250 = arith.constant 1.000000e+00 : f32
    %1337 = vector.broadcast %cst_250 : f32 to vector<8x128xf32>
    %1338 = arith.subf %1337, %1334 : vector<8x128xf32>
    %cst_251 = arith.constant 3.000000e+00 : f32
    %1339 = vector.broadcast %cst_251 : f32 to vector<8x128xf32>
    %1340 = arith.addf %1339, %1334 : vector<8x128xf32>
    %1341 = arith.select %1336, %1338, %1340 : vector<8x128xi1>, vector<8x128xf32>
    %cst_252 = arith.constant 5.000000e-01 : f32
    %1342 = vector.broadcast %cst_252 : f32 to vector<8x128xf32>
    %1343 = arith.cmpf ogt, %635, %1342 : vector<8x128xf32>
    %cst_253 = arith.constant 1.000000e+01 : f32
    %1344 = vector.broadcast %cst_253 : f32 to vector<8x128xf32>
    %1345 = arith.select %1343, %1341, %1344 : vector<8x128xi1>, vector<8x128xf32>
    %1346 = arith.subf %672, %1056 : vector<8x128xf32>
    %1347 = arith.mulf %1346, %676 : vector<8x128xf32>
    %1348 = arith.subf %674, %1057 : vector<8x128xf32>
    %1349 = arith.mulf %1348, %676 : vector<8x128xf32>
    %1350 = math.absf %1347 : vector<8x128xf32>
    %1351 = math.absf %1349 : vector<8x128xf32>
    %1352 = arith.addf %1350, %1351 : vector<8x128xf32>
    %cst_254 = arith.constant 9.99999996E-13 : f32
    %1353 = vector.broadcast %cst_254 : f32 to vector<8x128xf32>
    %1354 = arith.cmpf ogt, %1352, %1353 : vector<8x128xf32>
    %cst_255 = arith.constant 1.000000e+00 : f32
    %1355 = vector.broadcast %cst_255 : f32 to vector<8x128xf32>
    %1356 = arith.select %1354, %1352, %1355 : vector<8x128xi1>, vector<8x128xf32>
    %1357 = tpu.reciprocal %1356 {approx = true} : vector<8x128xf32> -> vector<8x128xf32>
    %1358 = arith.mulf %1347, %1357 : vector<8x128xf32>
    %cst_256 = arith.constant 0.000000e+00 : f32
    %1359 = vector.broadcast %cst_256 : f32 to vector<8x128xf32>
    %1360 = arith.cmpf oge, %1349, %1359 : vector<8x128xf32>
    %cst_257 = arith.constant 1.000000e+00 : f32
    %1361 = vector.broadcast %cst_257 : f32 to vector<8x128xf32>
    %1362 = arith.subf %1361, %1358 : vector<8x128xf32>
    %cst_258 = arith.constant 3.000000e+00 : f32
    %1363 = vector.broadcast %cst_258 : f32 to vector<8x128xf32>
    %1364 = arith.addf %1363, %1358 : vector<8x128xf32>
    %1365 = arith.select %1360, %1362, %1364 : vector<8x128xi1>, vector<8x128xf32>
    %cst_259 = arith.constant 5.000000e-01 : f32
    %1366 = vector.broadcast %cst_259 : f32 to vector<8x128xf32>
    %1367 = arith.cmpf ogt, %676, %1366 : vector<8x128xf32>
    %cst_260 = arith.constant 1.000000e+01 : f32
    %1368 = vector.broadcast %cst_260 : f32 to vector<8x128xf32>
    %1369 = arith.select %1367, %1365, %1368 : vector<8x128xi1>, vector<8x128xf32>
    %1370 = arith.subf %713, %1056 : vector<8x128xf32>
    %1371 = arith.mulf %1370, %717 : vector<8x128xf32>
    %1372 = arith.subf %715, %1057 : vector<8x128xf32>
    %1373 = arith.mulf %1372, %717 : vector<8x128xf32>
    %1374 = math.absf %1371 : vector<8x128xf32>
    %1375 = math.absf %1373 : vector<8x128xf32>
    %1376 = arith.addf %1374, %1375 : vector<8x128xf32>
    %cst_261 = arith.constant 9.99999996E-13 : f32
    %1377 = vector.broadcast %cst_261 : f32 to vector<8x128xf32>
    %1378 = arith.cmpf ogt, %1376, %1377 : vector<8x128xf32>
    %cst_262 = arith.constant 1.000000e+00 : f32
    %1379 = vector.broadcast %cst_262 : f32 to vector<8x128xf32>
    %1380 = arith.select %1378, %1376, %1379 : vector<8x128xi1>, vector<8x128xf32>
    %1381 = tpu.reciprocal %1380 {approx = true} : vector<8x128xf32> -> vector<8x128xf32>
    %1382 = arith.mulf %1371, %1381 : vector<8x128xf32>
    %cst_263 = arith.constant 0.000000e+00 : f32
    %1383 = vector.broadcast %cst_263 : f32 to vector<8x128xf32>
    %1384 = arith.cmpf oge, %1373, %1383 : vector<8x128xf32>
    %cst_264 = arith.constant 1.000000e+00 : f32
    %1385 = vector.broadcast %cst_264 : f32 to vector<8x128xf32>
    %1386 = arith.subf %1385, %1382 : vector<8x128xf32>
    %cst_265 = arith.constant 3.000000e+00 : f32
    %1387 = vector.broadcast %cst_265 : f32 to vector<8x128xf32>
    %1388 = arith.addf %1387, %1382 : vector<8x128xf32>
    %1389 = arith.select %1384, %1386, %1388 : vector<8x128xi1>, vector<8x128xf32>
    %cst_266 = arith.constant 5.000000e-01 : f32
    %1390 = vector.broadcast %cst_266 : f32 to vector<8x128xf32>
    %1391 = arith.cmpf ogt, %717, %1390 : vector<8x128xf32>
    %cst_267 = arith.constant 1.000000e+01 : f32
    %1392 = vector.broadcast %cst_267 : f32 to vector<8x128xf32>
    %1393 = arith.select %1391, %1389, %1392 : vector<8x128xi1>, vector<8x128xf32>
    %1394 = arith.subf %754, %1056 : vector<8x128xf32>
    %1395 = arith.mulf %1394, %758 : vector<8x128xf32>
    %1396 = arith.subf %756, %1057 : vector<8x128xf32>
    %1397 = arith.mulf %1396, %758 : vector<8x128xf32>
    %1398 = math.absf %1395 : vector<8x128xf32>
    %1399 = math.absf %1397 : vector<8x128xf32>
    %1400 = arith.addf %1398, %1399 : vector<8x128xf32>
    %cst_268 = arith.constant 9.99999996E-13 : f32
    %1401 = vector.broadcast %cst_268 : f32 to vector<8x128xf32>
    %1402 = arith.cmpf ogt, %1400, %1401 : vector<8x128xf32>
    %cst_269 = arith.constant 1.000000e+00 : f32
    %1403 = vector.broadcast %cst_269 : f32 to vector<8x128xf32>
    %1404 = arith.select %1402, %1400, %1403 : vector<8x128xi1>, vector<8x128xf32>
    %1405 = tpu.reciprocal %1404 {approx = true} : vector<8x128xf32> -> vector<8x128xf32>
    %1406 = arith.mulf %1395, %1405 : vector<8x128xf32>
    %cst_270 = arith.constant 0.000000e+00 : f32
    %1407 = vector.broadcast %cst_270 : f32 to vector<8x128xf32>
    %1408 = arith.cmpf oge, %1397, %1407 : vector<8x128xf32>
    %cst_271 = arith.constant 1.000000e+00 : f32
    %1409 = vector.broadcast %cst_271 : f32 to vector<8x128xf32>
    %1410 = arith.subf %1409, %1406 : vector<8x128xf32>
    %cst_272 = arith.constant 3.000000e+00 : f32
    %1411 = vector.broadcast %cst_272 : f32 to vector<8x128xf32>
    %1412 = arith.addf %1411, %1406 : vector<8x128xf32>
    %1413 = arith.select %1408, %1410, %1412 : vector<8x128xi1>, vector<8x128xf32>
    %cst_273 = arith.constant 5.000000e-01 : f32
    %1414 = vector.broadcast %cst_273 : f32 to vector<8x128xf32>
    %1415 = arith.cmpf ogt, %758, %1414 : vector<8x128xf32>
    %cst_274 = arith.constant 1.000000e+01 : f32
    %1416 = vector.broadcast %cst_274 : f32 to vector<8x128xf32>
    %1417 = arith.select %1415, %1413, %1416 : vector<8x128xi1>, vector<8x128xf32>
    %1418 = arith.subf %795, %1056 : vector<8x128xf32>
    %1419 = arith.mulf %1418, %799 : vector<8x128xf32>
    %1420 = arith.subf %797, %1057 : vector<8x128xf32>
    %1421 = arith.mulf %1420, %799 : vector<8x128xf32>
    %1422 = math.absf %1419 : vector<8x128xf32>
    %1423 = math.absf %1421 : vector<8x128xf32>
    %1424 = arith.addf %1422, %1423 : vector<8x128xf32>
    %cst_275 = arith.constant 9.99999996E-13 : f32
    %1425 = vector.broadcast %cst_275 : f32 to vector<8x128xf32>
    %1426 = arith.cmpf ogt, %1424, %1425 : vector<8x128xf32>
    %cst_276 = arith.constant 1.000000e+00 : f32
    %1427 = vector.broadcast %cst_276 : f32 to vector<8x128xf32>
    %1428 = arith.select %1426, %1424, %1427 : vector<8x128xi1>, vector<8x128xf32>
    %1429 = tpu.reciprocal %1428 {approx = true} : vector<8x128xf32> -> vector<8x128xf32>
    %1430 = arith.mulf %1419, %1429 : vector<8x128xf32>
    %cst_277 = arith.constant 0.000000e+00 : f32
    %1431 = vector.broadcast %cst_277 : f32 to vector<8x128xf32>
    %1432 = arith.cmpf oge, %1421, %1431 : vector<8x128xf32>
    %cst_278 = arith.constant 1.000000e+00 : f32
    %1433 = vector.broadcast %cst_278 : f32 to vector<8x128xf32>
    %1434 = arith.subf %1433, %1430 : vector<8x128xf32>
    %cst_279 = arith.constant 3.000000e+00 : f32
    %1435 = vector.broadcast %cst_279 : f32 to vector<8x128xf32>
    %1436 = arith.addf %1435, %1430 : vector<8x128xf32>
    %1437 = arith.select %1432, %1434, %1436 : vector<8x128xi1>, vector<8x128xf32>
    %cst_280 = arith.constant 5.000000e-01 : f32
    %1438 = vector.broadcast %cst_280 : f32 to vector<8x128xf32>
    %1439 = arith.cmpf ogt, %799, %1438 : vector<8x128xf32>
    %cst_281 = arith.constant 1.000000e+01 : f32
    %1440 = vector.broadcast %cst_281 : f32 to vector<8x128xf32>
    %1441 = arith.select %1439, %1437, %1440 : vector<8x128xi1>, vector<8x128xf32>
    %1442 = arith.subf %39, %1056 : vector<8x128xf32>
    %1443 = arith.mulf %1442, %816 : vector<8x128xf32>
    %1444 = arith.subf %43, %1057 : vector<8x128xf32>
    %1445 = arith.mulf %1444, %816 : vector<8x128xf32>
    %1446 = math.absf %1443 : vector<8x128xf32>
    %1447 = math.absf %1445 : vector<8x128xf32>
    %1448 = arith.addf %1446, %1447 : vector<8x128xf32>
    %cst_282 = arith.constant 9.99999996E-13 : f32
    %1449 = vector.broadcast %cst_282 : f32 to vector<8x128xf32>
    %1450 = arith.cmpf ogt, %1448, %1449 : vector<8x128xf32>
    %cst_283 = arith.constant 1.000000e+00 : f32
    %1451 = vector.broadcast %cst_283 : f32 to vector<8x128xf32>
    %1452 = arith.select %1450, %1448, %1451 : vector<8x128xi1>, vector<8x128xf32>
    %1453 = tpu.reciprocal %1452 {approx = true} : vector<8x128xf32> -> vector<8x128xf32>
    %1454 = arith.mulf %1443, %1453 : vector<8x128xf32>
    %cst_284 = arith.constant 0.000000e+00 : f32
    %1455 = vector.broadcast %cst_284 : f32 to vector<8x128xf32>
    %1456 = arith.cmpf oge, %1445, %1455 : vector<8x128xf32>
    %cst_285 = arith.constant 1.000000e+00 : f32
    %1457 = vector.broadcast %cst_285 : f32 to vector<8x128xf32>
    %1458 = arith.subf %1457, %1454 : vector<8x128xf32>
    %cst_286 = arith.constant 3.000000e+00 : f32
    %1459 = vector.broadcast %cst_286 : f32 to vector<8x128xf32>
    %1460 = arith.addf %1459, %1454 : vector<8x128xf32>
    %1461 = arith.select %1456, %1458, %1460 : vector<8x128xi1>, vector<8x128xf32>
    %cst_287 = arith.constant 5.000000e-01 : f32
    %1462 = vector.broadcast %cst_287 : f32 to vector<8x128xf32>
    %1463 = arith.cmpf ogt, %816, %1462 : vector<8x128xf32>
    %cst_288 = arith.constant 1.000000e+01 : f32
    %1464 = vector.broadcast %cst_288 : f32 to vector<8x128xf32>
    %1465 = arith.select %1463, %1461, %1464 : vector<8x128xi1>, vector<8x128xf32>
    %1466 = arith.subf %63, %1056 : vector<8x128xf32>
    %1467 = arith.mulf %1466, %833 : vector<8x128xf32>
    %1468 = arith.subf %67, %1057 : vector<8x128xf32>
    %1469 = arith.mulf %1468, %833 : vector<8x128xf32>
    %1470 = math.absf %1467 : vector<8x128xf32>
    %1471 = math.absf %1469 : vector<8x128xf32>
    %1472 = arith.addf %1470, %1471 : vector<8x128xf32>
    %cst_289 = arith.constant 9.99999996E-13 : f32
    %1473 = vector.broadcast %cst_289 : f32 to vector<8x128xf32>
    %1474 = arith.cmpf ogt, %1472, %1473 : vector<8x128xf32>
    %cst_290 = arith.constant 1.000000e+00 : f32
    %1475 = vector.broadcast %cst_290 : f32 to vector<8x128xf32>
    %1476 = arith.select %1474, %1472, %1475 : vector<8x128xi1>, vector<8x128xf32>
    %1477 = tpu.reciprocal %1476 {approx = true} : vector<8x128xf32> -> vector<8x128xf32>
    %1478 = arith.mulf %1467, %1477 : vector<8x128xf32>
    %cst_291 = arith.constant 0.000000e+00 : f32
    %1479 = vector.broadcast %cst_291 : f32 to vector<8x128xf32>
    %1480 = arith.cmpf oge, %1469, %1479 : vector<8x128xf32>
    %cst_292 = arith.constant 1.000000e+00 : f32
    %1481 = vector.broadcast %cst_292 : f32 to vector<8x128xf32>
    %1482 = arith.subf %1481, %1478 : vector<8x128xf32>
    %cst_293 = arith.constant 3.000000e+00 : f32
    %1483 = vector.broadcast %cst_293 : f32 to vector<8x128xf32>
    %1484 = arith.addf %1483, %1478 : vector<8x128xf32>
    %1485 = arith.select %1480, %1482, %1484 : vector<8x128xi1>, vector<8x128xf32>
    %cst_294 = arith.constant 5.000000e-01 : f32
    %1486 = vector.broadcast %cst_294 : f32 to vector<8x128xf32>
    %1487 = arith.cmpf ogt, %833, %1486 : vector<8x128xf32>
    %cst_295 = arith.constant 1.000000e+01 : f32
    %1488 = vector.broadcast %cst_295 : f32 to vector<8x128xf32>
    %1489 = arith.select %1487, %1485, %1488 : vector<8x128xi1>, vector<8x128xf32>
    %1490 = arith.subf %87, %1056 : vector<8x128xf32>
    %1491 = arith.mulf %1490, %850 : vector<8x128xf32>
    %1492 = arith.subf %91, %1057 : vector<8x128xf32>
    %1493 = arith.mulf %1492, %850 : vector<8x128xf32>
    %1494 = math.absf %1491 : vector<8x128xf32>
    %1495 = math.absf %1493 : vector<8x128xf32>
    %1496 = arith.addf %1494, %1495 : vector<8x128xf32>
    %cst_296 = arith.constant 9.99999996E-13 : f32
    %1497 = vector.broadcast %cst_296 : f32 to vector<8x128xf32>
    %1498 = arith.cmpf ogt, %1496, %1497 : vector<8x128xf32>
    %cst_297 = arith.constant 1.000000e+00 : f32
    %1499 = vector.broadcast %cst_297 : f32 to vector<8x128xf32>
    %1500 = arith.select %1498, %1496, %1499 : vector<8x128xi1>, vector<8x128xf32>
    %1501 = tpu.reciprocal %1500 {approx = true} : vector<8x128xf32> -> vector<8x128xf32>
    %1502 = arith.mulf %1491, %1501 : vector<8x128xf32>
    %cst_298 = arith.constant 0.000000e+00 : f32
    %1503 = vector.broadcast %cst_298 : f32 to vector<8x128xf32>
    %1504 = arith.cmpf oge, %1493, %1503 : vector<8x128xf32>
    %cst_299 = arith.constant 1.000000e+00 : f32
    %1505 = vector.broadcast %cst_299 : f32 to vector<8x128xf32>
    %1506 = arith.subf %1505, %1502 : vector<8x128xf32>
    %cst_300 = arith.constant 3.000000e+00 : f32
    %1507 = vector.broadcast %cst_300 : f32 to vector<8x128xf32>
    %1508 = arith.addf %1507, %1502 : vector<8x128xf32>
    %1509 = arith.select %1504, %1506, %1508 : vector<8x128xi1>, vector<8x128xf32>
    %cst_301 = arith.constant 5.000000e-01 : f32
    %1510 = vector.broadcast %cst_301 : f32 to vector<8x128xf32>
    %1511 = arith.cmpf ogt, %850, %1510 : vector<8x128xf32>
    %cst_302 = arith.constant 1.000000e+01 : f32
    %1512 = vector.broadcast %cst_302 : f32 to vector<8x128xf32>
    %1513 = arith.select %1511, %1509, %1512 : vector<8x128xi1>, vector<8x128xf32>
    %1514 = arith.subf %111, %1056 : vector<8x128xf32>
    %1515 = arith.mulf %1514, %867 : vector<8x128xf32>
    %1516 = arith.subf %115, %1057 : vector<8x128xf32>
    %1517 = arith.mulf %1516, %867 : vector<8x128xf32>
    %1518 = math.absf %1515 : vector<8x128xf32>
    %1519 = math.absf %1517 : vector<8x128xf32>
    %1520 = arith.addf %1518, %1519 : vector<8x128xf32>
    %cst_303 = arith.constant 9.99999996E-13 : f32
    %1521 = vector.broadcast %cst_303 : f32 to vector<8x128xf32>
    %1522 = arith.cmpf ogt, %1520, %1521 : vector<8x128xf32>
    %cst_304 = arith.constant 1.000000e+00 : f32
    %1523 = vector.broadcast %cst_304 : f32 to vector<8x128xf32>
    %1524 = arith.select %1522, %1520, %1523 : vector<8x128xi1>, vector<8x128xf32>
    %1525 = tpu.reciprocal %1524 {approx = true} : vector<8x128xf32> -> vector<8x128xf32>
    %1526 = arith.mulf %1515, %1525 : vector<8x128xf32>
    %cst_305 = arith.constant 0.000000e+00 : f32
    %1527 = vector.broadcast %cst_305 : f32 to vector<8x128xf32>
    %1528 = arith.cmpf oge, %1517, %1527 : vector<8x128xf32>
    %cst_306 = arith.constant 1.000000e+00 : f32
    %1529 = vector.broadcast %cst_306 : f32 to vector<8x128xf32>
    %1530 = arith.subf %1529, %1526 : vector<8x128xf32>
    %cst_307 = arith.constant 3.000000e+00 : f32
    %1531 = vector.broadcast %cst_307 : f32 to vector<8x128xf32>
    %1532 = arith.addf %1531, %1526 : vector<8x128xf32>
    %1533 = arith.select %1528, %1530, %1532 : vector<8x128xi1>, vector<8x128xf32>
    %cst_308 = arith.constant 5.000000e-01 : f32
    %1534 = vector.broadcast %cst_308 : f32 to vector<8x128xf32>
    %1535 = arith.cmpf ogt, %867, %1534 : vector<8x128xf32>
    %cst_309 = arith.constant 1.000000e+01 : f32
    %1536 = vector.broadcast %cst_309 : f32 to vector<8x128xf32>
    %1537 = arith.select %1535, %1533, %1536 : vector<8x128xi1>, vector<8x128xf32>
    %1538 = arith.subf %51, %1056 : vector<8x128xf32>
    %1539 = arith.mulf %1538, %884 : vector<8x128xf32>
    %1540 = arith.subf %55, %1057 : vector<8x128xf32>
    %1541 = arith.mulf %1540, %884 : vector<8x128xf32>
    %1542 = math.absf %1539 : vector<8x128xf32>
    %1543 = math.absf %1541 : vector<8x128xf32>
    %1544 = arith.addf %1542, %1543 : vector<8x128xf32>
    %cst_310 = arith.constant 9.99999996E-13 : f32
    %1545 = vector.broadcast %cst_310 : f32 to vector<8x128xf32>
    %1546 = arith.cmpf ogt, %1544, %1545 : vector<8x128xf32>
    %cst_311 = arith.constant 1.000000e+00 : f32
    %1547 = vector.broadcast %cst_311 : f32 to vector<8x128xf32>
    %1548 = arith.select %1546, %1544, %1547 : vector<8x128xi1>, vector<8x128xf32>
    %1549 = tpu.reciprocal %1548 {approx = true} : vector<8x128xf32> -> vector<8x128xf32>
    %1550 = arith.mulf %1539, %1549 : vector<8x128xf32>
    %cst_312 = arith.constant 0.000000e+00 : f32
    %1551 = vector.broadcast %cst_312 : f32 to vector<8x128xf32>
    %1552 = arith.cmpf oge, %1541, %1551 : vector<8x128xf32>
    %cst_313 = arith.constant 1.000000e+00 : f32
    %1553 = vector.broadcast %cst_313 : f32 to vector<8x128xf32>
    %1554 = arith.subf %1553, %1550 : vector<8x128xf32>
    %cst_314 = arith.constant 3.000000e+00 : f32
    %1555 = vector.broadcast %cst_314 : f32 to vector<8x128xf32>
    %1556 = arith.addf %1555, %1550 : vector<8x128xf32>
    %1557 = arith.select %1552, %1554, %1556 : vector<8x128xi1>, vector<8x128xf32>
    %cst_315 = arith.constant 5.000000e-01 : f32
    %1558 = vector.broadcast %cst_315 : f32 to vector<8x128xf32>
    %1559 = arith.cmpf ogt, %884, %1558 : vector<8x128xf32>
    %cst_316 = arith.constant 1.000000e+01 : f32
    %1560 = vector.broadcast %cst_316 : f32 to vector<8x128xf32>
    %1561 = arith.select %1559, %1557, %1560 : vector<8x128xi1>, vector<8x128xf32>
    %1562 = arith.subf %75, %1056 : vector<8x128xf32>
    %1563 = arith.mulf %1562, %901 : vector<8x128xf32>
    %1564 = arith.subf %79, %1057 : vector<8x128xf32>
    %1565 = arith.mulf %1564, %901 : vector<8x128xf32>
    %1566 = math.absf %1563 : vector<8x128xf32>
    %1567 = math.absf %1565 : vector<8x128xf32>
    %1568 = arith.addf %1566, %1567 : vector<8x128xf32>
    %cst_317 = arith.constant 9.99999996E-13 : f32
    %1569 = vector.broadcast %cst_317 : f32 to vector<8x128xf32>
    %1570 = arith.cmpf ogt, %1568, %1569 : vector<8x128xf32>
    %cst_318 = arith.constant 1.000000e+00 : f32
    %1571 = vector.broadcast %cst_318 : f32 to vector<8x128xf32>
    %1572 = arith.select %1570, %1568, %1571 : vector<8x128xi1>, vector<8x128xf32>
    %1573 = tpu.reciprocal %1572 {approx = true} : vector<8x128xf32> -> vector<8x128xf32>
    %1574 = arith.mulf %1563, %1573 : vector<8x128xf32>
    %cst_319 = arith.constant 0.000000e+00 : f32
    %1575 = vector.broadcast %cst_319 : f32 to vector<8x128xf32>
    %1576 = arith.cmpf oge, %1565, %1575 : vector<8x128xf32>
    %cst_320 = arith.constant 1.000000e+00 : f32
    %1577 = vector.broadcast %cst_320 : f32 to vector<8x128xf32>
    %1578 = arith.subf %1577, %1574 : vector<8x128xf32>
    %cst_321 = arith.constant 3.000000e+00 : f32
    %1579 = vector.broadcast %cst_321 : f32 to vector<8x128xf32>
    %1580 = arith.addf %1579, %1574 : vector<8x128xf32>
    %1581 = arith.select %1576, %1578, %1580 : vector<8x128xi1>, vector<8x128xf32>
    %cst_322 = arith.constant 5.000000e-01 : f32
    %1582 = vector.broadcast %cst_322 : f32 to vector<8x128xf32>
    %1583 = arith.cmpf ogt, %901, %1582 : vector<8x128xf32>
    %cst_323 = arith.constant 1.000000e+01 : f32
    %1584 = vector.broadcast %cst_323 : f32 to vector<8x128xf32>
    %1585 = arith.select %1583, %1581, %1584 : vector<8x128xi1>, vector<8x128xf32>
    %1586 = arith.subf %99, %1056 : vector<8x128xf32>
    %1587 = arith.mulf %1586, %918 : vector<8x128xf32>
    %1588 = arith.subf %103, %1057 : vector<8x128xf32>
    %1589 = arith.mulf %1588, %918 : vector<8x128xf32>
    %1590 = math.absf %1587 : vector<8x128xf32>
    %1591 = math.absf %1589 : vector<8x128xf32>
    %1592 = arith.addf %1590, %1591 : vector<8x128xf32>
    %cst_324 = arith.constant 9.99999996E-13 : f32
    %1593 = vector.broadcast %cst_324 : f32 to vector<8x128xf32>
    %1594 = arith.cmpf ogt, %1592, %1593 : vector<8x128xf32>
    %cst_325 = arith.constant 1.000000e+00 : f32
    %1595 = vector.broadcast %cst_325 : f32 to vector<8x128xf32>
    %1596 = arith.select %1594, %1592, %1595 : vector<8x128xi1>, vector<8x128xf32>
    %1597 = tpu.reciprocal %1596 {approx = true} : vector<8x128xf32> -> vector<8x128xf32>
    %1598 = arith.mulf %1587, %1597 : vector<8x128xf32>
    %cst_326 = arith.constant 0.000000e+00 : f32
    %1599 = vector.broadcast %cst_326 : f32 to vector<8x128xf32>
    %1600 = arith.cmpf oge, %1589, %1599 : vector<8x128xf32>
    %cst_327 = arith.constant 1.000000e+00 : f32
    %1601 = vector.broadcast %cst_327 : f32 to vector<8x128xf32>
    %1602 = arith.subf %1601, %1598 : vector<8x128xf32>
    %cst_328 = arith.constant 3.000000e+00 : f32
    %1603 = vector.broadcast %cst_328 : f32 to vector<8x128xf32>
    %1604 = arith.addf %1603, %1598 : vector<8x128xf32>
    %1605 = arith.select %1600, %1602, %1604 : vector<8x128xi1>, vector<8x128xf32>
    %cst_329 = arith.constant 5.000000e-01 : f32
    %1606 = vector.broadcast %cst_329 : f32 to vector<8x128xf32>
    %1607 = arith.cmpf ogt, %918, %1606 : vector<8x128xf32>
    %cst_330 = arith.constant 1.000000e+01 : f32
    %1608 = vector.broadcast %cst_330 : f32 to vector<8x128xf32>
    %1609 = arith.select %1607, %1605, %1608 : vector<8x128xi1>, vector<8x128xf32>
    %1610 = arith.subf %123, %1056 : vector<8x128xf32>
    %1611 = arith.mulf %1610, %935 : vector<8x128xf32>
    %1612 = arith.subf %127, %1057 : vector<8x128xf32>
    %1613 = arith.mulf %1612, %935 : vector<8x128xf32>
    %1614 = math.absf %1611 : vector<8x128xf32>
    %1615 = math.absf %1613 : vector<8x128xf32>
    %1616 = arith.addf %1614, %1615 : vector<8x128xf32>
    %cst_331 = arith.constant 9.99999996E-13 : f32
    %1617 = vector.broadcast %cst_331 : f32 to vector<8x128xf32>
    %1618 = arith.cmpf ogt, %1616, %1617 : vector<8x128xf32>
    %cst_332 = arith.constant 1.000000e+00 : f32
    %1619 = vector.broadcast %cst_332 : f32 to vector<8x128xf32>
    %1620 = arith.select %1618, %1616, %1619 : vector<8x128xi1>, vector<8x128xf32>
    %1621 = tpu.reciprocal %1620 {approx = true} : vector<8x128xf32> -> vector<8x128xf32>
    %1622 = arith.mulf %1611, %1621 : vector<8x128xf32>
    %cst_333 = arith.constant 0.000000e+00 : f32
    %1623 = vector.broadcast %cst_333 : f32 to vector<8x128xf32>
    %1624 = arith.cmpf oge, %1613, %1623 : vector<8x128xf32>
    %cst_334 = arith.constant 1.000000e+00 : f32
    %1625 = vector.broadcast %cst_334 : f32 to vector<8x128xf32>
    %1626 = arith.subf %1625, %1622 : vector<8x128xf32>
    %cst_335 = arith.constant 3.000000e+00 : f32
    %1627 = vector.broadcast %cst_335 : f32 to vector<8x128xf32>
    %1628 = arith.addf %1627, %1622 : vector<8x128xf32>
    %1629 = arith.select %1624, %1626, %1628 : vector<8x128xi1>, vector<8x128xf32>
    %cst_336 = arith.constant 5.000000e-01 : f32
    %1630 = vector.broadcast %cst_336 : f32 to vector<8x128xf32>
    %1631 = arith.cmpf ogt, %935, %1630 : vector<8x128xf32>
    %cst_337 = arith.constant 1.000000e+01 : f32
    %1632 = vector.broadcast %cst_337 : f32 to vector<8x128xf32>
    %1633 = arith.select %1631, %1629, %1632 : vector<8x128xi1>, vector<8x128xf32>
    %1634 = arith.cmpf olt, %1105, %1081 : vector<8x128xf32>
    %1635 = arith.minimumf %1081, %1105 : vector<8x128xf32>
    %1636 = arith.maximumf %1081, %1105 : vector<8x128xf32>
    %1637 = arith.select %1634, %1083, %1059 : vector<8x128xi1>, vector<8x128xf32>
    %1638 = arith.select %1634, %1059, %1083 : vector<8x128xi1>, vector<8x128xf32>
    %1639 = arith.select %1634, %1085, %1061 : vector<8x128xi1>, vector<8x128xf32>
    %1640 = arith.select %1634, %1061, %1085 : vector<8x128xi1>, vector<8x128xf32>
    %1641 = arith.cmpf olt, %1153, %1129 : vector<8x128xf32>
    %1642 = arith.minimumf %1129, %1153 : vector<8x128xf32>
    %1643 = arith.maximumf %1129, %1153 : vector<8x128xf32>
    %1644 = arith.select %1641, %1131, %1107 : vector<8x128xi1>, vector<8x128xf32>
    %1645 = arith.select %1641, %1107, %1131 : vector<8x128xi1>, vector<8x128xf32>
    %1646 = arith.select %1641, %1133, %1109 : vector<8x128xi1>, vector<8x128xf32>
    %1647 = arith.select %1641, %1109, %1133 : vector<8x128xi1>, vector<8x128xf32>
    %1648 = arith.cmpf olt, %1642, %1635 : vector<8x128xf32>
    %1649 = arith.minimumf %1635, %1642 : vector<8x128xf32>
    %1650 = arith.maximumf %1635, %1642 : vector<8x128xf32>
    %1651 = arith.select %1648, %1644, %1637 : vector<8x128xi1>, vector<8x128xf32>
    %1652 = arith.select %1648, %1637, %1644 : vector<8x128xi1>, vector<8x128xf32>
    %1653 = arith.select %1648, %1646, %1639 : vector<8x128xi1>, vector<8x128xf32>
    %1654 = arith.select %1648, %1639, %1646 : vector<8x128xi1>, vector<8x128xf32>
    %1655 = arith.cmpf olt, %1643, %1636 : vector<8x128xf32>
    %1656 = arith.minimumf %1636, %1643 : vector<8x128xf32>
    %1657 = arith.maximumf %1636, %1643 : vector<8x128xf32>
    %1658 = arith.select %1655, %1645, %1638 : vector<8x128xi1>, vector<8x128xf32>
    %1659 = arith.select %1655, %1638, %1645 : vector<8x128xi1>, vector<8x128xf32>
    %1660 = arith.select %1655, %1647, %1640 : vector<8x128xi1>, vector<8x128xf32>
    %1661 = arith.select %1655, %1640, %1647 : vector<8x128xi1>, vector<8x128xf32>
    %1662 = arith.cmpf olt, %1650, %1656 : vector<8x128xf32>
    %1663 = arith.minimumf %1656, %1650 : vector<8x128xf32>
    %1664 = arith.maximumf %1656, %1650 : vector<8x128xf32>
    %1665 = arith.select %1662, %1652, %1658 : vector<8x128xi1>, vector<8x128xf32>
    %1666 = arith.select %1662, %1658, %1652 : vector<8x128xi1>, vector<8x128xf32>
    %1667 = arith.select %1662, %1654, %1660 : vector<8x128xi1>, vector<8x128xf32>
    %1668 = arith.select %1662, %1660, %1654 : vector<8x128xi1>, vector<8x128xf32>
    %1669 = arith.cmpf olt, %1201, %1177 : vector<8x128xf32>
    %1670 = arith.minimumf %1177, %1201 : vector<8x128xf32>
    %1671 = arith.maximumf %1177, %1201 : vector<8x128xf32>
    %1672 = arith.select %1669, %1179, %1155 : vector<8x128xi1>, vector<8x128xf32>
    %1673 = arith.select %1669, %1155, %1179 : vector<8x128xi1>, vector<8x128xf32>
    %1674 = arith.select %1669, %1181, %1157 : vector<8x128xi1>, vector<8x128xf32>
    %1675 = arith.select %1669, %1157, %1181 : vector<8x128xi1>, vector<8x128xf32>
    %1676 = arith.cmpf olt, %1249, %1225 : vector<8x128xf32>
    %1677 = arith.minimumf %1225, %1249 : vector<8x128xf32>
    %1678 = arith.maximumf %1225, %1249 : vector<8x128xf32>
    %1679 = arith.select %1676, %1227, %1203 : vector<8x128xi1>, vector<8x128xf32>
    %1680 = arith.select %1676, %1203, %1227 : vector<8x128xi1>, vector<8x128xf32>
    %1681 = arith.select %1676, %1229, %1205 : vector<8x128xi1>, vector<8x128xf32>
    %1682 = arith.select %1676, %1205, %1229 : vector<8x128xi1>, vector<8x128xf32>
    %1683 = arith.cmpf olt, %1677, %1670 : vector<8x128xf32>
    %1684 = arith.minimumf %1670, %1677 : vector<8x128xf32>
    %1685 = arith.maximumf %1670, %1677 : vector<8x128xf32>
    %1686 = arith.select %1683, %1679, %1672 : vector<8x128xi1>, vector<8x128xf32>
    %1687 = arith.select %1683, %1672, %1679 : vector<8x128xi1>, vector<8x128xf32>
    %1688 = arith.select %1683, %1681, %1674 : vector<8x128xi1>, vector<8x128xf32>
    %1689 = arith.select %1683, %1674, %1681 : vector<8x128xi1>, vector<8x128xf32>
    %1690 = arith.cmpf olt, %1678, %1671 : vector<8x128xf32>
    %1691 = arith.minimumf %1671, %1678 : vector<8x128xf32>
    %1692 = arith.maximumf %1671, %1678 : vector<8x128xf32>
    %1693 = arith.select %1690, %1680, %1673 : vector<8x128xi1>, vector<8x128xf32>
    %1694 = arith.select %1690, %1673, %1680 : vector<8x128xi1>, vector<8x128xf32>
    %1695 = arith.select %1690, %1682, %1675 : vector<8x128xi1>, vector<8x128xf32>
    %1696 = arith.select %1690, %1675, %1682 : vector<8x128xi1>, vector<8x128xf32>
    %1697 = arith.cmpf olt, %1685, %1691 : vector<8x128xf32>
    %1698 = arith.minimumf %1691, %1685 : vector<8x128xf32>
    %1699 = arith.maximumf %1691, %1685 : vector<8x128xf32>
    %1700 = arith.select %1697, %1687, %1693 : vector<8x128xi1>, vector<8x128xf32>
    %1701 = arith.select %1697, %1693, %1687 : vector<8x128xi1>, vector<8x128xf32>
    %1702 = arith.select %1697, %1689, %1695 : vector<8x128xi1>, vector<8x128xf32>
    %1703 = arith.select %1697, %1695, %1689 : vector<8x128xi1>, vector<8x128xf32>
    %1704 = arith.cmpf olt, %1684, %1649 : vector<8x128xf32>
    %1705 = arith.minimumf %1649, %1684 : vector<8x128xf32>
    %1706 = arith.maximumf %1649, %1684 : vector<8x128xf32>
    %1707 = arith.select %1704, %1686, %1651 : vector<8x128xi1>, vector<8x128xf32>
    %1708 = arith.select %1704, %1651, %1686 : vector<8x128xi1>, vector<8x128xf32>
    %1709 = arith.select %1704, %1688, %1653 : vector<8x128xi1>, vector<8x128xf32>
    %1710 = arith.select %1704, %1653, %1688 : vector<8x128xi1>, vector<8x128xf32>
    %1711 = arith.cmpf olt, %1699, %1664 : vector<8x128xf32>
    %1712 = arith.minimumf %1664, %1699 : vector<8x128xf32>
    %1713 = arith.maximumf %1664, %1699 : vector<8x128xf32>
    %1714 = arith.select %1711, %1701, %1666 : vector<8x128xi1>, vector<8x128xf32>
    %1715 = arith.select %1711, %1666, %1701 : vector<8x128xi1>, vector<8x128xf32>
    %1716 = arith.select %1711, %1703, %1668 : vector<8x128xi1>, vector<8x128xf32>
    %1717 = arith.select %1711, %1668, %1703 : vector<8x128xi1>, vector<8x128xf32>
    %1718 = arith.cmpf olt, %1706, %1712 : vector<8x128xf32>
    %1719 = arith.minimumf %1712, %1706 : vector<8x128xf32>
    %1720 = arith.maximumf %1712, %1706 : vector<8x128xf32>
    %1721 = arith.select %1718, %1708, %1714 : vector<8x128xi1>, vector<8x128xf32>
    %1722 = arith.select %1718, %1714, %1708 : vector<8x128xi1>, vector<8x128xf32>
    %1723 = arith.select %1718, %1710, %1716 : vector<8x128xi1>, vector<8x128xf32>
    %1724 = arith.select %1718, %1716, %1710 : vector<8x128xi1>, vector<8x128xf32>
    %1725 = arith.cmpf olt, %1698, %1663 : vector<8x128xf32>
    %1726 = arith.minimumf %1663, %1698 : vector<8x128xf32>
    %1727 = arith.maximumf %1663, %1698 : vector<8x128xf32>
    %1728 = arith.select %1725, %1700, %1665 : vector<8x128xi1>, vector<8x128xf32>
    %1729 = arith.select %1725, %1665, %1700 : vector<8x128xi1>, vector<8x128xf32>
    %1730 = arith.select %1725, %1702, %1667 : vector<8x128xi1>, vector<8x128xf32>
    %1731 = arith.select %1725, %1667, %1702 : vector<8x128xi1>, vector<8x128xf32>
    %1732 = arith.cmpf olt, %1692, %1657 : vector<8x128xf32>
    %1733 = arith.minimumf %1657, %1692 : vector<8x128xf32>
    %1734 = arith.maximumf %1657, %1692 : vector<8x128xf32>
    %1735 = arith.select %1732, %1694, %1659 : vector<8x128xi1>, vector<8x128xf32>
    %1736 = arith.select %1732, %1659, %1694 : vector<8x128xi1>, vector<8x128xf32>
    %1737 = arith.select %1732, %1696, %1661 : vector<8x128xi1>, vector<8x128xf32>
    %1738 = arith.select %1732, %1661, %1696 : vector<8x128xi1>, vector<8x128xf32>
    %1739 = arith.cmpf olt, %1727, %1733 : vector<8x128xf32>
    %1740 = arith.minimumf %1733, %1727 : vector<8x128xf32>
    %1741 = arith.maximumf %1733, %1727 : vector<8x128xf32>
    %1742 = arith.select %1739, %1729, %1735 : vector<8x128xi1>, vector<8x128xf32>
    %1743 = arith.select %1739, %1735, %1729 : vector<8x128xi1>, vector<8x128xf32>
    %1744 = arith.select %1739, %1731, %1737 : vector<8x128xi1>, vector<8x128xf32>
    %1745 = arith.select %1739, %1737, %1731 : vector<8x128xi1>, vector<8x128xf32>
    %1746 = arith.cmpf olt, %1719, %1726 : vector<8x128xf32>
    %1747 = arith.minimumf %1726, %1719 : vector<8x128xf32>
    %1748 = arith.maximumf %1726, %1719 : vector<8x128xf32>
    %1749 = arith.select %1746, %1721, %1728 : vector<8x128xi1>, vector<8x128xf32>
    %1750 = arith.select %1746, %1728, %1721 : vector<8x128xi1>, vector<8x128xf32>
    %1751 = arith.select %1746, %1723, %1730 : vector<8x128xi1>, vector<8x128xf32>
    %1752 = arith.select %1746, %1730, %1723 : vector<8x128xi1>, vector<8x128xf32>
    %1753 = arith.cmpf olt, %1720, %1740 : vector<8x128xf32>
    %1754 = arith.minimumf %1740, %1720 : vector<8x128xf32>
    %1755 = arith.maximumf %1740, %1720 : vector<8x128xf32>
    %1756 = arith.select %1753, %1722, %1742 : vector<8x128xi1>, vector<8x128xf32>
    %1757 = arith.select %1753, %1742, %1722 : vector<8x128xi1>, vector<8x128xf32>
    %1758 = arith.select %1753, %1724, %1744 : vector<8x128xi1>, vector<8x128xf32>
    %1759 = arith.select %1753, %1744, %1724 : vector<8x128xi1>, vector<8x128xf32>
    %1760 = arith.cmpf olt, %1713, %1741 : vector<8x128xf32>
    %1761 = arith.minimumf %1741, %1713 : vector<8x128xf32>
    %1762 = arith.maximumf %1741, %1713 : vector<8x128xf32>
    %1763 = arith.select %1760, %1715, %1743 : vector<8x128xi1>, vector<8x128xf32>
    %1764 = arith.select %1760, %1743, %1715 : vector<8x128xi1>, vector<8x128xf32>
    %1765 = arith.select %1760, %1717, %1745 : vector<8x128xi1>, vector<8x128xf32>
    %1766 = arith.select %1760, %1745, %1717 : vector<8x128xi1>, vector<8x128xf32>
    %1767 = arith.cmpf olt, %1297, %1273 : vector<8x128xf32>
    %1768 = arith.minimumf %1273, %1297 : vector<8x128xf32>
    %1769 = arith.maximumf %1273, %1297 : vector<8x128xf32>
    %1770 = arith.select %1767, %1275, %1251 : vector<8x128xi1>, vector<8x128xf32>
    %1771 = arith.select %1767, %1251, %1275 : vector<8x128xi1>, vector<8x128xf32>
    %1772 = arith.select %1767, %1277, %1253 : vector<8x128xi1>, vector<8x128xf32>
    %1773 = arith.select %1767, %1253, %1277 : vector<8x128xi1>, vector<8x128xf32>
    %1774 = arith.cmpf olt, %1345, %1321 : vector<8x128xf32>
    %1775 = arith.minimumf %1321, %1345 : vector<8x128xf32>
    %1776 = arith.maximumf %1321, %1345 : vector<8x128xf32>
    %1777 = arith.select %1774, %1323, %1299 : vector<8x128xi1>, vector<8x128xf32>
    %1778 = arith.select %1774, %1299, %1323 : vector<8x128xi1>, vector<8x128xf32>
    %1779 = arith.select %1774, %1325, %1301 : vector<8x128xi1>, vector<8x128xf32>
    %1780 = arith.select %1774, %1301, %1325 : vector<8x128xi1>, vector<8x128xf32>
    %1781 = arith.cmpf olt, %1775, %1768 : vector<8x128xf32>
    %1782 = arith.minimumf %1768, %1775 : vector<8x128xf32>
    %1783 = arith.maximumf %1768, %1775 : vector<8x128xf32>
    %1784 = arith.select %1781, %1777, %1770 : vector<8x128xi1>, vector<8x128xf32>
    %1785 = arith.select %1781, %1770, %1777 : vector<8x128xi1>, vector<8x128xf32>
    %1786 = arith.select %1781, %1779, %1772 : vector<8x128xi1>, vector<8x128xf32>
    %1787 = arith.select %1781, %1772, %1779 : vector<8x128xi1>, vector<8x128xf32>
    %1788 = arith.cmpf olt, %1776, %1769 : vector<8x128xf32>
    %1789 = arith.minimumf %1769, %1776 : vector<8x128xf32>
    %1790 = arith.maximumf %1769, %1776 : vector<8x128xf32>
    %1791 = arith.select %1788, %1778, %1771 : vector<8x128xi1>, vector<8x128xf32>
    %1792 = arith.select %1788, %1771, %1778 : vector<8x128xi1>, vector<8x128xf32>
    %1793 = arith.select %1788, %1780, %1773 : vector<8x128xi1>, vector<8x128xf32>
    %1794 = arith.select %1788, %1773, %1780 : vector<8x128xi1>, vector<8x128xf32>
    %1795 = arith.cmpf olt, %1783, %1789 : vector<8x128xf32>
    %1796 = arith.minimumf %1789, %1783 : vector<8x128xf32>
    %1797 = arith.maximumf %1789, %1783 : vector<8x128xf32>
    %1798 = arith.select %1795, %1785, %1791 : vector<8x128xi1>, vector<8x128xf32>
    %1799 = arith.select %1795, %1791, %1785 : vector<8x128xi1>, vector<8x128xf32>
    %1800 = arith.select %1795, %1787, %1793 : vector<8x128xi1>, vector<8x128xf32>
    %1801 = arith.select %1795, %1793, %1787 : vector<8x128xi1>, vector<8x128xf32>
    %1802 = arith.cmpf olt, %1393, %1369 : vector<8x128xf32>
    %1803 = arith.minimumf %1369, %1393 : vector<8x128xf32>
    %1804 = arith.maximumf %1369, %1393 : vector<8x128xf32>
    %1805 = arith.select %1802, %1371, %1347 : vector<8x128xi1>, vector<8x128xf32>
    %1806 = arith.select %1802, %1347, %1371 : vector<8x128xi1>, vector<8x128xf32>
    %1807 = arith.select %1802, %1373, %1349 : vector<8x128xi1>, vector<8x128xf32>
    %1808 = arith.select %1802, %1349, %1373 : vector<8x128xi1>, vector<8x128xf32>
    %1809 = arith.cmpf olt, %1441, %1417 : vector<8x128xf32>
    %1810 = arith.minimumf %1417, %1441 : vector<8x128xf32>
    %1811 = arith.maximumf %1417, %1441 : vector<8x128xf32>
    %1812 = arith.select %1809, %1419, %1395 : vector<8x128xi1>, vector<8x128xf32>
    %1813 = arith.select %1809, %1395, %1419 : vector<8x128xi1>, vector<8x128xf32>
    %1814 = arith.select %1809, %1421, %1397 : vector<8x128xi1>, vector<8x128xf32>
    %1815 = arith.select %1809, %1397, %1421 : vector<8x128xi1>, vector<8x128xf32>
    %1816 = arith.cmpf olt, %1810, %1803 : vector<8x128xf32>
    %1817 = arith.minimumf %1803, %1810 : vector<8x128xf32>
    %1818 = arith.maximumf %1803, %1810 : vector<8x128xf32>
    %1819 = arith.select %1816, %1812, %1805 : vector<8x128xi1>, vector<8x128xf32>
    %1820 = arith.select %1816, %1805, %1812 : vector<8x128xi1>, vector<8x128xf32>
    %1821 = arith.select %1816, %1814, %1807 : vector<8x128xi1>, vector<8x128xf32>
    %1822 = arith.select %1816, %1807, %1814 : vector<8x128xi1>, vector<8x128xf32>
    %1823 = arith.cmpf olt, %1811, %1804 : vector<8x128xf32>
    %1824 = arith.minimumf %1804, %1811 : vector<8x128xf32>
    %1825 = arith.maximumf %1804, %1811 : vector<8x128xf32>
    %1826 = arith.select %1823, %1813, %1806 : vector<8x128xi1>, vector<8x128xf32>
    %1827 = arith.select %1823, %1806, %1813 : vector<8x128xi1>, vector<8x128xf32>
    %1828 = arith.select %1823, %1815, %1808 : vector<8x128xi1>, vector<8x128xf32>
    %1829 = arith.select %1823, %1808, %1815 : vector<8x128xi1>, vector<8x128xf32>
    %1830 = arith.cmpf olt, %1818, %1824 : vector<8x128xf32>
    %1831 = arith.minimumf %1824, %1818 : vector<8x128xf32>
    %1832 = arith.maximumf %1824, %1818 : vector<8x128xf32>
    %1833 = arith.select %1830, %1820, %1826 : vector<8x128xi1>, vector<8x128xf32>
    %1834 = arith.select %1830, %1826, %1820 : vector<8x128xi1>, vector<8x128xf32>
    %1835 = arith.select %1830, %1822, %1828 : vector<8x128xi1>, vector<8x128xf32>
    %1836 = arith.select %1830, %1828, %1822 : vector<8x128xi1>, vector<8x128xf32>
    %1837 = arith.cmpf olt, %1817, %1782 : vector<8x128xf32>
    %1838 = arith.minimumf %1782, %1817 : vector<8x128xf32>
    %1839 = arith.maximumf %1782, %1817 : vector<8x128xf32>
    %1840 = arith.select %1837, %1819, %1784 : vector<8x128xi1>, vector<8x128xf32>
    %1841 = arith.select %1837, %1784, %1819 : vector<8x128xi1>, vector<8x128xf32>
    %1842 = arith.select %1837, %1821, %1786 : vector<8x128xi1>, vector<8x128xf32>
    %1843 = arith.select %1837, %1786, %1821 : vector<8x128xi1>, vector<8x128xf32>
    %1844 = arith.cmpf olt, %1832, %1797 : vector<8x128xf32>
    %1845 = arith.minimumf %1797, %1832 : vector<8x128xf32>
    %1846 = arith.maximumf %1797, %1832 : vector<8x128xf32>
    %1847 = arith.select %1844, %1834, %1799 : vector<8x128xi1>, vector<8x128xf32>
    %1848 = arith.select %1844, %1799, %1834 : vector<8x128xi1>, vector<8x128xf32>
    %1849 = arith.select %1844, %1836, %1801 : vector<8x128xi1>, vector<8x128xf32>
    %1850 = arith.select %1844, %1801, %1836 : vector<8x128xi1>, vector<8x128xf32>
    %1851 = arith.cmpf olt, %1839, %1845 : vector<8x128xf32>
    %1852 = arith.minimumf %1845, %1839 : vector<8x128xf32>
    %1853 = arith.maximumf %1845, %1839 : vector<8x128xf32>
    %1854 = arith.select %1851, %1841, %1847 : vector<8x128xi1>, vector<8x128xf32>
    %1855 = arith.select %1851, %1847, %1841 : vector<8x128xi1>, vector<8x128xf32>
    %1856 = arith.select %1851, %1843, %1849 : vector<8x128xi1>, vector<8x128xf32>
    %1857 = arith.select %1851, %1849, %1843 : vector<8x128xi1>, vector<8x128xf32>
    %1858 = arith.cmpf olt, %1831, %1796 : vector<8x128xf32>
    %1859 = arith.minimumf %1796, %1831 : vector<8x128xf32>
    %1860 = arith.maximumf %1796, %1831 : vector<8x128xf32>
    %1861 = arith.select %1858, %1833, %1798 : vector<8x128xi1>, vector<8x128xf32>
    %1862 = arith.select %1858, %1798, %1833 : vector<8x128xi1>, vector<8x128xf32>
    %1863 = arith.select %1858, %1835, %1800 : vector<8x128xi1>, vector<8x128xf32>
    %1864 = arith.select %1858, %1800, %1835 : vector<8x128xi1>, vector<8x128xf32>
    %1865 = arith.cmpf olt, %1825, %1790 : vector<8x128xf32>
    %1866 = arith.minimumf %1790, %1825 : vector<8x128xf32>
    %1867 = arith.maximumf %1790, %1825 : vector<8x128xf32>
    %1868 = arith.select %1865, %1827, %1792 : vector<8x128xi1>, vector<8x128xf32>
    %1869 = arith.select %1865, %1792, %1827 : vector<8x128xi1>, vector<8x128xf32>
    %1870 = arith.select %1865, %1829, %1794 : vector<8x128xi1>, vector<8x128xf32>
    %1871 = arith.select %1865, %1794, %1829 : vector<8x128xi1>, vector<8x128xf32>
    %1872 = arith.cmpf olt, %1860, %1866 : vector<8x128xf32>
    %1873 = arith.minimumf %1866, %1860 : vector<8x128xf32>
    %1874 = arith.maximumf %1866, %1860 : vector<8x128xf32>
    %1875 = arith.select %1872, %1862, %1868 : vector<8x128xi1>, vector<8x128xf32>
    %1876 = arith.select %1872, %1868, %1862 : vector<8x128xi1>, vector<8x128xf32>
    %1877 = arith.select %1872, %1864, %1870 : vector<8x128xi1>, vector<8x128xf32>
    %1878 = arith.select %1872, %1870, %1864 : vector<8x128xi1>, vector<8x128xf32>
    %1879 = arith.cmpf olt, %1852, %1859 : vector<8x128xf32>
    %1880 = arith.minimumf %1859, %1852 : vector<8x128xf32>
    %1881 = arith.maximumf %1859, %1852 : vector<8x128xf32>
    %1882 = arith.select %1879, %1854, %1861 : vector<8x128xi1>, vector<8x128xf32>
    %1883 = arith.select %1879, %1861, %1854 : vector<8x128xi1>, vector<8x128xf32>
    %1884 = arith.select %1879, %1856, %1863 : vector<8x128xi1>, vector<8x128xf32>
    %1885 = arith.select %1879, %1863, %1856 : vector<8x128xi1>, vector<8x128xf32>
    %1886 = arith.cmpf olt, %1853, %1873 : vector<8x128xf32>
    %1887 = arith.minimumf %1873, %1853 : vector<8x128xf32>
    %1888 = arith.maximumf %1873, %1853 : vector<8x128xf32>
    %1889 = arith.select %1886, %1855, %1875 : vector<8x128xi1>, vector<8x128xf32>
    %1890 = arith.select %1886, %1875, %1855 : vector<8x128xi1>, vector<8x128xf32>
    %1891 = arith.select %1886, %1857, %1877 : vector<8x128xi1>, vector<8x128xf32>
    %1892 = arith.select %1886, %1877, %1857 : vector<8x128xi1>, vector<8x128xf32>
    %1893 = arith.cmpf olt, %1846, %1874 : vector<8x128xf32>
    %1894 = arith.minimumf %1874, %1846 : vector<8x128xf32>
    %1895 = arith.maximumf %1874, %1846 : vector<8x128xf32>
    %1896 = arith.select %1893, %1848, %1876 : vector<8x128xi1>, vector<8x128xf32>
    %1897 = arith.select %1893, %1876, %1848 : vector<8x128xi1>, vector<8x128xf32>
    %1898 = arith.select %1893, %1850, %1878 : vector<8x128xi1>, vector<8x128xf32>
    %1899 = arith.select %1893, %1878, %1850 : vector<8x128xi1>, vector<8x128xf32>
    %1900 = arith.cmpf olt, %1838, %1705 : vector<8x128xf32>
    %1901 = arith.minimumf %1705, %1838 : vector<8x128xf32>
    %1902 = arith.maximumf %1705, %1838 : vector<8x128xf32>
    %1903 = arith.select %1900, %1840, %1707 : vector<8x128xi1>, vector<8x128xf32>
    %1904 = arith.select %1900, %1707, %1840 : vector<8x128xi1>, vector<8x128xf32>
    %1905 = arith.select %1900, %1842, %1709 : vector<8x128xi1>, vector<8x128xf32>
    %1906 = arith.select %1900, %1709, %1842 : vector<8x128xi1>, vector<8x128xf32>
    %1907 = arith.cmpf olt, %1888, %1755 : vector<8x128xf32>
    %1908 = arith.minimumf %1755, %1888 : vector<8x128xf32>
    %1909 = arith.maximumf %1755, %1888 : vector<8x128xf32>
    %1910 = arith.select %1907, %1890, %1757 : vector<8x128xi1>, vector<8x128xf32>
    %1911 = arith.select %1907, %1757, %1890 : vector<8x128xi1>, vector<8x128xf32>
    %1912 = arith.select %1907, %1892, %1759 : vector<8x128xi1>, vector<8x128xf32>
    %1913 = arith.select %1907, %1759, %1892 : vector<8x128xi1>, vector<8x128xf32>
    %1914 = arith.cmpf olt, %1902, %1908 : vector<8x128xf32>
    %1915 = arith.minimumf %1908, %1902 : vector<8x128xf32>
    %1916 = arith.maximumf %1908, %1902 : vector<8x128xf32>
    %1917 = arith.select %1914, %1904, %1910 : vector<8x128xi1>, vector<8x128xf32>
    %1918 = arith.select %1914, %1910, %1904 : vector<8x128xi1>, vector<8x128xf32>
    %1919 = arith.select %1914, %1906, %1912 : vector<8x128xi1>, vector<8x128xf32>
    %1920 = arith.select %1914, %1912, %1906 : vector<8x128xi1>, vector<8x128xf32>
    %1921 = arith.cmpf olt, %1881, %1748 : vector<8x128xf32>
    %1922 = arith.minimumf %1748, %1881 : vector<8x128xf32>
    %1923 = arith.maximumf %1748, %1881 : vector<8x128xf32>
    %1924 = arith.select %1921, %1883, %1750 : vector<8x128xi1>, vector<8x128xf32>
    %1925 = arith.select %1921, %1750, %1883 : vector<8x128xi1>, vector<8x128xf32>
    %1926 = arith.select %1921, %1885, %1752 : vector<8x128xi1>, vector<8x128xf32>
    %1927 = arith.select %1921, %1752, %1885 : vector<8x128xi1>, vector<8x128xf32>
    %1928 = arith.cmpf olt, %1895, %1762 : vector<8x128xf32>
    %1929 = arith.minimumf %1762, %1895 : vector<8x128xf32>
    %1930 = arith.maximumf %1762, %1895 : vector<8x128xf32>
    %1931 = arith.select %1928, %1897, %1764 : vector<8x128xi1>, vector<8x128xf32>
    %1932 = arith.select %1928, %1764, %1897 : vector<8x128xi1>, vector<8x128xf32>
    %1933 = arith.select %1928, %1899, %1766 : vector<8x128xi1>, vector<8x128xf32>
    %1934 = arith.select %1928, %1766, %1899 : vector<8x128xi1>, vector<8x128xf32>
    %1935 = arith.cmpf olt, %1923, %1929 : vector<8x128xf32>
    %1936 = arith.minimumf %1929, %1923 : vector<8x128xf32>
    %1937 = arith.maximumf %1929, %1923 : vector<8x128xf32>
    %1938 = arith.select %1935, %1925, %1931 : vector<8x128xi1>, vector<8x128xf32>
    %1939 = arith.select %1935, %1931, %1925 : vector<8x128xi1>, vector<8x128xf32>
    %1940 = arith.select %1935, %1927, %1933 : vector<8x128xi1>, vector<8x128xf32>
    %1941 = arith.select %1935, %1933, %1927 : vector<8x128xi1>, vector<8x128xf32>
    %1942 = arith.cmpf olt, %1915, %1922 : vector<8x128xf32>
    %1943 = arith.minimumf %1922, %1915 : vector<8x128xf32>
    %1944 = arith.maximumf %1922, %1915 : vector<8x128xf32>
    %1945 = arith.select %1942, %1917, %1924 : vector<8x128xi1>, vector<8x128xf32>
    %1946 = arith.select %1942, %1924, %1917 : vector<8x128xi1>, vector<8x128xf32>
    %1947 = arith.select %1942, %1919, %1926 : vector<8x128xi1>, vector<8x128xf32>
    %1948 = arith.select %1942, %1926, %1919 : vector<8x128xi1>, vector<8x128xf32>
    %1949 = arith.cmpf olt, %1916, %1936 : vector<8x128xf32>
    %1950 = arith.minimumf %1936, %1916 : vector<8x128xf32>
    %1951 = arith.maximumf %1936, %1916 : vector<8x128xf32>
    %1952 = arith.select %1949, %1918, %1938 : vector<8x128xi1>, vector<8x128xf32>
    %1953 = arith.select %1949, %1938, %1918 : vector<8x128xi1>, vector<8x128xf32>
    %1954 = arith.select %1949, %1920, %1940 : vector<8x128xi1>, vector<8x128xf32>
    %1955 = arith.select %1949, %1940, %1920 : vector<8x128xi1>, vector<8x128xf32>
    %1956 = arith.cmpf olt, %1909, %1937 : vector<8x128xf32>
    %1957 = arith.minimumf %1937, %1909 : vector<8x128xf32>
    %1958 = arith.maximumf %1937, %1909 : vector<8x128xf32>
    %1959 = arith.select %1956, %1911, %1939 : vector<8x128xi1>, vector<8x128xf32>
    %1960 = arith.select %1956, %1939, %1911 : vector<8x128xi1>, vector<8x128xf32>
    %1961 = arith.select %1956, %1913, %1941 : vector<8x128xi1>, vector<8x128xf32>
    %1962 = arith.select %1956, %1941, %1913 : vector<8x128xi1>, vector<8x128xf32>
    %1963 = arith.cmpf olt, %1880, %1747 : vector<8x128xf32>
    %1964 = arith.minimumf %1747, %1880 : vector<8x128xf32>
    %1965 = arith.maximumf %1747, %1880 : vector<8x128xf32>
    %1966 = arith.select %1963, %1882, %1749 : vector<8x128xi1>, vector<8x128xf32>
    %1967 = arith.select %1963, %1749, %1882 : vector<8x128xi1>, vector<8x128xf32>
    %1968 = arith.select %1963, %1884, %1751 : vector<8x128xi1>, vector<8x128xf32>
    %1969 = arith.select %1963, %1751, %1884 : vector<8x128xi1>, vector<8x128xf32>
    %1970 = arith.cmpf olt, %1894, %1761 : vector<8x128xf32>
    %1971 = arith.minimumf %1761, %1894 : vector<8x128xf32>
    %1972 = arith.maximumf %1761, %1894 : vector<8x128xf32>
    %1973 = arith.select %1970, %1896, %1763 : vector<8x128xi1>, vector<8x128xf32>
    %1974 = arith.select %1970, %1763, %1896 : vector<8x128xi1>, vector<8x128xf32>
    %1975 = arith.select %1970, %1898, %1765 : vector<8x128xi1>, vector<8x128xf32>
    %1976 = arith.select %1970, %1765, %1898 : vector<8x128xi1>, vector<8x128xf32>
    %1977 = arith.cmpf olt, %1965, %1971 : vector<8x128xf32>
    %1978 = arith.minimumf %1971, %1965 : vector<8x128xf32>
    %1979 = arith.maximumf %1971, %1965 : vector<8x128xf32>
    %1980 = arith.select %1977, %1967, %1973 : vector<8x128xi1>, vector<8x128xf32>
    %1981 = arith.select %1977, %1973, %1967 : vector<8x128xi1>, vector<8x128xf32>
    %1982 = arith.select %1977, %1969, %1975 : vector<8x128xi1>, vector<8x128xf32>
    %1983 = arith.select %1977, %1975, %1969 : vector<8x128xi1>, vector<8x128xf32>
    %1984 = arith.cmpf olt, %1887, %1754 : vector<8x128xf32>
    %1985 = arith.minimumf %1754, %1887 : vector<8x128xf32>
    %1986 = arith.maximumf %1754, %1887 : vector<8x128xf32>
    %1987 = arith.select %1984, %1889, %1756 : vector<8x128xi1>, vector<8x128xf32>
    %1988 = arith.select %1984, %1756, %1889 : vector<8x128xi1>, vector<8x128xf32>
    %1989 = arith.select %1984, %1891, %1758 : vector<8x128xi1>, vector<8x128xf32>
    %1990 = arith.select %1984, %1758, %1891 : vector<8x128xi1>, vector<8x128xf32>
    %1991 = arith.cmpf olt, %1867, %1734 : vector<8x128xf32>
    %1992 = arith.minimumf %1734, %1867 : vector<8x128xf32>
    %1993 = arith.maximumf %1734, %1867 : vector<8x128xf32>
    %1994 = arith.select %1991, %1869, %1736 : vector<8x128xi1>, vector<8x128xf32>
    %1995 = arith.select %1991, %1736, %1869 : vector<8x128xi1>, vector<8x128xf32>
    %1996 = arith.select %1991, %1871, %1738 : vector<8x128xi1>, vector<8x128xf32>
    %1997 = arith.select %1991, %1738, %1871 : vector<8x128xi1>, vector<8x128xf32>
    %1998 = arith.cmpf olt, %1986, %1992 : vector<8x128xf32>
    %1999 = arith.minimumf %1992, %1986 : vector<8x128xf32>
    %2000 = arith.maximumf %1992, %1986 : vector<8x128xf32>
    %2001 = arith.select %1998, %1988, %1994 : vector<8x128xi1>, vector<8x128xf32>
    %2002 = arith.select %1998, %1994, %1988 : vector<8x128xi1>, vector<8x128xf32>
    %2003 = arith.select %1998, %1990, %1996 : vector<8x128xi1>, vector<8x128xf32>
    %2004 = arith.select %1998, %1996, %1990 : vector<8x128xi1>, vector<8x128xf32>
    %2005 = arith.cmpf olt, %1978, %1985 : vector<8x128xf32>
    %2006 = arith.minimumf %1985, %1978 : vector<8x128xf32>
    %2007 = arith.maximumf %1985, %1978 : vector<8x128xf32>
    %2008 = arith.select %2005, %1980, %1987 : vector<8x128xi1>, vector<8x128xf32>
    %2009 = arith.select %2005, %1987, %1980 : vector<8x128xi1>, vector<8x128xf32>
    %2010 = arith.select %2005, %1982, %1989 : vector<8x128xi1>, vector<8x128xf32>
    %2011 = arith.select %2005, %1989, %1982 : vector<8x128xi1>, vector<8x128xf32>
    %2012 = arith.cmpf olt, %1979, %1999 : vector<8x128xf32>
    %2013 = arith.minimumf %1999, %1979 : vector<8x128xf32>
    %2014 = arith.maximumf %1999, %1979 : vector<8x128xf32>
    %2015 = arith.select %2012, %1981, %2001 : vector<8x128xi1>, vector<8x128xf32>
    %2016 = arith.select %2012, %2001, %1981 : vector<8x128xi1>, vector<8x128xf32>
    %2017 = arith.select %2012, %1983, %2003 : vector<8x128xi1>, vector<8x128xf32>
    %2018 = arith.select %2012, %2003, %1983 : vector<8x128xi1>, vector<8x128xf32>
    %2019 = arith.cmpf olt, %1972, %2000 : vector<8x128xf32>
    %2020 = arith.minimumf %2000, %1972 : vector<8x128xf32>
    %2021 = arith.maximumf %2000, %1972 : vector<8x128xf32>
    %2022 = arith.select %2019, %1974, %2002 : vector<8x128xi1>, vector<8x128xf32>
    %2023 = arith.select %2019, %2002, %1974 : vector<8x128xi1>, vector<8x128xf32>
    %2024 = arith.select %2019, %1976, %2004 : vector<8x128xi1>, vector<8x128xf32>
    %2025 = arith.select %2019, %2004, %1976 : vector<8x128xi1>, vector<8x128xf32>
    %2026 = arith.cmpf olt, %1943, %1964 : vector<8x128xf32>
    %2027 = arith.minimumf %1964, %1943 : vector<8x128xf32>
    %2028 = arith.maximumf %1964, %1943 : vector<8x128xf32>
    %2029 = arith.select %2026, %1945, %1966 : vector<8x128xi1>, vector<8x128xf32>
    %2030 = arith.select %2026, %1966, %1945 : vector<8x128xi1>, vector<8x128xf32>
    %2031 = arith.select %2026, %1947, %1968 : vector<8x128xi1>, vector<8x128xf32>
    %2032 = arith.select %2026, %1968, %1947 : vector<8x128xi1>, vector<8x128xf32>
    %2033 = arith.cmpf olt, %1944, %2006 : vector<8x128xf32>
    %2034 = arith.minimumf %2006, %1944 : vector<8x128xf32>
    %2035 = arith.maximumf %2006, %1944 : vector<8x128xf32>
    %2036 = arith.select %2033, %1946, %2008 : vector<8x128xi1>, vector<8x128xf32>
    %2037 = arith.select %2033, %2008, %1946 : vector<8x128xi1>, vector<8x128xf32>
    %2038 = arith.select %2033, %1948, %2010 : vector<8x128xi1>, vector<8x128xf32>
    %2039 = arith.select %2033, %2010, %1948 : vector<8x128xi1>, vector<8x128xf32>
    %2040 = arith.cmpf olt, %1950, %2007 : vector<8x128xf32>
    %2041 = arith.minimumf %2007, %1950 : vector<8x128xf32>
    %2042 = arith.maximumf %2007, %1950 : vector<8x128xf32>
    %2043 = arith.select %2040, %1952, %2009 : vector<8x128xi1>, vector<8x128xf32>
    %2044 = arith.select %2040, %2009, %1952 : vector<8x128xi1>, vector<8x128xf32>
    %2045 = arith.select %2040, %1954, %2011 : vector<8x128xi1>, vector<8x128xf32>
    %2046 = arith.select %2040, %2011, %1954 : vector<8x128xi1>, vector<8x128xf32>
    %2047 = arith.cmpf olt, %1951, %2013 : vector<8x128xf32>
    %2048 = arith.minimumf %2013, %1951 : vector<8x128xf32>
    %2049 = arith.maximumf %2013, %1951 : vector<8x128xf32>
    %2050 = arith.select %2047, %1953, %2015 : vector<8x128xi1>, vector<8x128xf32>
    %2051 = arith.select %2047, %2015, %1953 : vector<8x128xi1>, vector<8x128xf32>
    %2052 = arith.select %2047, %1955, %2017 : vector<8x128xi1>, vector<8x128xf32>
    %2053 = arith.select %2047, %2017, %1955 : vector<8x128xi1>, vector<8x128xf32>
    %2054 = arith.cmpf olt, %1957, %2014 : vector<8x128xf32>
    %2055 = arith.minimumf %2014, %1957 : vector<8x128xf32>
    %2056 = arith.maximumf %2014, %1957 : vector<8x128xf32>
    %2057 = arith.select %2054, %1959, %2016 : vector<8x128xi1>, vector<8x128xf32>
    %2058 = arith.select %2054, %2016, %1959 : vector<8x128xi1>, vector<8x128xf32>
    %2059 = arith.select %2054, %1961, %2018 : vector<8x128xi1>, vector<8x128xf32>
    %2060 = arith.select %2054, %2018, %1961 : vector<8x128xi1>, vector<8x128xf32>
    %2061 = arith.cmpf olt, %1958, %2020 : vector<8x128xf32>
    %2062 = arith.minimumf %2020, %1958 : vector<8x128xf32>
    %2063 = arith.maximumf %2020, %1958 : vector<8x128xf32>
    %2064 = arith.select %2061, %1960, %2022 : vector<8x128xi1>, vector<8x128xf32>
    %2065 = arith.select %2061, %2022, %1960 : vector<8x128xi1>, vector<8x128xf32>
    %2066 = arith.select %2061, %1962, %2024 : vector<8x128xi1>, vector<8x128xf32>
    %2067 = arith.select %2061, %2024, %1962 : vector<8x128xi1>, vector<8x128xf32>
    %2068 = arith.cmpf olt, %1930, %2021 : vector<8x128xf32>
    %2069 = arith.minimumf %2021, %1930 : vector<8x128xf32>
    %2070 = arith.maximumf %2021, %1930 : vector<8x128xf32>
    %2071 = arith.select %2068, %1932, %2023 : vector<8x128xi1>, vector<8x128xf32>
    %2072 = arith.select %2068, %2023, %1932 : vector<8x128xi1>, vector<8x128xf32>
    %2073 = arith.select %2068, %1934, %2025 : vector<8x128xi1>, vector<8x128xf32>
    %2074 = arith.select %2068, %2025, %1934 : vector<8x128xi1>, vector<8x128xf32>
    %2075 = arith.cmpf olt, %1489, %1465 : vector<8x128xf32>
    %2076 = arith.minimumf %1465, %1489 : vector<8x128xf32>
    %2077 = arith.maximumf %1465, %1489 : vector<8x128xf32>
    %2078 = arith.select %2075, %1467, %1443 : vector<8x128xi1>, vector<8x128xf32>
    %2079 = arith.select %2075, %1443, %1467 : vector<8x128xi1>, vector<8x128xf32>
    %2080 = arith.select %2075, %1469, %1445 : vector<8x128xi1>, vector<8x128xf32>
    %2081 = arith.select %2075, %1445, %1469 : vector<8x128xi1>, vector<8x128xf32>
    %2082 = arith.cmpf olt, %1537, %1513 : vector<8x128xf32>
    %2083 = arith.minimumf %1513, %1537 : vector<8x128xf32>
    %2084 = arith.maximumf %1513, %1537 : vector<8x128xf32>
    %2085 = arith.select %2082, %1515, %1491 : vector<8x128xi1>, vector<8x128xf32>
    %2086 = arith.select %2082, %1491, %1515 : vector<8x128xi1>, vector<8x128xf32>
    %2087 = arith.select %2082, %1517, %1493 : vector<8x128xi1>, vector<8x128xf32>
    %2088 = arith.select %2082, %1493, %1517 : vector<8x128xi1>, vector<8x128xf32>
    %2089 = arith.cmpf olt, %2083, %2076 : vector<8x128xf32>
    %2090 = arith.minimumf %2076, %2083 : vector<8x128xf32>
    %2091 = arith.maximumf %2076, %2083 : vector<8x128xf32>
    %2092 = arith.select %2089, %2085, %2078 : vector<8x128xi1>, vector<8x128xf32>
    %2093 = arith.select %2089, %2078, %2085 : vector<8x128xi1>, vector<8x128xf32>
    %2094 = arith.select %2089, %2087, %2080 : vector<8x128xi1>, vector<8x128xf32>
    %2095 = arith.select %2089, %2080, %2087 : vector<8x128xi1>, vector<8x128xf32>
    %2096 = arith.cmpf olt, %2084, %2077 : vector<8x128xf32>
    %2097 = arith.minimumf %2077, %2084 : vector<8x128xf32>
    %2098 = arith.maximumf %2077, %2084 : vector<8x128xf32>
    %2099 = arith.select %2096, %2086, %2079 : vector<8x128xi1>, vector<8x128xf32>
    %2100 = arith.select %2096, %2079, %2086 : vector<8x128xi1>, vector<8x128xf32>
    %2101 = arith.select %2096, %2088, %2081 : vector<8x128xi1>, vector<8x128xf32>
    %2102 = arith.select %2096, %2081, %2088 : vector<8x128xi1>, vector<8x128xf32>
    %2103 = arith.cmpf olt, %2091, %2097 : vector<8x128xf32>
    %2104 = arith.minimumf %2097, %2091 : vector<8x128xf32>
    %2105 = arith.maximumf %2097, %2091 : vector<8x128xf32>
    %2106 = arith.select %2103, %2093, %2099 : vector<8x128xi1>, vector<8x128xf32>
    %2107 = arith.select %2103, %2099, %2093 : vector<8x128xi1>, vector<8x128xf32>
    %2108 = arith.select %2103, %2095, %2101 : vector<8x128xi1>, vector<8x128xf32>
    %2109 = arith.select %2103, %2101, %2095 : vector<8x128xi1>, vector<8x128xf32>
    %2110 = arith.cmpf olt, %1585, %1561 : vector<8x128xf32>
    %2111 = arith.minimumf %1561, %1585 : vector<8x128xf32>
    %2112 = arith.maximumf %1561, %1585 : vector<8x128xf32>
    %2113 = arith.select %2110, %1563, %1539 : vector<8x128xi1>, vector<8x128xf32>
    %2114 = arith.select %2110, %1539, %1563 : vector<8x128xi1>, vector<8x128xf32>
    %2115 = arith.select %2110, %1565, %1541 : vector<8x128xi1>, vector<8x128xf32>
    %2116 = arith.select %2110, %1541, %1565 : vector<8x128xi1>, vector<8x128xf32>
    %2117 = arith.cmpf olt, %1633, %1609 : vector<8x128xf32>
    %2118 = arith.minimumf %1609, %1633 : vector<8x128xf32>
    %2119 = arith.maximumf %1609, %1633 : vector<8x128xf32>
    %2120 = arith.select %2117, %1611, %1587 : vector<8x128xi1>, vector<8x128xf32>
    %2121 = arith.select %2117, %1587, %1611 : vector<8x128xi1>, vector<8x128xf32>
    %2122 = arith.select %2117, %1613, %1589 : vector<8x128xi1>, vector<8x128xf32>
    %2123 = arith.select %2117, %1589, %1613 : vector<8x128xi1>, vector<8x128xf32>
    %2124 = arith.cmpf olt, %2118, %2111 : vector<8x128xf32>
    %2125 = arith.minimumf %2111, %2118 : vector<8x128xf32>
    %2126 = arith.maximumf %2111, %2118 : vector<8x128xf32>
    %2127 = arith.select %2124, %2120, %2113 : vector<8x128xi1>, vector<8x128xf32>
    %2128 = arith.select %2124, %2113, %2120 : vector<8x128xi1>, vector<8x128xf32>
    %2129 = arith.select %2124, %2122, %2115 : vector<8x128xi1>, vector<8x128xf32>
    %2130 = arith.select %2124, %2115, %2122 : vector<8x128xi1>, vector<8x128xf32>
    %2131 = arith.cmpf olt, %2119, %2112 : vector<8x128xf32>
    %2132 = arith.minimumf %2112, %2119 : vector<8x128xf32>
    %2133 = arith.maximumf %2112, %2119 : vector<8x128xf32>
    %2134 = arith.select %2131, %2121, %2114 : vector<8x128xi1>, vector<8x128xf32>
    %2135 = arith.select %2131, %2114, %2121 : vector<8x128xi1>, vector<8x128xf32>
    %2136 = arith.select %2131, %2123, %2116 : vector<8x128xi1>, vector<8x128xf32>
    %2137 = arith.select %2131, %2116, %2123 : vector<8x128xi1>, vector<8x128xf32>
    %2138 = arith.cmpf olt, %2126, %2132 : vector<8x128xf32>
    %2139 = arith.minimumf %2132, %2126 : vector<8x128xf32>
    %2140 = arith.maximumf %2132, %2126 : vector<8x128xf32>
    %2141 = arith.select %2138, %2128, %2134 : vector<8x128xi1>, vector<8x128xf32>
    %2142 = arith.select %2138, %2134, %2128 : vector<8x128xi1>, vector<8x128xf32>
    %2143 = arith.select %2138, %2130, %2136 : vector<8x128xi1>, vector<8x128xf32>
    %2144 = arith.select %2138, %2136, %2130 : vector<8x128xi1>, vector<8x128xf32>
    %2145 = arith.cmpf olt, %2125, %2090 : vector<8x128xf32>
    %2146 = arith.minimumf %2090, %2125 : vector<8x128xf32>
    %2147 = arith.maximumf %2090, %2125 : vector<8x128xf32>
    %2148 = arith.select %2145, %2127, %2092 : vector<8x128xi1>, vector<8x128xf32>
    %2149 = arith.select %2145, %2092, %2127 : vector<8x128xi1>, vector<8x128xf32>
    %2150 = arith.select %2145, %2129, %2094 : vector<8x128xi1>, vector<8x128xf32>
    %2151 = arith.select %2145, %2094, %2129 : vector<8x128xi1>, vector<8x128xf32>
    %2152 = arith.cmpf olt, %2140, %2105 : vector<8x128xf32>
    %2153 = arith.minimumf %2105, %2140 : vector<8x128xf32>
    %2154 = arith.maximumf %2105, %2140 : vector<8x128xf32>
    %2155 = arith.select %2152, %2142, %2107 : vector<8x128xi1>, vector<8x128xf32>
    %2156 = arith.select %2152, %2107, %2142 : vector<8x128xi1>, vector<8x128xf32>
    %2157 = arith.select %2152, %2144, %2109 : vector<8x128xi1>, vector<8x128xf32>
    %2158 = arith.select %2152, %2109, %2144 : vector<8x128xi1>, vector<8x128xf32>
    %2159 = arith.cmpf olt, %2147, %2153 : vector<8x128xf32>
    %2160 = arith.minimumf %2153, %2147 : vector<8x128xf32>
    %2161 = arith.maximumf %2153, %2147 : vector<8x128xf32>
    %2162 = arith.select %2159, %2149, %2155 : vector<8x128xi1>, vector<8x128xf32>
    %2163 = arith.select %2159, %2155, %2149 : vector<8x128xi1>, vector<8x128xf32>
    %2164 = arith.select %2159, %2151, %2157 : vector<8x128xi1>, vector<8x128xf32>
    %2165 = arith.select %2159, %2157, %2151 : vector<8x128xi1>, vector<8x128xf32>
    %2166 = arith.cmpf olt, %2139, %2104 : vector<8x128xf32>
    %2167 = arith.minimumf %2104, %2139 : vector<8x128xf32>
    %2168 = arith.maximumf %2104, %2139 : vector<8x128xf32>
    %2169 = arith.select %2166, %2141, %2106 : vector<8x128xi1>, vector<8x128xf32>
    %2170 = arith.select %2166, %2106, %2141 : vector<8x128xi1>, vector<8x128xf32>
    %2171 = arith.select %2166, %2143, %2108 : vector<8x128xi1>, vector<8x128xf32>
    %2172 = arith.select %2166, %2108, %2143 : vector<8x128xi1>, vector<8x128xf32>
    %2173 = arith.cmpf olt, %2133, %2098 : vector<8x128xf32>
    %2174 = arith.minimumf %2098, %2133 : vector<8x128xf32>
    %2175 = arith.maximumf %2098, %2133 : vector<8x128xf32>
    %2176 = arith.select %2173, %2135, %2100 : vector<8x128xi1>, vector<8x128xf32>
    %2177 = arith.select %2173, %2100, %2135 : vector<8x128xi1>, vector<8x128xf32>
    %2178 = arith.select %2173, %2137, %2102 : vector<8x128xi1>, vector<8x128xf32>
    %2179 = arith.select %2173, %2102, %2137 : vector<8x128xi1>, vector<8x128xf32>
    %2180 = arith.cmpf olt, %2168, %2174 : vector<8x128xf32>
    %2181 = arith.minimumf %2174, %2168 : vector<8x128xf32>
    %2182 = arith.maximumf %2174, %2168 : vector<8x128xf32>
    %2183 = arith.select %2180, %2170, %2176 : vector<8x128xi1>, vector<8x128xf32>
    %2184 = arith.select %2180, %2176, %2170 : vector<8x128xi1>, vector<8x128xf32>
    %2185 = arith.select %2180, %2172, %2178 : vector<8x128xi1>, vector<8x128xf32>
    %2186 = arith.select %2180, %2178, %2172 : vector<8x128xi1>, vector<8x128xf32>
    %2187 = arith.cmpf olt, %2160, %2167 : vector<8x128xf32>
    %2188 = arith.minimumf %2167, %2160 : vector<8x128xf32>
    %2189 = arith.maximumf %2167, %2160 : vector<8x128xf32>
    %2190 = arith.select %2187, %2162, %2169 : vector<8x128xi1>, vector<8x128xf32>
    %2191 = arith.select %2187, %2169, %2162 : vector<8x128xi1>, vector<8x128xf32>
    %2192 = arith.select %2187, %2164, %2171 : vector<8x128xi1>, vector<8x128xf32>
    %2193 = arith.select %2187, %2171, %2164 : vector<8x128xi1>, vector<8x128xf32>
    %2194 = arith.cmpf olt, %2161, %2181 : vector<8x128xf32>
    %2195 = arith.minimumf %2181, %2161 : vector<8x128xf32>
    %2196 = arith.maximumf %2181, %2161 : vector<8x128xf32>
    %2197 = arith.select %2194, %2163, %2183 : vector<8x128xi1>, vector<8x128xf32>
    %2198 = arith.select %2194, %2183, %2163 : vector<8x128xi1>, vector<8x128xf32>
    %2199 = arith.select %2194, %2165, %2185 : vector<8x128xi1>, vector<8x128xf32>
    %2200 = arith.select %2194, %2185, %2165 : vector<8x128xi1>, vector<8x128xf32>
    %2201 = arith.cmpf olt, %2154, %2182 : vector<8x128xf32>
    %2202 = arith.minimumf %2182, %2154 : vector<8x128xf32>
    %2203 = arith.maximumf %2182, %2154 : vector<8x128xf32>
    %2204 = arith.select %2201, %2156, %2184 : vector<8x128xi1>, vector<8x128xf32>
    %2205 = arith.select %2201, %2184, %2156 : vector<8x128xi1>, vector<8x128xf32>
    %2206 = arith.select %2201, %2158, %2186 : vector<8x128xi1>, vector<8x128xf32>
    %2207 = arith.select %2201, %2186, %2158 : vector<8x128xi1>, vector<8x128xf32>
    %2208 = arith.cmpf olt, %2196, %2189 : vector<8x128xf32>
    %2209 = arith.minimumf %2189, %2196 : vector<8x128xf32>
    %2210 = arith.maximumf %2189, %2196 : vector<8x128xf32>
    %2211 = arith.select %2208, %2198, %2191 : vector<8x128xi1>, vector<8x128xf32>
    %2212 = arith.select %2208, %2191, %2198 : vector<8x128xi1>, vector<8x128xf32>
    %2213 = arith.select %2208, %2200, %2193 : vector<8x128xi1>, vector<8x128xf32>
    %2214 = arith.select %2208, %2193, %2200 : vector<8x128xi1>, vector<8x128xf32>
    %2215 = arith.cmpf olt, %2202, %2195 : vector<8x128xf32>
    %2216 = arith.minimumf %2195, %2202 : vector<8x128xf32>
    %2217 = arith.maximumf %2195, %2202 : vector<8x128xf32>
    %2218 = arith.select %2215, %2204, %2197 : vector<8x128xi1>, vector<8x128xf32>
    %2219 = arith.select %2215, %2197, %2204 : vector<8x128xi1>, vector<8x128xf32>
    %2220 = arith.select %2215, %2206, %2199 : vector<8x128xi1>, vector<8x128xf32>
    %2221 = arith.select %2215, %2199, %2206 : vector<8x128xi1>, vector<8x128xf32>
    %2222 = arith.cmpf olt, %2209, %2188 : vector<8x128xf32>
    %2223 = arith.minimumf %2188, %2209 : vector<8x128xf32>
    %2224 = arith.maximumf %2188, %2209 : vector<8x128xf32>
    %2225 = arith.select %2222, %2211, %2190 : vector<8x128xi1>, vector<8x128xf32>
    %2226 = arith.select %2222, %2190, %2211 : vector<8x128xi1>, vector<8x128xf32>
    %2227 = arith.select %2222, %2213, %2192 : vector<8x128xi1>, vector<8x128xf32>
    %2228 = arith.select %2222, %2192, %2213 : vector<8x128xi1>, vector<8x128xf32>
    %2229 = arith.cmpf olt, %2210, %2216 : vector<8x128xf32>
    %2230 = arith.minimumf %2216, %2210 : vector<8x128xf32>
    %2231 = arith.maximumf %2216, %2210 : vector<8x128xf32>
    %2232 = arith.select %2229, %2212, %2218 : vector<8x128xi1>, vector<8x128xf32>
    %2233 = arith.select %2229, %2218, %2212 : vector<8x128xi1>, vector<8x128xf32>
    %2234 = arith.select %2229, %2214, %2220 : vector<8x128xi1>, vector<8x128xf32>
    %2235 = arith.select %2229, %2220, %2214 : vector<8x128xi1>, vector<8x128xf32>
    %2236 = arith.cmpf olt, %2203, %2217 : vector<8x128xf32>
    %2237 = arith.minimumf %2217, %2203 : vector<8x128xf32>
    %2238 = arith.maximumf %2217, %2203 : vector<8x128xf32>
    %2239 = arith.select %2236, %2205, %2219 : vector<8x128xi1>, vector<8x128xf32>
    %2240 = arith.select %2236, %2219, %2205 : vector<8x128xi1>, vector<8x128xf32>
    %2241 = arith.select %2236, %2207, %2221 : vector<8x128xi1>, vector<8x128xf32>
    %2242 = arith.select %2236, %2221, %2207 : vector<8x128xi1>, vector<8x128xf32>
    %2243 = arith.cmpf olt, %2146, %1901 : vector<8x128xf32>
    %2244 = arith.maximumf %1901, %2146 : vector<8x128xf32>
    %2245 = arith.select %2243, %2148, %1903 : vector<8x128xi1>, vector<8x128xf32>
    %2246 = arith.select %2243, %1903, %2148 : vector<8x128xi1>, vector<8x128xf32>
    %2247 = arith.select %2243, %2150, %1905 : vector<8x128xi1>, vector<8x128xf32>
    %2248 = arith.select %2243, %1905, %2150 : vector<8x128xi1>, vector<8x128xf32>
    %2249 = arith.cmpf olt, %2244, %2049 : vector<8x128xf32>
    %2250 = arith.minimumf %2049, %2244 : vector<8x128xf32>
    %2251 = arith.maximumf %2049, %2244 : vector<8x128xf32>
    %2252 = arith.select %2249, %2246, %2051 : vector<8x128xi1>, vector<8x128xf32>
    %2253 = arith.select %2249, %2051, %2246 : vector<8x128xi1>, vector<8x128xf32>
    %2254 = arith.select %2249, %2248, %2053 : vector<8x128xi1>, vector<8x128xf32>
    %2255 = arith.select %2249, %2053, %2248 : vector<8x128xi1>, vector<8x128xf32>
    %2256 = arith.cmpf olt, %2231, %2035 : vector<8x128xf32>
    %2257 = arith.minimumf %2035, %2231 : vector<8x128xf32>
    %2258 = arith.maximumf %2035, %2231 : vector<8x128xf32>
    %2259 = arith.select %2256, %2233, %2037 : vector<8x128xi1>, vector<8x128xf32>
    %2260 = arith.select %2256, %2037, %2233 : vector<8x128xi1>, vector<8x128xf32>
    %2261 = arith.select %2256, %2235, %2039 : vector<8x128xi1>, vector<8x128xf32>
    %2262 = arith.select %2256, %2039, %2235 : vector<8x128xi1>, vector<8x128xf32>
    %2263 = arith.cmpf olt, %2258, %2063 : vector<8x128xf32>
    %2264 = arith.minimumf %2063, %2258 : vector<8x128xf32>
    %2265 = arith.maximumf %2063, %2258 : vector<8x128xf32>
    %2266 = arith.select %2263, %2260, %2065 : vector<8x128xi1>, vector<8x128xf32>
    %2267 = arith.select %2263, %2065, %2260 : vector<8x128xi1>, vector<8x128xf32>
    %2268 = arith.select %2263, %2262, %2067 : vector<8x128xi1>, vector<8x128xf32>
    %2269 = arith.select %2263, %2067, %2262 : vector<8x128xi1>, vector<8x128xf32>
    %2270 = arith.cmpf olt, %2250, %2257 : vector<8x128xf32>
    %2271 = arith.minimumf %2257, %2250 : vector<8x128xf32>
    %2272 = arith.maximumf %2257, %2250 : vector<8x128xf32>
    %2273 = arith.select %2270, %2252, %2259 : vector<8x128xi1>, vector<8x128xf32>
    %2274 = arith.select %2270, %2259, %2252 : vector<8x128xi1>, vector<8x128xf32>
    %2275 = arith.select %2270, %2254, %2261 : vector<8x128xi1>, vector<8x128xf32>
    %2276 = arith.select %2270, %2261, %2254 : vector<8x128xi1>, vector<8x128xf32>
    %2277 = arith.cmpf olt, %2251, %2264 : vector<8x128xf32>
    %2278 = arith.minimumf %2264, %2251 : vector<8x128xf32>
    %2279 = arith.maximumf %2264, %2251 : vector<8x128xf32>
    %2280 = arith.select %2277, %2253, %2266 : vector<8x128xi1>, vector<8x128xf32>
    %2281 = arith.select %2277, %2266, %2253 : vector<8x128xi1>, vector<8x128xf32>
    %2282 = arith.select %2277, %2255, %2268 : vector<8x128xi1>, vector<8x128xf32>
    %2283 = arith.select %2277, %2268, %2255 : vector<8x128xi1>, vector<8x128xf32>
    %2284 = arith.cmpf olt, %2224, %2028 : vector<8x128xf32>
    %2285 = arith.minimumf %2028, %2224 : vector<8x128xf32>
    %2286 = arith.maximumf %2028, %2224 : vector<8x128xf32>
    %2287 = arith.select %2284, %2226, %2030 : vector<8x128xi1>, vector<8x128xf32>
    %2288 = arith.select %2284, %2030, %2226 : vector<8x128xi1>, vector<8x128xf32>
    %2289 = arith.select %2284, %2228, %2032 : vector<8x128xi1>, vector<8x128xf32>
    %2290 = arith.select %2284, %2032, %2228 : vector<8x128xi1>, vector<8x128xf32>
    %2291 = arith.cmpf olt, %2286, %2056 : vector<8x128xf32>
    %2292 = arith.minimumf %2056, %2286 : vector<8x128xf32>
    %2293 = arith.maximumf %2056, %2286 : vector<8x128xf32>
    %2294 = arith.select %2291, %2288, %2058 : vector<8x128xi1>, vector<8x128xf32>
    %2295 = arith.select %2291, %2058, %2288 : vector<8x128xi1>, vector<8x128xf32>
    %2296 = arith.select %2291, %2290, %2060 : vector<8x128xi1>, vector<8x128xf32>
    %2297 = arith.select %2291, %2060, %2290 : vector<8x128xi1>, vector<8x128xf32>
    %2298 = arith.cmpf olt, %2238, %2042 : vector<8x128xf32>
    %2299 = arith.minimumf %2042, %2238 : vector<8x128xf32>
    %2300 = arith.maximumf %2042, %2238 : vector<8x128xf32>
    %2301 = arith.select %2298, %2240, %2044 : vector<8x128xi1>, vector<8x128xf32>
    %2302 = arith.select %2298, %2044, %2240 : vector<8x128xi1>, vector<8x128xf32>
    %2303 = arith.select %2298, %2242, %2046 : vector<8x128xi1>, vector<8x128xf32>
    %2304 = arith.select %2298, %2046, %2242 : vector<8x128xi1>, vector<8x128xf32>
    %2305 = arith.cmpf olt, %2300, %2070 : vector<8x128xf32>
    %2306 = arith.minimumf %2070, %2300 : vector<8x128xf32>
    %2307 = arith.maximumf %2070, %2300 : vector<8x128xf32>
    %2308 = arith.select %2305, %2302, %2072 : vector<8x128xi1>, vector<8x128xf32>
    %2309 = arith.select %2305, %2072, %2302 : vector<8x128xi1>, vector<8x128xf32>
    %2310 = arith.select %2305, %2304, %2074 : vector<8x128xi1>, vector<8x128xf32>
    %2311 = arith.select %2305, %2074, %2304 : vector<8x128xi1>, vector<8x128xf32>
    %2312 = arith.cmpf olt, %2292, %2299 : vector<8x128xf32>
    %2313 = arith.minimumf %2299, %2292 : vector<8x128xf32>
    %2314 = arith.maximumf %2299, %2292 : vector<8x128xf32>
    %2315 = arith.select %2312, %2294, %2301 : vector<8x128xi1>, vector<8x128xf32>
    %2316 = arith.select %2312, %2301, %2294 : vector<8x128xi1>, vector<8x128xf32>
    %2317 = arith.select %2312, %2296, %2303 : vector<8x128xi1>, vector<8x128xf32>
    %2318 = arith.select %2312, %2303, %2296 : vector<8x128xi1>, vector<8x128xf32>
    %2319 = arith.cmpf olt, %2293, %2306 : vector<8x128xf32>
    %2320 = arith.minimumf %2306, %2293 : vector<8x128xf32>
    %2321 = arith.maximumf %2306, %2293 : vector<8x128xf32>
    %2322 = arith.select %2319, %2295, %2308 : vector<8x128xi1>, vector<8x128xf32>
    %2323 = arith.select %2319, %2308, %2295 : vector<8x128xi1>, vector<8x128xf32>
    %2324 = arith.select %2319, %2297, %2310 : vector<8x128xi1>, vector<8x128xf32>
    %2325 = arith.select %2319, %2310, %2297 : vector<8x128xi1>, vector<8x128xf32>
    %2326 = arith.cmpf olt, %2271, %2285 : vector<8x128xf32>
    %2327 = arith.minimumf %2285, %2271 : vector<8x128xf32>
    %2328 = arith.maximumf %2285, %2271 : vector<8x128xf32>
    %2329 = arith.select %2326, %2273, %2287 : vector<8x128xi1>, vector<8x128xf32>
    %2330 = arith.select %2326, %2287, %2273 : vector<8x128xi1>, vector<8x128xf32>
    %2331 = arith.select %2326, %2275, %2289 : vector<8x128xi1>, vector<8x128xf32>
    %2332 = arith.select %2326, %2289, %2275 : vector<8x128xi1>, vector<8x128xf32>
    %2333 = arith.cmpf olt, %2272, %2313 : vector<8x128xf32>
    %2334 = arith.minimumf %2313, %2272 : vector<8x128xf32>
    %2335 = arith.maximumf %2313, %2272 : vector<8x128xf32>
    %2336 = arith.select %2333, %2274, %2315 : vector<8x128xi1>, vector<8x128xf32>
    %2337 = arith.select %2333, %2315, %2274 : vector<8x128xi1>, vector<8x128xf32>
    %2338 = arith.select %2333, %2276, %2317 : vector<8x128xi1>, vector<8x128xf32>
    %2339 = arith.select %2333, %2317, %2276 : vector<8x128xi1>, vector<8x128xf32>
    %2340 = arith.cmpf olt, %2278, %2314 : vector<8x128xf32>
    %2341 = arith.minimumf %2314, %2278 : vector<8x128xf32>
    %2342 = arith.maximumf %2314, %2278 : vector<8x128xf32>
    %2343 = arith.select %2340, %2280, %2316 : vector<8x128xi1>, vector<8x128xf32>
    %2344 = arith.select %2340, %2316, %2280 : vector<8x128xi1>, vector<8x128xf32>
    %2345 = arith.select %2340, %2282, %2318 : vector<8x128xi1>, vector<8x128xf32>
    %2346 = arith.select %2340, %2318, %2282 : vector<8x128xi1>, vector<8x128xf32>
    %2347 = arith.cmpf olt, %2279, %2320 : vector<8x128xf32>
    %2348 = arith.minimumf %2320, %2279 : vector<8x128xf32>
    %2349 = arith.maximumf %2320, %2279 : vector<8x128xf32>
    %2350 = arith.select %2347, %2281, %2322 : vector<8x128xi1>, vector<8x128xf32>
    %2351 = arith.select %2347, %2322, %2281 : vector<8x128xi1>, vector<8x128xf32>
    %2352 = arith.select %2347, %2283, %2324 : vector<8x128xi1>, vector<8x128xf32>
    %2353 = arith.select %2347, %2324, %2283 : vector<8x128xi1>, vector<8x128xf32>
    %2354 = arith.cmpf olt, %2265, %2321 : vector<8x128xf32>
    %2355 = arith.minimumf %2321, %2265 : vector<8x128xf32>
    %2356 = arith.maximumf %2321, %2265 : vector<8x128xf32>
    %2357 = arith.select %2354, %2267, %2323 : vector<8x128xi1>, vector<8x128xf32>
    %2358 = arith.select %2354, %2323, %2267 : vector<8x128xi1>, vector<8x128xf32>
    %2359 = arith.select %2354, %2269, %2325 : vector<8x128xi1>, vector<8x128xf32>
    %2360 = arith.select %2354, %2325, %2269 : vector<8x128xi1>, vector<8x128xf32>
    %2361 = arith.cmpf olt, %2223, %2027 : vector<8x128xf32>
    %2362 = arith.minimumf %2027, %2223 : vector<8x128xf32>
    %2363 = arith.maximumf %2027, %2223 : vector<8x128xf32>
    %2364 = arith.select %2361, %2225, %2029 : vector<8x128xi1>, vector<8x128xf32>
    %2365 = arith.select %2361, %2029, %2225 : vector<8x128xi1>, vector<8x128xf32>
    %2366 = arith.select %2361, %2227, %2031 : vector<8x128xi1>, vector<8x128xf32>
    %2367 = arith.select %2361, %2031, %2227 : vector<8x128xi1>, vector<8x128xf32>
    %2368 = arith.cmpf olt, %2363, %2055 : vector<8x128xf32>
    %2369 = arith.minimumf %2055, %2363 : vector<8x128xf32>
    %2370 = arith.maximumf %2055, %2363 : vector<8x128xf32>
    %2371 = arith.select %2368, %2365, %2057 : vector<8x128xi1>, vector<8x128xf32>
    %2372 = arith.select %2368, %2057, %2365 : vector<8x128xi1>, vector<8x128xf32>
    %2373 = arith.select %2368, %2367, %2059 : vector<8x128xi1>, vector<8x128xf32>
    %2374 = arith.select %2368, %2059, %2367 : vector<8x128xi1>, vector<8x128xf32>
    %2375 = arith.cmpf olt, %2237, %2041 : vector<8x128xf32>
    %2376 = arith.minimumf %2041, %2237 : vector<8x128xf32>
    %2377 = arith.maximumf %2041, %2237 : vector<8x128xf32>
    %2378 = arith.select %2375, %2239, %2043 : vector<8x128xi1>, vector<8x128xf32>
    %2379 = arith.select %2375, %2043, %2239 : vector<8x128xi1>, vector<8x128xf32>
    %2380 = arith.select %2375, %2241, %2045 : vector<8x128xi1>, vector<8x128xf32>
    %2381 = arith.select %2375, %2045, %2241 : vector<8x128xi1>, vector<8x128xf32>
    %2382 = arith.cmpf olt, %2377, %2069 : vector<8x128xf32>
    %2383 = arith.minimumf %2069, %2377 : vector<8x128xf32>
    %2384 = arith.maximumf %2069, %2377 : vector<8x128xf32>
    %2385 = arith.select %2382, %2379, %2071 : vector<8x128xi1>, vector<8x128xf32>
    %2386 = arith.select %2382, %2071, %2379 : vector<8x128xi1>, vector<8x128xf32>
    %2387 = arith.select %2382, %2381, %2073 : vector<8x128xi1>, vector<8x128xf32>
    %2388 = arith.select %2382, %2073, %2381 : vector<8x128xi1>, vector<8x128xf32>
    %2389 = arith.cmpf olt, %2369, %2376 : vector<8x128xf32>
    %2390 = arith.minimumf %2376, %2369 : vector<8x128xf32>
    %2391 = arith.maximumf %2376, %2369 : vector<8x128xf32>
    %2392 = arith.select %2389, %2371, %2378 : vector<8x128xi1>, vector<8x128xf32>
    %2393 = arith.select %2389, %2378, %2371 : vector<8x128xi1>, vector<8x128xf32>
    %2394 = arith.select %2389, %2373, %2380 : vector<8x128xi1>, vector<8x128xf32>
    %2395 = arith.select %2389, %2380, %2373 : vector<8x128xi1>, vector<8x128xf32>
    %2396 = arith.cmpf olt, %2370, %2383 : vector<8x128xf32>
    %2397 = arith.minimumf %2383, %2370 : vector<8x128xf32>
    %2398 = arith.maximumf %2383, %2370 : vector<8x128xf32>
    %2399 = arith.select %2396, %2372, %2385 : vector<8x128xi1>, vector<8x128xf32>
    %2400 = arith.select %2396, %2385, %2372 : vector<8x128xi1>, vector<8x128xf32>
    %2401 = arith.select %2396, %2374, %2387 : vector<8x128xi1>, vector<8x128xf32>
    %2402 = arith.select %2396, %2387, %2374 : vector<8x128xi1>, vector<8x128xf32>
    %2403 = arith.cmpf olt, %2230, %2034 : vector<8x128xf32>
    %2404 = arith.minimumf %2034, %2230 : vector<8x128xf32>
    %2405 = arith.maximumf %2034, %2230 : vector<8x128xf32>
    %2406 = arith.select %2403, %2232, %2036 : vector<8x128xi1>, vector<8x128xf32>
    %2407 = arith.select %2403, %2036, %2232 : vector<8x128xi1>, vector<8x128xf32>
    %2408 = arith.select %2403, %2234, %2038 : vector<8x128xi1>, vector<8x128xf32>
    %2409 = arith.select %2403, %2038, %2234 : vector<8x128xi1>, vector<8x128xf32>
    %2410 = arith.cmpf olt, %2405, %2062 : vector<8x128xf32>
    %2411 = arith.minimumf %2062, %2405 : vector<8x128xf32>
    %2412 = arith.maximumf %2062, %2405 : vector<8x128xf32>
    %2413 = arith.select %2410, %2407, %2064 : vector<8x128xi1>, vector<8x128xf32>
    %2414 = arith.select %2410, %2064, %2407 : vector<8x128xi1>, vector<8x128xf32>
    %2415 = arith.select %2410, %2409, %2066 : vector<8x128xi1>, vector<8x128xf32>
    %2416 = arith.select %2410, %2066, %2409 : vector<8x128xi1>, vector<8x128xf32>
    %2417 = arith.cmpf olt, %2175, %2048 : vector<8x128xf32>
    %2418 = arith.minimumf %2048, %2175 : vector<8x128xf32>
    %2419 = arith.maximumf %2048, %2175 : vector<8x128xf32>
    %2420 = arith.select %2417, %2177, %2050 : vector<8x128xi1>, vector<8x128xf32>
    %2421 = arith.select %2417, %2050, %2177 : vector<8x128xi1>, vector<8x128xf32>
    %2422 = arith.select %2417, %2179, %2052 : vector<8x128xi1>, vector<8x128xf32>
    %2423 = arith.select %2417, %2052, %2179 : vector<8x128xi1>, vector<8x128xf32>
    %2424 = arith.cmpf olt, %2419, %1993 : vector<8x128xf32>
    %2425 = arith.minimumf %1993, %2419 : vector<8x128xf32>
    %2426 = arith.maximumf %1993, %2419 : vector<8x128xf32>
    %2427 = arith.select %2424, %2421, %1995 : vector<8x128xi1>, vector<8x128xf32>
    %2428 = arith.select %2424, %1995, %2421 : vector<8x128xi1>, vector<8x128xf32>
    %2429 = arith.select %2424, %2423, %1997 : vector<8x128xi1>, vector<8x128xf32>
    %2430 = arith.select %2424, %1997, %2423 : vector<8x128xi1>, vector<8x128xf32>
    %2431 = arith.cmpf olt, %2411, %2418 : vector<8x128xf32>
    %2432 = arith.minimumf %2418, %2411 : vector<8x128xf32>
    %2433 = arith.maximumf %2418, %2411 : vector<8x128xf32>
    %2434 = arith.select %2431, %2413, %2420 : vector<8x128xi1>, vector<8x128xf32>
    %2435 = arith.select %2431, %2420, %2413 : vector<8x128xi1>, vector<8x128xf32>
    %2436 = arith.select %2431, %2415, %2422 : vector<8x128xi1>, vector<8x128xf32>
    %2437 = arith.select %2431, %2422, %2415 : vector<8x128xi1>, vector<8x128xf32>
    %2438 = arith.cmpf olt, %2412, %2425 : vector<8x128xf32>
    %2439 = arith.minimumf %2425, %2412 : vector<8x128xf32>
    %2440 = arith.maximumf %2425, %2412 : vector<8x128xf32>
    %2441 = arith.select %2438, %2414, %2427 : vector<8x128xi1>, vector<8x128xf32>
    %2442 = arith.select %2438, %2427, %2414 : vector<8x128xi1>, vector<8x128xf32>
    %2443 = arith.select %2438, %2416, %2429 : vector<8x128xi1>, vector<8x128xf32>
    %2444 = arith.select %2438, %2429, %2416 : vector<8x128xi1>, vector<8x128xf32>
    %2445 = arith.cmpf olt, %2390, %2404 : vector<8x128xf32>
    %2446 = arith.minimumf %2404, %2390 : vector<8x128xf32>
    %2447 = arith.maximumf %2404, %2390 : vector<8x128xf32>
    %2448 = arith.select %2445, %2392, %2406 : vector<8x128xi1>, vector<8x128xf32>
    %2449 = arith.select %2445, %2406, %2392 : vector<8x128xi1>, vector<8x128xf32>
    %2450 = arith.select %2445, %2394, %2408 : vector<8x128xi1>, vector<8x128xf32>
    %2451 = arith.select %2445, %2408, %2394 : vector<8x128xi1>, vector<8x128xf32>
    %2452 = arith.cmpf olt, %2391, %2432 : vector<8x128xf32>
    %2453 = arith.minimumf %2432, %2391 : vector<8x128xf32>
    %2454 = arith.maximumf %2432, %2391 : vector<8x128xf32>
    %2455 = arith.select %2452, %2393, %2434 : vector<8x128xi1>, vector<8x128xf32>
    %2456 = arith.select %2452, %2434, %2393 : vector<8x128xi1>, vector<8x128xf32>
    %2457 = arith.select %2452, %2395, %2436 : vector<8x128xi1>, vector<8x128xf32>
    %2458 = arith.select %2452, %2436, %2395 : vector<8x128xi1>, vector<8x128xf32>
    %2459 = arith.cmpf olt, %2397, %2433 : vector<8x128xf32>
    %2460 = arith.minimumf %2433, %2397 : vector<8x128xf32>
    %2461 = arith.maximumf %2433, %2397 : vector<8x128xf32>
    %2462 = arith.select %2459, %2399, %2435 : vector<8x128xi1>, vector<8x128xf32>
    %2463 = arith.select %2459, %2435, %2399 : vector<8x128xi1>, vector<8x128xf32>
    %2464 = arith.select %2459, %2401, %2437 : vector<8x128xi1>, vector<8x128xf32>
    %2465 = arith.select %2459, %2437, %2401 : vector<8x128xi1>, vector<8x128xf32>
    %2466 = arith.cmpf olt, %2398, %2439 : vector<8x128xf32>
    %2467 = arith.minimumf %2439, %2398 : vector<8x128xf32>
    %2468 = arith.maximumf %2439, %2398 : vector<8x128xf32>
    %2469 = arith.select %2466, %2400, %2441 : vector<8x128xi1>, vector<8x128xf32>
    %2470 = arith.select %2466, %2441, %2400 : vector<8x128xi1>, vector<8x128xf32>
    %2471 = arith.select %2466, %2402, %2443 : vector<8x128xi1>, vector<8x128xf32>
    %2472 = arith.select %2466, %2443, %2402 : vector<8x128xi1>, vector<8x128xf32>
    %2473 = arith.cmpf olt, %2384, %2440 : vector<8x128xf32>
    %2474 = arith.minimumf %2440, %2384 : vector<8x128xf32>
    %2475 = arith.maximumf %2440, %2384 : vector<8x128xf32>
    %2476 = arith.select %2473, %2386, %2442 : vector<8x128xi1>, vector<8x128xf32>
    %2477 = arith.select %2473, %2442, %2386 : vector<8x128xi1>, vector<8x128xf32>
    %2478 = arith.select %2473, %2388, %2444 : vector<8x128xi1>, vector<8x128xf32>
    %2479 = arith.select %2473, %2444, %2388 : vector<8x128xi1>, vector<8x128xf32>
    %2480 = arith.cmpf olt, %2327, %2362 : vector<8x128xf32>
    %2481 = arith.minimumf %2362, %2327 : vector<8x128xf32>
    %2482 = arith.maximumf %2362, %2327 : vector<8x128xf32>
    %2483 = arith.select %2480, %2329, %2364 : vector<8x128xi1>, vector<8x128xf32>
    %2484 = arith.select %2480, %2364, %2329 : vector<8x128xi1>, vector<8x128xf32>
    %2485 = arith.select %2480, %2331, %2366 : vector<8x128xi1>, vector<8x128xf32>
    %2486 = arith.select %2480, %2366, %2331 : vector<8x128xi1>, vector<8x128xf32>
    %2487 = arith.cmpf olt, %2328, %2446 : vector<8x128xf32>
    %2488 = arith.minimumf %2446, %2328 : vector<8x128xf32>
    %2489 = arith.maximumf %2446, %2328 : vector<8x128xf32>
    %2490 = arith.select %2487, %2330, %2448 : vector<8x128xi1>, vector<8x128xf32>
    %2491 = arith.select %2487, %2448, %2330 : vector<8x128xi1>, vector<8x128xf32>
    %2492 = arith.select %2487, %2332, %2450 : vector<8x128xi1>, vector<8x128xf32>
    %2493 = arith.select %2487, %2450, %2332 : vector<8x128xi1>, vector<8x128xf32>
    %2494 = arith.cmpf olt, %2334, %2447 : vector<8x128xf32>
    %2495 = arith.minimumf %2447, %2334 : vector<8x128xf32>
    %2496 = arith.maximumf %2447, %2334 : vector<8x128xf32>
    %2497 = arith.select %2494, %2336, %2449 : vector<8x128xi1>, vector<8x128xf32>
    %2498 = arith.select %2494, %2449, %2336 : vector<8x128xi1>, vector<8x128xf32>
    %2499 = arith.select %2494, %2338, %2451 : vector<8x128xi1>, vector<8x128xf32>
    %2500 = arith.select %2494, %2451, %2338 : vector<8x128xi1>, vector<8x128xf32>
    %2501 = arith.cmpf olt, %2335, %2453 : vector<8x128xf32>
    %2502 = arith.minimumf %2453, %2335 : vector<8x128xf32>
    %2503 = arith.maximumf %2453, %2335 : vector<8x128xf32>
    %2504 = arith.select %2501, %2337, %2455 : vector<8x128xi1>, vector<8x128xf32>
    %2505 = arith.select %2501, %2455, %2337 : vector<8x128xi1>, vector<8x128xf32>
    %2506 = arith.select %2501, %2339, %2457 : vector<8x128xi1>, vector<8x128xf32>
    %2507 = arith.select %2501, %2457, %2339 : vector<8x128xi1>, vector<8x128xf32>
    %2508 = arith.cmpf olt, %2341, %2454 : vector<8x128xf32>
    %2509 = arith.minimumf %2454, %2341 : vector<8x128xf32>
    %2510 = arith.maximumf %2454, %2341 : vector<8x128xf32>
    %2511 = arith.select %2508, %2343, %2456 : vector<8x128xi1>, vector<8x128xf32>
    %2512 = arith.select %2508, %2456, %2343 : vector<8x128xi1>, vector<8x128xf32>
    %2513 = arith.select %2508, %2345, %2458 : vector<8x128xi1>, vector<8x128xf32>
    %2514 = arith.select %2508, %2458, %2345 : vector<8x128xi1>, vector<8x128xf32>
    %2515 = arith.cmpf olt, %2342, %2460 : vector<8x128xf32>
    %2516 = arith.minimumf %2460, %2342 : vector<8x128xf32>
    %2517 = arith.maximumf %2460, %2342 : vector<8x128xf32>
    %2518 = arith.select %2515, %2344, %2462 : vector<8x128xi1>, vector<8x128xf32>
    %2519 = arith.select %2515, %2462, %2344 : vector<8x128xi1>, vector<8x128xf32>
    %2520 = arith.select %2515, %2346, %2464 : vector<8x128xi1>, vector<8x128xf32>
    %2521 = arith.select %2515, %2464, %2346 : vector<8x128xi1>, vector<8x128xf32>
    %2522 = arith.cmpf olt, %2348, %2461 : vector<8x128xf32>
    %2523 = arith.minimumf %2461, %2348 : vector<8x128xf32>
    %2524 = arith.maximumf %2461, %2348 : vector<8x128xf32>
    %2525 = arith.select %2522, %2350, %2463 : vector<8x128xi1>, vector<8x128xf32>
    %2526 = arith.select %2522, %2463, %2350 : vector<8x128xi1>, vector<8x128xf32>
    %2527 = arith.select %2522, %2352, %2465 : vector<8x128xi1>, vector<8x128xf32>
    %2528 = arith.select %2522, %2465, %2352 : vector<8x128xi1>, vector<8x128xf32>
    %2529 = arith.cmpf olt, %2349, %2467 : vector<8x128xf32>
    %2530 = arith.minimumf %2467, %2349 : vector<8x128xf32>
    %2531 = arith.maximumf %2467, %2349 : vector<8x128xf32>
    %2532 = arith.select %2529, %2351, %2469 : vector<8x128xi1>, vector<8x128xf32>
    %2533 = arith.select %2529, %2469, %2351 : vector<8x128xi1>, vector<8x128xf32>
    %2534 = arith.select %2529, %2353, %2471 : vector<8x128xi1>, vector<8x128xf32>
    %2535 = arith.select %2529, %2471, %2353 : vector<8x128xi1>, vector<8x128xf32>
    %2536 = arith.cmpf olt, %2355, %2468 : vector<8x128xf32>
    %2537 = arith.minimumf %2468, %2355 : vector<8x128xf32>
    %2538 = arith.maximumf %2468, %2355 : vector<8x128xf32>
    %2539 = arith.select %2536, %2357, %2470 : vector<8x128xi1>, vector<8x128xf32>
    %2540 = arith.select %2536, %2470, %2357 : vector<8x128xi1>, vector<8x128xf32>
    %2541 = arith.select %2536, %2359, %2472 : vector<8x128xi1>, vector<8x128xf32>
    %2542 = arith.select %2536, %2472, %2359 : vector<8x128xi1>, vector<8x128xf32>
    %2543 = arith.cmpf olt, %2356, %2474 : vector<8x128xf32>
    %2544 = arith.minimumf %2474, %2356 : vector<8x128xf32>
    %2545 = arith.maximumf %2474, %2356 : vector<8x128xf32>
    %2546 = arith.select %2543, %2358, %2476 : vector<8x128xi1>, vector<8x128xf32>
    %2547 = arith.select %2543, %2476, %2358 : vector<8x128xi1>, vector<8x128xf32>
    %2548 = arith.select %2543, %2360, %2478 : vector<8x128xi1>, vector<8x128xf32>
    %2549 = arith.select %2543, %2478, %2360 : vector<8x128xi1>, vector<8x128xf32>
    %2550 = arith.cmpf olt, %2307, %2475 : vector<8x128xf32>
    %2551 = arith.minimumf %2475, %2307 : vector<8x128xf32>
    %2552 = arith.maximumf %2475, %2307 : vector<8x128xf32>
    %2553 = arith.select %2550, %2309, %2477 : vector<8x128xi1>, vector<8x128xf32>
    %2554 = arith.select %2550, %2477, %2309 : vector<8x128xi1>, vector<8x128xf32>
    %2555 = arith.select %2550, %2311, %2479 : vector<8x128xi1>, vector<8x128xf32>
    %2556 = arith.select %2550, %2479, %2311 : vector<8x128xi1>, vector<8x128xf32>
    %2557 = arith.mulf %2245, %2485 : vector<8x128xf32>
    %2558 = arith.mulf %2483, %2247 : vector<8x128xf32>
    %2559 = arith.subf %2557, %2558 : vector<8x128xf32>
    %2560 = arith.mulf %2483, %2486 : vector<8x128xf32>
    %2561 = arith.mulf %2484, %2485 : vector<8x128xf32>
    %2562 = arith.subf %2560, %2561 : vector<8x128xf32>
    %2563 = arith.addf %2559, %2562 : vector<8x128xf32>
    %2564 = arith.mulf %2484, %2492 : vector<8x128xf32>
    %2565 = arith.mulf %2490, %2486 : vector<8x128xf32>
    %2566 = arith.subf %2564, %2565 : vector<8x128xf32>
    %2567 = arith.addf %2563, %2566 : vector<8x128xf32>
    %2568 = arith.mulf %2490, %2493 : vector<8x128xf32>
    %2569 = arith.mulf %2491, %2492 : vector<8x128xf32>
    %2570 = arith.subf %2568, %2569 : vector<8x128xf32>
    %2571 = arith.addf %2567, %2570 : vector<8x128xf32>
    %2572 = arith.mulf %2491, %2499 : vector<8x128xf32>
    %2573 = arith.mulf %2497, %2493 : vector<8x128xf32>
    %2574 = arith.subf %2572, %2573 : vector<8x128xf32>
    %2575 = arith.addf %2571, %2574 : vector<8x128xf32>
    %2576 = arith.mulf %2497, %2500 : vector<8x128xf32>
    %2577 = arith.mulf %2498, %2499 : vector<8x128xf32>
    %2578 = arith.subf %2576, %2577 : vector<8x128xf32>
    %2579 = arith.addf %2575, %2578 : vector<8x128xf32>
    %2580 = arith.mulf %2498, %2506 : vector<8x128xf32>
    %2581 = arith.mulf %2504, %2500 : vector<8x128xf32>
    %2582 = arith.subf %2580, %2581 : vector<8x128xf32>
    %2583 = arith.addf %2579, %2582 : vector<8x128xf32>
    %2584 = arith.mulf %2504, %2507 : vector<8x128xf32>
    %2585 = arith.mulf %2505, %2506 : vector<8x128xf32>
    %2586 = arith.subf %2584, %2585 : vector<8x128xf32>
    %2587 = arith.addf %2583, %2586 : vector<8x128xf32>
    %2588 = arith.mulf %2505, %2513 : vector<8x128xf32>
    %2589 = arith.mulf %2511, %2507 : vector<8x128xf32>
    %2590 = arith.subf %2588, %2589 : vector<8x128xf32>
    %2591 = arith.addf %2587, %2590 : vector<8x128xf32>
    %2592 = arith.mulf %2511, %2514 : vector<8x128xf32>
    %2593 = arith.mulf %2512, %2513 : vector<8x128xf32>
    %2594 = arith.subf %2592, %2593 : vector<8x128xf32>
    %2595 = arith.addf %2591, %2594 : vector<8x128xf32>
    %2596 = arith.mulf %2512, %2520 : vector<8x128xf32>
    %2597 = arith.mulf %2518, %2514 : vector<8x128xf32>
    %2598 = arith.subf %2596, %2597 : vector<8x128xf32>
    %2599 = arith.addf %2595, %2598 : vector<8x128xf32>
    %2600 = arith.mulf %2518, %2521 : vector<8x128xf32>
    %2601 = arith.mulf %2519, %2520 : vector<8x128xf32>
    %2602 = arith.subf %2600, %2601 : vector<8x128xf32>
    %2603 = arith.addf %2599, %2602 : vector<8x128xf32>
    %2604 = arith.mulf %2519, %2527 : vector<8x128xf32>
    %2605 = arith.mulf %2525, %2521 : vector<8x128xf32>
    %2606 = arith.subf %2604, %2605 : vector<8x128xf32>
    %2607 = arith.addf %2603, %2606 : vector<8x128xf32>
    %2608 = arith.mulf %2525, %2528 : vector<8x128xf32>
    %2609 = arith.mulf %2526, %2527 : vector<8x128xf32>
    %2610 = arith.subf %2608, %2609 : vector<8x128xf32>
    %2611 = arith.addf %2607, %2610 : vector<8x128xf32>
    %2612 = arith.mulf %2526, %2534 : vector<8x128xf32>
    %2613 = arith.mulf %2532, %2528 : vector<8x128xf32>
    %2614 = arith.subf %2612, %2613 : vector<8x128xf32>
    %2615 = arith.addf %2611, %2614 : vector<8x128xf32>
    %2616 = arith.mulf %2532, %2535 : vector<8x128xf32>
    %2617 = arith.mulf %2533, %2534 : vector<8x128xf32>
    %2618 = arith.subf %2616, %2617 : vector<8x128xf32>
    %2619 = arith.addf %2615, %2618 : vector<8x128xf32>
    %2620 = arith.mulf %2533, %2541 : vector<8x128xf32>
    %2621 = arith.mulf %2539, %2535 : vector<8x128xf32>
    %2622 = arith.subf %2620, %2621 : vector<8x128xf32>
    %2623 = arith.addf %2619, %2622 : vector<8x128xf32>
    %2624 = arith.mulf %2539, %2542 : vector<8x128xf32>
    %2625 = arith.mulf %2540, %2541 : vector<8x128xf32>
    %2626 = arith.subf %2624, %2625 : vector<8x128xf32>
    %2627 = arith.addf %2623, %2626 : vector<8x128xf32>
    %2628 = arith.mulf %2540, %2548 : vector<8x128xf32>
    %2629 = arith.mulf %2546, %2542 : vector<8x128xf32>
    %2630 = arith.subf %2628, %2629 : vector<8x128xf32>
    %2631 = arith.addf %2627, %2630 : vector<8x128xf32>
    %2632 = arith.mulf %2546, %2549 : vector<8x128xf32>
    %2633 = arith.mulf %2547, %2548 : vector<8x128xf32>
    %2634 = arith.subf %2632, %2633 : vector<8x128xf32>
    %2635 = arith.addf %2631, %2634 : vector<8x128xf32>
    %2636 = arith.mulf %2547, %2555 : vector<8x128xf32>
    %2637 = arith.mulf %2553, %2549 : vector<8x128xf32>
    %2638 = arith.subf %2636, %2637 : vector<8x128xf32>
    %2639 = arith.addf %2635, %2638 : vector<8x128xf32>
    %2640 = arith.mulf %2553, %2556 : vector<8x128xf32>
    %2641 = arith.mulf %2554, %2555 : vector<8x128xf32>
    %2642 = arith.subf %2640, %2641 : vector<8x128xf32>
    %2643 = arith.addf %2639, %2642 : vector<8x128xf32>
    %2644 = arith.mulf %2554, %2430 : vector<8x128xf32>
    %2645 = arith.mulf %2428, %2556 : vector<8x128xf32>
    %2646 = arith.subf %2644, %2645 : vector<8x128xf32>
    %2647 = arith.addf %2643, %2646 : vector<8x128xf32>
    %cst_338 = arith.constant 9.500000e+00 : f32
    %2648 = vector.broadcast %cst_338 : f32 to vector<8x128xf32>
    %2649 = arith.cmpf olt, %2481, %2648 : vector<8x128xf32>
    %2650 = arith.select %2649, %2483, %2245 : vector<8x128xi1>, vector<8x128xf32>
    %2651 = arith.select %2649, %2485, %2247 : vector<8x128xi1>, vector<8x128xf32>
    %cst_339 = arith.constant 9.500000e+00 : f32
    %2652 = vector.broadcast %cst_339 : f32 to vector<8x128xf32>
    %2653 = arith.cmpf olt, %2482, %2652 : vector<8x128xf32>
    %2654 = arith.select %2653, %2484, %2650 : vector<8x128xi1>, vector<8x128xf32>
    %2655 = arith.select %2653, %2486, %2651 : vector<8x128xi1>, vector<8x128xf32>
    %cst_340 = arith.constant 9.500000e+00 : f32
    %2656 = vector.broadcast %cst_340 : f32 to vector<8x128xf32>
    %2657 = arith.cmpf olt, %2488, %2656 : vector<8x128xf32>
    %2658 = arith.select %2657, %2490, %2654 : vector<8x128xi1>, vector<8x128xf32>
    %2659 = arith.select %2657, %2492, %2655 : vector<8x128xi1>, vector<8x128xf32>
    %cst_341 = arith.constant 9.500000e+00 : f32
    %2660 = vector.broadcast %cst_341 : f32 to vector<8x128xf32>
    %2661 = arith.cmpf olt, %2489, %2660 : vector<8x128xf32>
    %2662 = arith.select %2661, %2491, %2658 : vector<8x128xi1>, vector<8x128xf32>
    %2663 = arith.select %2661, %2493, %2659 : vector<8x128xi1>, vector<8x128xf32>
    %cst_342 = arith.constant 9.500000e+00 : f32
    %2664 = vector.broadcast %cst_342 : f32 to vector<8x128xf32>
    %2665 = arith.cmpf olt, %2495, %2664 : vector<8x128xf32>
    %2666 = arith.select %2665, %2497, %2662 : vector<8x128xi1>, vector<8x128xf32>
    %2667 = arith.select %2665, %2499, %2663 : vector<8x128xi1>, vector<8x128xf32>
    %cst_343 = arith.constant 9.500000e+00 : f32
    %2668 = vector.broadcast %cst_343 : f32 to vector<8x128xf32>
    %2669 = arith.cmpf olt, %2496, %2668 : vector<8x128xf32>
    %2670 = arith.select %2669, %2498, %2666 : vector<8x128xi1>, vector<8x128xf32>
    %2671 = arith.select %2669, %2500, %2667 : vector<8x128xi1>, vector<8x128xf32>
    %cst_344 = arith.constant 9.500000e+00 : f32
    %2672 = vector.broadcast %cst_344 : f32 to vector<8x128xf32>
    %2673 = arith.cmpf olt, %2502, %2672 : vector<8x128xf32>
    %2674 = arith.select %2673, %2504, %2670 : vector<8x128xi1>, vector<8x128xf32>
    %2675 = arith.select %2673, %2506, %2671 : vector<8x128xi1>, vector<8x128xf32>
    %cst_345 = arith.constant 9.500000e+00 : f32
    %2676 = vector.broadcast %cst_345 : f32 to vector<8x128xf32>
    %2677 = arith.cmpf olt, %2503, %2676 : vector<8x128xf32>
    %2678 = arith.select %2677, %2505, %2674 : vector<8x128xi1>, vector<8x128xf32>
    %2679 = arith.select %2677, %2507, %2675 : vector<8x128xi1>, vector<8x128xf32>
    %cst_346 = arith.constant 9.500000e+00 : f32
    %2680 = vector.broadcast %cst_346 : f32 to vector<8x128xf32>
    %2681 = arith.cmpf olt, %2509, %2680 : vector<8x128xf32>
    %2682 = arith.select %2681, %2511, %2678 : vector<8x128xi1>, vector<8x128xf32>
    %2683 = arith.select %2681, %2513, %2679 : vector<8x128xi1>, vector<8x128xf32>
    %cst_347 = arith.constant 9.500000e+00 : f32
    %2684 = vector.broadcast %cst_347 : f32 to vector<8x128xf32>
    %2685 = arith.cmpf olt, %2510, %2684 : vector<8x128xf32>
    %2686 = arith.select %2685, %2512, %2682 : vector<8x128xi1>, vector<8x128xf32>
    %2687 = arith.select %2685, %2514, %2683 : vector<8x128xi1>, vector<8x128xf32>
    %cst_348 = arith.constant 9.500000e+00 : f32
    %2688 = vector.broadcast %cst_348 : f32 to vector<8x128xf32>
    %2689 = arith.cmpf olt, %2516, %2688 : vector<8x128xf32>
    %2690 = arith.select %2689, %2518, %2686 : vector<8x128xi1>, vector<8x128xf32>
    %2691 = arith.select %2689, %2520, %2687 : vector<8x128xi1>, vector<8x128xf32>
    %cst_349 = arith.constant 9.500000e+00 : f32
    %2692 = vector.broadcast %cst_349 : f32 to vector<8x128xf32>
    %2693 = arith.cmpf olt, %2517, %2692 : vector<8x128xf32>
    %2694 = arith.select %2693, %2519, %2690 : vector<8x128xi1>, vector<8x128xf32>
    %2695 = arith.select %2693, %2521, %2691 : vector<8x128xi1>, vector<8x128xf32>
    %cst_350 = arith.constant 9.500000e+00 : f32
    %2696 = vector.broadcast %cst_350 : f32 to vector<8x128xf32>
    %2697 = arith.cmpf olt, %2523, %2696 : vector<8x128xf32>
    %2698 = arith.select %2697, %2525, %2694 : vector<8x128xi1>, vector<8x128xf32>
    %2699 = arith.select %2697, %2527, %2695 : vector<8x128xi1>, vector<8x128xf32>
    %cst_351 = arith.constant 9.500000e+00 : f32
    %2700 = vector.broadcast %cst_351 : f32 to vector<8x128xf32>
    %2701 = arith.cmpf olt, %2524, %2700 : vector<8x128xf32>
    %2702 = arith.select %2701, %2526, %2698 : vector<8x128xi1>, vector<8x128xf32>
    %2703 = arith.select %2701, %2528, %2699 : vector<8x128xi1>, vector<8x128xf32>
    %cst_352 = arith.constant 9.500000e+00 : f32
    %2704 = vector.broadcast %cst_352 : f32 to vector<8x128xf32>
    %2705 = arith.cmpf olt, %2530, %2704 : vector<8x128xf32>
    %2706 = arith.select %2705, %2532, %2702 : vector<8x128xi1>, vector<8x128xf32>
    %2707 = arith.select %2705, %2534, %2703 : vector<8x128xi1>, vector<8x128xf32>
    %cst_353 = arith.constant 9.500000e+00 : f32
    %2708 = vector.broadcast %cst_353 : f32 to vector<8x128xf32>
    %2709 = arith.cmpf olt, %2531, %2708 : vector<8x128xf32>
    %2710 = arith.select %2709, %2533, %2706 : vector<8x128xi1>, vector<8x128xf32>
    %2711 = arith.select %2709, %2535, %2707 : vector<8x128xi1>, vector<8x128xf32>
    %cst_354 = arith.constant 9.500000e+00 : f32
    %2712 = vector.broadcast %cst_354 : f32 to vector<8x128xf32>
    %2713 = arith.cmpf olt, %2537, %2712 : vector<8x128xf32>
    %2714 = arith.select %2713, %2539, %2710 : vector<8x128xi1>, vector<8x128xf32>
    %2715 = arith.select %2713, %2541, %2711 : vector<8x128xi1>, vector<8x128xf32>
    %cst_355 = arith.constant 9.500000e+00 : f32
    %2716 = vector.broadcast %cst_355 : f32 to vector<8x128xf32>
    %2717 = arith.cmpf olt, %2538, %2716 : vector<8x128xf32>
    %2718 = arith.select %2717, %2540, %2714 : vector<8x128xi1>, vector<8x128xf32>
    %2719 = arith.select %2717, %2542, %2715 : vector<8x128xi1>, vector<8x128xf32>
    %cst_356 = arith.constant 9.500000e+00 : f32
    %2720 = vector.broadcast %cst_356 : f32 to vector<8x128xf32>
    %2721 = arith.cmpf olt, %2544, %2720 : vector<8x128xf32>
    %2722 = arith.select %2721, %2546, %2718 : vector<8x128xi1>, vector<8x128xf32>
    %2723 = arith.select %2721, %2548, %2719 : vector<8x128xi1>, vector<8x128xf32>
    %cst_357 = arith.constant 9.500000e+00 : f32
    %2724 = vector.broadcast %cst_357 : f32 to vector<8x128xf32>
    %2725 = arith.cmpf olt, %2545, %2724 : vector<8x128xf32>
    %2726 = arith.select %2725, %2547, %2722 : vector<8x128xi1>, vector<8x128xf32>
    %2727 = arith.select %2725, %2549, %2723 : vector<8x128xi1>, vector<8x128xf32>
    %cst_358 = arith.constant 9.500000e+00 : f32
    %2728 = vector.broadcast %cst_358 : f32 to vector<8x128xf32>
    %2729 = arith.cmpf olt, %2551, %2728 : vector<8x128xf32>
    %2730 = arith.select %2729, %2553, %2726 : vector<8x128xi1>, vector<8x128xf32>
    %2731 = arith.select %2729, %2555, %2727 : vector<8x128xi1>, vector<8x128xf32>
    %cst_359 = arith.constant 9.500000e+00 : f32
    %2732 = vector.broadcast %cst_359 : f32 to vector<8x128xf32>
    %2733 = arith.cmpf olt, %2552, %2732 : vector<8x128xf32>
    %2734 = arith.select %2733, %2554, %2730 : vector<8x128xi1>, vector<8x128xf32>
    %2735 = arith.select %2733, %2556, %2731 : vector<8x128xi1>, vector<8x128xf32>
    %cst_360 = arith.constant 9.500000e+00 : f32
    %2736 = vector.broadcast %cst_360 : f32 to vector<8x128xf32>
    %2737 = arith.cmpf olt, %2426, %2736 : vector<8x128xf32>
    %2738 = arith.select %2737, %2428, %2734 : vector<8x128xi1>, vector<8x128xf32>
    %2739 = arith.select %2737, %2430, %2735 : vector<8x128xi1>, vector<8x128xf32>
    %2740 = arith.mulf %2738, %2247 : vector<8x128xf32>
    %2741 = arith.mulf %2245, %2739 : vector<8x128xf32>
    %2742 = arith.subf %2740, %2741 : vector<8x128xf32>
    %2743 = arith.addf %2647, %2742 : vector<8x128xf32>
    %2744 = math.absf %2743 : vector<8x128xf32>
    %cst_361 = arith.constant 5.000000e-01 : f32
    %2745 = vector.broadcast %cst_361 : f32 to vector<8x128xf32>
    %2746 = arith.mulf %2745, %2744 : vector<8x128xf32>
    %c2_362 = arith.constant 2 : index
    %c0_363 = arith.constant 0 : index
    %c0_364 = arith.constant 0 : index
    %2747 = vector.load %arg1[%c2_362, %c0_363, %c0_364] : memref<6x8x128xf32, #tpu.memory_space<vmem>>, vector<1x8x128xf32>
    %2748 = vector.shape_cast %2747 : vector<1x8x128xf32> to vector<8x128xf32>
    %c3_365 = arith.constant 3 : index
    %c0_366 = arith.constant 0 : index
    %c0_367 = arith.constant 0 : index
    %2749 = vector.load %arg1[%c3_365, %c0_366, %c0_367] : memref<6x8x128xf32, #tpu.memory_space<vmem>>, vector<1x8x128xf32>
    %2750 = vector.shape_cast %2749 : vector<1x8x128xf32> to vector<8x128xf32>
    %2751 = arith.mulf %2748, %2750 : vector<8x128xf32>
    %2752 = math.absf %2751 : vector<8x128xf32>
    %c2_368 = arith.constant 2 : index
    %c0_369 = arith.constant 0 : index
    %c0_370 = arith.constant 0 : index
    %2753 = vector.load %arg2[%c2_368, %c0_369, %c0_370] : memref<6x8x128xf32, #tpu.memory_space<vmem>>, vector<1x8x128xf32>
    %2754 = vector.shape_cast %2753 : vector<1x8x128xf32> to vector<8x128xf32>
    %c3_371 = arith.constant 3 : index
    %c0_372 = arith.constant 0 : index
    %c0_373 = arith.constant 0 : index
    %2755 = vector.load %arg2[%c3_371, %c0_372, %c0_373] : memref<6x8x128xf32, #tpu.memory_space<vmem>>, vector<1x8x128xf32>
    %2756 = vector.shape_cast %2755 : vector<1x8x128xf32> to vector<8x128xf32>
    %2757 = arith.mulf %2754, %2756 : vector<8x128xf32>
    %2758 = math.absf %2757 : vector<8x128xf32>
    %2759 = arith.addf %2752, %2758 : vector<8x128xf32>
    %2760 = arith.subf %2759, %2746 : vector<8x128xf32>
    %cst_374 = arith.constant 9.99999993E-9 : f32
    %2761 = vector.broadcast %cst_374 : f32 to vector<8x128xf32>
    %2762 = arith.addf %2760, %2761 : vector<8x128xf32>
    %2763 = tpu.reciprocal %2762 {approx = true} : vector<8x128xf32> -> vector<8x128xf32>
    %2764 = arith.mulf %2762, %2763 : vector<8x128xf32>
    %cst_375 = arith.constant 2.000000e+00 : f32
    %2765 = vector.broadcast %cst_375 : f32 to vector<8x128xf32>
    %2766 = arith.subf %2765, %2764 : vector<8x128xf32>
    %2767 = arith.mulf %2763, %2766 : vector<8x128xf32>
    %2768 = arith.mulf %2746, %2767 : vector<8x128xf32>
    %cst_376 = arith.constant 9.99999997E-7 : f32
    %2769 = vector.broadcast %cst_376 : f32 to vector<8x128xf32>
    %2770 = arith.maximumf %2768, %2769 : vector<8x128xf32>
    %cst_377 = arith.constant 1.000000e+00 : f32
    %2771 = vector.broadcast %cst_377 : f32 to vector<8x128xf32>
    %2772 = arith.subf %2771, %2770 : vector<8x128xf32>
    %c0_378 = arith.constant 0 : index
    %c0_379 = arith.constant 0 : index
    %c0_380 = arith.constant 0 : index
    %2773 = vector.load %arg1[%c0_378, %c0_379, %c0_380] : memref<6x8x128xf32, #tpu.memory_space<vmem>>, vector<1x8x128xf32>
    %2774 = vector.shape_cast %2773 : vector<1x8x128xf32> to vector<8x128xf32>
    %c1_381 = arith.constant 1 : index
    %c0_382 = arith.constant 0 : index
    %c0_383 = arith.constant 0 : index
    %2775 = vector.load %arg1[%c1_381, %c0_382, %c0_383] : memref<6x8x128xf32, #tpu.memory_space<vmem>>, vector<1x8x128xf32>
    %2776 = vector.shape_cast %2775 : vector<1x8x128xf32> to vector<8x128xf32>
    %c2_384 = arith.constant 2 : index
    %c0_385 = arith.constant 0 : index
    %c0_386 = arith.constant 0 : index
    %2777 = vector.load %arg1[%c2_384, %c0_385, %c0_386] : memref<6x8x128xf32, #tpu.memory_space<vmem>>, vector<1x8x128xf32>
    %2778 = vector.shape_cast %2777 : vector<1x8x128xf32> to vector<8x128xf32>
    %c3_387 = arith.constant 3 : index
    %c0_388 = arith.constant 0 : index
    %c0_389 = arith.constant 0 : index
    %2779 = vector.load %arg1[%c3_387, %c0_388, %c0_389] : memref<6x8x128xf32, #tpu.memory_space<vmem>>, vector<1x8x128xf32>
    %2780 = vector.shape_cast %2779 : vector<1x8x128xf32> to vector<8x128xf32>
    %c4_390 = arith.constant 4 : index
    %c0_391 = arith.constant 0 : index
    %c0_392 = arith.constant 0 : index
    %2781 = vector.load %arg1[%c4_390, %c0_391, %c0_392] : memref<6x8x128xf32, #tpu.memory_space<vmem>>, vector<1x8x128xf32>
    %2782 = vector.shape_cast %2781 : vector<1x8x128xf32> to vector<8x128xf32>
    %c5_393 = arith.constant 5 : index
    %c0_394 = arith.constant 0 : index
    %c0_395 = arith.constant 0 : index
    %2783 = vector.load %arg1[%c5_393, %c0_394, %c0_395] : memref<6x8x128xf32, #tpu.memory_space<vmem>>, vector<1x8x128xf32>
    %2784 = vector.shape_cast %2783 : vector<1x8x128xf32> to vector<8x128xf32>
    %c0_396 = arith.constant 0 : index
    %c0_397 = arith.constant 0 : index
    %c0_398 = arith.constant 0 : index
    %2785 = vector.load %arg2[%c0_396, %c0_397, %c0_398] : memref<6x8x128xf32, #tpu.memory_space<vmem>>, vector<1x8x128xf32>
    %2786 = vector.shape_cast %2785 : vector<1x8x128xf32> to vector<8x128xf32>
    %c1_399 = arith.constant 1 : index
    %c0_400 = arith.constant 0 : index
    %c0_401 = arith.constant 0 : index
    %2787 = vector.load %arg2[%c1_399, %c0_400, %c0_401] : memref<6x8x128xf32, #tpu.memory_space<vmem>>, vector<1x8x128xf32>
    %2788 = vector.shape_cast %2787 : vector<1x8x128xf32> to vector<8x128xf32>
    %c2_402 = arith.constant 2 : index
    %c0_403 = arith.constant 0 : index
    %c0_404 = arith.constant 0 : index
    %2789 = vector.load %arg2[%c2_402, %c0_403, %c0_404] : memref<6x8x128xf32, #tpu.memory_space<vmem>>, vector<1x8x128xf32>
    %2790 = vector.shape_cast %2789 : vector<1x8x128xf32> to vector<8x128xf32>
    %c3_405 = arith.constant 3 : index
    %c0_406 = arith.constant 0 : index
    %c0_407 = arith.constant 0 : index
    %2791 = vector.load %arg2[%c3_405, %c0_406, %c0_407] : memref<6x8x128xf32, #tpu.memory_space<vmem>>, vector<1x8x128xf32>
    %2792 = vector.shape_cast %2791 : vector<1x8x128xf32> to vector<8x128xf32>
    %c4_408 = arith.constant 4 : index
    %c0_409 = arith.constant 0 : index
    %c0_410 = arith.constant 0 : index
    %2793 = vector.load %arg2[%c4_408, %c0_409, %c0_410] : memref<6x8x128xf32, #tpu.memory_space<vmem>>, vector<1x8x128xf32>
    %2794 = vector.shape_cast %2793 : vector<1x8x128xf32> to vector<8x128xf32>
    %c5_411 = arith.constant 5 : index
    %c0_412 = arith.constant 0 : index
    %c0_413 = arith.constant 0 : index
    %2795 = vector.load %arg2[%c5_411, %c0_412, %c0_413] : memref<6x8x128xf32, #tpu.memory_space<vmem>>, vector<1x8x128xf32>
    %2796 = vector.shape_cast %2795 : vector<1x8x128xf32> to vector<8x128xf32>
    %2797 = arith.mulf %2778, %2778 : vector<8x128xf32>
    %cst_414 = arith.constant 0.0833333358 : f32
    %2798 = vector.broadcast %cst_414 : f32 to vector<8x128xf32>
    %2799 = arith.mulf %2797, %2798 : vector<8x128xf32>
    %2800 = arith.mulf %2780, %2780 : vector<8x128xf32>
    %cst_415 = arith.constant 0.0833333358 : f32
    %2801 = vector.broadcast %cst_415 : f32 to vector<8x128xf32>
    %2802 = arith.mulf %2800, %2801 : vector<8x128xf32>
    %2803 = arith.mulf %2790, %2790 : vector<8x128xf32>
    %cst_416 = arith.constant 0.0833333358 : f32
    %2804 = vector.broadcast %cst_416 : f32 to vector<8x128xf32>
    %2805 = arith.mulf %2803, %2804 : vector<8x128xf32>
    %2806 = arith.mulf %2792, %2792 : vector<8x128xf32>
    %cst_417 = arith.constant 0.0833333358 : f32
    %2807 = vector.broadcast %cst_417 : f32 to vector<8x128xf32>
    %2808 = arith.mulf %2806, %2807 : vector<8x128xf32>
    %2809 = arith.mulf %2782, %2782 : vector<8x128xf32>
    %2810 = arith.mulf %2784, %2784 : vector<8x128xf32>
    %2811 = arith.mulf %2794, %2794 : vector<8x128xf32>
    %2812 = arith.mulf %2796, %2796 : vector<8x128xf32>
    %2813 = arith.mulf %2799, %2809 : vector<8x128xf32>
    %2814 = arith.mulf %2802, %2810 : vector<8x128xf32>
    %2815 = arith.addf %2813, %2814 : vector<8x128xf32>
    %2816 = arith.mulf %2799, %2810 : vector<8x128xf32>
    %2817 = arith.mulf %2802, %2809 : vector<8x128xf32>
    %2818 = arith.addf %2816, %2817 : vector<8x128xf32>
    %2819 = arith.subf %2799, %2802 : vector<8x128xf32>
    %2820 = arith.mulf %2819, %2782 : vector<8x128xf32>
    %2821 = arith.mulf %2820, %2784 : vector<8x128xf32>
    %2822 = arith.mulf %2805, %2811 : vector<8x128xf32>
    %2823 = arith.mulf %2808, %2812 : vector<8x128xf32>
    %2824 = arith.addf %2822, %2823 : vector<8x128xf32>
    %2825 = arith.mulf %2805, %2812 : vector<8x128xf32>
    %2826 = arith.mulf %2808, %2811 : vector<8x128xf32>
    %2827 = arith.addf %2825, %2826 : vector<8x128xf32>
    %2828 = arith.subf %2805, %2808 : vector<8x128xf32>
    %2829 = arith.mulf %2828, %2794 : vector<8x128xf32>
    %2830 = arith.mulf %2829, %2796 : vector<8x128xf32>
    %2831 = arith.subf %2774, %2786 : vector<8x128xf32>
    %2832 = arith.subf %2776, %2788 : vector<8x128xf32>
    %2833 = arith.addf %2815, %2824 : vector<8x128xf32>
    %2834 = arith.addf %2818, %2827 : vector<8x128xf32>
    %2835 = arith.addf %2821, %2830 : vector<8x128xf32>
    %2836 = arith.mulf %2833, %2832 : vector<8x128xf32>
    %2837 = arith.mulf %2836, %2832 : vector<8x128xf32>
    %2838 = arith.mulf %2834, %2831 : vector<8x128xf32>
    %2839 = arith.mulf %2838, %2831 : vector<8x128xf32>
    %2840 = arith.addf %2837, %2839 : vector<8x128xf32>
    %cst_418 = arith.constant 2.500000e-01 : f32
    %2841 = vector.broadcast %cst_418 : f32 to vector<8x128xf32>
    %2842 = arith.mulf %2841, %2840 : vector<8x128xf32>
    %cst_419 = arith.constant 0.000000e+00 : f32
    %2843 = vector.broadcast %cst_419 : f32 to vector<8x128xf32>
    %2844 = arith.subf %2843, %2831 : vector<8x128xf32>
    %2845 = arith.mulf %2835, %2844 : vector<8x128xf32>
    %2846 = arith.mulf %2845, %2832 : vector<8x128xf32>
    %cst_420 = arith.constant 5.000000e-01 : f32
    %2847 = vector.broadcast %cst_420 : f32 to vector<8x128xf32>
    %2848 = arith.mulf %2847, %2846 : vector<8x128xf32>
    %2849 = arith.addf %2842, %2848 : vector<8x128xf32>
    %2850 = arith.mulf %2833, %2834 : vector<8x128xf32>
    %2851 = arith.mulf %2835, %2835 : vector<8x128xf32>
    %2852 = arith.subf %2850, %2851 : vector<8x128xf32>
    %2853 = arith.mulf %2815, %2818 : vector<8x128xf32>
    %2854 = arith.mulf %2821, %2821 : vector<8x128xf32>
    %2855 = arith.subf %2853, %2854 : vector<8x128xf32>
    %2856 = arith.mulf %2824, %2827 : vector<8x128xf32>
    %2857 = arith.mulf %2830, %2830 : vector<8x128xf32>
    %2858 = arith.subf %2856, %2857 : vector<8x128xf32>
    %2859 = arith.mulf %2855, %2858 : vector<8x128xf32>
    %cst_421 = arith.constant 0.000000e+00 : f32
    %2860 = vector.broadcast %cst_421 : f32 to vector<8x128xf32>
    %2861 = arith.maximumf %2859, %2860 : vector<8x128xf32>
    %2862 = math.sqrt %2861 : vector<8x128xf32>
    %cst_422 = arith.constant 4.000000e+00 : f32
    %2863 = vector.broadcast %cst_422 : f32 to vector<8x128xf32>
    %2864 = arith.mulf %2863, %2862 : vector<8x128xf32>
    %cst_423 = arith.constant 1.000000e-03 : f32
    %2865 = vector.broadcast %cst_423 : f32 to vector<8x128xf32>
    %2866 = arith.addf %2864, %2865 : vector<8x128xf32>
    %2867 = arith.divf %2852, %2866 : vector<8x128xf32>
    %2868 = math.log %2867 : vector<8x128xf32>
    %cst_424 = arith.constant 5.000000e-01 : f32
    %2869 = vector.broadcast %cst_424 : f32 to vector<8x128xf32>
    %2870 = arith.mulf %2869, %2868 : vector<8x128xf32>
    %2871 = arith.divf %2849, %2852 : vector<8x128xf32>
    %2872 = arith.addf %2871, %2870 : vector<8x128xf32>
    %cst_425 = arith.constant 1.000000e-03 : f32
    %cst_426 = arith.constant 1.000000e+02 : f32
    %2873 = vector.broadcast %cst_425 : f32 to vector<8x128xf32>
    %2874 = arith.maximumf %2873, %2872 : vector<8x128xf32>
    %2875 = vector.broadcast %cst_426 : f32 to vector<8x128xf32>
    %2876 = arith.minimumf %2875, %2874 : vector<8x128xf32>
    %cst_427 = arith.constant 0.000000e+00 : f32
    %2877 = vector.broadcast %cst_427 : f32 to vector<8x128xf32>
    %2878 = arith.subf %2877, %2876 : vector<8x128xf32>
    %2879 = math.exp %2878 : vector<8x128xf32>
    %cst_428 = arith.constant 1.000000e+00 : f32
    %2880 = vector.broadcast %cst_428 : f32 to vector<8x128xf32>
    %2881 = arith.subf %2880, %2879 : vector<8x128xf32>
    %cst_429 = arith.constant 1.000000e-03 : f32
    %2882 = vector.broadcast %cst_429 : f32 to vector<8x128xf32>
    %2883 = arith.addf %2881, %2882 : vector<8x128xf32>
    %2884 = math.sqrt %2883 : vector<8x128xf32>
    %2885 = arith.addf %2884, %2772 : vector<8x128xf32>
    %cst_430 = arith.constant 5.000000e-01 : f32
    %2886 = vector.broadcast %cst_430 : f32 to vector<8x128xf32>
    %2887 = arith.mulf %2886, %2885 : vector<8x128xf32>
    %c0_431 = arith.constant 0 : index
    %c0_432 = arith.constant 0 : index
    %2888 = vector.load %arg3[%c0_431, %c0_432] : memref<8x128xf32, #tpu.memory_space<vmem>>, vector<8x128xf32>
    %2889 = arith.mulf %2887, %2888 : vector<8x128xf32>
    %c0_433 = arith.constant 0 : index
    %c0_434 = arith.constant 0 : index
    %2890 = vector.load %arg4[%c0_433, %c0_434] : memref<8x128xf32, #tpu.memory_space<vmem>>, vector<8x128xf32>
    tpu.vector_store %arg4[%c0_433, %c0_434], %2889 {strides = array<i32>} : memref<8x128xf32, #tpu.memory_space<vmem>>, vector<8x128xf32>,
    return
  }
  func.func @transform_0(%arg0: i32) -> (i32, i32, i32) {
    %c0_i32 = arith.constant 0 : i32
    %c0_i32_0 = arith.constant 0 : i32
    %c0_i32_1 = arith.constant 0 : i32
    return %c0_i32, %arg0, %c0_i32_0 : i32, i32, i32
  }
  func.func @transform_1(%arg0: i32) -> (i32, i32, i32) {
    %c0_i32 = arith.constant 0 : i32
    %c0_i32_0 = arith.constant 0 : i32
    %c0_i32_1 = arith.constant 0 : i32
    return %c0_i32, %arg0, %c0_i32_0 : i32, i32, i32
  }
  func.func @transform_2(%arg0: i32) -> (i32, i32) {
    %c0_i32 = arith.constant 0 : i32
    %c0_i32_0 = arith.constant 0 : i32
    return %arg0, %c0_i32 : i32, i32
  }
  func.func @transform_3(%arg0: i32) -> (i32, i32) {
    %c0_i32 = arith.constant 0 : i32
    %c0_i32_0 = arith.constant 0 : i32
    return %arg0, %c0_i32 : i32, i32
  }
}

</mosaic_0001>

<llo_original>
// kernel: probiou_riou_loss.1
$region0: #{probiou_riou_loss.1}
  #allocation0 [shape = 'u32[]', space=smem, size = 0x4, offset = 0x4, fixed_abs, tag = 'smem constant byte address 0x4 - core index']
  #allocation1 [shape = 'u32[144,128]{1,0:T(1,128)}', space=vmem, size = 0x12000, scoped, tag = 'internal scratch']
  %s0 = inlined_call_operand.vmem [shape: f32[6,8,128], index: 0, kind: input, shape index: {}]
  %s1 = inlined_call_operand.vmem [shape: f32[6,8,128], index: 1, kind: input, shape index: {}]
  %s2 = inlined_call_operand.vmem [shape: f32[8,128], index: 2, kind: input, shape index: {}]
  %s3 = inlined_call_operand.vmem [shape: f32[8,128], index: 3, kind: output, shape index: {}]
  %s4 = sld [smem:[#allocation0]]
  $region22: #{probiou_riou_loss.1} parent=0
    _
  %s6 = ssub.s32 1, %s4
  %s7 = scalar_select 0, %s6, %s4
  // Predicated region
  $region2: #{probiou_riou_loss.1} parent=0 // pred_check
    _
  $region3: #{probiou_riou_loss.1} parent=0 // pred_check_branch
    %9 = sbr.rel (0) target = $region5
  $region4: #{probiou_riou_loss.1} parent=0 // pred_region
    _
  $region5: #{probiou_riou_loss.1} parent=0 // pred_fallthru
    _
  // Predicated region
  $region6: #{probiou_riou_loss.1} parent=0 // pred_check
    _
  $region7: #{probiou_riou_loss.1} parent=0 // pred_check_branch
    %11 = sbr.rel (0) target = $region9
  $region8: #{probiou_riou_loss.1} parent=0 // pred_region
    _
  $region9: #{probiou_riou_loss.1} parent=0 // pred_fallthru
    _
  // Predicated region
  $region10: #{probiou_riou_loss.1} parent=0 // pred_check
    _
  $region11: #{probiou_riou_loss.1} parent=0 // pred_check_branch
    %13 = sbr.rel (0) target = $region13
  $region12: #{probiou_riou_loss.1} parent=0 // pred_region
    _
  $region13: #{probiou_riou_loss.1} parent=0 // pred_fallthru
    _
  %v14 = vld [vmem:[%s0] sm:$0xff]
  %s15 = scalar_lea.vmem %s0, 8
  %v16 = vld [vmem:[%s15] sm:$0xff]
  %s17 = scalar_lea.vmem %s0, 32
  %v18 = vld [vmem:[%s17] sm:$0xff]
  %s19 = scalar_lea.vmem %s0, 40
  %v20 = vld [vmem:[%s19] sm:$0xff]
  %v21 = vld [vmem:[%s1] sm:$0xff]
  %s22 = scalar_lea.vmem %s1, 8
  %v23 = vld [vmem:[%s22] sm:$0xff]
  %s24 = scalar_lea.vmem %s1, 32
  %v25 = vld [vmem:[%s24] sm:$0xff]
  %s26 = scalar_lea.vmem %s1, 40
  %v27 = vld [vmem:[%s26] sm:$0xff]
  %s28 = scalar_lea.vmem %s0, 16
  %v29 = vld [vmem:[%s28] sm:$0xff]
  %v30 = vmul.f32 %v29, 0.5
  %s31 = scalar_lea.vmem %s0, 24
  %v32 = vld [vmem:[%s31] sm:$0xff]
  %v33 = vmul.f32 %v32, 0.5
  %s34 = scalar_lea.vmem %s1, 16
  %v35 = vld [vmem:[%s34] sm:$0xff]
  %v36 = vmul.f32 %v35, 0.5
  %s37 = scalar_lea.vmem %s1, 24
  %v38 = vld [vmem:[%s37] sm:$0xff]
  %v39 = vmul.f32 %v38, 0.5
  %v40 = vmul.f32 %v30, -1.0
  %v41 = vmul.f32 %v33, -1.0
  %v42 = vmul.f32 %v40, %v18
  %v43 = vadd.f32 %v14, %v42
  %v44 = vmul.f32 %v41, %v20
  %v45 = vsub.f32 %v43, %v44
  %v46 = vmul.f32 %v40, %v20
  %v47 = vadd.f32 %v16, %v46
  %v48 = vmul.f32 %v41, %v18
  %v49 = vadd.f32 %v47, %v48
  %v50 = vmul.f32 %v36, -1.0
  %v51 = vmul.f32 %v39, -1.0
  %v52 = vmul.f32 %v50, %v25
  %v53 = vadd.f32 %v21, %v52
  %v54 = vmul.f32 %v51, %v27
  %v55 = vsub.f32 %v53, %v54
  %v56 = vmul.f32 %v50, %v27
  %v57 = vadd.f32 %v23, %v56
  %v58 = vmul.f32 %v51, %v25
  %v59 = vadd.f32 %v57, %v58
  %v60 = vmul.f32 %v30, %v18
  %v61 = vadd.f32 %v14, %v60
  %v62 = vsub.f32 %v61, %v44
  %v63 = vmul.f32 %v30, %v20
  %v64 = vadd.f32 %v16, %v63
  %v65 = vadd.f32 %v64, %v48
  %v66 = vmul.f32 %v36, %v25
  %v67 = vadd.f32 %v21, %v66
  %v68 = vsub.f32 %v67, %v54
  %v69 = vmul.f32 %v36, %v27
  %v70 = vadd.f32 %v23, %v69
  %v71 = vadd.f32 %v70, %v58
  %v72 = vmul.f32 %v33, %v20
  %v73 = vsub.f32 %v61, %v72
  %v74 = vmul.f32 %v33, %v18
  %v75 = vadd.f32 %v64, %v74
  %v76 = vmul.f32 %v39, %v27
  %v77 = vsub.f32 %v67, %v76
  %v78 = vmul.f32 %v39, %v25
  %v79 = vadd.f32 %v70, %v78
  %v80 = vsub.f32 %v43, %v72
  %v81 = vadd.f32 %v47, %v74
  %v82 = vsub.f32 %v53, %v76
  %v83 = vadd.f32 %v57, %v78
  %v84 = vsub.f32 %v62, %v45
  %v85 = vsub.f32 %v73, %v62
  %v86 = vsub.f32 %v80, %v73
  %v87 = vsub.f32 %v45, %v80
  %v88 = vsub.f32 %v65, %v49
  %v89 = vsub.f32 %v75, %v65
  %v90 = vsub.f32 %v81, %v75
  %v91 = vsub.f32 %v49, %v81
  %v92 = vsub.f32 %v68, %v55
  %v93 = vsub.f32 %v77, %v68
  %v94 = vsub.f32 %v82, %v77
  %v95 = vsub.f32 %v55, %v82
  %v96 = vsub.f32 %v71, %v59
  %v97 = vsub.f32 %v79, %v71
  %v98 = vsub.f32 %v83, %v79
  %v99 = vsub.f32 %v59, %v83
  %v100 = vmul.f32 %v84, %v96
  %v101 = vmul.f32 %v88, %v92
  %v102 = vsub.f32 %v100, %v101
  %v103 = vand.u32 2147483647, %v102
  %vm104 = vcmp.gt.f32.partialorder %v103, 1e-12
  %v105 = vsel %vm104, %v102, 1.0
  %v106 = vrcp.pop %v105
  %v107 = vmul.f32 %v105, %v106
  %v108 = vsub.f32 2.0, %v107
  %v109 = vmul.f32 %v106, %v108
  %v110 = vsub.f32 %v55, %v45
  %v111 = vsub.f32 %v59, %v49
  %v112 = vmul.f32 %v110, %v96
  %v113 = vmul.f32 %v111, %v92
  %v114 = vsub.f32 %v112, %v113
  %v115 = vmul.f32 %v114, %v109
  %v116 = vmul.f32 %v110, %v88
  %v117 = vmul.f32 %v111, %v84
  %v118 = vsub.f32 %v116, %v117
  %v119 = vmul.f32 %v118, %v109
  %vm120 = vcmp.ge.f32.partialorder %v115, 0.0
  %vm121 = vmand %vm104, %vm120
  %vm122 = vcmp.le.f32.partialorder %v115, 1.0
  %vm123 = vmand %vm121, %vm122
  %vm124 = vcmp.ge.f32.partialorder %v119, 0.0
  %vm125 = vmand %vm123, %vm124
  %vm126 = vcmp.le.f32.partialorder %v119, 1.0
  %vm127 = vmand %vm125, %vm126
  %v128 = vmul.f32 %v115, %v84
  %v129 = vadd.f32 %v45, %v128
  %v130 = vmul.f32 %v115, %v88
  %v131 = vadd.f32 %v49, %v130
  %v132 = vsel %vm127, 1, 0
  %v133 = vcvt.s32.f32 %v132
  %v134 = vmul.f32 %v84, %v97
  %v135 = vmul.f32 %v88, %v93
  %v136 = vsub.f32 %v134, %v135
  %v137 = vand.u32 2147483647, %v136
  %vm138 = vcmp.gt.f32.partialorder %v137, 1e-12
  %v139 = vsel %vm138, %v136, 1.0
  %v140 = vrcp.pop %v139
  %v141 = vmul.f32 %v139, %v140
  %v142 = vsub.f32 2.0, %v141
  %v143 = vmul.f32 %v140, %v142
  %v144 = vsub.f32 %v68, %v45
  %v145 = vsub.f32 %v71, %v49
  %v146 = vmul.f32 %v144, %v97
  %v147 = vmul.f32 %v145, %v93
  %v148 = vsub.f32 %v146, %v147
  %v149 = vmul.f32 %v148, %v143
  %v150 = vmul.f32 %v144, %v88
  %v151 = vmul.f32 %v145, %v84
  %v152 = vsub.f32 %v150, %v151
  %v153 = vmul.f32 %v152, %v143
  %vm154 = vcmp.ge.f32.partialorder %v149, 0.0
  %vm155 = vmand %vm138, %vm154
  %vm156 = vcmp.le.f32.partialorder %v149, 1.0
  %vm157 = vmand %vm155, %vm156
  %vm158 = vcmp.ge.f32.partialorder %v153, 0.0
  %vm159 = vmand %vm157, %vm158
  %vm160 = vcmp.le.f32.partialorder %v153, 1.0
  %vm161 = vmand %vm159, %vm160
  %v162 = vmul.f32 %v149, %v84
  %v163 = vadd.f32 %v45, %v162
  %v164 = vmul.f32 %v149, %v88
  %v165 = vadd.f32 %v49, %v164
  %v166 = vsel %vm161, 1, 0
  %v167 = vcvt.s32.f32 %v166
  %v168 = vmul.f32 %v84, %v98
  %v169 = vmul.f32 %v88, %v94
  %v170 = vsub.f32 %v168, %v169
  %v171 = vand.u32 2147483647, %v170
  %vm172 = vcmp.gt.f32.partialorder %v171, 1e-12
  %v173 = vsel %vm172, %v170, 1.0
  %v174 = vrcp.pop %v173
  %v175 = vmul.f32 %v173, %v174
  %v176 = vsub.f32 2.0, %v175
  %v177 = vmul.f32 %v174, %v176
  %v178 = vsub.f32 %v77, %v45
  %v179 = vsub.f32 %v79, %v49
  %v180 = vmul.f32 %v178, %v98
  %v181 = vmul.f32 %v179, %v94
  %v182 = vsub.f32 %v180, %v181
  %v183 = vmul.f32 %v182, %v177
  %v184 = vmul.f32 %v178, %v88
  %v185 = vmul.f32 %v179, %v84
  %v186 = vsub.f32 %v184, %v185
  %v187 = vmul.f32 %v186, %v177
  %vm188 = vcmp.ge.f32.partialorder %v183, 0.0
  %vm189 = vmand %vm172, %vm188
  %vm190 = vcmp.le.f32.partialorder %v183, 1.0
  %vm191 = vmand %vm189, %vm190
  %vm192 = vcmp.ge.f32.partialorder %v187, 0.0
  %vm193 = vmand %vm191, %vm192
  %vm194 = vcmp.le.f32.partialorder %v187, 1.0
  %vm195 = vmand %vm193, %vm194
  %v196 = vmul.f32 %v183, %v84
  %v197 = vadd.f32 %v45, %v196
  %v198 = vmul.f32 %v183, %v88
  %v199 = vadd.f32 %v49, %v198
  %v200 = vsel %vm195, 1, 0
  %v201 = vcvt.s32.f32 %v200
  %v202 = vmul.f32 %v84, %v99
  %v203 = vmul.f32 %v88, %v95
  %v204 = vsub.f32 %v202, %v203
  %v205 = vand.u32 2147483647, %v204
  %vm206 = vcmp.gt.f32.partialorder %v205, 1e-12
  %v207 = vsel %vm206, %v204, 1.0
  %v208 = vrcp.pop %v207
  %v209 = vmul.f32 %v207, %v208
  %v210 = vsub.f32 2.0, %v209
  %v211 = vmul.f32 %v208, %v210
  %v212 = vsub.f32 %v82, %v45
  %v213 = vsub.f32 %v83, %v49
  %v214 = vmul.f32 %v212, %v99
  %v215 = vmul.f32 %v213, %v95
  %v216 = vsub.f32 %v214, %v215
  %v217 = vmul.f32 %v216, %v211
  %v218 = vmul.f32 %v212, %v88
  %v219 = vmul.f32 %v213, %v84
  %v220 = vsub.f32 %v218, %v219
  %v221 = vmul.f32 %v220, %v211
  %vm222 = vcmp.ge.f32.partialorder %v217, 0.0
  %vm223 = vmand %vm206, %vm222
  %vm224 = vcmp.le.f32.partialorder %v217, 1.0
  %vm225 = vmand %vm223, %vm224
  %vm226 = vcmp.ge.f32.partialorder %v221, 0.0
  %vm227 = vmand %vm225, %vm226
  %vm228 = vcmp.le.f32.partialorder %v221, 1.0
  %vm229 = vmand %vm227, %vm228
  %v230 = vmul.f32 %v217, %v84
  %v231 = vadd.f32 %v45, %v230
  %v232 = vmul.f32 %v217, %v88
  %v233 = vadd.f32 %v49, %v232
  %v234 = vsel %vm229, 1, 0
  %v235 = vcvt.s32.f32 %v234
  %v236 = vmul.f32 %v85, %v96
  %v237 = vmul.f32 %v89, %v92
  %v238 = vsub.f32 %v236, %v237
  %v239 = vand.u32 2147483647, %v238
  %vm240 = vcmp.gt.f32.partialorder %v239, 1e-12
  %v241 = vsel %vm240, %v238, 1.0
  %v242 = vrcp.pop %v241
  %v243 = vmul.f32 %v241, %v242
  %v244 = vsub.f32 2.0, %v243
  %v245 = vmul.f32 %v242, %v244
  %v246 = vsub.f32 %v55, %v62
  %v247 = vsub.f32 %v59, %v65
  %v248 = vmul.f32 %v246, %v96
  %v249 = vmul.f32 %v247, %v92
  %v250 = vsub.f32 %v248, %v249
  %v251 = vmul.f32 %v250, %v245
  %v252 = vmul.f32 %v246, %v89
  %v253 = vmul.f32 %v247, %v85
  %v254 = vsub.f32 %v252, %v253
  %v255 = vmul.f32 %v254, %v245
  %vm256 = vcmp.ge.f32.partialorder %v251, 0.0
  %vm257 = vmand %vm240, %vm256
  %vm258 = vcmp.le.f32.partialorder %v251, 1.0
  %vm259 = vmand %vm257, %vm258
  %vm260 = vcmp.ge.f32.partialorder %v255, 0.0
  %vm261 = vmand %vm259, %vm260
  %vm262 = vcmp.le.f32.partialorder %v255, 1.0
  %vm263 = vmand %vm261, %vm262
  %v264 = vmul.f32 %v251, %v85
  %v265 = vadd.f32 %v62, %v264
  %v266 = vmul.f32 %v251, %v89
  %v267 = vadd.f32 %v65, %v266
  %v268 = vsel %vm263, 1, 0
  %v269 = vcvt.s32.f32 %v268
  %v270 = vmul.f32 %v85, %v97
  %v271 = vmul.f32 %v89, %v93
  %v272 = vsub.f32 %v270, %v271
  %v273 = vand.u32 2147483647, %v272
  %vm274 = vcmp.gt.f32.partialorder %v273, 1e-12
  %v275 = vsel %vm274, %v272, 1.0
  %v276 = vrcp.pop %v275
  %v277 = vmul.f32 %v275, %v276
  %v278 = vsub.f32 2.0, %v277
  %v279 = vmul.f32 %v276, %v278
  %v280 = vsub.f32 %v68, %v62
  %v281 = vsub.f32 %v71, %v65
  %v282 = vmul.f32 %v280, %v97
  %v283 = vmul.f32 %v281, %v93
  %v284 = vsub.f32 %v282, %v283
  %v285 = vmul.f32 %v284, %v279
  %v286 = vmul.f32 %v280, %v89
  %v287 = vmul.f32 %v281, %v85
  %v288 = vsub.f32 %v286, %v287
  %v289 = vmul.f32 %v288, %v279
  %vm290 = vcmp.ge.f32.partialorder %v285, 0.0
  %vm291 = vmand %vm274, %vm290
  %vm292 = vcmp.le.f32.partialorder %v285, 1.0
  %vm293 = vmand %vm291, %vm292
  %vm294 = vcmp.ge.f32.partialorder %v289, 0.0
  %vm295 = vmand %vm293, %vm294
  %vm296 = vcmp.le.f32.partialorder %v289, 1.0
  %vm297 = vmand %vm295, %vm296
  %v298 = vmul.f32 %v285, %v85
  %v299 = vadd.f32 %v62, %v298
  %v300 = vmul.f32 %v285, %v89
  %v301 = vadd.f32 %v65, %v300
  %v302 = vsel %vm297, 1, 0
  %v303 = vcvt.s32.f32 %v302
  %v304 = vmul.f32 %v85, %v98
  %v305 = vmul.f32 %v89, %v94
  %v306 = vsub.f32 %v304, %v305
  %v307 = vand.u32 2147483647, %v306
  %vm308 = vcmp.gt.f32.partialorder %v307, 1e-12
  %v309 = vsel %vm308, %v306, 1.0
  %v310 = vrcp.pop %v309
  %v311 = vmul.f32 %v309, %v310
  %v312 = vsub.f32 2.0, %v311
  %v313 = vmul.f32 %v310, %v312
  %v314 = vsub.f32 %v77, %v62
  %v315 = vsub.f32 %v79, %v65
  %v316 = vmul.f32 %v314, %v98
  %v317 = vmul.f32 %v315, %v94
  %v318 = vsub.f32 %v316, %v317
  %v319 = vmul.f32 %v318, %v313
  %v320 = vmul.f32 %v314, %v89
  %v321 = vmul.f32 %v315, %v85
  %v322 = vsub.f32 %v320, %v321
  %v323 = vmul.f32 %v322, %v313
  %vm324 = vcmp.ge.f32.partialorder %v319, 0.0
  %vm325 = vmand %vm308, %vm324
  %vm326 = vcmp.le.f32.partialorder %v319, 1.0
  %vm327 = vmand %vm325, %vm326
  %vm328 = vcmp.ge.f32.partialorder %v323, 0.0
  %vm329 = vmand %vm327, %vm328
  %vm330 = vcmp.le.f32.partialorder %v323, 1.0
  %vm331 = vmand %vm329, %vm330
  %v332 = vmul.f32 %v319, %v85
  %v333 = vadd.f32 %v62, %v332
  %v334 = vmul.f32 %v319, %v89
  %v335 = vadd.f32 %v65, %v334
  %v336 = vsel %vm331, 1, 0
  %v337 = vcvt.s32.f32 %v336
  %v338 = vmul.f32 %v85, %v99
  %v339 = vmul.f32 %v89, %v95
  %v340 = vsub.f32 %v338, %v339
  %v341 = vand.u32 2147483647, %v340
  %vm342 = vcmp.gt.f32.partialorder %v341, 1e-12
  %v343 = vsel %vm342, %v340, 1.0
  %v344 = vrcp.pop %v343
  %v345 = vmul.f32 %v343, %v344
  %v346 = vsub.f32 2.0, %v345
  %v347 = vmul.f32 %v344, %v346
  %v348 = vsub.f32 %v82, %v62
  %v349 = vsub.f32 %v83, %v65
  %v350 = vmul.f32 %v348, %v99
  %v351 = vmul.f32 %v349, %v95
  %v352 = vsub.f32 %v350, %v351
  %v353 = vmul.f32 %v352, %v347
  %v354 = vmul.f32 %v348, %v89
  %v355 = vmul.f32 %v349, %v85
  %v356 = vsub.f32 %v354, %v355
  %v357 = vmul.f32 %v356, %v347
  %vm358 = vcmp.ge.f32.partialorder %v353, 0.0
  %vm359 = vmand %vm342, %vm358
  %vm360 = vcmp.le.f32.partialorder %v353, 1.0
  %vm361 = vmand %vm359, %vm360
  %vm362 = vcmp.ge.f32.partialorder %v357, 0.0
  %vm363 = vmand %vm361, %vm362
  %vm364 = vcmp.le.f32.partialorder %v357, 1.0
  %vm365 = vmand %vm363, %vm364
  %v366 = vmul.f32 %v353, %v85
  %v367 = vadd.f32 %v62, %v366
  %v368 = vmul.f32 %v353, %v89
  %v369 = vadd.f32 %v65, %v368
  %v370 = vsel %vm365, 1, 0
  %v371 = vcvt.s32.f32 %v370
  %v372 = vmul.f32 %v86, %v96
  %v373 = vmul.f32 %v90, %v92
  %v374 = vsub.f32 %v372, %v373
  %v375 = vand.u32 2147483647, %v374
  %vm376 = vcmp.gt.f32.partialorder %v375, 1e-12
  %v377 = vsel %vm376, %v374, 1.0
  %v378 = vrcp.pop %v377
  %v379 = vmul.f32 %v377, %v378
  %v380 = vsub.f32 2.0, %v379
  %v381 = vmul.f32 %v378, %v380
  %v382 = vsub.f32 %v55, %v73
  %v383 = vsub.f32 %v59, %v75
  %v384 = vmul.f32 %v382, %v96
  %v385 = vmul.f32 %v383, %v92
  %v386 = vsub.f32 %v384, %v385
  %v387 = vmul.f32 %v386, %v381
  %v388 = vmul.f32 %v382, %v90
  %v389 = vmul.f32 %v383, %v86
  %v390 = vsub.f32 %v388, %v389
  %v391 = vmul.f32 %v390, %v381
  %vm392 = vcmp.ge.f32.partialorder %v387, 0.0
  %vm393 = vmand %vm376, %vm392
  %vm394 = vcmp.le.f32.partialorder %v387, 1.0
  %vm395 = vmand %vm393, %vm394
  %vm396 = vcmp.ge.f32.partialorder %v391, 0.0
  %vm397 = vmand %vm395, %vm396
  %vm398 = vcmp.le.f32.partialorder %v391, 1.0
  %vm399 = vmand %vm397, %vm398
  %v400 = vmul.f32 %v387, %v86
  %v401 = vadd.f32 %v73, %v400
  %v402 = vmul.f32 %v387, %v90
  %v403 = vadd.f32 %v75, %v402
  %v404 = vsel %vm399, 1, 0
  %v405 = vcvt.s32.f32 %v404
  %v406 = vmul.f32 %v86, %v97
  %v407 = vmul.f32 %v90, %v93
  %v408 = vsub.f32 %v406, %v407
  %v409 = vand.u32 2147483647, %v408
  %vm410 = vcmp.gt.f32.partialorder %v409, 1e-12
  %v411 = vsel %vm410, %v408, 1.0
  %v412 = vrcp.pop %v411
  %v413 = vmul.f32 %v411, %v412
  %v414 = vsub.f32 2.0, %v413
  %v415 = vmul.f32 %v412, %v414
  %v416 = vsub.f32 %v68, %v73
  %v417 = vsub.f32 %v71, %v75
  %v418 = vmul.f32 %v416, %v97
  %v419 = vmul.f32 %v417, %v93
  %v420 = vsub.f32 %v418, %v419
  %v421 = vmul.f32 %v420, %v415
  %v422 = vmul.f32 %v416, %v90
  %v423 = vmul.f32 %v417, %v86
  %v424 = vsub.f32 %v422, %v423
  %v425 = vmul.f32 %v424, %v415
  %vm426 = vcmp.ge.f32.partialorder %v421, 0.0
  %vm427 = vmand %vm410, %vm426
  %vm428 = vcmp.le.f32.partialorder %v421, 1.0
  %vm429 = vmand %vm427, %vm428
  %vm430 = vcmp.ge.f32.partialorder %v425, 0.0
  %vm431 = vmand %vm429, %vm430
  %vm432 = vcmp.le.f32.partialorder %v425, 1.0
  %vm433 = vmand %vm431, %vm432
  %v434 = vmul.f32 %v421, %v86
  %v435 = vadd.f32 %v73, %v434
  %v436 = vmul.f32 %v421, %v90
  %v437 = vadd.f32 %v75, %v436
  %v438 = vsel %vm433, 1, 0
  %v439 = vcvt.s32.f32 %v438
  %v440 = vmul.f32 %v86, %v98
  %v441 = vmul.f32 %v90, %v94
  %v442 = vsub.f32 %v440, %v441
  %v443 = vand.u32 2147483647, %v442
  %vm444 = vcmp.gt.f32.partialorder %v443, 1e-12
  %v445 = vsel %vm444, %v442, 1.0
  %v446 = vrcp.pop %v445
  %v447 = vmul.f32 %v445, %v446
  %v448 = vsub.f32 2.0, %v447
  %v449 = vmul.f32 %v446, %v448
  %v450 = vsub.f32 %v77, %v73
  %v451 = vsub.f32 %v79, %v75
  %v452 = vmul.f32 %v450, %v98
  %v453 = vmul.f32 %v451, %v94
  %v454 = vsub.f32 %v452, %v453
  %v455 = vmul.f32 %v454, %v449
  %v456 = vmul.f32 %v450, %v90
  %v457 = vmul.f32 %v451, %v86
  %v458 = vsub.f32 %v456, %v457
  %v459 = vmul.f32 %v458, %v449
  %vm460 = vcmp.ge.f32.partialorder %v455, 0.0
  %vm461 = vmand %vm444, %vm460
  %vm462 = vcmp.le.f32.partialorder %v455, 1.0
  %vm463 = vmand %vm461, %vm462
  %vm464 = vcmp.ge.f32.partialorder %v459, 0.0
  %vm465 = vmand %vm463, %vm464
  %vm466 = vcmp.le.f32.partialorder %v459, 1.0
  %vm467 = vmand %vm465, %vm466
  %v468 = vmul.f32 %v455, %v86
  %v469 = vadd.f32 %v73, %v468
  %v470 = vmul.f32 %v455, %v90
  %v471 = vadd.f32 %v75, %v470
  %v472 = vsel %vm467, 1, 0
  %v473 = vcvt.s32.f32 %v472
  %v474 = vmul.f32 %v86, %v99
  %v475 = vmul.f32 %v90, %v95
  %v476 = vsub.f32 %v474, %v475
  %v477 = vand.u32 2147483647, %v476
  %vm478 = vcmp.gt.f32.partialorder %v477, 1e-12
  %v479 = vsel %vm478, %v476, 1.0
  %v480 = vrcp.pop %v479
  %v481 = vmul.f32 %v479, %v480
  %v482 = vsub.f32 2.0, %v481
  %v483 = vmul.f32 %v480, %v482
  %v484 = vsub.f32 %v82, %v73
  %v485 = vsub.f32 %v83, %v75
  %v486 = vmul.f32 %v484, %v99
  %v487 = vmul.f32 %v485, %v95
  %v488 = vsub.f32 %v486, %v487
  %v489 = vmul.f32 %v488, %v483
  %v490 = vmul.f32 %v484, %v90
  %v491 = vmul.f32 %v485, %v86
  %v492 = vsub.f32 %v490, %v491
  %v493 = vmul.f32 %v492, %v483
  %vm494 = vcmp.ge.f32.partialorder %v489, 0.0
  %vm495 = vmand %vm478, %vm494
  %vm496 = vcmp.le.f32.partialorder %v489, 1.0
  %vm497 = vmand %vm495, %vm496
  %vm498 = vcmp.ge.f32.partialorder %v493, 0.0
  %vm499 = vmand %vm497, %vm498
  %vm500 = vcmp.le.f32.partialorder %v493, 1.0
  %vm501 = vmand %vm499, %vm500
  %v502 = vmul.f32 %v489, %v86
  %v503 = vadd.f32 %v73, %v502
  %v504 = vmul.f32 %v489, %v90
  %v505 = vadd.f32 %v75, %v504
  %v506 = vsel %vm501, 1, 0
  %v507 = vcvt.s32.f32 %v506
  %v508 = vmul.f32 %v87, %v96
  %v509 = vmul.f32 %v91, %v92
  %v510 = vsub.f32 %v508, %v509
  %v511 = vand.u32 2147483647, %v510
  %vm512 = vcmp.gt.f32.partialorder %v511, 1e-12
  %v513 = vsel %vm512, %v510, 1.0
  %v514 = vrcp.pop %v513
  %v515 = vmul.f32 %v513, %v514
  %v516 = vsub.f32 2.0, %v515
  %v517 = vmul.f32 %v514, %v516
  %v518 = vsub.f32 %v55, %v80
  %v519 = vsub.f32 %v59, %v81
  %v520 = vmul.f32 %v518, %v96
  %v521 = vmul.f32 %v519, %v92
  %v522 = vsub.f32 %v520, %v521
  %v523 = vmul.f32 %v522, %v517
  %v524 = vmul.f32 %v518, %v91
  %v525 = vmul.f32 %v519, %v87
  %v526 = vsub.f32 %v524, %v525
  %v527 = vmul.f32 %v526, %v517
  %vm528 = vcmp.ge.f32.partialorder %v523, 0.0
  %vm529 = vmand %vm512, %vm528
  %vm530 = vcmp.le.f32.partialorder %v523, 1.0
  %vm531 = vmand %vm529, %vm530
  %vm532 = vcmp.ge.f32.partialorder %v527, 0.0
  %vm533 = vmand %vm531, %vm532
  %vm534 = vcmp.le.f32.partialorder %v527, 1.0
  %vm535 = vmand %vm533, %vm534
  %v536 = vmul.f32 %v523, %v87
  %v537 = vadd.f32 %v80, %v536
  %v538 = vmul.f32 %v523, %v91
  %v539 = vadd.f32 %v81, %v538
  %v540 = vsel %vm535, 1, 0
  %v541 = vcvt.s32.f32 %v540
  %v542 = vmul.f32 %v87, %v97
  %v543 = vmul.f32 %v91, %v93
  %v544 = vsub.f32 %v542, %v543
  %v545 = vand.u32 2147483647, %v544
  %vm546 = vcmp.gt.f32.partialorder %v545, 1e-12
  %v547 = vsel %vm546, %v544, 1.0
  %v548 = vrcp.pop %v547
  %v549 = vmul.f32 %v547, %v548
  %v550 = vsub.f32 2.0, %v549
  %v551 = vmul.f32 %v548, %v550
  %v552 = vsub.f32 %v68, %v80
  %v553 = vsub.f32 %v71, %v81
  %v554 = vmul.f32 %v552, %v97
  %v555 = vmul.f32 %v553, %v93
  %v556 = vsub.f32 %v554, %v555
  %v557 = vmul.f32 %v556, %v551
  %v558 = vmul.f32 %v552, %v91
  %v559 = vmul.f32 %v553, %v87
  %v560 = vsub.f32 %v558, %v559
  %v561 = vmul.f32 %v560, %v551
  %vm562 = vcmp.ge.f32.partialorder %v557, 0.0
  %vm563 = vmand %vm546, %vm562
  %vm564 = vcmp.le.f32.partialorder %v557, 1.0
  %vm565 = vmand %vm563, %vm564
  %vm566 = vcmp.ge.f32.partialorder %v561, 0.0
  %vm567 = vmand %vm565, %vm566
  %vm568 = vcmp.le.f32.partialorder %v561, 1.0
  %vm569 = vmand %vm567, %vm568
  %v570 = vmul.f32 %v557, %v87
  %v571 = vadd.f32 %v80, %v570
  %v572 = vmul.f32 %v557, %v91
  %v573 = vadd.f32 %v81, %v572
  %v574 = vsel %vm569, 1, 0
  %v575 = vcvt.s32.f32 %v574
  %v576 = vmul.f32 %v87, %v98
  %v577 = vmul.f32 %v91, %v94
  %v578 = vsub.f32 %v576, %v577
  %v579 = vand.u32 2147483647, %v578
  %vm580 = vcmp.gt.f32.partialorder %v579, 1e-12
  %v581 = vsel %vm580, %v578, 1.0
  %v582 = vrcp.pop %v581
  %v583 = vmul.f32 %v581, %v582
  %v584 = vsub.f32 2.0, %v583
  %v585 = vmul.f32 %v582, %v584
  %v586 = vsub.f32 %v77, %v80
  %v587 = vsub.f32 %v79, %v81
  %v588 = vmul.f32 %v586, %v98
  %v589 = vmul.f32 %v587, %v94
  %v590 = vsub.f32 %v588, %v589
  %v591 = vmul.f32 %v590, %v585
  %v592 = vmul.f32 %v586, %v91
  %v593 = vmul.f32 %v587, %v87
  %v594 = vsub.f32 %v592, %v593
  %v595 = vmul.f32 %v594, %v585
  %vm596 = vcmp.ge.f32.partialorder %v591, 0.0
  %vm597 = vmand %vm580, %vm596
  %vm598 = vcmp.le.f32.partialorder %v591, 1.0
  %vm599 = vmand %vm597, %vm598
  %vm600 = vcmp.ge.f32.partialorder %v595, 0.0
  %vm601 = vmand %vm599, %vm600
  %vm602 = vcmp.le.f32.partialorder %v595, 1.0
  %vm603 = vmand %vm601, %vm602
  %v604 = vmul.f32 %v591, %v87
  %v605 = vadd.f32 %v80, %v604
  %v606 = vmul.f32 %v591, %v91
  %v607 = vadd.f32 %v81, %v606
  %v608 = vsel %vm603, 1, 0
  %v609 = vcvt.s32.f32 %v608
  %v610 = vmul.f32 %v87, %v99
  %v611 = vmul.f32 %v91, %v95
  %v612 = vsub.f32 %v610, %v611
  %v613 = vand.u32 2147483647, %v612
  %vm614 = vcmp.gt.f32.partialorder %v613, 1e-12
  %v615 = vsel %vm614, %v612, 1.0
  %v616 = vrcp.pop %v615
  %v617 = vmul.f32 %v615, %v616
  %v618 = vsub.f32 2.0, %v617
  %v619 = vmul.f32 %v616, %v618
  %v620 = vsub.f32 %v82, %v80
  %v621 = vsub.f32 %v83, %v81
  %v622 = vmul.f32 %v620, %v99
  %v623 = vmul.f32 %v621, %v95
  %v624 = vsub.f32 %v622, %v623
  %v625 = vmul.f32 %v624, %v619
  %v626 = vmul.f32 %v620, %v91
  %v627 = vmul.f32 %v621, %v87
  %v628 = vsub.f32 %v626, %v627
  %v629 = vmul.f32 %v628, %v619
  %vm630 = vcmp.ge.f32.partialorder %v625, 0.0
  %vm631 = vmand %vm614, %vm630
  %vm632 = vcmp.le.f32.partialorder %v625, 1.0
  %vm633 = vmand %vm631, %vm632
  %vm634 = vcmp.ge.f32.partialorder %v629, 0.0
  %vm635 = vmand %vm633, %vm634
  %vm636 = vcmp.le.f32.partialorder %v629, 1.0
  %vm637 = vmand %vm635, %vm636
  %v638 = vmul.f32 %v625, %v87
  %v639 = vadd.f32 %v80, %v638
  %v640 = vmul.f32 %v625, %v91
  %v641 = vadd.f32 %v81, %v640
  %v642 = vsel %vm637, 1, 0
  %v643 = vcvt.s32.f32 %v642
  %v644 = vsub.f32 %v45, %v21
  %v645 = vsub.f32 %v49, %v23
  %v646 = vmul.f32 %v644, %v25
  %v647 = vmul.f32 %v645, %v27
  %v648 = vadd.f32 %v646, %v647
  %v649 = vsub.f32 0.0, %v644
  %v650 = vmul.f32 %v649, %v27
  %v651 = vmul.f32 %v645, %v25
  %v652 = vadd.f32 %v650, %v651
  %v653 = vand.u32 2147483647, %v648
  %vm654 = vcmp.le.f32.partialorder %v653, %v36
  %v655 = vand.u32 2147483647, %v652
  %vm656 = vcmp.le.f32.partialorder %v655, %v39
  %vm657 = vmand %vm654, %vm656
  %v658 = vsel %vm657, 1, 0
  %v659 = vcvt.s32.f32 %v658
  %v660 = vsub.f32 %v62, %v21
  %v661 = vsub.f32 %v65, %v23
  %v662 = vmul.f32 %v660, %v25
  %v663 = vmul.f32 %v661, %v27
  %v664 = vadd.f32 %v662, %v663
  %v665 = vsub.f32 0.0, %v660
  %v666 = vmul.f32 %v665, %v27
  %v667 = vmul.f32 %v661, %v25
  %v668 = vadd.f32 %v666, %v667
  %v669 = vand.u32 2147483647, %v664
  %vm670 = vcmp.le.f32.partialorder %v669, %v36
  %v671 = vand.u32 2147483647, %v668
  %vm672 = vcmp.le.f32.partialorder %v671, %v39
  %vm673 = vmand %vm670, %vm672
  %v674 = vsel %vm673, 1, 0
  %v675 = vcvt.s32.f32 %v674
  %v676 = vsub.f32 %v73, %v21
  %v677 = vsub.f32 %v75, %v23
  %v678 = vmul.f32 %v676, %v25
  %v679 = vmul.f32 %v677, %v27
  %v680 = vadd.f32 %v678, %v679
  %v681 = vsub.f32 0.0, %v676
  %v682 = vmul.f32 %v681, %v27
  %v683 = vmul.f32 %v677, %v25
  %v684 = vadd.f32 %v682, %v683
  %v685 = vand.u32 2147483647, %v680
  %vm686 = vcmp.le.f32.partialorder %v685, %v36
  %v687 = vand.u32 2147483647, %v684
  %vm688 = vcmp.le.f32.partialorder %v687, %v39
  %vm689 = vmand %vm686, %vm688
  %v690 = vsel %vm689, 1, 0
  %v691 = vcvt.s32.f32 %v690
  %v692 = vsub.f32 %v80, %v21
  %v693 = vsub.f32 %v81, %v23
  %v694 = vmul.f32 %v692, %v25
  %v695 = vmul.f32 %v693, %v27
  %v696 = vadd.f32 %v694, %v695
  %v697 = vsub.f32 0.0, %v692
  %v698 = vmul.f32 %v697, %v27
  %v699 = vmul.f32 %v693, %v25
  %v700 = vadd.f32 %v698, %v699
  %v701 = vand.u32 2147483647, %v696
  %vm702 = vcmp.le.f32.partialorder %v701, %v36
  %v703 = vand.u32 2147483647, %v700
  %vm704 = vcmp.le.f32.partialorder %v703, %v39
  %vm705 = vmand %vm702, %vm704
  %v706 = vsel %vm705, 1, 0
  %v707 = vcvt.s32.f32 %v706
  %v708 = vsub.f32 %v55, %v14
  %v709 = vsub.f32 %v59, %v16
  %v710 = vmul.f32 %v708, %v18
  %v711 = vmul.f32 %v709, %v20
  %v712 = vadd.f32 %v710, %v711
  %v713 = vsub.f32 0.0, %v708
  %v714 = vmul.f32 %v713, %v20
  %v715 = vmul.f32 %v709, %v18
  %v716 = vadd.f32 %v714, %v715
  %v717 = vand.u32 2147483647, %v712
  %vm718 = vcmp.le.f32.partialorder %v717, %v30
  %v719 = vand.u32 2147483647, %v716
  %vm720 = vcmp.le.f32.partialorder %v719, %v33
  %vm721 = vmand %vm718, %vm720
  %v722 = vsel %vm721, 1, 0
  %v723 = vcvt.s32.f32 %v722
  %v724 = vsub.f32 %v68, %v14
  %v725 = vsub.f32 %v71, %v16
  %v726 = vmul.f32 %v724, %v18
  %v727 = vmul.f32 %v725, %v20
  %v728 = vadd.f32 %v726, %v727
  %v729 = vsub.f32 0.0, %v724
  %v730 = vmul.f32 %v729, %v20
  %v731 = vmul.f32 %v725, %v18
  %v732 = vadd.f32 %v730, %v731
  %v733 = vand.u32 2147483647, %v728
  %vm734 = vcmp.le.f32.partialorder %v733, %v30
  %v735 = vand.u32 2147483647, %v732
  %vm736 = vcmp.le.f32.partialorder %v735, %v33
  %vm737 = vmand %vm734, %vm736
  %v738 = vsel %vm737, 1, 0
  %v739 = vcvt.s32.f32 %v738
  %v740 = vsub.f32 %v77, %v14
  %v741 = vsub.f32 %v79, %v16
  %v742 = vmul.f32 %v740, %v18
  %v743 = vmul.f32 %v741, %v20
  %v744 = vadd.f32 %v742, %v743
  %v745 = vsub.f32 0.0, %v740
  %v746 = vmul.f32 %v745, %v20
  %v747 = vmul.f32 %v741, %v18
  %v748 = vadd.f32 %v746, %v747
  %v749 = vand.u32 2147483647, %v744
  %vm750 = vcmp.le.f32.partialorder %v749, %v30
  %v751 = vand.u32 2147483647, %v748
  %vm752 = vcmp.le.f32.partialorder %v751, %v33
  %vm753 = vmand %vm750, %vm752
  %v754 = vsel %vm753, 1, 0
  %v755 = vcvt.s32.f32 %v754
  %v756 = vsub.f32 %v82, %v14
  %v757 = vsub.f32 %v83, %v16
  %v758 = vmul.f32 %v756, %v18
  %v759 = vmul.f32 %v757, %v20
  %v760 = vadd.f32 %v758, %v759
  %v761 = vsub.f32 0.0, %v756
  %v762 = vmul.f32 %v761, %v20
  %v763 = vmul.f32 %v757, %v18
  %v764 = vadd.f32 %v762, %v763
  %v765 = vand.u32 2147483647, %v760
  %vm766 = vcmp.le.f32.partialorder %v765, %v30
  %v767 = vand.u32 2147483647, %v764
  %vm768 = vcmp.le.f32.partialorder %v767, %v33
  %vm769 = vmand %vm766, %vm768
  %v770 = vsel %vm769, 1, 0
  %v771 = vcvt.s32.f32 %v770
  %v772 = vmul.f32 %v129, %v133
  %v773 = vmul.f32 %v131, %v133
  %v774 = vadd.f32 %v133, %v167
  %v775 = vmul.f32 %v163, %v167
  %v776 = vadd.f32 %v772, %v775
  %v777 = vmul.f32 %v165, %v167
  %v778 = vadd.f32 %v773, %v777
  %v779 = vadd.f32 %v774, %v201
  %v780 = vmul.f32 %v197, %v201
  %v781 = vadd.f32 %v776, %v780
  %v782 = vmul.f32 %v199, %v201
  %v783 = vadd.f32 %v778, %v782
  %v784 = vadd.f32 %v779, %v235
  %v785 = vmul.f32 %v231, %v235
  %v786 = vadd.f32 %v781, %v785
  %v787 = vmul.f32 %v233, %v235
  %v788 = vadd.f32 %v783, %v787
  %v789 = vadd.f32 %v784, %v269
  %v790 = vmul.f32 %v265, %v269
  %v791 = vadd.f32 %v786, %v790
  %v792 = vmul.f32 %v267, %v269
  %v793 = vadd.f32 %v788, %v792
  %v794 = vadd.f32 %v789, %v303
  %v795 = vmul.f32 %v299, %v303
  %v796 = vadd.f32 %v791, %v795
  %v797 = vmul.f32 %v301, %v303
  %v798 = vadd.f32 %v793, %v797
  %v799 = vadd.f32 %v794, %v337
  %v800 = vmul.f32 %v333, %v337
  %v801 = vadd.f32 %v796, %v800
  %v802 = vmul.f32 %v335, %v337
  %v803 = vadd.f32 %v798, %v802
  %v804 = vadd.f32 %v799, %v371
  %v805 = vmul.f32 %v367, %v371
  %v806 = vadd.f32 %v801, %v805
  %v807 = vmul.f32 %v369, %v371
  %v808 = vadd.f32 %v803, %v807
  %v809 = vadd.f32 %v804, %v405
  %v810 = vmul.f32 %v401, %v405
  %v811 = vadd.f32 %v806, %v810
  %v812 = vmul.f32 %v403, %v405
  %v813 = vadd.f32 %v808, %v812
  %v814 = vadd.f32 %v809, %v439
  %v815 = vmul.f32 %v435, %v439
  %v816 = vadd.f32 %v811, %v815
  %v817 = vmul.f32 %v437, %v439
  %v818 = vadd.f32 %v813, %v817
  %v819 = vadd.f32 %v814, %v473
  %v820 = vmul.f32 %v469, %v473
  %v821 = vadd.f32 %v816, %v820
  %v822 = vmul.f32 %v471, %v473
  %v823 = vadd.f32 %v818, %v822
  %v824 = vadd.f32 %v819, %v507
  %v825 = vmul.f32 %v503, %v507
  %v826 = vadd.f32 %v821, %v825
  %v827 = vmul.f32 %v505, %v507
  %v828 = vadd.f32 %v823, %v827
  %v829 = vadd.f32 %v824, %v541
  %v830 = vmul.f32 %v537, %v541
  %v831 = vadd.f32 %v826, %v830
  %v832 = vmul.f32 %v539, %v541
  %v833 = vadd.f32 %v828, %v832
  %v834 = vadd.f32 %v829, %v575
  %v835 = vmul.f32 %v571, %v575
  %v836 = vadd.f32 %v831, %v835
  %v837 = vmul.f32 %v573, %v575
  %v838 = vadd.f32 %v833, %v837
  %v839 = vadd.f32 %v834, %v609
  %v840 = vmul.f32 %v605, %v609
  %v841 = vadd.f32 %v836, %v840
  %v842 = vmul.f32 %v607, %v609
  %v843 = vadd.f32 %v838, %v842
  %v844 = vadd.f32 %v839, %v643
  %v845 = vmul.f32 %v639, %v643
  %v846 = vadd.f32 %v841, %v845
  %v847 = vmul.f32 %v641, %v643
  %v848 = vadd.f32 %v843, %v847
  %v849 = vadd.f32 %v844, %v659
  %v850 = vmul.f32 %v45, %v659
  %v851 = vadd.f32 %v846, %v850
  %v852 = vmul.f32 %v49, %v659
  %v853 = vadd.f32 %v848, %v852
  %v854 = vadd.f32 %v849, %v675
  %v855 = vmul.f32 %v62, %v675
  %v856 = vadd.f32 %v851, %v855
  %v857 = vmul.f32 %v65, %v675
  %v858 = vadd.f32 %v853, %v857
  %v859 = vadd.f32 %v854, %v691
  %v860 = vmul.f32 %v73, %v691
  %v861 = vadd.f32 %v856, %v860
  %v862 = vmul.f32 %v75, %v691
  %v863 = vadd.f32 %v858, %v862
  %v864 = vadd.f32 %v859, %v707
  %v865 = vmul.f32 %v80, %v707
  %v866 = vadd.f32 %v861, %v865
  %v867 = vmul.f32 %v81, %v707
  %v868 = vadd.f32 %v863, %v867
  %v869 = vadd.f32 %v864, %v723
  %v870 = vmul.f32 %v55, %v723
  %v871 = vadd.f32 %v866, %v870
  %v872 = vmul.f32 %v59, %v723
  %v873 = vadd.f32 %v868, %v872
  %v874 = vadd.f32 %v869, %v739
  %v875 = vmul.f32 %v68, %v739
  %v876 = vadd.f32 %v871, %v875
  %v877 = vmul.f32 %v71, %v739
  %v878 = vadd.f32 %v873, %v877
  %v879 = vadd.f32 %v874, %v755
  %v880 = vmul.f32 %v77, %v755
  %v881 = vadd.f32 %v876, %v880
  %v882 = vmul.f32 %v79, %v755
  %v883 = vadd.f32 %v878, %v882
  %v884 = vadd.f32 %v879, %v771
  %v885 = vmul.f32 %v82, %v771
  %v886 = vadd.f32 %v881, %v885
  %v887 = vmul.f32 %v83, %v771
  %v888 = vadd.f32 %v883, %v887
  %v889 = vmax.f32 %v884, 1.0
  %v890 = vrcp.pop %v889
  %v891 = vmul.f32 %v886, %v890
  %v892 = vmul.f32 %v888, %v890
  %v893 = vsub.f32 %v129, %v891
  %v894 = vmul.f32 %v893, %v133
  %v895 = vsub.f32 %v131, %v892
  %v896 = vmul.f32 %v895, %v133
  %v897 = vand.u32 2147483647, %v894
  %v898 = vand.u32 2147483647, %v896
  %v899 = vadd.f32 %v897, %v898
  %vm900 = vcmp.gt.f32.partialorder %v899, 1e-12
  %v901 = vsel %vm900, %v899, 1.0
  %v902 = vrcp.pop %v901
  %v903 = vmul.f32 %v894, %v902
  %vm904 = vcmp.ge.f32.partialorder %v896, 0.0
  %v905 = vsub.f32 1.0, %v903
  %v906 = vadd.f32 %v903, 3.0
  %v907 = vsel %vm904, %v905, %v906
  %vm908 = vcmp.gt.f32.partialorder %v133, 0.5
  %v909 = vsel %vm908, %v907, 10.0
  %v910 = vsub.f32 %v163, %v891
  %v911 = vmul.f32 %v910, %v167
  %v912 = vsub.f32 %v165, %v892
  %v913 = vmul.f32 %v912, %v167
  %v914 = vand.u32 2147483647, %v911
  %v915 = vand.u32 2147483647, %v913
  %v916 = vadd.f32 %v914, %v915
  %vm917 = vcmp.gt.f32.partialorder %v916, 1e-12
  %v918 = vsel %vm917, %v916, 1.0
  %v919 = vrcp.pop %v918
  %v920 = vmul.f32 %v911, %v919
  %vm921 = vcmp.ge.f32.partialorder %v913, 0.0
  %v922 = vsub.f32 1.0, %v920
  %v923 = vadd.f32 %v920, 3.0
  %v924 = vsel %vm921, %v922, %v923
  %vm925 = vcmp.gt.f32.partialorder %v167, 0.5
  %v926 = vsel %vm925, %v924, 10.0
  %v927 = vsub.f32 %v197, %v891
  %v928 = vmul.f32 %v927, %v201
  %v929 = vsub.f32 %v199, %v892
  %v930 = vmul.f32 %v929, %v201
  %v931 = vand.u32 2147483647, %v928
  %v932 = vand.u32 2147483647, %v930
  %v933 = vadd.f32 %v931, %v932
  %vm934 = vcmp.gt.f32.partialorder %v933, 1e-12
  %v935 = vsel %vm934, %v933, 1.0
  %v936 = vrcp.pop %v935
  %v937 = vmul.f32 %v928, %v936
  %vm938 = vcmp.ge.f32.partialorder %v930, 0.0
  %v939 = vsub.f32 1.0, %v937
  %v940 = vadd.f32 %v937, 3.0
  %v941 = vsel %vm938, %v939, %v940
  %vm942 = vcmp.gt.f32.partialorder %v201, 0.5
  %v943 = vsel %vm942, %v941, 10.0
  %v944 = vsub.f32 %v231, %v891
  %v945 = vmul.f32 %v944, %v235
  %v946 = vsub.f32 %v233, %v892
  %v947 = vmul.f32 %v946, %v235
  %v948 = vand.u32 2147483647, %v945
  %v949 = vand.u32 2147483647, %v947
  %v950 = vadd.f32 %v948, %v949
  %vm951 = vcmp.gt.f32.partialorder %v950, 1e-12
  %v952 = vsel %vm951, %v950, 1.0
  %v953 = vrcp.pop %v952
  %v954 = vmul.f32 %v945, %v953
  %vm955 = vcmp.ge.f32.partialorder %v947, 0.0
  %v956 = vsub.f32 1.0, %v954
  %v957 = vadd.f32 %v954, 3.0
  %v958 = vsel %vm955, %v956, %v957
  %vm959 = vcmp.gt.f32.partialorder %v235, 0.5
  %v960 = vsel %vm959, %v958, 10.0
  %v961 = vsub.f32 %v265, %v891
  %v962 = vmul.f32 %v961, %v269
  %v963 = vsub.f32 %v267, %v892
  %v964 = vmul.f32 %v963, %v269
  %v965 = vand.u32 2147483647, %v962
  %v966 = vand.u32 2147483647, %v964
  %v967 = vadd.f32 %v965, %v966
  %vm968 = vcmp.gt.f32.partialorder %v967, 1e-12
  %v969 = vsel %vm968, %v967, 1.0
  %v970 = vrcp.pop %v969
  %v971 = vmul.f32 %v962, %v970
  %vm972 = vcmp.ge.f32.partialorder %v964, 0.0
  %v973 = vsub.f32 1.0, %v971
  %v974 = vadd.f32 %v971, 3.0
  %v975 = vsel %vm972, %v973, %v974
  %vm976 = vcmp.gt.f32.partialorder %v269, 0.5
  %v977 = vsel %vm976, %v975, 10.0
  %v978 = vsub.f32 %v299, %v891
  %v979 = vmul.f32 %v978, %v303
  %v980 = vsub.f32 %v301, %v892
  %v981 = vmul.f32 %v980, %v303
  %v982 = vand.u32 2147483647, %v979
  %v983 = vand.u32 2147483647, %v981
  %v984 = vadd.f32 %v982, %v983
  %vm985 = vcmp.gt.f32.partialorder %v984, 1e-12
  %v986 = vsel %vm985, %v984, 1.0
  %v987 = vrcp.pop %v986
  %v988 = vmul.f32 %v979, %v987
  %vm989 = vcmp.ge.f32.partialorder %v981, 0.0
  %v990 = vsub.f32 1.0, %v988
  %v991 = vadd.f32 %v988, 3.0
  %v992 = vsel %vm989, %v990, %v991
  %vm993 = vcmp.gt.f32.partialorder %v303, 0.5
  %v994 = vsel %vm993, %v992, 10.0
  %v995 = vsub.f32 %v333, %v891
  %v996 = vmul.f32 %v995, %v337
  %v997 = vsub.f32 %v335, %v892
  %v998 = vmul.f32 %v997, %v337
  %v999 = vand.u32 2147483647, %v996
  %v1000 = vand.u32 2147483647, %v998
  %v1001 = vadd.f32 %v999, %v1000
  %vm1002 = vcmp.gt.f32.partialorder %v1001, 1e-12
  %v1003 = vsel %vm1002, %v1001, 1.0
  %v1004 = vrcp.pop %v1003
  %v1005 = vmul.f32 %v996, %v1004
  %vm1006 = vcmp.ge.f32.partialorder %v998, 0.0
  %v1007 = vsub.f32 1.0, %v1005
  %v1008 = vadd.f32 %v1005, 3.0
  %v1009 = vsel %vm1006, %v1007, %v1008
  %vm1010 = vcmp.gt.f32.partialorder %v337, 0.5
  %v1011 = vsel %vm1010, %v1009, 10.0
  %v1012 = vsub.f32 %v367, %v891
  %v1013 = vmul.f32 %v1012, %v371
  %v1014 = vsub.f32 %v369, %v892
  %v1015 = vmul.f32 %v1014, %v371
  %v1016 = vand.u32 2147483647, %v1013
  %v1017 = vand.u32 2147483647, %v1015
  %v1018 = vadd.f32 %v1016, %v1017
  %vm1019 = vcmp.gt.f32.partialorder %v1018, 1e-12
  %v1020 = vsel %vm1019, %v1018, 1.0
  %v1021 = vrcp.pop %v1020
  %v1022 = vmul.f32 %v1013, %v1021
  %vm1023 = vcmp.ge.f32.partialorder %v1015, 0.0
  %v1024 = vsub.f32 1.0, %v1022
  %v1025 = vadd.f32 %v1022, 3.0
  %v1026 = vsel %vm1023, %v1024, %v1025
  %vm1027 = vcmp.gt.f32.partialorder %v371, 0.5
  %v1028 = vsel %vm1027, %v1026, 10.0
  %v1029 = vsub.f32 %v401, %v891
  %v1030 = vmul.f32 %v1029, %v405
  %v1031 = vsub.f32 %v403, %v892
  %v1032 = vmul.f32 %v1031, %v405
  %v1033 = vand.u32 2147483647, %v1030
  %v1034 = vand.u32 2147483647, %v1032
  %v1035 = vadd.f32 %v1033, %v1034
  %vm1036 = vcmp.gt.f32.partialorder %v1035, 1e-12
  %v1037 = vsel %vm1036, %v1035, 1.0
  %v1038 = vrcp.pop %v1037
  %v1039 = vmul.f32 %v1030, %v1038
  %vm1040 = vcmp.ge.f32.partialorder %v1032, 0.0
  %v1041 = vsub.f32 1.0, %v1039
  %v1042 = vadd.f32 %v1039, 3.0
  %v1043 = vsel %vm1040, %v1041, %v1042
  %vm1044 = vcmp.gt.f32.partialorder %v405, 0.5
  %v1045 = vsel %vm1044, %v1043, 10.0
  %v1046 = vsub.f32 %v435, %v891
  %v1047 = vmul.f32 %v1046, %v439
  %v1048 = vsub.f32 %v437, %v892
  %v1049 = vmul.f32 %v1048, %v439
  %v1050 = vand.u32 2147483647, %v1047
  %v1051 = vand.u32 2147483647, %v1049
  %v1052 = vadd.f32 %v1050, %v1051
  %vm1053 = vcmp.gt.f32.partialorder %v1052, 1e-12
  %v1054 = vsel %vm1053, %v1052, 1.0
  %v1055 = vrcp.pop %v1054
  %v1056 = vmul.f32 %v1047, %v1055
  %vm1057 = vcmp.ge.f32.partialorder %v1049, 0.0
  %v1058 = vsub.f32 1.0, %v1056
  %v1059 = vadd.f32 %v1056, 3.0
  %v1060 = vsel %vm1057, %v1058, %v1059
  %vm1061 = vcmp.gt.f32.partialorder %v439, 0.5
  %v1062 = vsel %vm1061, %v1060, 10.0
  %v1063 = vsub.f32 %v469, %v891
  %v1064 = vmul.f32 %v1063, %v473
  %v1065 = vsub.f32 %v471, %v892
  %v1066 = vmul.f32 %v1065, %v473
  %v1067 = vand.u32 2147483647, %v1064
  %v1068 = vand.u32 2147483647, %v1066
  %v1069 = vadd.f32 %v1067, %v1068
  %vm1070 = vcmp.gt.f32.partialorder %v1069, 1e-12
  %v1071 = vsel %vm1070, %v1069, 1.0
  %v1072 = vrcp.pop %v1071
  %v1073 = vmul.f32 %v1064, %v1072
  %vm1074 = vcmp.ge.f32.partialorder %v1066, 0.0
  %v1075 = vsub.f32 1.0, %v1073
  %v1076 = vadd.f32 %v1073, 3.0
  %v1077 = vsel %vm1074, %v1075, %v1076
  %vm1078 = vcmp.gt.f32.partialorder %v473, 0.5
  %v1079 = vsel %vm1078, %v1077, 10.0
  %v1080 = vsub.f32 %v503, %v891
  %v1081 = vmul.f32 %v1080, %v507
  %v1082 = vsub.f32 %v505, %v892
  %v1083 = vmul.f32 %v1082, %v507
  %v1084 = vand.u32 2147483647, %v1081
  %v1085 = vand.u32 2147483647, %v1083
  %v1086 = vadd.f32 %v1084, %v1085
  %vm1087 = vcmp.gt.f32.partialorder %v1086, 1e-12
  %v1088 = vsel %vm1087, %v1086, 1.0
  %v1089 = vrcp.pop %v1088
  %v1090 = vmul.f32 %v1081, %v1089
  %vm1091 = vcmp.ge.f32.partialorder %v1083, 0.0
  %v1092 = vsub.f32 1.0, %v1090
  %v1093 = vadd.f32 %v1090, 3.0
  %v1094 = vsel %vm1091, %v1092, %v1093
  %vm1095 = vcmp.gt.f32.partialorder %v507, 0.5
  %v1096 = vsel %vm1095, %v1094, 10.0
  %v1097 = vsub.f32 %v537, %v891
  %v1098 = vmul.f32 %v1097, %v541
  %v1099 = vsub.f32 %v539, %v892
  %v1100 = vmul.f32 %v1099, %v541
  %v1101 = vand.u32 2147483647, %v1098
  %v1102 = vand.u32 2147483647, %v1100
  %v1103 = vadd.f32 %v1101, %v1102
  %vm1104 = vcmp.gt.f32.partialorder %v1103, 1e-12
  %v1105 = vsel %vm1104, %v1103, 1.0
  %v1106 = vrcp.pop %v1105
  %v1107 = vmul.f32 %v1098, %v1106
  %vm1108 = vcmp.ge.f32.partialorder %v1100, 0.0
  %v1109 = vsub.f32 1.0, %v1107
  %v1110 = vadd.f32 %v1107, 3.0
  %v1111 = vsel %vm1108, %v1109, %v1110
  %vm1112 = vcmp.gt.f32.partialorder %v541, 0.5
  %v1113 = vsel %vm1112, %v1111, 10.0
  %v1114 = vsub.f32 %v571, %v891
  %v1115 = vmul.f32 %v1114, %v575
  %v1116 = vsub.f32 %v573, %v892
  %v1117 = vmul.f32 %v1116, %v575
  %v1118 = vand.u32 2147483647, %v1115
  %v1119 = vand.u32 2147483647, %v1117
  %v1120 = vadd.f32 %v1118, %v1119
  %vm1121 = vcmp.gt.f32.partialorder %v1120, 1e-12
  %v1122 = vsel %vm1121, %v1120, 1.0
  %v1123 = vrcp.pop %v1122
  %v1124 = vmul.f32 %v1115, %v1123
  %vm1125 = vcmp.ge.f32.partialorder %v1117, 0.0
  %v1126 = vsub.f32 1.0, %v1124
  %v1127 = vadd.f32 %v1124, 3.0
  %v1128 = vsel %vm1125, %v1126, %v1127
  %vm1129 = vcmp.gt.f32.partialorder %v575, 0.5
  %v1130 = vsel %vm1129, %v1128, 10.0
  %v1131 = vsub.f32 %v605, %v891
  %v1132 = vmul.f32 %v1131, %v609
  %v1133 = vsub.f32 %v607, %v892
  %v1134 = vmul.f32 %v1133, %v609
  %v1135 = vand.u32 2147483647, %v1132
  %v1136 = vand.u32 2147483647, %v1134
  %v1137 = vadd.f32 %v1135, %v1136
  %vm1138 = vcmp.gt.f32.partialorder %v1137, 1e-12
  %v1139 = vsel %vm1138, %v1137, 1.0
  %v1140 = vrcp.pop %v1139
  %v1141 = vmul.f32 %v1132, %v1140
  %vm1142 = vcmp.ge.f32.partialorder %v1134, 0.0
  %v1143 = vsub.f32 1.0, %v1141
  %v1144 = vadd.f32 %v1141, 3.0
  %v1145 = vsel %vm1142, %v1143, %v1144
  %vm1146 = vcmp.gt.f32.partialorder %v609, 0.5
  %v1147 = vsel %vm1146, %v1145, 10.0
  %v1148 = vsub.f32 %v639, %v891
  %v1149 = vmul.f32 %v1148, %v643
  %v1150 = vsub.f32 %v641, %v892
  %v1151 = vmul.f32 %v1150, %v643
  %v1152 = vand.u32 2147483647, %v1149
  %v1153 = vand.u32 2147483647, %v1151
  %v1154 = vadd.f32 %v1152, %v1153
  %vm1155 = vcmp.gt.f32.partialorder %v1154, 1e-12
  %v1156 = vsel %vm1155, %v1154, 1.0
  %v1157 = vrcp.pop %v1156
  %v1158 = vmul.f32 %v1149, %v1157
  %vm1159 = vcmp.ge.f32.partialorder %v1151, 0.0
  %v1160 = vsub.f32 1.0, %v1158
  %v1161 = vadd.f32 %v1158, 3.0
  %v1162 = vsel %vm1159, %v1160, %v1161
  %vm1163 = vcmp.gt.f32.partialorder %v643, 0.5
  %v1164 = vsel %vm1163, %v1162, 10.0
  %v1165 = vsub.f32 %v45, %v891
  %v1166 = vmul.f32 %v1165, %v659
  %v1167 = vsub.f32 %v49, %v892
  %v1168 = vmul.f32 %v1167, %v659
  %v1169 = vand.u32 2147483647, %v1166
  %v1170 = vand.u32 2147483647, %v1168
  %v1171 = vadd.f32 %v1169, %v1170
  %vm1172 = vcmp.gt.f32.partialorder %v1171, 1e-12
  %v1173 = vsel %vm1172, %v1171, 1.0
  %v1174 = vrcp.pop %v1173
  %v1175 = vmul.f32 %v1166, %v1174
  %vm1176 = vcmp.ge.f32.partialorder %v1168, 0.0
  %v1177 = vsub.f32 1.0, %v1175
  %v1178 = vadd.f32 %v1175, 3.0
  %v1179 = vsel %vm1176, %v1177, %v1178
  %vm1180 = vcmp.gt.f32.partialorder %v659, 0.5
  %v1181 = vsel %vm1180, %v1179, 10.0
  %v1182 = vsub.f32 %v62, %v891
  %v1183 = vmul.f32 %v1182, %v675
  %v1184 = vsub.f32 %v65, %v892
  %v1185 = vmul.f32 %v1184, %v675
  %v1186 = vand.u32 2147483647, %v1183
  %v1187 = vand.u32 2147483647, %v1185
  %v1188 = vadd.f32 %v1186, %v1187
  %vm1189 = vcmp.gt.f32.partialorder %v1188, 1e-12
  %v1190 = vsel %vm1189, %v1188, 1.0
  %v1191 = vrcp.pop %v1190
  %v1192 = vmul.f32 %v1183, %v1191
  %vm1193 = vcmp.ge.f32.partialorder %v1185, 0.0
  %v1194 = vsub.f32 1.0, %v1192
  %v1195 = vadd.f32 %v1192, 3.0
  %v1196 = vsel %vm1193, %v1194, %v1195
  %vm1197 = vcmp.gt.f32.partialorder %v675, 0.5
  %v1198 = vsel %vm1197, %v1196, 10.0
  %v1199 = vsub.f32 %v73, %v891
  %v1200 = vmul.f32 %v1199, %v691
  %v1201 = vsub.f32 %v75, %v892
  %v1202 = vmul.f32 %v1201, %v691
  %v1203 = vand.u32 2147483647, %v1200
  %v1204 = vand.u32 2147483647, %v1202
  %v1205 = vadd.f32 %v1203, %v1204
  %vm1206 = vcmp.gt.f32.partialorder %v1205, 1e-12
  %v1207 = vsel %vm1206, %v1205, 1.0
  %v1208 = vrcp.pop %v1207
  %v1209 = vmul.f32 %v1200, %v1208
  %vm1210 = vcmp.ge.f32.partialorder %v1202, 0.0
  %v1211 = vsub.f32 1.0, %v1209
  %v1212 = vadd.f32 %v1209, 3.0
  %v1213 = vsel %vm1210, %v1211, %v1212
  %vm1214 = vcmp.gt.f32.partialorder %v691, 0.5
  %v1215 = vsel %vm1214, %v1213, 10.0
  %v1216 = vsub.f32 %v80, %v891
  %v1217 = vmul.f32 %v1216, %v707
  %v1218 = vsub.f32 %v81, %v892
  %v1219 = vmul.f32 %v1218, %v707
  %v1220 = vand.u32 2147483647, %v1217
  %v1221 = vand.u32 2147483647, %v1219
  %v1222 = vadd.f32 %v1220, %v1221
  %vm1223 = vcmp.gt.f32.partialorder %v1222, 1e-12
  %v1224 = vsel %vm1223, %v1222, 1.0
  %v1225 = vrcp.pop %v1224
  %v1226 = vmul.f32 %v1217, %v1225
  %vm1227 = vcmp.ge.f32.partialorder %v1219, 0.0
  %v1228 = vsub.f32 1.0, %v1226
  %v1229 = vadd.f32 %v1226, 3.0
  %v1230 = vsel %vm1227, %v1228, %v1229
  %vm1231 = vcmp.gt.f32.partialorder %v707, 0.5
  %v1232 = vsel %vm1231, %v1230, 10.0
  %v1233 = vsub.f32 %v55, %v891
  %v1234 = vmul.f32 %v1233, %v723
  %v1235 = vsub.f32 %v59, %v892
  %v1236 = vmul.f32 %v1235, %v723
  %v1237 = vand.u32 2147483647, %v1234
  %v1238 = vand.u32 2147483647, %v1236
  %v1239 = vadd.f32 %v1237, %v1238
  %vm1240 = vcmp.gt.f32.partialorder %v1239, 1e-12
  %v1241 = vsel %vm1240, %v1239, 1.0
  %v1242 = vrcp.pop %v1241
  %v1243 = vmul.f32 %v1234, %v1242
  %vm1244 = vcmp.ge.f32.partialorder %v1236, 0.0
  %v1245 = vsub.f32 1.0, %v1243
  %v1246 = vadd.f32 %v1243, 3.0
  %v1247 = vsel %vm1244, %v1245, %v1246
  %vm1248 = vcmp.gt.f32.partialorder %v723, 0.5
  %v1249 = vsel %vm1248, %v1247, 10.0
  %v1250 = vsub.f32 %v68, %v891
  %v1251 = vmul.f32 %v1250, %v739
  %v1252 = vsub.f32 %v71, %v892
  %v1253 = vmul.f32 %v1252, %v739
  %v1254 = vand.u32 2147483647, %v1251
  %v1255 = vand.u32 2147483647, %v1253
  %v1256 = vadd.f32 %v1254, %v1255
  %vm1257 = vcmp.gt.f32.partialorder %v1256, 1e-12
  %v1258 = vsel %vm1257, %v1256, 1.0
  %v1259 = vrcp.pop %v1258
  %v1260 = vmul.f32 %v1251, %v1259
  %vm1261 = vcmp.ge.f32.partialorder %v1253, 0.0
  %v1262 = vsub.f32 1.0, %v1260
  %v1263 = vadd.f32 %v1260, 3.0
  %v1264 = vsel %vm1261, %v1262, %v1263
  %vm1265 = vcmp.gt.f32.partialorder %v739, 0.5
  %v1266 = vsel %vm1265, %v1264, 10.0
  %v1267 = vsub.f32 %v77, %v891
  %v1268 = vmul.f32 %v1267, %v755
  %v1269 = vsub.f32 %v79, %v892
  %v1270 = vmul.f32 %v1269, %v755
  %v1271 = vand.u32 2147483647, %v1268
  %v1272 = vand.u32 2147483647, %v1270
  %v1273 = vadd.f32 %v1271, %v1272
  %vm1274 = vcmp.gt.f32.partialorder %v1273, 1e-12
  %v1275 = vsel %vm1274, %v1273, 1.0
  %v1276 = vrcp.pop %v1275
  %v1277 = vmul.f32 %v1268, %v1276
  %vm1278 = vcmp.ge.f32.partialorder %v1270, 0.0
  %v1279 = vsub.f32 1.0, %v1277
  %v1280 = vadd.f32 %v1277, 3.0
  %v1281 = vsel %vm1278, %v1279, %v1280
  %vm1282 = vcmp.gt.f32.partialorder %v755, 0.5
  %v1283 = vsel %vm1282, %v1281, 10.0
  %v1284 = vsub.f32 %v82, %v891
  %v1285 = vmul.f32 %v1284, %v771
  %v1286 = vsub.f32 %v83, %v892
  %v1287 = vmul.f32 %v1286, %v771
  %v1288 = vand.u32 2147483647, %v1285
  %v1289 = vand.u32 2147483647, %v1287
  %v1290 = vadd.f32 %v1288, %v1289
  %vm1291 = vcmp.gt.f32.partialorder %v1290, 1e-12
  %v1292 = vsel %vm1291, %v1290, 1.0
  %v1293 = vrcp.pop %v1292
  %v1294 = vmul.f32 %v1285, %v1293
  %vm1295 = vcmp.ge.f32.partialorder %v1287, 0.0
  %v1296 = vsub.f32 1.0, %v1294
  %v1297 = vadd.f32 %v1294, 3.0
  %v1298 = vsel %vm1295, %v1296, %v1297
  %vm1299 = vcmp.gt.f32.partialorder %v771, 0.5
  %v1300 = vsel %vm1299, %v1298, 10.0
  %vm1301 = vcmp.lt.f32.partialorder %v926, %v909
  %v1302 = vmin.f32 %v909, %v926
  %v1303 = vmax.f32 %v909, %v926
  %v1304 = vsel %vm1301, %v911, %v894
  %v1305 = vsel %vm1301, %v894, %v911
  %v1306 = vsel %vm1301, %v913, %v896
  %v1307 = vsel %vm1301, %v896, %v913
  %vm1308 = vcmp.lt.f32.partialorder %v960, %v943
  %v1309 = vmin.f32 %v943, %v960
  %v1310 = vmax.f32 %v943, %v960
  %v1311 = vsel %vm1308, %v945, %v928
  %v1312 = vsel %vm1308, %v928, %v945
  %v1313 = vsel %vm1308, %v947, %v930
  %v1314 = vsel %vm1308, %v930, %v947
  %vm1315 = vcmp.lt.f32.partialorder %v1309, %v1302
  %v1316 = vmin.f32 %v1302, %v1309
  %v1317 = vmax.f32 %v1302, %v1309
  %v1318 = vsel %vm1315, %v1311, %v1304
  %v1319 = vsel %vm1315, %v1304, %v1311
  %v1320 = vsel %vm1315, %v1313, %v1306
  %v1321 = vsel %vm1315, %v1306, %v1313
  %vm1322 = vcmp.lt.f32.partialorder %v1310, %v1303
  %v1323 = vmin.f32 %v1303, %v1310
  %v1324 = vmax.f32 %v1303, %v1310
  %v1325 = vsel %vm1322, %v1312, %v1305
  %v1326 = vsel %vm1322, %v1305, %v1312
  %v1327 = vsel %vm1322, %v1314, %v1307
  %v1328 = vsel %vm1322, %v1307, %v1314
  %vm1329 = vcmp.lt.f32.partialorder %v1317, %v1323
  %v1330 = vmin.f32 %v1323, %v1317
  %v1331 = vmax.f32 %v1323, %v1317
  %v1332 = vsel %vm1329, %v1319, %v1325
  %v1333 = vsel %vm1329, %v1325, %v1319
  %v1334 = vsel %vm1329, %v1321, %v1327
  %v1335 = vsel %vm1329, %v1327, %v1321
  %vm1336 = vcmp.lt.f32.partialorder %v994, %v977
  %v1337 = vmin.f32 %v977, %v994
  %v1338 = vmax.f32 %v977, %v994
  %v1339 = vsel %vm1336, %v979, %v962
  %v1340 = vsel %vm1336, %v962, %v979
  %v1341 = vsel %vm1336, %v981, %v964
  %v1342 = vsel %vm1336, %v964, %v981
  %vm1343 = vcmp.lt.f32.partialorder %v1028, %v1011
  %v1344 = vmin.f32 %v1011, %v1028
  %v1345 = vmax.f32 %v1011, %v1028
  %v1346 = vsel %vm1343, %v1013, %v996
  %v1347 = vsel %vm1343, %v996, %v1013
  %v1348 = vsel %vm1343, %v1015, %v998
  %v1349 = vsel %vm1343, %v998, %v1015
  %vm1350 = vcmp.lt.f32.partialorder %v1344, %v1337
  %v1351 = vmin.f32 %v1337, %v1344
  %v1352 = vmax.f32 %v1337, %v1344
  %v1353 = vsel %vm1350, %v1346, %v1339
  %v1354 = vsel %vm1350, %v1339, %v1346
  %v1355 = vsel %vm1350, %v1348, %v1341
  %v1356 = vsel %vm1350, %v1341, %v1348
  %vm1357 = vcmp.lt.f32.partialorder %v1345, %v1338
  %v1358 = vmin.f32 %v1338, %v1345
  %v1359 = vmax.f32 %v1338, %v1345
  %v1360 = vsel %vm1357, %v1347, %v1340
  %v1361 = vsel %vm1357, %v1340, %v1347
  %v1362 = vsel %vm1357, %v1349, %v1342
  %v1363 = vsel %vm1357, %v1342, %v1349
  %vm1364 = vcmp.lt.f32.partialorder %v1352, %v1358
  %v1365 = vmin.f32 %v1358, %v1352
  %v1366 = vmax.f32 %v1358, %v1352
  %v1367 = vsel %vm1364, %v1354, %v1360
  %v1368 = vsel %vm1364, %v1360, %v1354
  %v1369 = vsel %vm1364, %v1356, %v1362
  %v1370 = vsel %vm1364, %v1362, %v1356
  %vm1371 = vcmp.lt.f32.partialorder %v1351, %v1316
  %v1372 = vmin.f32 %v1316, %v1351
  %v1373 = vmax.f32 %v1316, %v1351
  %v1374 = vsel %vm1371, %v1353, %v1318
  %v1375 = vsel %vm1371, %v1318, %v1353
  %v1376 = vsel %vm1371, %v1355, %v1320
  %v1377 = vsel %vm1371, %v1320, %v1355
  %vm1378 = vcmp.lt.f32.partialorder %v1366, %v1331
  %v1379 = vmin.f32 %v1331, %v1366
  %v1380 = vmax.f32 %v1331, %v1366
  %v1381 = vsel %vm1378, %v1368, %v1333
  %v1382 = vsel %vm1378, %v1333, %v1368
  %v1383 = vsel %vm1378, %v1370, %v1335
  %v1384 = vsel %vm1378, %v1335, %v1370
  %vm1385 = vcmp.lt.f32.partialorder %v1373, %v1379
  %v1386 = vmin.f32 %v1379, %v1373
  %v1387 = vmax.f32 %v1379, %v1373
  %v1388 = vsel %vm1385, %v1375, %v1381
  %v1389 = vsel %vm1385, %v1381, %v1375
  %v1390 = vsel %vm1385, %v1377, %v1383
  %v1391 = vsel %vm1385, %v1383, %v1377
  %vm1392 = vcmp.lt.f32.partialorder %v1365, %v1330
  %v1393 = vmin.f32 %v1330, %v1365
  %v1394 = vmax.f32 %v1330, %v1365
  %v1395 = vsel %vm1392, %v1367, %v1332
  %v1396 = vsel %vm1392, %v1332, %v1367
  %v1397 = vsel %vm1392, %v1369, %v1334
  %v1398 = vsel %vm1392, %v1334, %v1369
  %vm1399 = vcmp.lt.f32.partialorder %v1359, %v1324
  %v1400 = vmin.f32 %v1324, %v1359
  %v1401 = vmax.f32 %v1324, %v1359
  %v1402 = vsel %vm1399, %v1361, %v1326
  %v1403 = vsel %vm1399, %v1326, %v1361
  %v1404 = vsel %vm1399, %v1363, %v1328
  %v1405 = vsel %vm1399, %v1328, %v1363
  %vm1406 = vcmp.lt.f32.partialorder %v1394, %v1400
  %v1407 = vmin.f32 %v1400, %v1394
  %v1408 = vmax.f32 %v1400, %v1394
  %v1409 = vsel %vm1406, %v1396, %v1402
  %v1410 = vsel %vm1406, %v1402, %v1396
  %v1411 = vsel %vm1406, %v1398, %v1404
  %v1412 = vsel %vm1406, %v1404, %v1398
  %vm1413 = vcmp.lt.f32.partialorder %v1386, %v1393
  %v1414 = vmin.f32 %v1393, %v1386
  %v1415 = vmax.f32 %v1393, %v1386
  %v1416 = vsel %vm1413, %v1388, %v1395
  %v1417 = vsel %vm1413, %v1395, %v1388
  %v1418 = vsel %vm1413, %v1390, %v1397
  %v1419 = vsel %vm1413, %v1397, %v1390
  %vm1420 = vcmp.lt.f32.partialorder %v1387, %v1407
  %v1421 = vmin.f32 %v1407, %v1387
  %v1422 = vmax.f32 %v1407, %v1387
  %v1423 = vsel %vm1420, %v1389, %v1409
  %v1424 = vsel %vm1420, %v1409, %v1389
  %v1425 = vsel %vm1420, %v1391, %v1411
  %v1426 = vsel %vm1420, %v1411, %v1391
  %vm1427 = vcmp.lt.f32.partialorder %v1380, %v1408
  %v1428 = vmin.f32 %v1408, %v1380
  %v1429 = vmax.f32 %v1408, %v1380
  %v1430 = vsel %vm1427, %v1382, %v1410
  %v1431 = vsel %vm1427, %v1410, %v1382
  %v1432 = vsel %vm1427, %v1384, %v1412
  %v1433 = vsel %vm1427, %v1412, %v1384
  %vm1434 = vcmp.lt.f32.partialorder %v1062, %v1045
  %v1435 = vmin.f32 %v1045, %v1062
  %v1436 = vmax.f32 %v1045, %v1062
  %v1437 = vsel %vm1434, %v1047, %v1030
  %v1438 = vsel %vm1434, %v1030, %v1047
  %v1439 = vsel %vm1434, %v1049, %v1032
  %v1440 = vsel %vm1434, %v1032, %v1049
  %vm1441 = vcmp.lt.f32.partialorder %v1096, %v1079
  %v1442 = vmin.f32 %v1079, %v1096
  %v1443 = vmax.f32 %v1079, %v1096
  %v1444 = vsel %vm1441, %v1081, %v1064
  %v1445 = vsel %vm1441, %v1064, %v1081
  %v1446 = vsel %vm1441, %v1083, %v1066
  %v1447 = vsel %vm1441, %v1066, %v1083
  %vm1448 = vcmp.lt.f32.partialorder %v1442, %v1435
  %v1449 = vmin.f32 %v1435, %v1442
  %v1450 = vmax.f32 %v1435, %v1442
  %v1451 = vsel %vm1448, %v1444, %v1437
  %v1452 = vsel %vm1448, %v1437, %v1444
  %v1453 = vsel %vm1448, %v1446, %v1439
  %v1454 = vsel %vm1448, %v1439, %v1446
  %vm1455 = vcmp.lt.f32.partialorder %v1443, %v1436
  %v1456 = vmin.f32 %v1436, %v1443
  %v1457 = vmax.f32 %v1436, %v1443
  %v1458 = vsel %vm1455, %v1445, %v1438
  %v1459 = vsel %vm1455, %v1438, %v1445
  %v1460 = vsel %vm1455, %v1447, %v1440
  %v1461 = vsel %vm1455, %v1440, %v1447
  %vm1462 = vcmp.lt.f32.partialorder %v1450, %v1456
  %v1463 = vmin.f32 %v1456, %v1450
  %v1464 = vmax.f32 %v1456, %v1450
  %v1465 = vsel %vm1462, %v1452, %v1458
  %v1466 = vsel %vm1462, %v1458, %v1452
  %v1467 = vsel %vm1462, %v1454, %v1460
  %v1468 = vsel %vm1462, %v1460, %v1454
  %vm1469 = vcmp.lt.f32.partialorder %v1130, %v1113
  %v1470 = vmin.f32 %v1113, %v1130
  %v1471 = vmax.f32 %v1113, %v1130
  %v1472 = vsel %vm1469, %v1115, %v1098
  %v1473 = vsel %vm1469, %v1098, %v1115
  %v1474 = vsel %vm1469, %v1117, %v1100
  %v1475 = vsel %vm1469, %v1100, %v1117
  %vm1476 = vcmp.lt.f32.partialorder %v1164, %v1147
  %v1477 = vmin.f32 %v1147, %v1164
  %v1478 = vmax.f32 %v1147, %v1164
  %v1479 = vsel %vm1476, %v1149, %v1132
  %v1480 = vsel %vm1476, %v1132, %v1149
  %v1481 = vsel %vm1476, %v1151, %v1134
  %v1482 = vsel %vm1476, %v1134, %v1151
  %vm1483 = vcmp.lt.f32.partialorder %v1477, %v1470
  %v1484 = vmin.f32 %v1470, %v1477
  %v1485 = vmax.f32 %v1470, %v1477
  %v1486 = vsel %vm1483, %v1479, %v1472
  %v1487 = vsel %vm1483, %v1472, %v1479
  %v1488 = vsel %vm1483, %v1481, %v1474
  %v1489 = vsel %vm1483, %v1474, %v1481
  %vm1490 = vcmp.lt.f32.partialorder %v1478, %v1471
  %v1491 = vmin.f32 %v1471, %v1478
  %v1492 = vmax.f32 %v1471, %v1478
  %v1493 = vsel %vm1490, %v1480, %v1473
  %v1494 = vsel %vm1490, %v1473, %v1480
  %v1495 = vsel %vm1490, %v1482, %v1475
  %v1496 = vsel %vm1490, %v1475, %v1482
  %vm1497 = vcmp.lt.f32.partialorder %v1485, %v1491
  %v1498 = vmin.f32 %v1491, %v1485
  %v1499 = vmax.f32 %v1491, %v1485
  %v1500 = vsel %vm1497, %v1487, %v1493
  %v1501 = vsel %vm1497, %v1493, %v1487
  %v1502 = vsel %vm1497, %v1489, %v1495
  %v1503 = vsel %vm1497, %v1495, %v1489
  %vm1504 = vcmp.lt.f32.partialorder %v1484, %v1449
  %v1505 = vmin.f32 %v1449, %v1484
  %v1506 = vmax.f32 %v1449, %v1484
  %v1507 = vsel %vm1504, %v1486, %v1451
  %v1508 = vsel %vm1504, %v1451, %v1486
  %v1509 = vsel %vm1504, %v1488, %v1453
  %v1510 = vsel %vm1504, %v1453, %v1488
  %vm1511 = vcmp.lt.f32.partialorder %v1499, %v1464
  %v1512 = vmin.f32 %v1464, %v1499
  %v1513 = vmax.f32 %v1464, %v1499
  %v1514 = vsel %vm1511, %v1501, %v1466
  %v1515 = vsel %vm1511, %v1466, %v1501
  %v1516 = vsel %vm1511, %v1503, %v1468
  %v1517 = vsel %vm1511, %v1468, %v1503
  %vm1518 = vcmp.lt.f32.partialorder %v1506, %v1512
  %v1519 = vmin.f32 %v1512, %v1506
  %v1520 = vmax.f32 %v1512, %v1506
  %v1521 = vsel %vm1518, %v1508, %v1514
  %v1522 = vsel %vm1518, %v1514, %v1508
  %v1523 = vsel %vm1518, %v1510, %v1516
  %v1524 = vsel %vm1518, %v1516, %v1510
  %vm1525 = vcmp.lt.f32.partialorder %v1498, %v1463
  %v1526 = vmin.f32 %v1463, %v1498
  %v1527 = vmax.f32 %v1463, %v1498
  %v1528 = vsel %vm1525, %v1500, %v1465
  %v1529 = vsel %vm1525, %v1465, %v1500
  %v1530 = vsel %vm1525, %v1502, %v1467
  %v1531 = vsel %vm1525, %v1467, %v1502
  %vm1532 = vcmp.lt.f32.partialorder %v1492, %v1457
  %v1533 = vmin.f32 %v1457, %v1492
  %v1534 = vmax.f32 %v1457, %v1492
  %v1535 = vsel %vm1532, %v1494, %v1459
  %v1536 = vsel %vm1532, %v1459, %v1494
  %v1537 = vsel %vm1532, %v1496, %v1461
  %v1538 = vsel %vm1532, %v1461, %v1496
  %vm1539 = vcmp.lt.f32.partialorder %v1527, %v1533
  %v1540 = vmin.f32 %v1533, %v1527
  %v1541 = vmax.f32 %v1533, %v1527
  %v1542 = vsel %vm1539, %v1529, %v1535
  %v1543 = vsel %vm1539, %v1535, %v1529
  %v1544 = vsel %vm1539, %v1531, %v1537
  %v1545 = vsel %vm1539, %v1537, %v1531
  %vm1546 = vcmp.lt.f32.partialorder %v1519, %v1526
  %v1547 = vmin.f32 %v1526, %v1519
  %v1548 = vmax.f32 %v1526, %v1519
  %v1549 = vsel %vm1546, %v1521, %v1528
  %v1550 = vsel %vm1546, %v1528, %v1521
  %v1551 = vsel %vm1546, %v1523, %v1530
  %v1552 = vsel %vm1546, %v1530, %v1523
  %vm1553 = vcmp.lt.f32.partialorder %v1520, %v1540
  %v1554 = vmin.f32 %v1540, %v1520
  %v1555 = vmax.f32 %v1540, %v1520
  %v1556 = vsel %vm1553, %v1522, %v1542
  %v1557 = vsel %vm1553, %v1542, %v1522
  %v1558 = vsel %vm1553, %v1524, %v1544
  %v1559 = vsel %vm1553, %v1544, %v1524
  %vm1560 = vcmp.lt.f32.partialorder %v1513, %v1541
  %v1561 = vmin.f32 %v1541, %v1513
  %v1562 = vmax.f32 %v1541, %v1513
  %v1563 = vsel %vm1560, %v1515, %v1543
  %v1564 = vsel %vm1560, %v1543, %v1515
  %v1565 = vsel %vm1560, %v1517, %v1545
  %v1566 = vsel %vm1560, %v1545, %v1517
  %vm1567 = vcmp.lt.f32.partialorder %v1505, %v1372
  %v1568 = vmin.f32 %v1372, %v1505
  %v1569 = vmax.f32 %v1372, %v1505
  %v1570 = vsel %vm1567, %v1507, %v1374
  %v1571 = vsel %vm1567, %v1374, %v1507
  %v1572 = vsel %vm1567, %v1509, %v1376
  %v1573 = vsel %vm1567, %v1376, %v1509
  %vm1574 = vcmp.lt.f32.partialorder %v1555, %v1422
  %v1575 = vmin.f32 %v1422, %v1555
  %v1576 = vmax.f32 %v1422, %v1555
  %v1577 = vsel %vm1574, %v1557, %v1424
  %v1578 = vsel %vm1574, %v1424, %v1557
  %v1579 = vsel %vm1574, %v1559, %v1426
  %v1580 = vsel %vm1574, %v1426, %v1559
  %vm1581 = vcmp.lt.f32.partialorder %v1569, %v1575
  %v1582 = vmin.f32 %v1575, %v1569
  %v1583 = vmax.f32 %v1575, %v1569
  %v1584 = vsel %vm1581, %v1571, %v1577
  %v1585 = vsel %vm1581, %v1577, %v1571
  %v1586 = vsel %vm1581, %v1573, %v1579
  %v1587 = vsel %vm1581, %v1579, %v1573
  %vm1588 = vcmp.lt.f32.partialorder %v1548, %v1415
  %v1589 = vmin.f32 %v1415, %v1548
  %v1590 = vmax.f32 %v1415, %v1548
  %v1591 = vsel %vm1588, %v1550, %v1417
  %v1592 = vsel %vm1588, %v1417, %v1550
  %v1593 = vsel %vm1588, %v1552, %v1419
  %v1594 = vsel %vm1588, %v1419, %v1552
  %vm1595 = vcmp.lt.f32.partialorder %v1562, %v1429
  %v1596 = vmin.f32 %v1429, %v1562
  %v1597 = vmax.f32 %v1429, %v1562
  %v1598 = vsel %vm1595, %v1564, %v1431
  %v1599 = vsel %vm1595, %v1431, %v1564
  %v1600 = vsel %vm1595, %v1566, %v1433
  %v1601 = vsel %vm1595, %v1433, %v1566
  %vm1602 = vcmp.lt.f32.partialorder %v1590, %v1596
  %v1603 = vmin.f32 %v1596, %v1590
  %v1604 = vmax.f32 %v1596, %v1590
  %v1605 = vsel %vm1602, %v1592, %v1598
  %v1606 = vsel %vm1602, %v1598, %v1592
  %v1607 = vsel %vm1602, %v1594, %v1600
  %v1608 = vsel %vm1602, %v1600, %v1594
  %vm1609 = vcmp.lt.f32.partialorder %v1582, %v1589
  %v1610 = vmin.f32 %v1589, %v1582
  %v1611 = vmax.f32 %v1589, %v1582
  %v1612 = vsel %vm1609, %v1584, %v1591
  %v1613 = vsel %vm1609, %v1591, %v1584
  %v1614 = vsel %vm1609, %v1586, %v1593
  %v1615 = vsel %vm1609, %v1593, %v1586
  %vm1616 = vcmp.lt.f32.partialorder %v1583, %v1603
  %v1617 = vmin.f32 %v1603, %v1583
  %v1618 = vmax.f32 %v1603, %v1583
  %v1619 = vsel %vm1616, %v1585, %v1605
  %v1620 = vsel %vm1616, %v1605, %v1585
  %v1621 = vsel %vm1616, %v1587, %v1607
  %v1622 = vsel %vm1616, %v1607, %v1587
  %vm1623 = vcmp.lt.f32.partialorder %v1576, %v1604
  %v1624 = vmin.f32 %v1604, %v1576
  %v1625 = vmax.f32 %v1604, %v1576
  %v1626 = vsel %vm1623, %v1578, %v1606
  %v1627 = vsel %vm1623, %v1606, %v1578
  %v1628 = vsel %vm1623, %v1580, %v1608
  %v1629 = vsel %vm1623, %v1608, %v1580
  %vm1630 = vcmp.lt.f32.partialorder %v1547, %v1414
  %v1631 = vmin.f32 %v1414, %v1547
  %v1632 = vmax.f32 %v1414, %v1547
  %v1633 = vsel %vm1630, %v1549, %v1416
  %v1634 = vsel %vm1630, %v1416, %v1549
  %v1635 = vsel %vm1630, %v1551, %v1418
  %v1636 = vsel %vm1630, %v1418, %v1551
  %vm1637 = vcmp.lt.f32.partialorder %v1561, %v1428
  %v1638 = vmin.f32 %v1428, %v1561
  %v1639 = vmax.f32 %v1428, %v1561
  %v1640 = vsel %vm1637, %v1563, %v1430
  %v1641 = vsel %vm1637, %v1430, %v1563
  %v1642 = vsel %vm1637, %v1565, %v1432
  %v1643 = vsel %vm1637, %v1432, %v1565
  %vm1644 = vcmp.lt.f32.partialorder %v1632, %v1638
  %v1645 = vmin.f32 %v1638, %v1632
  %v1646 = vmax.f32 %v1638, %v1632
  %v1647 = vsel %vm1644, %v1634, %v1640
  %v1648 = vsel %vm1644, %v1640, %v1634
  %v1649 = vsel %vm1644, %v1636, %v1642
  %v1650 = vsel %vm1644, %v1642, %v1636
  %vm1651 = vcmp.lt.f32.partialorder %v1554, %v1421
  %v1652 = vmin.f32 %v1421, %v1554
  %v1653 = vmax.f32 %v1421, %v1554
  %v1654 = vsel %vm1651, %v1556, %v1423
  %v1655 = vsel %vm1651, %v1423, %v1556
  %v1656 = vsel %vm1651, %v1558, %v1425
  %v1657 = vsel %vm1651, %v1425, %v1558
  %vm1658 = vcmp.lt.f32.partialorder %v1534, %v1401
  %v1659 = vmin.f32 %v1401, %v1534
  %v1660 = vmax.f32 %v1401, %v1534
  %v1661 = vsel %vm1658, %v1536, %v1403
  %v1662 = vsel %vm1658, %v1403, %v1536
  %v1663 = vsel %vm1658, %v1538, %v1405
  %v1664 = vsel %vm1658, %v1405, %v1538
  %vm1665 = vcmp.lt.f32.partialorder %v1653, %v1659
  %v1666 = vmin.f32 %v1659, %v1653
  %v1667 = vmax.f32 %v1659, %v1653
  %v1668 = vsel %vm1665, %v1655, %v1661
  %v1669 = vsel %vm1665, %v1661, %v1655
  %v1670 = vsel %vm1665, %v1657, %v1663
  %v1671 = vsel %vm1665, %v1663, %v1657
  %vm1672 = vcmp.lt.f32.partialorder %v1645, %v1652
  %v1673 = vmin.f32 %v1652, %v1645
  %v1674 = vmax.f32 %v1652, %v1645
  %v1675 = vsel %vm1672, %v1647, %v1654
  %v1676 = vsel %vm1672, %v1654, %v1647
  %v1677 = vsel %vm1672, %v1649, %v1656
  %v1678 = vsel %vm1672, %v1656, %v1649
  %vm1679 = vcmp.lt.f32.partialorder %v1646, %v1666
  %v1680 = vmin.f32 %v1666, %v1646
  %v1681 = vmax.f32 %v1666, %v1646
  %v1682 = vsel %vm1679, %v1648, %v1668
  %v1683 = vsel %vm1679, %v1668, %v1648
  %v1684 = vsel %vm1679, %v1650, %v1670
  %v1685 = vsel %vm1679, %v1670, %v1650
  %vm1686 = vcmp.lt.f32.partialorder %v1639, %v1667
  %v1687 = vmin.f32 %v1667, %v1639
  %v1688 = vmax.f32 %v1667, %v1639
  %v1689 = vsel %vm1686, %v1641, %v1669
  %v1690 = vsel %vm1686, %v1669, %v1641
  %v1691 = vsel %vm1686, %v1643, %v1671
  %v1692 = vsel %vm1686, %v1671, %v1643
  %vm1693 = vcmp.lt.f32.partialorder %v1610, %v1631
  %v1694 = vmin.f32 %v1631, %v1610
  %v1695 = vmax.f32 %v1631, %v1610
  %v1696 = vsel %vm1693, %v1612, %v1633
  %v1697 = vsel %vm1693, %v1633, %v1612
  %v1698 = vsel %vm1693, %v1614, %v1635
  %v1699 = vsel %vm1693, %v1635, %v1614
  %vm1700 = vcmp.lt.f32.partialorder %v1611, %v1673
  %v1701 = vmin.f32 %v1673, %v1611
  %v1702 = vmax.f32 %v1673, %v1611
  %v1703 = vsel %vm1700, %v1613, %v1675
  %v1704 = vsel %vm1700, %v1675, %v1613
  %v1705 = vsel %vm1700, %v1615, %v1677
  %v1706 = vsel %vm1700, %v1677, %v1615
  %vm1707 = vcmp.lt.f32.partialorder %v1617, %v1674
  %v1708 = vmin.f32 %v1674, %v1617
  %v1709 = vmax.f32 %v1674, %v1617
  %v1710 = vsel %vm1707, %v1619, %v1676
  %v1711 = vsel %vm1707, %v1676, %v1619
  %v1712 = vsel %vm1707, %v1621, %v1678
  %v1713 = vsel %vm1707, %v1678, %v1621
  %vm1714 = vcmp.lt.f32.partialorder %v1618, %v1680
  %v1715 = vmin.f32 %v1680, %v1618
  %v1716 = vmax.f32 %v1680, %v1618
  %v1717 = vsel %vm1714, %v1620, %v1682
  %v1718 = vsel %vm1714, %v1682, %v1620
  %v1719 = vsel %vm1714, %v1622, %v1684
  %v1720 = vsel %vm1714, %v1684, %v1622
  %vm1721 = vcmp.lt.f32.partialorder %v1624, %v1681
  %v1722 = vmin.f32 %v1681, %v1624
  %v1723 = vmax.f32 %v1681, %v1624
  %v1724 = vsel %vm1721, %v1626, %v1683
  %v1725 = vsel %vm1721, %v1683, %v1626
  %v1726 = vsel %vm1721, %v1628, %v1685
  %v1727 = vsel %vm1721, %v1685, %v1628
  %vm1728 = vcmp.lt.f32.partialorder %v1625, %v1687
  %v1729 = vmin.f32 %v1687, %v1625
  %v1730 = vmax.f32 %v1687, %v1625
  %v1731 = vsel %vm1728, %v1627, %v1689
  %v1732 = vsel %vm1728, %v1689, %v1627
  %v1733 = vsel %vm1728, %v1629, %v1691
  %v1734 = vsel %vm1728, %v1691, %v1629
  %vm1735 = vcmp.lt.f32.partialorder %v1597, %v1688
  %v1736 = vmin.f32 %v1688, %v1597
  %v1737 = vmax.f32 %v1688, %v1597
  %v1738 = vsel %vm1735, %v1599, %v1690
  %v1739 = vsel %vm1735, %v1690, %v1599
  %v1740 = vsel %vm1735, %v1601, %v1692
  %v1741 = vsel %vm1735, %v1692, %v1601
  %vm1742 = vcmp.lt.f32.partialorder %v1198, %v1181
  %v1743 = vmin.f32 %v1181, %v1198
  %v1744 = vmax.f32 %v1181, %v1198
  %v1745 = vsel %vm1742, %v1183, %v1166
  %v1746 = vsel %vm1742, %v1166, %v1183
  %v1747 = vsel %vm1742, %v1185, %v1168
  %v1748 = vsel %vm1742, %v1168, %v1185
  %vm1749 = vcmp.lt.f32.partialorder %v1232, %v1215
  %v1750 = vmin.f32 %v1215, %v1232
  %v1751 = vmax.f32 %v1215, %v1232
  %v1752 = vsel %vm1749, %v1217, %v1200
  %v1753 = vsel %vm1749, %v1200, %v1217
  %v1754 = vsel %vm1749, %v1219, %v1202
  %v1755 = vsel %vm1749, %v1202, %v1219
  %vm1756 = vcmp.lt.f32.partialorder %v1750, %v1743
  %v1757 = vmin.f32 %v1743, %v1750
  %v1758 = vmax.f32 %v1743, %v1750
  %v1759 = vsel %vm1756, %v1752, %v1745
  %v1760 = vsel %vm1756, %v1745, %v1752
  %v1761 = vsel %vm1756, %v1754, %v1747
  %v1762 = vsel %vm1756, %v1747, %v1754
  %vm1763 = vcmp.lt.f32.partialorder %v1751, %v1744
  %v1764 = vmin.f32 %v1744, %v1751
  %v1765 = vmax.f32 %v1744, %v1751
  %v1766 = vsel %vm1763, %v1753, %v1746
  %v1767 = vsel %vm1763, %v1746, %v1753
  %v1768 = vsel %vm1763, %v1755, %v1748
  %v1769 = vsel %vm1763, %v1748, %v1755
  %vm1770 = vcmp.lt.f32.partialorder %v1758, %v1764
  %v1771 = vmin.f32 %v1764, %v1758
  %v1772 = vmax.f32 %v1764, %v1758
  %v1773 = vsel %vm1770, %v1760, %v1766
  %v1774 = vsel %vm1770, %v1766, %v1760
  %v1775 = vsel %vm1770, %v1762, %v1768
  %v1776 = vsel %vm1770, %v1768, %v1762
  %vm1777 = vcmp.lt.f32.partialorder %v1266, %v1249
  %v1778 = vmin.f32 %v1249, %v1266
  %v1779 = vmax.f32 %v1249, %v1266
  %v1780 = vsel %vm1777, %v1251, %v1234
  %v1781 = vsel %vm1777, %v1234, %v1251
  %v1782 = vsel %vm1777, %v1253, %v1236
  %v1783 = vsel %vm1777, %v1236, %v1253
  %vm1784 = vcmp.lt.f32.partialorder %v1300, %v1283
  %v1785 = vmin.f32 %v1283, %v1300
  %v1786 = vmax.f32 %v1283, %v1300
  %v1787 = vsel %vm1784, %v1285, %v1268
  %v1788 = vsel %vm1784, %v1268, %v1285
  %v1789 = vsel %vm1784, %v1287, %v1270
  %v1790 = vsel %vm1784, %v1270, %v1287
  %vm1791 = vcmp.lt.f32.partialorder %v1785, %v1778
  %v1792 = vmin.f32 %v1778, %v1785
  %v1793 = vmax.f32 %v1778, %v1785
  %v1794 = vsel %vm1791, %v1787, %v1780
  %v1795 = vsel %vm1791, %v1780, %v1787
  %v1796 = vsel %vm1791, %v1789, %v1782
  %v1797 = vsel %vm1791, %v1782, %v1789
  %vm1798 = vcmp.lt.f32.partialorder %v1786, %v1779
  %v1799 = vmin.f32 %v1779, %v1786
  %v1800 = vmax.f32 %v1779, %v1786
  %v1801 = vsel %vm1798, %v1788, %v1781
  %v1802 = vsel %vm1798, %v1781, %v1788
  %v1803 = vsel %vm1798, %v1790, %v1783
  %v1804 = vsel %vm1798, %v1783, %v1790
  %vm1805 = vcmp.lt.f32.partialorder %v1793, %v1799
  %v1806 = vmin.f32 %v1799, %v1793
  %v1807 = vmax.f32 %v1799, %v1793
  %v1808 = vsel %vm1805, %v1795, %v1801
  %v1809 = vsel %vm1805, %v1801, %v1795
  %v1810 = vsel %vm1805, %v1797, %v1803
  %v1811 = vsel %vm1805, %v1803, %v1797
  %vm1812 = vcmp.lt.f32.partialorder %v1792, %v1757
  %v1813 = vmin.f32 %v1757, %v1792
  %v1814 = vmax.f32 %v1757, %v1792
  %v1815 = vsel %vm1812, %v1794, %v1759
  %v1816 = vsel %vm1812, %v1759, %v1794
  %v1817 = vsel %vm1812, %v1796, %v1761
  %v1818 = vsel %vm1812, %v1761, %v1796
  %vm1819 = vcmp.lt.f32.partialorder %v1807, %v1772
  %v1820 = vmin.f32 %v1772, %v1807
  %v1821 = vmax.f32 %v1772, %v1807
  %v1822 = vsel %vm1819, %v1809, %v1774
  %v1823 = vsel %vm1819, %v1774, %v1809
  %v1824 = vsel %vm1819, %v1811, %v1776
  %v1825 = vsel %vm1819, %v1776, %v1811
  %vm1826 = vcmp.lt.f32.partialorder %v1814, %v1820
  %v1827 = vmin.f32 %v1820, %v1814
  %v1828 = vmax.f32 %v1820, %v1814
  %v1829 = vsel %vm1826, %v1816, %v1822
  %v1830 = vsel %vm1826, %v1822, %v1816
  %v1831 = vsel %vm1826, %v1818, %v1824
  %v1832 = vsel %vm1826, %v1824, %v1818
  %vm1833 = vcmp.lt.f32.partialorder %v1806, %v1771
  %v1834 = vmin.f32 %v1771, %v1806
  %v1835 = vmax.f32 %v1771, %v1806
  %v1836 = vsel %vm1833, %v1808, %v1773
  %v1837 = vsel %vm1833, %v1773, %v1808
  %v1838 = vsel %vm1833, %v1810, %v1775
  %v1839 = vsel %vm1833, %v1775, %v1810
  %vm1840 = vcmp.lt.f32.partialorder %v1800, %v1765
  %v1841 = vmin.f32 %v1765, %v1800
  %v1842 = vmax.f32 %v1765, %v1800
  %v1843 = vsel %vm1840, %v1802, %v1767
  %v1844 = vsel %vm1840, %v1767, %v1802
  %v1845 = vsel %vm1840, %v1804, %v1769
  %v1846 = vsel %vm1840, %v1769, %v1804
  %vm1847 = vcmp.lt.f32.partialorder %v1835, %v1841
  %v1848 = vmin.f32 %v1841, %v1835
  %v1849 = vmax.f32 %v1841, %v1835
  %v1850 = vsel %vm1847, %v1837, %v1843
  %v1851 = vsel %vm1847, %v1843, %v1837
  %v1852 = vsel %vm1847, %v1839, %v1845
  %v1853 = vsel %vm1847, %v1845, %v1839
  %vm1854 = vcmp.lt.f32.partialorder %v1827, %v1834
  %v1855 = vmin.f32 %v1834, %v1827
  %v1856 = vmax.f32 %v1834, %v1827
  %v1857 = vsel %vm1854, %v1829, %v1836
  %v1858 = vsel %vm1854, %v1836, %v1829
  %v1859 = vsel %vm1854, %v1831, %v1838
  %v1860 = vsel %vm1854, %v1838, %v1831
  %vm1861 = vcmp.lt.f32.partialorder %v1828, %v1848
  %v1862 = vmin.f32 %v1848, %v1828
  %v1863 = vmax.f32 %v1848, %v1828
  %v1864 = vsel %vm1861, %v1830, %v1850
  %v1865 = vsel %vm1861, %v1850, %v1830
  %v1866 = vsel %vm1861, %v1832, %v1852
  %v1867 = vsel %vm1861, %v1852, %v1832
  %vm1868 = vcmp.lt.f32.partialorder %v1821, %v1849
  %v1869 = vmin.f32 %v1849, %v1821
  %v1870 = vmax.f32 %v1849, %v1821
  %v1871 = vsel %vm1868, %v1823, %v1851
  %v1872 = vsel %vm1868, %v1851, %v1823
  %v1873 = vsel %vm1868, %v1825, %v1853
  %v1874 = vsel %vm1868, %v1853, %v1825
  %vm1875 = vcmp.lt.f32.partialorder %v1863, %v1856
  %v1876 = vmin.f32 %v1856, %v1863
  %v1877 = vmax.f32 %v1856, %v1863
  %v1878 = vsel %vm1875, %v1865, %v1858
  %v1879 = vsel %vm1875, %v1858, %v1865
  %v1880 = vsel %vm1875, %v1867, %v1860
  %v1881 = vsel %vm1875, %v1860, %v1867
  %vm1882 = vcmp.lt.f32.partialorder %v1869, %v1862
  %v1883 = vmin.f32 %v1862, %v1869
  %v1884 = vmax.f32 %v1862, %v1869
  %v1885 = vsel %vm1882, %v1871, %v1864
  %v1886 = vsel %vm1882, %v1864, %v1871
  %v1887 = vsel %vm1882, %v1873, %v1866
  %v1888 = vsel %vm1882, %v1866, %v1873
  %vm1889 = vcmp.lt.f32.partialorder %v1876, %v1855
  %v1890 = vmin.f32 %v1855, %v1876
  %v1891 = vmax.f32 %v1855, %v1876
  %v1892 = vsel %vm1889, %v1878, %v1857
  %v1893 = vsel %vm1889, %v1857, %v1878
  %v1894 = vsel %vm1889, %v1880, %v1859
  %v1895 = vsel %vm1889, %v1859, %v1880
  %vm1896 = vcmp.lt.f32.partialorder %v1877, %v1883
  %v1897 = vmin.f32 %v1883, %v1877
  %v1898 = vmax.f32 %v1883, %v1877
  %v1899 = vsel %vm1896, %v1879, %v1885
  %v1900 = vsel %vm1896, %v1885, %v1879
  %v1901 = vsel %vm1896, %v1881, %v1887
  %v1902 = vsel %vm1896, %v1887, %v1881
  %vm1903 = vcmp.lt.f32.partialorder %v1870, %v1884
  %v1904 = vmin.f32 %v1884, %v1870
  %v1905 = vmax.f32 %v1884, %v1870
  %v1906 = vsel %vm1903, %v1872, %v1886
  %v1907 = vsel %vm1903, %v1886, %v1872
  %v1908 = vsel %vm1903, %v1874, %v1888
  %v1909 = vsel %vm1903, %v1888, %v1874
  %vm1910 = vcmp.lt.f32.partialorder %v1813, %v1568
  %v1911 = vmax.f32 %v1568, %v1813
  %v1912 = vsel %vm1910, %v1815, %v1570
  %v1913 = vsel %vm1910, %v1570, %v1815
  %v1914 = vsel %vm1910, %v1817, %v1572
  %v1915 = vsel %vm1910, %v1572, %v1817
  %vm1916 = vcmp.lt.f32.partialorder %v1911, %v1716
  %v1917 = vmin.f32 %v1716, %v1911
  %v1918 = vmax.f32 %v1716, %v1911
  %v1919 = vsel %vm1916, %v1913, %v1718
  %v1920 = vsel %vm1916, %v1718, %v1913
  %v1921 = vsel %vm1916, %v1915, %v1720
  %v1922 = vsel %vm1916, %v1720, %v1915
  %vm1923 = vcmp.lt.f32.partialorder %v1898, %v1702
  %v1924 = vmin.f32 %v1702, %v1898
  %v1925 = vmax.f32 %v1702, %v1898
  %v1926 = vsel %vm1923, %v1900, %v1704
  %v1927 = vsel %vm1923, %v1704, %v1900
  %v1928 = vsel %vm1923, %v1902, %v1706
  %v1929 = vsel %vm1923, %v1706, %v1902
  %vm1930 = vcmp.lt.f32.partialorder %v1925, %v1730
  %v1931 = vmin.f32 %v1730, %v1925
  %v1932 = vmax.f32 %v1730, %v1925
  %v1933 = vsel %vm1930, %v1927, %v1732
  %v1934 = vsel %vm1930, %v1732, %v1927
  %v1935 = vsel %vm1930, %v1929, %v1734
  %v1936 = vsel %vm1930, %v1734, %v1929
  %vm1937 = vcmp.lt.f32.partialorder %v1917, %v1924
  %v1938 = vmin.f32 %v1924, %v1917
  %v1939 = vmax.f32 %v1924, %v1917
  %v1940 = vsel %vm1937, %v1919, %v1926
  %v1941 = vsel %vm1937, %v1926, %v1919
  %v1942 = vsel %vm1937, %v1921, %v1928
  %v1943 = vsel %vm1937, %v1928, %v1921
  %vm1944 = vcmp.lt.f32.partialorder %v1918, %v1931
  %v1945 = vmin.f32 %v1931, %v1918
  %v1946 = vmax.f32 %v1931, %v1918
  %v1947 = vsel %vm1944, %v1920, %v1933
  %v1948 = vsel %vm1944, %v1933, %v1920
  %v1949 = vsel %vm1944, %v1922, %v1935
  %v1950 = vsel %vm1944, %v1935, %v1922
  %vm1951 = vcmp.lt.f32.partialorder %v1891, %v1695
  %v1952 = vmin.f32 %v1695, %v1891
  %v1953 = vmax.f32 %v1695, %v1891
  %v1954 = vsel %vm1951, %v1893, %v1697
  %v1955 = vsel %vm1951, %v1697, %v1893
  %v1956 = vsel %vm1951, %v1895, %v1699
  %v1957 = vsel %vm1951, %v1699, %v1895
  %vm1958 = vcmp.lt.f32.partialorder %v1953, %v1723
  %v1959 = vmin.f32 %v1723, %v1953
  %v1960 = vmax.f32 %v1723, %v1953
  %v1961 = vsel %vm1958, %v1955, %v1725
  %v1962 = vsel %vm1958, %v1725, %v1955
  %v1963 = vsel %vm1958, %v1957, %v1727
  %v1964 = vsel %vm1958, %v1727, %v1957
  %vm1965 = vcmp.lt.f32.partialorder %v1905, %v1709
  %v1966 = vmin.f32 %v1709, %v1905
  %v1967 = vmax.f32 %v1709, %v1905
  %v1968 = vsel %vm1965, %v1907, %v1711
  %v1969 = vsel %vm1965, %v1711, %v1907
  %v1970 = vsel %vm1965, %v1909, %v1713
  %v1971 = vsel %vm1965, %v1713, %v1909
  %vm1972 = vcmp.lt.f32.partialorder %v1967, %v1737
  %v1973 = vmin.f32 %v1737, %v1967
  %v1974 = vmax.f32 %v1737, %v1967
  %v1975 = vsel %vm1972, %v1969, %v1739
  %v1976 = vsel %vm1972, %v1739, %v1969
  %v1977 = vsel %vm1972, %v1971, %v1741
  %v1978 = vsel %vm1972, %v1741, %v1971
  %vm1979 = vcmp.lt.f32.partialorder %v1959, %v1966
  %v1980 = vmin.f32 %v1966, %v1959
  %v1981 = vmax.f32 %v1966, %v1959
  %v1982 = vsel %vm1979, %v1961, %v1968
  %v1983 = vsel %vm1979, %v1968, %v1961
  %v1984 = vsel %vm1979, %v1963, %v1970
  %v1985 = vsel %vm1979, %v1970, %v1963
  %vm1986 = vcmp.lt.f32.partialorder %v1960, %v1973
  %v1987 = vmin.f32 %v1973, %v1960
  %v1988 = vmax.f32 %v1973, %v1960
  %v1989 = vsel %vm1986, %v1962, %v1975
  %v1990 = vsel %vm1986, %v1975, %v1962
  %v1991 = vsel %vm1986, %v1964, %v1977
  %v1992 = vsel %vm1986, %v1977, %v1964
  %vm1993 = vcmp.lt.f32.partialorder %v1938, %v1952
  %v1994 = vmin.f32 %v1952, %v1938
  %v1995 = vmax.f32 %v1952, %v1938
  %v1996 = vsel %vm1993, %v1940, %v1954
  %v1997 = vsel %vm1993, %v1954, %v1940
  %v1998 = vsel %vm1993, %v1942, %v1956
  %v1999 = vsel %vm1993, %v1956, %v1942
  %vm2000 = vcmp.lt.f32.partialorder %v1939, %v1980
  %v2001 = vmin.f32 %v1980, %v1939
  %v2002 = vmax.f32 %v1980, %v1939
  %v2003 = vsel %vm2000, %v1941, %v1982
  %v2004 = vsel %vm2000, %v1982, %v1941
  %v2005 = vsel %vm2000, %v1943, %v1984
  %v2006 = vsel %vm2000, %v1984, %v1943
  %vm2007 = vcmp.lt.f32.partialorder %v1945, %v1981
  %v2008 = vmin.f32 %v1981, %v1945
  %v2009 = vmax.f32 %v1981, %v1945
  %v2010 = vsel %vm2007, %v1947, %v1983
  %v2011 = vsel %vm2007, %v1983, %v1947
  %v2012 = vsel %vm2007, %v1949, %v1985
  %v2013 = vsel %vm2007, %v1985, %v1949
  %vm2014 = vcmp.lt.f32.partialorder %v1946, %v1987
  %v2015 = vmin.f32 %v1987, %v1946
  %v2016 = vmax.f32 %v1987, %v1946
  %v2017 = vsel %vm2014, %v1948, %v1989
  %v2018 = vsel %vm2014, %v1989, %v1948
  %v2019 = vsel %vm2014, %v1950, %v1991
  %v2020 = vsel %vm2014, %v1991, %v1950
  %vm2021 = vcmp.lt.f32.partialorder %v1932, %v1988
  %v2022 = vmin.f32 %v1988, %v1932
  %v2023 = vmax.f32 %v1988, %v1932
  %v2024 = vsel %vm2021, %v1934, %v1990
  %v2025 = vsel %vm2021, %v1990, %v1934
  %v2026 = vsel %vm2021, %v1936, %v1992
  %v2027 = vsel %vm2021, %v1992, %v1936
  %vm2028 = vcmp.lt.f32.partialorder %v1890, %v1694
  %v2029 = vmin.f32 %v1694, %v1890
  %v2030 = vmax.f32 %v1694, %v1890
  %v2031 = vsel %vm2028, %v1892, %v1696
  %v2032 = vsel %vm2028, %v1696, %v1892
  %v2033 = vsel %vm2028, %v1894, %v1698
  %v2034 = vsel %vm2028, %v1698, %v1894
  %vm2035 = vcmp.lt.f32.partialorder %v2030, %v1722
  %v2036 = vmin.f32 %v1722, %v2030
  %v2037 = vmax.f32 %v1722, %v2030
  %v2038 = vsel %vm2035, %v2032, %v1724
  %v2039 = vsel %vm2035, %v1724, %v2032
  %v2040 = vsel %vm2035, %v2034, %v1726
  %v2041 = vsel %vm2035, %v1726, %v2034
  %vm2042 = vcmp.lt.f32.partialorder %v1904, %v1708
  %v2043 = vmin.f32 %v1708, %v1904
  %v2044 = vmax.f32 %v1708, %v1904
  %v2045 = vsel %vm2042, %v1906, %v1710
  %v2046 = vsel %vm2042, %v1710, %v1906
  %v2047 = vsel %vm2042, %v1908, %v1712
  %v2048 = vsel %vm2042, %v1712, %v1908
  %vm2049 = vcmp.lt.f32.partialorder %v2044, %v1736
  %v2050 = vmin.f32 %v1736, %v2044
  %v2051 = vmax.f32 %v1736, %v2044
  %v2052 = vsel %vm2049, %v2046, %v1738
  %v2053 = vsel %vm2049, %v1738, %v2046
  %v2054 = vsel %vm2049, %v2048, %v1740
  %v2055 = vsel %vm2049, %v1740, %v2048
  %vm2056 = vcmp.lt.f32.partialorder %v2036, %v2043
  %v2057 = vmin.f32 %v2043, %v2036
  %v2058 = vmax.f32 %v2043, %v2036
  %v2059 = vsel %vm2056, %v2038, %v2045
  %v2060 = vsel %vm2056, %v2045, %v2038
  %v2061 = vsel %vm2056, %v2040, %v2047
  %v2062 = vsel %vm2056, %v2047, %v2040
  %vm2063 = vcmp.lt.f32.partialorder %v2037, %v2050
  %v2064 = vmin.f32 %v2050, %v2037
  %v2065 = vmax.f32 %v2050, %v2037
  %v2066 = vsel %vm2063, %v2039, %v2052
  %v2067 = vsel %vm2063, %v2052, %v2039
  %v2068 = vsel %vm2063, %v2041, %v2054
  %v2069 = vsel %vm2063, %v2054, %v2041
  %vm2070 = vcmp.lt.f32.partialorder %v1897, %v1701
  %v2071 = vmin.f32 %v1701, %v1897
  %v2072 = vmax.f32 %v1701, %v1897
  %v2073 = vsel %vm2070, %v1899, %v1703
  %v2074 = vsel %vm2070, %v1703, %v1899
  %v2075 = vsel %vm2070, %v1901, %v1705
  %v2076 = vsel %vm2070, %v1705, %v1901
  %vm2077 = vcmp.lt.f32.partialorder %v2072, %v1729
  %v2078 = vmin.f32 %v1729, %v2072
  %v2079 = vmax.f32 %v1729, %v2072
  %v2080 = vsel %vm2077, %v2074, %v1731
  %v2081 = vsel %vm2077, %v1731, %v2074
  %v2082 = vsel %vm2077, %v2076, %v1733
  %v2083 = vsel %vm2077, %v1733, %v2076
  %vm2084 = vcmp.lt.f32.partialorder %v1842, %v1715
  %v2085 = vmin.f32 %v1715, %v1842
  %v2086 = vmax.f32 %v1715, %v1842
  %v2087 = vsel %vm2084, %v1844, %v1717
  %v2088 = vsel %vm2084, %v1717, %v1844
  %v2089 = vsel %vm2084, %v1846, %v1719
  %v2090 = vsel %vm2084, %v1719, %v1846
  %vm2091 = vcmp.lt.f32.partialorder %v2086, %v1660
  %v2092 = vmin.f32 %v1660, %v2086
  %v2093 = vmax.f32 %v1660, %v2086
  %v2094 = vsel %vm2091, %v2088, %v1662
  %v2095 = vsel %vm2091, %v1662, %v2088
  %v2096 = vsel %vm2091, %v2090, %v1664
  %v2097 = vsel %vm2091, %v1664, %v2090
  %vm2098 = vcmp.lt.f32.partialorder %v2078, %v2085
  %v2099 = vmin.f32 %v2085, %v2078
  %v2100 = vmax.f32 %v2085, %v2078
  %v2101 = vsel %vm2098, %v2080, %v2087
  %v2102 = vsel %vm2098, %v2087, %v2080
  %v2103 = vsel %vm2098, %v2082, %v2089
  %v2104 = vsel %vm2098, %v2089, %v2082
  %vm2105 = vcmp.lt.f32.partialorder %v2079, %v2092
  %v2106 = vmin.f32 %v2092, %v2079
  %v2107 = vmax.f32 %v2092, %v2079
  %v2108 = vsel %vm2105, %v2081, %v2094
  %v2109 = vsel %vm2105, %v2094, %v2081
  %v2110 = vsel %vm2105, %v2083, %v2096
  %v2111 = vsel %vm2105, %v2096, %v2083
  %vm2112 = vcmp.lt.f32.partialorder %v2057, %v2071
  %v2113 = vmin.f32 %v2071, %v2057
  %v2114 = vmax.f32 %v2071, %v2057
  %v2115 = vsel %vm2112, %v2059, %v2073
  %v2116 = vsel %vm2112, %v2073, %v2059
  %v2117 = vsel %vm2112, %v2061, %v2075
  %v2118 = vsel %vm2112, %v2075, %v2061
  %vm2119 = vcmp.lt.f32.partialorder %v2058, %v2099
  %v2120 = vmin.f32 %v2099, %v2058
  %v2121 = vmax.f32 %v2099, %v2058
  %v2122 = vsel %vm2119, %v2060, %v2101
  %v2123 = vsel %vm2119, %v2101, %v2060
  %v2124 = vsel %vm2119, %v2062, %v2103
  %v2125 = vsel %vm2119, %v2103, %v2062
  %vm2126 = vcmp.lt.f32.partialorder %v2064, %v2100
  %v2127 = vmin.f32 %v2100, %v2064
  %v2128 = vmax.f32 %v2100, %v2064
  %v2129 = vsel %vm2126, %v2066, %v2102
  %v2130 = vsel %vm2126, %v2102, %v2066
  %v2131 = vsel %vm2126, %v2068, %v2104
  %v2132 = vsel %vm2126, %v2104, %v2068
  %vm2133 = vcmp.lt.f32.partialorder %v2065, %v2106
  %v2134 = vmin.f32 %v2106, %v2065
  %v2135 = vmax.f32 %v2106, %v2065
  %v2136 = vsel %vm2133, %v2067, %v2108
  %v2137 = vsel %vm2133, %v2108, %v2067
  %v2138 = vsel %vm2133, %v2069, %v2110
  %v2139 = vsel %vm2133, %v2110, %v2069
  %vm2140 = vcmp.lt.f32.partialorder %v2051, %v2107
  %v2141 = vmin.f32 %v2107, %v2051
  %v2142 = vmax.f32 %v2107, %v2051
  %v2143 = vsel %vm2140, %v2053, %v2109
  %v2144 = vsel %vm2140, %v2109, %v2053
  %v2145 = vsel %vm2140, %v2055, %v2111
  %v2146 = vsel %vm2140, %v2111, %v2055
  %vm2147 = vcmp.lt.f32.partialorder %v1994, %v2029
  %v2148 = vmin.f32 %v2029, %v1994
  %v2149 = vmax.f32 %v2029, %v1994
  %v2150 = vsel %vm2147, %v1996, %v2031
  %v2151 = vsel %vm2147, %v2031, %v1996
  %v2152 = vsel %vm2147, %v1998, %v2033
  %v2153 = vsel %vm2147, %v2033, %v1998
  %vm2154 = vcmp.lt.f32.partialorder %v1995, %v2113
  %v2155 = vmin.f32 %v2113, %v1995
  %v2156 = vmax.f32 %v2113, %v1995
  %v2157 = vsel %vm2154, %v1997, %v2115
  %v2158 = vsel %vm2154, %v2115, %v1997
  %v2159 = vsel %vm2154, %v1999, %v2117
  %v2160 = vsel %vm2154, %v2117, %v1999
  %vm2161 = vcmp.lt.f32.partialorder %v2001, %v2114
  %v2162 = vmin.f32 %v2114, %v2001
  %v2163 = vmax.f32 %v2114, %v2001
  %v2164 = vsel %vm2161, %v2003, %v2116
  %v2165 = vsel %vm2161, %v2116, %v2003
  %v2166 = vsel %vm2161, %v2005, %v2118
  %v2167 = vsel %vm2161, %v2118, %v2005
  %vm2168 = vcmp.lt.f32.partialorder %v2002, %v2120
  %v2169 = vmin.f32 %v2120, %v2002
  %v2170 = vmax.f32 %v2120, %v2002
  %v2171 = vsel %vm2168, %v2004, %v2122
  %v2172 = vsel %vm2168, %v2122, %v2004
  %v2173 = vsel %vm2168, %v2006, %v2124
  %v2174 = vsel %vm2168, %v2124, %v2006
  %vm2175 = vcmp.lt.f32.partialorder %v2008, %v2121
  %v2176 = vmin.f32 %v2121, %v2008
  %v2177 = vmax.f32 %v2121, %v2008
  %v2178 = vsel %vm2175, %v2010, %v2123
  %v2179 = vsel %vm2175, %v2123, %v2010
  %v2180 = vsel %vm2175, %v2012, %v2125
  %v2181 = vsel %vm2175, %v2125, %v2012
  %vm2182 = vcmp.lt.f32.partialorder %v2009, %v2127
  %v2183 = vmin.f32 %v2127, %v2009
  %v2184 = vmax.f32 %v2127, %v2009
  %v2185 = vsel %vm2182, %v2011, %v2129
  %v2186 = vsel %vm2182, %v2129, %v2011
  %v2187 = vsel %vm2182, %v2013, %v2131
  %v2188 = vsel %vm2182, %v2131, %v2013
  %vm2189 = vcmp.lt.f32.partialorder %v2015, %v2128
  %v2190 = vmin.f32 %v2128, %v2015
  %v2191 = vmax.f32 %v2128, %v2015
  %v2192 = vsel %vm2189, %v2017, %v2130
  %v2193 = vsel %vm2189, %v2130, %v2017
  %v2194 = vsel %vm2189, %v2019, %v2132
  %v2195 = vsel %vm2189, %v2132, %v2019
  %vm2196 = vcmp.lt.f32.partialorder %v2016, %v2134
  %v2197 = vmin.f32 %v2134, %v2016
  %v2198 = vmax.f32 %v2134, %v2016
  %v2199 = vsel %vm2196, %v2018, %v2136
  %v2200 = vsel %vm2196, %v2136, %v2018
  %v2201 = vsel %vm2196, %v2020, %v2138
  %v2202 = vsel %vm2196, %v2138, %v2020
  %vm2203 = vcmp.lt.f32.partialorder %v2022, %v2135
  %v2204 = vmin.f32 %v2135, %v2022
  %v2205 = vmax.f32 %v2135, %v2022
  %v2206 = vsel %vm2203, %v2024, %v2137
  %v2207 = vsel %vm2203, %v2137, %v2024
  %v2208 = vsel %vm2203, %v2026, %v2139
  %v2209 = vsel %vm2203, %v2139, %v2026
  %vm2210 = vcmp.lt.f32.partialorder %v2023, %v2141
  %v2211 = vmin.f32 %v2141, %v2023
  %v2212 = vmax.f32 %v2141, %v2023
  %v2213 = vsel %vm2210, %v2025, %v2143
  %v2214 = vsel %vm2210, %v2143, %v2025
  %v2215 = vsel %vm2210, %v2027, %v2145
  %v2216 = vsel %vm2210, %v2145, %v2027
  %vm2217 = vcmp.lt.f32.partialorder %v1974, %v2142
  %v2218 = vmin.f32 %v2142, %v1974
  %v2219 = vmax.f32 %v2142, %v1974
  %v2220 = vsel %vm2217, %v1976, %v2144
  %v2221 = vsel %vm2217, %v2144, %v1976
  %v2222 = vsel %vm2217, %v1978, %v2146
  %v2223 = vsel %vm2217, %v2146, %v1978
  %v2224 = vmul.f32 %v1912, %v2152
  %v2225 = vmul.f32 %v2150, %v1914
  %v2226 = vsub.f32 %v2224, %v2225
  %v2227 = vmul.f32 %v2150, %v2153
  %v2228 = vmul.f32 %v2151, %v2152
  %v2229 = vsub.f32 %v2227, %v2228
  %v2230 = vadd.f32 %v2226, %v2229
  %v2231 = vmul.f32 %v2151, %v2159
  %v2232 = vmul.f32 %v2157, %v2153
  %v2233 = vsub.f32 %v2231, %v2232
  %v2234 = vadd.f32 %v2230, %v2233
  %v2235 = vmul.f32 %v2157, %v2160
  %v2236 = vmul.f32 %v2158, %v2159
  %v2237 = vsub.f32 %v2235, %v2236
  %v2238 = vadd.f32 %v2234, %v2237
  %v2239 = vmul.f32 %v2158, %v2166
  %v2240 = vmul.f32 %v2164, %v2160
  %v2241 = vsub.f32 %v2239, %v2240
  %v2242 = vadd.f32 %v2238, %v2241
  %v2243 = vmul.f32 %v2164, %v2167
  %v2244 = vmul.f32 %v2165, %v2166
  %v2245 = vsub.f32 %v2243, %v2244
  %v2246 = vadd.f32 %v2242, %v2245
  %v2247 = vmul.f32 %v2165, %v2173
  %v2248 = vmul.f32 %v2171, %v2167
  %v2249 = vsub.f32 %v2247, %v2248
  %v2250 = vadd.f32 %v2246, %v2249
  %v2251 = vmul.f32 %v2171, %v2174
  %v2252 = vmul.f32 %v2172, %v2173
  %v2253 = vsub.f32 %v2251, %v2252
  %v2254 = vadd.f32 %v2250, %v2253
  %v2255 = vmul.f32 %v2172, %v2180
  %v2256 = vmul.f32 %v2178, %v2174
  %v2257 = vsub.f32 %v2255, %v2256
  %v2258 = vadd.f32 %v2254, %v2257
  %v2259 = vmul.f32 %v2178, %v2181
  %v2260 = vmul.f32 %v2179, %v2180
  %v2261 = vsub.f32 %v2259, %v2260
  %v2262 = vadd.f32 %v2258, %v2261
  %v2263 = vmul.f32 %v2179, %v2187
  %v2264 = vmul.f32 %v2185, %v2181
  %v2265 = vsub.f32 %v2263, %v2264
  %v2266 = vadd.f32 %v2262, %v2265
  %v2267 = vmul.f32 %v2185, %v2188
  %v2268 = vmul.f32 %v2186, %v2187
  %v2269 = vsub.f32 %v2267, %v2268
  %v2270 = vadd.f32 %v2266, %v2269
  %v2271 = vmul.f32 %v2186, %v2194
  %v2272 = vmul.f32 %v2192, %v2188
  %v2273 = vsub.f32 %v2271, %v2272
  %v2274 = vadd.f32 %v2270, %v2273
  %v2275 = vmul.f32 %v2192, %v2195
  %v2276 = vmul.f32 %v2193, %v2194
  %v2277 = vsub.f32 %v2275, %v2276
  %v2278 = vadd.f32 %v2274, %v2277
  %v2279 = vmul.f32 %v2193, %v2201
  %v2280 = vmul.f32 %v2199, %v2195
  %v2281 = vsub.f32 %v2279, %v2280
  %v2282 = vadd.f32 %v2278, %v2281
  %v2283 = vmul.f32 %v2199, %v2202
  %v2284 = vmul.f32 %v2200, %v2201
  %v2285 = vsub.f32 %v2283, %v2284
  %v2286 = vadd.f32 %v2282, %v2285
  %v2287 = vmul.f32 %v2200, %v2208
  %v2288 = vmul.f32 %v2206, %v2202
  %v2289 = vsub.f32 %v2287, %v2288
  %v2290 = vadd.f32 %v2286, %v2289
  %v2291 = vmul.f32 %v2206, %v2209
  %v2292 = vmul.f32 %v2207, %v2208
  %v2293 = vsub.f32 %v2291, %v2292
  %v2294 = vadd.f32 %v2290, %v2293
  %v2295 = vmul.f32 %v2207, %v2215
  %v2296 = vmul.f32 %v2213, %v2209
  %v2297 = vsub.f32 %v2295, %v2296
  %v2298 = vadd.f32 %v2294, %v2297
  %v2299 = vmul.f32 %v2213, %v2216
  %v2300 = vmul.f32 %v2214, %v2215
  %v2301 = vsub.f32 %v2299, %v2300
  %v2302 = vadd.f32 %v2298, %v2301
  %v2303 = vmul.f32 %v2214, %v2222
  %v2304 = vmul.f32 %v2220, %v2216
  %v2305 = vsub.f32 %v2303, %v2304
  %v2306 = vadd.f32 %v2302, %v2305
  %v2307 = vmul.f32 %v2220, %v2223
  %v2308 = vmul.f32 %v2221, %v2222
  %v2309 = vsub.f32 %v2307, %v2308
  %v2310 = vadd.f32 %v2306, %v2309
  %v2311 = vmul.f32 %v2221, %v2097
  %v2312 = vmul.f32 %v2095, %v2223
  %v2313 = vsub.f32 %v2311, %v2312
  %v2314 = vadd.f32 %v2310, %v2313
  %vm2315 = vcmp.lt.f32.partialorder %v2148, 9.5
  %v2316 = vsel %vm2315, %v2150, %v1912
  %v2317 = vsel %vm2315, %v2152, %v1914
  %vm2318 = vcmp.lt.f32.partialorder %v2149, 9.5
  %v2319 = vsel %vm2318, %v2151, %v2316
  %v2320 = vsel %vm2318, %v2153, %v2317
  %vm2321 = vcmp.lt.f32.partialorder %v2155, 9.5
  %v2322 = vsel %vm2321, %v2157, %v2319
  %v2323 = vsel %vm2321, %v2159, %v2320
  %vm2324 = vcmp.lt.f32.partialorder %v2156, 9.5
  %v2325 = vsel %vm2324, %v2158, %v2322
  %v2326 = vsel %vm2324, %v2160, %v2323
  %vm2327 = vcmp.lt.f32.partialorder %v2162, 9.5
  %v2328 = vsel %vm2327, %v2164, %v2325
  %v2329 = vsel %vm2327, %v2166, %v2326
  %vm2330 = vcmp.lt.f32.partialorder %v2163, 9.5
  %v2331 = vsel %vm2330, %v2165, %v2328
  %v2332 = vsel %vm2330, %v2167, %v2329
  %vm2333 = vcmp.lt.f32.partialorder %v2169, 9.5
  %v2334 = vsel %vm2333, %v2171, %v2331
  %v2335 = vsel %vm2333, %v2173, %v2332
  %vm2336 = vcmp.lt.f32.partialorder %v2170, 9.5
  %v2337 = vsel %vm2336, %v2172, %v2334
  %v2338 = vsel %vm2336, %v2174, %v2335
  %vm2339 = vcmp.lt.f32.partialorder %v2176, 9.5
  %v2340 = vsel %vm2339, %v2178, %v2337
  %v2341 = vsel %vm2339, %v2180, %v2338
  %vm2342 = vcmp.lt.f32.partialorder %v2177, 9.5
  %v2343 = vsel %vm2342, %v2179, %v2340
  %v2344 = vsel %vm2342, %v2181, %v2341
  %vm2345 = vcmp.lt.f32.partialorder %v2183, 9.5
  %v2346 = vsel %vm2345, %v2185, %v2343
  %v2347 = vsel %vm2345, %v2187, %v2344
  %vm2348 = vcmp.lt.f32.partialorder %v2184, 9.5
  %v2349 = vsel %vm2348, %v2186, %v2346
  %v2350 = vsel %vm2348, %v2188, %v2347
  %vm2351 = vcmp.lt.f32.partialorder %v2190, 9.5
  %v2352 = vsel %vm2351, %v2192, %v2349
  %v2353 = vsel %vm2351, %v2194, %v2350
  %vm2354 = vcmp.lt.f32.partialorder %v2191, 9.5
  %v2355 = vsel %vm2354, %v2193, %v2352
  %v2356 = vsel %vm2354, %v2195, %v2353
  %vm2357 = vcmp.lt.f32.partialorder %v2197, 9.5
  %v2358 = vsel %vm2357, %v2199, %v2355
  %v2359 = vsel %vm2357, %v2201, %v2356
  %vm2360 = vcmp.lt.f32.partialorder %v2198, 9.5
  %v2361 = vsel %vm2360, %v2200, %v2358
  %v2362 = vsel %vm2360, %v2202, %v2359
  %vm2363 = vcmp.lt.f32.partialorder %v2204, 9.5
  %v2364 = vsel %vm2363, %v2206, %v2361
  %v2365 = vsel %vm2363, %v2208, %v2362
  %vm2366 = vcmp.lt.f32.partialorder %v2205, 9.5
  %v2367 = vsel %vm2366, %v2207, %v2364
  %v2368 = vsel %vm2366, %v2209, %v2365
  %vm2369 = vcmp.lt.f32.partialorder %v2211, 9.5
  %v2370 = vsel %vm2369, %v2213, %v2367
  %v2371 = vsel %vm2369, %v2215, %v2368
  %vm2372 = vcmp.lt.f32.partialorder %v2212, 9.5
  %v2373 = vsel %vm2372, %v2214, %v2370
  %v2374 = vsel %vm2372, %v2216, %v2371
  %vm2375 = vcmp.lt.f32.partialorder %v2218, 9.5
  %v2376 = vsel %vm2375, %v2220, %v2373
  %v2377 = vsel %vm2375, %v2222, %v2374
  %vm2378 = vcmp.lt.f32.partialorder %v2219, 9.5
  %v2379 = vsel %vm2378, %v2221, %v2376
  %v2380 = vsel %vm2378, %v2223, %v2377
  %vm2381 = vcmp.lt.f32.partialorder %v2093, 9.5
  %v2382 = vsel %vm2381, %v2095, %v2379
  %v2383 = vsel %vm2381, %v2097, %v2380
  %v2384 = vmul.f32 %v2382, %v1914
  %v2385 = vmul.f32 %v1912, %v2383
  %v2386 = vsub.f32 %v2384, %v2385
  %v2387 = vadd.f32 %v2314, %v2386
  %v2388 = vand.u32 2147483647, %v2387
  %v2389 = vmul.f32 %v2388, 0.5
  %v2390 = vmul.f32 %v29, %v32
  %v2391 = vand.u32 2147483647, %v2390
  %v2392 = vmul.f32 %v35, %v38
  %v2393 = vand.u32 2147483647, %v2392
  %v2394 = vadd.f32 %v2391, %v2393
  %v2395 = vsub.f32 %v2394, %v2389
  %v2396 = vadd.f32 %v2395, 1e-08
  %v2397 = vrcp.pop %v2396
  %v2398 = vmul.f32 %v2396, %v2397
  %v2399 = vsub.f32 2.0, %v2398
  %v2400 = vmul.f32 %v2397, %v2399
  %v2401 = vmul.f32 %v2389, %v2400
  %v2402 = vmax.f32 %v2401, 1e-06
  %v2403 = vsub.f32 1.0, %v2402
  %v2404 = vmul.f32 %v29, %v29
  %v2405 = vmul.f32 %v2404, 0.083333336
  %v2406 = vmul.f32 %v32, %v32
  %v2407 = vmul.f32 %v2406, 0.083333336
  %v2408 = vmul.f32 %v35, %v35
  %v2409 = vmul.f32 %v2408, 0.083333336
  %v2410 = vmul.f32 %v38, %v38
  %v2411 = vmul.f32 %v2410, 0.083333336
  %v2412 = vmul.f32 %v18, %v18
  %v2413 = vmul.f32 %v20, %v20
  %v2414 = vmul.f32 %v25, %v25
  %v2415 = vmul.f32 %v27, %v27
  %v2416 = vmul.f32 %v2405, %v2412
  %v2417 = vmul.f32 %v2407, %v2413
  %v2418 = vadd.f32 %v2416, %v2417
  %v2419 = vmul.f32 %v2405, %v2413
  %v2420 = vmul.f32 %v2407, %v2412
  %v2421 = vadd.f32 %v2419, %v2420
  %v2422 = vsub.f32 %v2405, %v2407
  %v2423 = vmul.f32 %v2422, %v18
  %v2424 = vmul.f32 %v2423, %v20
  %v2425 = vmul.f32 %v2409, %v2414
  %v2426 = vmul.f32 %v2411, %v2415
  %v2427 = vadd.f32 %v2425, %v2426
  %v2428 = vmul.f32 %v2409, %v2415
  %v2429 = vmul.f32 %v2411, %v2414
  %v2430 = vadd.f32 %v2428, %v2429
  %v2431 = vsub.f32 %v2409, %v2411
  %v2432 = vmul.f32 %v2431, %v25
  %v2433 = vmul.f32 %v2432, %v27
  %v2434 = vsub.f32 %v14, %v21
  %v2435 = vsub.f32 %v16, %v23
  %v2436 = vadd.f32 %v2418, %v2427
  %v2437 = vadd.f32 %v2421, %v2430
  %v2438 = vadd.f32 %v2424, %v2433
  %v2439 = vmul.f32 %v2436, %v2435
  %v2440 = vmul.f32 %v2439, %v2435
  %v2441 = vmul.f32 %v2437, %v2434
  %v2442 = vmul.f32 %v2441, %v2434
  %v2443 = vadd.f32 %v2440, %v2442
  %v2444 = vmul.f32 %v2443, 0.25
  %v2445 = vsub.f32 0.0, %v2434
  %v2446 = vmul.f32 %v2438, %v2445
  %v2447 = vmul.f32 %v2446, %v2435
  %v2448 = vmul.f32 %v2447, 0.5
  %v2449 = vadd.f32 %v2444, %v2448
  %v2450 = vmul.f32 %v2436, %v2437
  %v2451 = vmul.f32 %v2438, %v2438
  %v2452 = vsub.f32 %v2450, %v2451
  %v2453 = vmul.f32 %v2418, %v2421
  %v2454 = vmul.f32 %v2424, %v2424
  %v2455 = vsub.f32 %v2453, %v2454
  %v2456 = vmul.f32 %v2427, %v2430
  %v2457 = vmul.f32 %v2433, %v2433
  %v2458 = vsub.f32 %v2456, %v2457
  %v2459 = vmul.f32 %v2455, %v2458
  %v2460 = vmax.f32 %v2459, 0.0
  %v2461 = vrsqrt.pop %v2460
  %v2462 = vmul.f32 %v2460, %v2461
  %vm2463 = vcmp.eq.f32.partialorder %v2460, inf
  %v2464 = vsel %vm2463, %v2460, %v2462
  %vm2465 = vcmp.eq.f32.partialorder %v2460, 0.0
  %v2466 = vand.u32 %v2460, 2147483648
  %v2467 = vsel %vm2465, %v2466, %v2464
  %v2468 = vmul.f32 %v2467, 4.0
  %v2469 = vadd.f32 %v2468, 0.001
  %v2470 = vrcp.pop %v2469
  %v2471 = vmul.f32 %v2452, %v2470
  %v2472 = vlog2.pop %v2471
  %v2473 = vmul.f32 %v2472, 0.6931472
  %v2474 = vmul.f32 %v2473, 0.5
  %v2475 = vrcp.pop %v2452
  %v2476 = vmul.f32 %v2449, %v2475
  %v2477 = vadd.f32 %v2476, %v2474
  %v2478 = vmax.f32 %v2477, 0.001
  %v2479 = vmin.f32 %v2478, 100.0
  %v2480 = vsub.f32 0.0, %v2479
  %v2481 = vmul.f32 %v2480, 1.442695
  %v2482 = vpow.pop %v2481
  %v2483 = vsub.f32 1.0, %v2482
  %v2484 = vadd.f32 %v2483, 0.001
  %v2485 = vrsqrt.pop %v2484
  %v2486 = vmul.f32 %v2484, %v2485
  %vm2487 = vcmp.eq.f32.partialorder %v2484, inf
  %v2488 = vsel %vm2487, %v2484, %v2486
  %vm2489 = vcmp.eq.f32.partialorder %v2484, 0.0
  %v2490 = vand.u32 %v2484, 2147483648
  %v2491 = vsel %vm2489, %v2490, %v2488
  %v2492 = vadd.f32 %v2491, %v2403
  %v2493 = vmul.f32 %v2492, 0.5
  %v2494 = vld [vmem:[%s2] sm:$0xff]
  %v2495 = vmul.f32 %v2493, %v2494
  %2496 = vst [vmem:[%s3] sm:$0xff] %v2495
  // Predicated region
  $region14: #{probiou_riou_loss.1} parent=0 // pred_check
    _
  $region15: #{probiou_riou_loss.1} parent=0 // pred_check_branch
    %2498 = sbr.rel (0) target = $region17
  $region16: #{probiou_riou_loss.1} parent=0 // pred_region
    _
  $region17: #{probiou_riou_loss.1} parent=0 // pred_fallthru
    _
  // Predicated region
  $region18: #{probiou_riou_loss.1} parent=0 // pred_check
    _
  $region19: #{probiou_riou_loss.1} parent=0 // pred_check_branch
    %2500 = sbr.rel (0) target = $region21
  $region20: #{probiou_riou_loss.1} parent=0 // pred_region
    _
  $region21: #{probiou_riou_loss.1} parent=0 // pred_fallthru
    _

</llo_original>
